<compile_context>
chip_gen: v5e
topology: v5e:2x2
jax: 0.10.0
libtpu: 0.0.40
codegen_flags: <defaults>
</compile_context>

<pallas_src>
import jax
import jax.numpy as jnp
from jax.experimental import pallas as pl
from jax.experimental.pallas import tpu as pltpu

# ---- model dimensions (mirrors Critic.__init__) ----------------------------
VIS_DIM = 2048                       # resnet avgpool output, reshape(-1, 2048)
SENT_DIM = 96                        # sentence feature dim (free choice)
LOC_DIM = 32                         # location feature dim (free choice)
SL_DIM = SENT_DIM + LOC_DIM          # merged sent+loc contraction (=128, MXU aligned)
STATE_SIZE = VIS_DIM + SL_DIM        # Linear1 input
H1_DIM = 2048                        # Linear1 out
H2_DIM = 512                         # Linear2 out
OUT_DIM = 1                          # Linear3 out
TN = 1024                            # Linear1-output tile (grid over H1, 2 steps)


def critic_kernel(feat_ref, sentloc_ref,
                  w1v_ref, w1sl_ref, b1_ref,
                  w2_ref, b2_ref, w3_ref, b3_ref,
                  out_ref, avg_sc, acc_sc):
    """Fused GAP + 3-layer MLP, tiled over the Linear1 output dimension."""
    j = pl.program_id(0)

    @pl.when(j == 0)
    def _():
        hw = feat_ref.shape[1]
        # adaptive_avg_pool2d(., 1).reshape(-1, 2048): sum over packed H*W axis
        # (f32 accumulation of the bf16 feature map), stored as bf16 MXU input.
        pooled = jnp.sum(feat_ref[...].astype(jnp.float32), axis=1) * (1.0 / hw)
        avg_sc[...] = pooled.astype(jnp.bfloat16)
        acc_sc[...] = jnp.zeros_like(acc_sc)

    # Linear1 tile j: split-K matmul (visual | sent+loc).
    # bf16 x bf16 MXU dots with f32 accumulation -- no weight upcast.
    h1 = jnp.dot(avg_sc[...], w1v_ref[...],
                 preferred_element_type=jnp.float32)
    h1 += jnp.dot(sentloc_ref[...], w1sl_ref[...],
                  preferred_element_type=jnp.float32)
    h1 = jnp.maximum(h1 + b1_ref[...], 0.0)                 # ReLU, (Bp, TN) f32

    # Linear2 partial sum over the H1 tiles (bf16 activations, f32 acc).
    acc_sc[...] += jnp.dot(h1.astype(jnp.bfloat16), w2_ref[...],
                           preferred_element_type=jnp.float32)

    @pl.when(j == pl.num_programs(0) - 1)
    def _():
        h2 = jnp.maximum(acc_sc[...] + b2_ref[...], 0.0)    # ReLU, (Bp, 512)
        # N=1 head as VPU multiply + lane reduce (skip a 512x1 MXU pass).
        v = jnp.sum(h2 * w3_ref[...], axis=-1, keepdims=True)
        out_ref[...] = v + b3_ref[...]                      # (Bp, 1)


def _pad_rows(x, target_rows):
    pad = target_rows - x.shape[0]
    if pad == 0:
        return x
    return jnp.pad(x, ((0, pad),) + ((0, 0),) * (x.ndim - 1))


def critic_forward(feat4, sent_feats, location, params):
    """One pallas_call, grid over H1 so weight DMA pipelines with compute."""
    w1v, w1sl, b1, w2, b2, w3_row, b3 = params
    B, H, W, C = feat4.shape
    Bp = max(8, ((B + 7) // 8) * 8)                          # pad batch to 8 sublanes

    feat = _pad_rows(feat4.reshape(B, H * W, C).astype(jnp.bfloat16), Bp)
    sentloc = _pad_rows(
        jnp.concatenate([sent_feats, location], axis=1).astype(jnp.bfloat16), Bp)

    grid = (H1_DIM // TN,)
    out = pl.pallas_call(
        critic_kernel,
        out_shape=jax.ShapeDtypeStruct((Bp, OUT_DIM), jnp.float32),
        grid_spec=pltpu.PrefetchScalarGridSpec(
            num_scalar_prefetch=0,
            grid=grid,
            in_specs=[
                pl.BlockSpec((Bp, H * W, C), lambda j: (0, 0, 0)),   # feat (bf16, resident)
                pl.BlockSpec((Bp, SL_DIM), lambda j: (0, 0)),        # sent+loc (bf16, resident)
                pl.BlockSpec((VIS_DIM, TN), lambda j: (0, j)),       # W1 visual slab (bf16)
                pl.BlockSpec((SL_DIM, TN), lambda j: (0, j)),        # W1 sent+loc slab (bf16)
                pl.BlockSpec((1, TN), lambda j: (0, j)),             # b1 tile (f32)
                pl.BlockSpec((TN, H2_DIM), lambda j: (j, 0)),        # W2 slab (bf16)
                pl.BlockSpec((1, H2_DIM), lambda j: (0, 0)),         # b2 (resident)
                pl.BlockSpec((1, H2_DIM), lambda j: (0, 0)),         # w3 row (resident)
                pl.BlockSpec((1, OUT_DIM), lambda j: (0, 0)),        # b3
            ],
            out_specs=pl.BlockSpec((Bp, OUT_DIM), lambda j: (0, 0)),
            scratch_shapes=[pltpu.VMEM((Bp, VIS_DIM), jnp.bfloat16),  # pooled features (MXU input)
                            pltpu.VMEM((Bp, H2_DIM), jnp.float32)],   # Linear2 accumulator
        ),
        compiler_params=pltpu.CompilerParams(
            # acc_sc accumulates across the grid axis -> must stay "arbitrary".
            dimension_semantics=("arbitrary",),
            vmem_limit_bytes=20 << 20,            # bf16/TN=1024 footprint + headroom
        ),
    )(feat, sentloc, w1v, w1sl, b1, w2, b2, w3_row, b3)
    return out[:B]


def init_params(key):
    """Deterministic synthetic weights with Linear-like shapes (stored as (in, out))."""
    ks = jax.random.split(key, 6)
    s = 0.02
    w1 = jax.random.normal(ks[0], (STATE_SIZE, H1_DIM), jnp.float32) * s
    b1 = jax.random.normal(ks[1], (1, H1_DIM), jnp.float32) * s
    w2 = jax.random.normal(ks[2], (H1_DIM, H2_DIM), jnp.float32) * s
    b2 = jax.random.normal(ks[3], (1, H2_DIM), jnp.float32) * s
    w3 = jax.random.normal(ks[4], (H2_DIM, OUT_DIM), jnp.float32) * s
    b3 = jax.random.normal(ks[5], (1, OUT_DIM), jnp.float32) * s

    # Kernel weights: large matrices in bf16 (HBM bytes dominate runtime),
    # biases and the tiny final head row stay f32.
    w1_bf = w1.astype(jnp.bfloat16)
    w2_bf = w2.astype(jnp.bfloat16)
    w1v = w1_bf[:VIS_DIM]                       # (2048, H1)   visual slab
    w1sl = w1_bf[VIS_DIM:]                      # (128,  H1)   merged sent+loc slab
    w3_row = w3.T                               # (1, 512)     VPU head row
    kernel_params = (w1v, w1sl, b1, w2_bf, b2, w3_row, b3)

    # References: one emulating the kernel's bf16 numerics (tight check),
    # one in full f32 (semantics / numerics sanity check, looser tolerance).
    ref_params_bf16 = (w1_bf, b1, w2_bf, b2, w3, b3)
    ref_params_f32 = (w1, b1, w2, b2, w3, b3)
    return kernel_params, ref_params_bf16, ref_params_f32


def reference_forward_bf16(feat4, sent_feats, location, params):
    """Plain-JAX reference matching the kernel's bf16-input / f32-acc numerics."""
    w1_bf, b1, w2_bf, b2, w3, b3 = params
    feat_bf = feat4.astype(jnp.bfloat16)
    avg = jnp.mean(feat_bf.astype(jnp.float32), axis=(1, 2)).astype(jnp.bfloat16)
    sentloc = jnp.concatenate([sent_feats, location], axis=1).astype(jnp.bfloat16)
    state = jnp.concatenate([avg, sentloc], axis=1)
    h1 = jnp.maximum(jnp.dot(state, w1_bf, preferred_element_type=jnp.float32) + b1, 0.0)
    h2 = jnp.maximum(jnp.dot(h1.astype(jnp.bfloat16), w2_bf,
                             preferred_element_type=jnp.float32) + b2, 0.0)
    return h2 @ w3 + b3


def reference_forward_f32(feat4, sent_feats, location, params):
    """Full-precision reference of the original module math."""
    w1, b1, w2, b2, w3, b3 = params
    avg = jnp.mean(feat4, axis=(1, 2))
    state = jnp.concatenate([avg, sent_feats, location], axis=1)
    h1 = jax.nn.relu(state @ w1 + b1)
    h2 = jax.nn.relu(h1 @ w2 + b2)
    return h2 @ w3 + b3


if __name__ == "__main__":
    key = jax.random.PRNGKey(0)
    k_feat, k_sent, k_loc, k_par = jax.random.split(key, 4)

    B, H4, W4 = 2, 4, 4
    # layout: NHWC feature map standing in for resnet layer4 output.
    feat4 = jax.random.normal(k_feat, (B, H4, W4, VIS_DIM), jnp.float32)
    sent_feats = jax.random.normal(k_sent, (B, SENT_DIM), jnp.float32)
    location = jax.random.normal(k_loc, (B, LOC_DIM), jnp.float32)

    kernel_params, ref_params_bf16, ref_params_f32 = init_params(k_par)

    values = critic_forward(feat4, sent_feats, location, kernel_params)
    values = jax.block_until_ready(values)

    assert values.shape == (B, 1)

    # Tight check against a plain-JAX emulation of the kernel's bf16 math.
    ref_bf = reference_forward_bf16(feat4, sent_feats, location, ref_params_bf16)
    assert jnp.allclose(values, ref_bf, atol=2e-3, rtol=2e-3), (values, ref_bf)

    # Looser check against the full-f32 reference (bf16 weight/activation quantization).
    ref_f32 = reference_forward_f32(feat4, sent_feats, location, ref_params_f32)
    assert jnp.allclose(values, ref_f32, atol=3e-2, rtol=3e-2), (values, ref_f32)

    print("KERNEL_OK")
</pallas_src>

<mosaic_0001>
module attributes {stable_mosaic.version = 11 : i64} {
  func.func @critic_kernel(%arg0: i32, %arg1: memref<8x16x2048xbf16, #tpu.memory_space<vmem>>, %arg2: memref<8x128xbf16, #tpu.memory_space<vmem>>, %arg3: memref<2048x1024xbf16, #tpu.memory_space<vmem>>, %arg4: memref<128x1024xbf16, #tpu.memory_space<vmem>>, %arg5: memref<1x1024xf32, #tpu.memory_space<vmem>>, %arg6: memref<1024x512xbf16, #tpu.memory_space<vmem>>, %arg7: memref<1x512xf32, #tpu.memory_space<vmem>>, %arg8: memref<1x512xf32, #tpu.memory_space<vmem>>, %arg9: memref<1x1xf32, #tpu.memory_space<vmem>>, %arg10: memref<8x1xf32, #tpu.memory_space<vmem>>, %arg11: memref<8x2048xbf16, #tpu.memory_space<vmem>>, %arg12: memref<8x512xf32, #tpu.memory_space<vmem>>) attributes {dimension_semantics = [#tpu.dimension_semantics<arbitrary>], iteration_bounds = array<i64: 2>, scalar_prefetch = 0 : i64, scratch_operands = 2 : i64, tpu.core_type = #tpu.core_type<tc>, window_params = [{pipeline_mode = #tpu.pipeline_mode<synchronous>, transform_indices = @transform_0, window_bounds = array<i64: 8, 16, 2048>}, {pipeline_mode = #tpu.pipeline_mode<synchronous>, transform_indices = @transform_1, window_bounds = array<i64: 8, 128>}, {transform_indices = @transform_2, window_bounds = array<i64: 2048, 1024>}, {transform_indices = @transform_3, window_bounds = array<i64: 128, 1024>}, {transform_indices = @transform_4, window_bounds = array<i64: 1, 1024>}, {transform_indices = @transform_5, window_bounds = array<i64: 1024, 512>}, {pipeline_mode = #tpu.pipeline_mode<synchronous>, transform_indices = @transform_6, window_bounds = array<i64: 1, 512>}, {pipeline_mode = #tpu.pipeline_mode<synchronous>, transform_indices = @transform_7, window_bounds = array<i64: 1, 512>}, {pipeline_mode = #tpu.pipeline_mode<synchronous>, transform_indices = @transform_8, window_bounds = array<i64: 1, 1>}, {pipeline_mode = #tpu.pipeline_mode<synchronous>, transform_indices = @transform_9, window_bounds = array<i64: 8, 1>}]} {
    %c0_i32 = arith.constant 0 : i32
    %0 = arith.cmpi eq, %arg0, %c0_i32 : i32
    %1 = arith.extui %0 : i1 to i32
    %c0_i32_0 = arith.constant 0 : i32
    %2 = arith.cmpi ne, %1, %c0_i32_0 : i32
    scf.if %2 {
      %c0_20 = arith.constant 0 : index
      %c0_21 = arith.constant 0 : index
      %c0_22 = arith.constant 0 : index
      %24 = vector.load %arg1[%c0_20, %c0_21, %c0_22] : memref<8x16x2048xbf16, #tpu.memory_space<vmem>>, vector<8x16x2048xbf16>
      %25 = arith.extf %24 : vector<8x16x2048xbf16> to vector<8x16x2048xf32>
      %cst_23 = arith.constant dense<0.000000e+00> : vector<8x2048xf32>
      %26 = vector.multi_reduction <add>, %25, %cst_23 [1] : vector<8x16x2048xf32> to vector<8x2048xf32>
      %cst_24 = arith.constant 6.250000e-02 : f32
      %27 = vector.broadcast %cst_24 : f32 to vector<8x2048xf32>
      %28 = arith.mulf %26, %27 : vector<8x2048xf32>
      %29 = arith.truncf %28 : vector<8x2048xf32> to vector<8x2048xbf16>
      %c0_25 = arith.constant 0 : index
      %c0_26 = arith.constant 0 : index
      %30 = vector.load %arg11[%c0_25, %c0_26] : memref<8x2048xbf16, #tpu.memory_space<vmem>>, vector<8x2048xbf16>
      tpu.vector_store %arg11[%c0_25, %c0_26], %29 {strides = array<i32>} : memref<8x2048xbf16, #tpu.memory_space<vmem>>, vector<8x2048xbf16>,
      %cst_27 = arith.constant 0.000000e+00 : f32
      %31 = vector.broadcast %cst_27 : f32 to vector<8x512xf32>
      %c0_28 = arith.constant 0 : index
      %c0_29 = arith.constant 0 : index
      %32 = vector.load %arg12[%c0_28, %c0_29] : memref<8x512xf32, #tpu.memory_space<vmem>>, vector<8x512xf32>
      tpu.vector_store %arg12[%c0_28, %c0_29], %31 {strides = array<i32>} : memref<8x512xf32, #tpu.memory_space<vmem>>, vector<8x512xf32>,
    } else {
    }
    %c0 = arith.constant 0 : index
    %c0_1 = arith.constant 0 : index
    %3 = vector.load %arg11[%c0, %c0_1] : memref<8x2048xbf16, #tpu.memory_space<vmem>>, vector<8x2048xbf16>
    %c0_2 = arith.constant 0 : index
    %c0_3 = arith.constant 0 : index
    %4 = vector.load %arg3[%c0_2, %c0_3] : memref<2048x1024xbf16, #tpu.memory_space<vmem>>, vector<2048x1024xbf16>
    %cst = arith.constant dense<0.000000e+00> : vector<8x1024xf32>
    %5 = tpu.matmul %3, %4, %cst {dimension_numbers = #tpu.dot_dimension_numbers<[1], [0], [0], [1], [0, 0, 1, 1], [], []>} : vector<8x2048xbf16>, vector<2048x1024xbf16>, vector<8x1024xf32> -> vector<8x1024xf32>
    %c0_4 = arith.constant 0 : index
    %c0_5 = arith.constant 0 : index
    %6 = vector.load %arg2[%c0_4, %c0_5] : memref<8x128xbf16, #tpu.memory_space<vmem>>, vector<8x128xbf16>
    %c0_6 = arith.constant 0 : index
    %c0_7 = arith.constant 0 : index
    %7 = vector.load %arg4[%c0_6, %c0_7] : memref<128x1024xbf16, #tpu.memory_space<vmem>>, vector<128x1024xbf16>
    %cst_8 = arith.constant dense<0.000000e+00> : vector<8x1024xf32>
    %8 = tpu.matmul %6, %7, %cst_8 {dimension_numbers = #tpu.dot_dimension_numbers<[1], [0], [0], [1], [0, 0, 1, 1], [], []>} : vector<8x128xbf16>, vector<128x1024xbf16>, vector<8x1024xf32> -> vector<8x1024xf32>
    %9 = arith.addf %5, %8 : vector<8x1024xf32>
    %c0_9 = arith.constant 0 : index
    %c0_10 = arith.constant 0 : index
    %10 = vector.load %arg5[%c0_9, %c0_10] : memref<1x1024xf32, #tpu.memory_space<vmem>>, vector<1x1024xf32>
    %11 = vector.broadcast %10 : vector<1x1024xf32> to vector<8x1024xf32>
    %12 = arith.addf %9, %11 : vector<8x1024xf32>
    %cst_11 = arith.constant 0.000000e+00 : f32
    %13 = vector.broadcast %cst_11 : f32 to vector<8x1024xf32>
    %14 = arith.maximumf %12, %13 : vector<8x1024xf32>
    %c0_12 = arith.constant 0 : index
    %c0_13 = arith.constant 0 : index
    %15 = vector.load %arg12[%c0_12, %c0_13] : memref<8x512xf32, #tpu.memory_space<vmem>>, vector<8x512xf32>
    %16 = arith.truncf %14 : vector<8x1024xf32> to vector<8x1024xbf16>
    %c0_14 = arith.constant 0 : index
    %c0_15 = arith.constant 0 : index
    %17 = vector.load %arg6[%c0_14, %c0_15] : memref<1024x512xbf16, #tpu.memory_space<vmem>>, vector<1024x512xbf16>
    %cst_16 = arith.constant dense<0.000000e+00> : vector<8x512xf32>
    %18 = tpu.matmul %16, %17, %cst_16 {dimension_numbers = #tpu.dot_dimension_numbers<[1], [0], [0], [1], [0, 0, 1, 1], [], []>} : vector<8x1024xbf16>, vector<1024x512xbf16>, vector<8x512xf32> -> vector<8x512xf32>
    %19 = arith.addf %15, %18 : vector<8x512xf32>
    %c0_17 = arith.constant 0 : index
    %c0_18 = arith.constant 0 : index
    %20 = vector.load %arg12[%c0_17, %c0_18] : memref<8x512xf32, #tpu.memory_space<vmem>>, vector<8x512xf32>
    tpu.vector_store %arg12[%c0_17, %c0_18], %19 {strides = array<i32>} : memref<8x512xf32, #tpu.memory_space<vmem>>, vector<8x512xf32>,
    %c1_i32 = arith.constant 1 : i32
    %21 = arith.cmpi eq, %arg0, %c1_i32 : i32
    %22 = arith.extui %21 : i1 to i32
    %c0_i32_19 = arith.constant 0 : i32
    %23 = arith.cmpi ne, %22, %c0_i32_19 : i32
    scf.if %23 {
      %c0_20 = arith.constant 0 : index
      %c0_21 = arith.constant 0 : index
      %24 = vector.load %arg12[%c0_20, %c0_21] : memref<8x512xf32, #tpu.memory_space<vmem>>, vector<8x512xf32>
      %c0_22 = arith.constant 0 : index
      %c0_23 = arith.constant 0 : index
      %25 = vector.load %arg7[%c0_22, %c0_23] : memref<1x512xf32, #tpu.memory_space<vmem>>, vector<1x512xf32>
      %26 = vector.broadcast %25 : vector<1x512xf32> to vector<8x512xf32>
      %27 = arith.addf %24, %26 : vector<8x512xf32>
      %cst_24 = arith.constant 0.000000e+00 : f32
      %28 = vector.broadcast %cst_24 : f32 to vector<8x512xf32>
      %29 = arith.maximumf %27, %28 : vector<8x512xf32>
      %c0_25 = arith.constant 0 : index
      %c0_26 = arith.constant 0 : index
      %30 = vector.load %arg8[%c0_25, %c0_26] : memref<1x512xf32, #tpu.memory_space<vmem>>, vector<1x512xf32>
      %31 = vector.broadcast %30 : vector<1x512xf32> to vector<8x512xf32>
      %32 = arith.mulf %29, %31 : vector<8x512xf32>
      %cst_27 = arith.constant dense<0.000000e+00> : vector<8xf32>
      %33 = vector.multi_reduction <add>, %32, %cst_27 [1] : vector<8x512xf32> to vector<8xf32>
      %34 = vector.shape_cast %33 : vector<8xf32> to vector<8x1xf32>
      %c0_28 = arith.constant 0 : index
      %c0_29 = arith.constant 0 : index
      %35 = vector.load %arg9[%c0_28, %c0_29] : memref<1x1xf32, #tpu.memory_space<vmem>>, vector<1x1xf32>
      %36 = vector.broadcast %35 : vector<1x1xf32> to vector<8x1xf32>
      %37 = arith.addf %34, %36 : vector<8x1xf32>
      %c0_30 = arith.constant 0 : index
      %c0_31 = arith.constant 0 : index
      %38 = vector.load %arg10[%c0_30, %c0_31] : memref<8x1xf32, #tpu.memory_space<vmem>>, vector<8x1xf32>
      tpu.vector_store %arg10[%c0_30, %c0_31], %37 {strides = array<i32>} : memref<8x1xf32, #tpu.memory_space<vmem>>, vector<8x1xf32>,
    } else {
    }
    return
  }
  func.func @transform_0(%arg0: i32) -> (i32, i32, i32) {
    %c0_i32 = arith.constant 0 : i32
    %c0_i32_0 = arith.constant 0 : i32
    %c0_i32_1 = arith.constant 0 : i32
    %c0_i32_2 = arith.constant 0 : i32
    return %c0_i32, %c0_i32_0, %c0_i32_1 : i32, i32, i32
  }
  func.func @transform_1(%arg0: i32) -> (i32, i32) {
    %c0_i32 = arith.constant 0 : i32
    %c0_i32_0 = arith.constant 0 : i32
    %c0_i32_1 = arith.constant 0 : i32
    return %c0_i32, %c0_i32_0 : i32, i32
  }
  func.func @transform_2(%arg0: i32) -> (i32, i32) {
    %c0_i32 = arith.constant 0 : i32
    %c0_i32_0 = arith.constant 0 : i32
    return %c0_i32, %arg0 : i32, i32
  }
  func.func @transform_3(%arg0: i32) -> (i32, i32) {
    %c0_i32 = arith.constant 0 : i32
    %c0_i32_0 = arith.constant 0 : i32
    return %c0_i32, %arg0 : i32, i32
  }
  func.func @transform_4(%arg0: i32) -> (i32, i32) {
    %c0_i32 = arith.constant 0 : i32
    %c0_i32_0 = arith.constant 0 : i32
    return %c0_i32, %arg0 : i32, i32
  }
  func.func @transform_5(%arg0: i32) -> (i32, i32) {
    %c0_i32 = arith.constant 0 : i32
    %c0_i32_0 = arith.constant 0 : i32
    return %arg0, %c0_i32 : i32, i32
  }
  func.func @transform_6(%arg0: i32) -> (i32, i32) {
    %c0_i32 = arith.constant 0 : i32
    %c0_i32_0 = arith.constant 0 : i32
    %c0_i32_1 = arith.constant 0 : i32
    return %c0_i32, %c0_i32_0 : i32, i32
  }
  func.func @transform_7(%arg0: i32) -> (i32, i32) {
    %c0_i32 = arith.constant 0 : i32
    %c0_i32_0 = arith.constant 0 : i32
    %c0_i32_1 = arith.constant 0 : i32
    return %c0_i32, %c0_i32_0 : i32, i32
  }
  func.func @transform_8(%arg0: i32) -> (i32, i32) {
    %c0_i32 = arith.constant 0 : i32
    %c0_i32_0 = arith.constant 0 : i32
    %c0_i32_1 = arith.constant 0 : i32
    return %c0_i32, %c0_i32_0 : i32, i32
  }
  func.func @transform_9(%arg0: i32) -> (i32, i32) {
    %c0_i32 = arith.constant 0 : i32
    %c0_i32_0 = arith.constant 0 : i32
    %c0_i32_1 = arith.constant 0 : i32
    return %c0_i32, %c0_i32_0 : i32, i32
  }
}

</mosaic_0001>

<llo_original>
// kernel: tpu_custom_call.1
$region0: #{tpu_custom_call.1}
  #allocation0 [shape = 'u32[]', space=smem, size = 0x4, offset = 0x4, fixed_abs, tag = 'smem constant byte address 0x4 - core index']
  #allocation1 [shape = 'u32[72,128]{1,0:T(1,128)}', space=vmem, size = 0x9000, scoped, tag = 'internal scratch']
  #allocation2 [shape = 'bf16[8,2048]{1,0:T(8,128)(2,1)}', space=vmem, size = 0x8000, scoped, tag = 'scratch operand']
  #allocation3 [shape = 'f32[8,512]{1,0:T(8,128)}', space=vmem, size = 0x4000, scoped, tag = 'scratch operand']
  #allocation4 [shape = 'f32[1,1]{1,0:T(1,128)S(1)}', space=vmem, size = 0x200, scoped, tag = 'scoped memory for tpu_custom_call.1']
  %s0 = inlined_call_operand.hbm [shape: bf16[8,16,2048], index: 0, kind: input, shape index: {}]
  %s1 = inlined_call_operand.hbm [shape: bf16[8,128], index: 1, kind: input, shape index: {}]
  %s2 = inlined_call_operand.hbm [shape: bf16[2048,2048], index: 2, kind: input, shape index: {}]
  %s3 = inlined_call_operand.hbm [shape: bf16[128,2048], index: 3, kind: input, shape index: {}]
  %s4 = inlined_call_operand.hbm [shape: f32[1,2048], index: 4, kind: input, shape index: {}]
  %s5 = inlined_call_operand.hbm [shape: bf16[2048,512], index: 5, kind: input, shape index: {}]
  %s6 = inlined_call_operand.hbm [shape: f32[1,512], index: 6, kind: input, shape index: {}]
  %s7 = inlined_call_operand.hbm [shape: f32[1,512], index: 7, kind: input, shape index: {}]
  %s8 = inlined_call_operand.<no memory space> [shape: f32[1,1], index: 8, kind: input, shape index: {}]
  %s9 = inlined_call_operand.vmem [shape: f32[8,1], index: 9, kind: output, shape index: {}]
  %s10 = sld [smem:[#allocation0]]
  $region109: #{tpu_custom_call.1} parent=0
    _
  %s12 = ssub.s32 1, %s10
  %s13 = scalar_select 0, %s12, %s10
  %v14 = vstv %s8
  %15 = vst [vmem:[#allocation4] sm:$0x1] %v14
  $region1: #{tpu_custom_call.1} parent=0
    #allocation5 [shape = 'u8[524288]{0}', space=vmem, size = 0x80000, scoped, tag = 'input window, operand 0, single buffered']
    #allocation6 [shape = 's32[2]{0}', space=sflag, size = 0x8, scoped, tag = 'scoped memory for tpu_custom_call.1']
    #allocation7 [shape = 'u8[2048]{0}', space=vmem, size = 0x800, scoped, tag = 'input window, operand 1, single buffered']
    #allocation8 [shape = 's32[1]{0}', space=sflag, size = 0x4, scoped, tag = 'scoped memory for tpu_custom_call.1']
    #allocation9 [shape = 'u8[8388608]{0}', space=vmem, size = 0x800000, scoped, tag = 'input window, operand 2']
    #allocation10 [shape = 'u8[524288]{0}', space=vmem, size = 0x80000, scoped, tag = 'input window, operand 3']
    #allocation11 [shape = 'u8[8192]{0}', space=vmem, size = 0x2000, scoped, tag = 'input window, operand 4']
    #allocation12 [shape = 'u8[2097152]{0}', space=vmem, size = 0x200000, scoped, tag = 'input window, operand 5']
    #allocation13 [shape = 'u8[2048]{0}', space=vmem, size = 0x800, scoped, tag = 'input window, operand 6, single buffered']
    #allocation14 [shape = 'u8[2048]{0}', space=vmem, size = 0x800, scoped, tag = 'input window, operand 7, single buffered']
    #allocation15 [shape = 's32[1]{0}', space=sflag, size = 0x4, scoped, tag = 'scoped memory for tpu_custom_call.1']
    %16 = vsyncpa [#allocation6], 0
    %17 = vsyncpa [#allocation8], 0
    %18 = vsyncpa [#allocation15], 0
    loop: start=0, step=1, limit=4
    $region2: #{tpu_custom_call.1} parent=1 // loop_pre_header
      _
    $region3: #{tpu_custom_call.1} parent=1 // loop_header
      %s20 = sphi 0, %s24
      %p21 = scmp.ge.s32.totalorder %s20, 4
      %s28 = sphi 0, %s28
      %s30 = sphi 0, %s28
      %s31 = sphi 0, %s30
      %s45 = sphi 0, %s31
      %s49 = sphi 0, %s49
      %s51 = sphi 0, %s49
      %s52 = sphi 0, %s51
      %s66 = sphi 0, %s52
      %s72 = sphi 0, %s74
      %s75 = sphi 0, %s72
      %s76 = sphi 0, %s75
      %s92 = sphi 0, %s76
      %s98 = sphi 0, %s100
      %s101 = sphi 0, %s98
      %s102 = sphi 0, %s101
      %s118 = sphi 0, %s102
      %s124 = sphi 0, %s126
      %s127 = sphi 0, %s124
      %s128 = sphi 0, %s127
      %s144 = sphi 0, %s128
      %s150 = sphi 0, %s152
      %s153 = sphi 0, %s150
      %s154 = sphi 0, %s153
      %s170 = sphi 0, %s154
      %s174 = sphi 0, %s174
      %s176 = sphi 0, %s174
      %s177 = sphi 0, %s176
      %s191 = sphi 0, %s177
      %s195 = sphi 0, %s195
      %s197 = sphi 0, %s195
      %s198 = sphi 0, %s197
      %s212 = sphi 0, %s198
      %s216 = sphi 0, %s216
      %s218 = sphi 0, %s216
      %s219 = sphi 0, %s218
      %s233 = sphi 0, %s219
      %s237 = sphi 0, %s237
      %s239 = sphi 0, %s237
      %s240 = sphi 0, %s239
      %s254 = sphi 0, %s240
    $region4: #{tpu_custom_call.1} parent=1 // loop_header_branch
      %23 = sbr.rel (%p21) target = $region8
    $region5: #{tpu_custom_call.1} parent=1 // loop_body
      %s25 = ssub.s32 %s20, 1
      %s26 = ssub.s32 %s20, 2
      %s27 = sadd.s32 %s20, 1
      %s29 = sadd.s32 %s28, 1
      %p32 = scmp.eq.s32.totalorder %s20, 1
      %p33 = scmp.ne.s32.totalorder %s28, %s30
      %p34 = scmp.eq.s32.totalorder %s20, 0
      %p35 = por %p33, %p34
      %p36 = scmp.ne.s32.totalorder %s28, %s30
      %p37 = scmp.eq.s32.totalorder %s25, 1
      %p38 = por %p36, %p37
      %p39 = scmp.ne.s32.totalorder %s30, %s31
      %p40 = scmp.eq.s32.totalorder %s25, 0
      %p41 = por %p39, %p40
      %p42 = scmp.ne.s32.totalorder %s30, %s31
      %p43 = scmp.eq.s32.totalorder %s26, 1
      %p44 = por %p42, %p43
      %p46 = scmp.ne.s32.totalorder %s31, %s45
      %p47 = scmp.eq.s32.totalorder %s26, 0
      %p48 = por %p46, %p47
      %s50 = sadd.s32 %s49, 1
      %p53 = scmp.eq.s32.totalorder %s20, 1
      %p54 = scmp.ne.s32.totalorder %s49, %s51
      %p55 = scmp.eq.s32.totalorder %s20, 0
      %p56 = por %p54, %p55
      %p57 = scmp.ne.s32.totalorder %s49, %s51
      %p58 = scmp.eq.s32.totalorder %s25, 1
      %p59 = por %p57, %p58
      %p60 = scmp.ne.s32.totalorder %s51, %s52
      %p61 = scmp.eq.s32.totalorder %s25, 0
      %p62 = por %p60, %p61
      %p63 = scmp.ne.s32.totalorder %s51, %s52
      %p64 = scmp.eq.s32.totalorder %s26, 1
      %p65 = por %p63, %p64
      %p67 = scmp.ne.s32.totalorder %s52, %s66
      %p68 = scmp.eq.s32.totalorder %s26, 0
      %p69 = por %p67, %p68
      %s70 = ssub.s32 %s20, %s27
      %p71 = scmp.eq.s32.totalorder %s70, 0
      %s73 = sadd.s32 %s72, 1
      %s74 = scalar_select %p71, %s72, %s73
      %p77 = pneg %p71
      %p78 = scmp.eq.s32.totalorder %s20, 1
      %p79 = por %p77, %p78
      %p80 = scmp.ne.s32.totalorder %s72, %s75
      %p81 = scmp.eq.s32.totalorder %s20, 0
      %p82 = por %p80, %p81
      %p83 = scmp.ne.s32.totalorder %s72, %s75
      %p84 = scmp.eq.s32.totalorder %s25, 1
      %p85 = por %p83, %p84
      %p86 = scmp.ne.s32.totalorder %s75, %s76
      %p87 = scmp.eq.s32.totalorder %s25, 0
      %p88 = por %p86, %p87
      %p89 = scmp.ne.s32.totalorder %s75, %s76
      %p90 = scmp.eq.s32.totalorder %s26, 1
      %p91 = por %p89, %p90
      %p93 = scmp.ne.s32.totalorder %s76, %s92
      %p94 = scmp.eq.s32.totalorder %s26, 0
      %p95 = por %p93, %p94
      %s96 = ssub.s32 %s20, %s27
      %p97 = scmp.eq.s32.totalorder %s96, 0
      %s99 = sadd.s32 %s98, 1
      %s100 = scalar_select %p97, %s98, %s99
      %p103 = pneg %p97
      %p104 = scmp.eq.s32.totalorder %s20, 1
      %p105 = por %p103, %p104
      %p106 = scmp.ne.s32.totalorder %s98, %s101
      %p107 = scmp.eq.s32.totalorder %s20, 0
      %p108 = por %p106, %p107
      %p109 = scmp.ne.s32.totalorder %s98, %s101
      %p110 = scmp.eq.s32.totalorder %s25, 1
      %p111 = por %p109, %p110
      %p112 = scmp.ne.s32.totalorder %s101, %s102
      %p113 = scmp.eq.s32.totalorder %s25, 0
      %p114 = por %p112, %p113
      %p115 = scmp.ne.s32.totalorder %s101, %s102
      %p116 = scmp.eq.s32.totalorder %s26, 1
      %p117 = por %p115, %p116
      %p119 = scmp.ne.s32.totalorder %s102, %s118
      %p120 = scmp.eq.s32.totalorder %s26, 0
      %p121 = por %p119, %p120
      %s122 = ssub.s32 %s20, %s27
      %p123 = scmp.eq.s32.totalorder %s122, 0
      %s125 = sadd.s32 %s124, 1
      %s126 = scalar_select %p123, %s124, %s125
      %p129 = pneg %p123
      %p130 = scmp.eq.s32.totalorder %s20, 1
      %p131 = por %p129, %p130
      %p132 = scmp.ne.s32.totalorder %s124, %s127
      %p133 = scmp.eq.s32.totalorder %s20, 0
      %p134 = por %p132, %p133
      %p135 = scmp.ne.s32.totalorder %s124, %s127
      %p136 = scmp.eq.s32.totalorder %s25, 1
      %p137 = por %p135, %p136
      %p138 = scmp.ne.s32.totalorder %s127, %s128
      %p139 = scmp.eq.s32.totalorder %s25, 0
      %p140 = por %p138, %p139
      %p141 = scmp.ne.s32.totalorder %s127, %s128
      %p142 = scmp.eq.s32.totalorder %s26, 1
      %p143 = por %p141, %p142
      %p145 = scmp.ne.s32.totalorder %s128, %s144
      %p146 = scmp.eq.s32.totalorder %s26, 0
      %p147 = por %p145, %p146
      %s148 = ssub.s32 %s20, %s27
      %p149 = scmp.eq.s32.totalorder %s148, 0
      %s151 = sadd.s32 %s150, 1
      %s152 = scalar_select %p149, %s150, %s151
      %p155 = pneg %p149
      %p156 = scmp.eq.s32.totalorder %s20, 1
      %p157 = por %p155, %p156
      %p158 = scmp.ne.s32.totalorder %s150, %s153
      %p159 = scmp.eq.s32.totalorder %s20, 0
      %p160 = por %p158, %p159
      %p161 = scmp.ne.s32.totalorder %s150, %s153
      %p162 = scmp.eq.s32.totalorder %s25, 1
      %p163 = por %p161, %p162
      %p164 = scmp.ne.s32.totalorder %s153, %s154
      %p165 = scmp.eq.s32.totalorder %s25, 0
      %p166 = por %p164, %p165
      %p167 = scmp.ne.s32.totalorder %s153, %s154
      %p168 = scmp.eq.s32.totalorder %s26, 1
      %p169 = por %p167, %p168
      %p171 = scmp.ne.s32.totalorder %s154, %s170
      %p172 = scmp.eq.s32.totalorder %s26, 0
      %p173 = por %p171, %p172
      %s175 = sadd.s32 %s174, 1
      %p178 = scmp.eq.s32.totalorder %s20, 1
      %p179 = scmp.ne.s32.totalorder %s174, %s176
      %p180 = scmp.eq.s32.totalorder %s20, 0
      %p181 = por %p179, %p180
      %p182 = scmp.ne.s32.totalorder %s174, %s176
      %p183 = scmp.eq.s32.totalorder %s25, 1
      %p184 = por %p182, %p183
      %p185 = scmp.ne.s32.totalorder %s176, %s177
      %p186 = scmp.eq.s32.totalorder %s25, 0
      %p187 = por %p185, %p186
      %p188 = scmp.ne.s32.totalorder %s176, %s177
      %p189 = scmp.eq.s32.totalorder %s26, 1
      %p190 = por %p188, %p189
      %p192 = scmp.ne.s32.totalorder %s177, %s191
      %p193 = scmp.eq.s32.totalorder %s26, 0
      %p194 = por %p192, %p193
      %s196 = sadd.s32 %s195, 1
      %p199 = scmp.eq.s32.totalorder %s20, 1
      %p200 = scmp.ne.s32.totalorder %s195, %s197
      %p201 = scmp.eq.s32.totalorder %s20, 0
      %p202 = por %p200, %p201
      %p203 = scmp.ne.s32.totalorder %s195, %s197
      %p204 = scmp.eq.s32.totalorder %s25, 1
      %p205 = por %p203, %p204
      %p206 = scmp.ne.s32.totalorder %s197, %s198
      %p207 = scmp.eq.s32.totalorder %s25, 0
      %p208 = por %p206, %p207
      %p209 = scmp.ne.s32.totalorder %s197, %s198
      %p210 = scmp.eq.s32.totalorder %s26, 1
      %p211 = por %p209, %p210
      %p213 = scmp.ne.s32.totalorder %s198, %s212
      %p214 = scmp.eq.s32.totalorder %s26, 0
      %p215 = por %p213, %p214
      %s217 = sadd.s32 %s216, 1
      %p220 = scmp.eq.s32.totalorder %s20, 1
      %p221 = scmp.ne.s32.totalorder %s216, %s218
      %p222 = scmp.eq.s32.totalorder %s20, 0
      %p223 = por %p221, %p222
      %p224 = scmp.ne.s32.totalorder %s216, %s218
      %p225 = scmp.eq.s32.totalorder %s25, 1
      %p226 = por %p224, %p225
      %p227 = scmp.ne.s32.totalorder %s218, %s219
      %p228 = scmp.eq.s32.totalorder %s25, 0
      %p229 = por %p227, %p228
      %p230 = scmp.ne.s32.totalorder %s218, %s219
      %p231 = scmp.eq.s32.totalorder %s26, 1
      %p232 = por %p230, %p231
      %p234 = scmp.ne.s32.totalorder %s219, %s233
      %p235 = scmp.eq.s32.totalorder %s26, 0
      %p236 = por %p234, %p235
      %s238 = sadd.s32 %s237, 1
      %p241 = scmp.eq.s32.totalorder %s20, 1
      %p242 = scmp.ne.s32.totalorder %s237, %s239
      %p243 = scmp.eq.s32.totalorder %s20, 0
      %p244 = por %p242, %p243
      %p245 = scmp.ne.s32.totalorder %s237, %s239
      %p246 = scmp.eq.s32.totalorder %s25, 1
      %p247 = por %p245, %p246
      %p248 = scmp.ne.s32.totalorder %s239, %s240
      %p249 = scmp.eq.s32.totalorder %s25, 0
      %p250 = por %p248, %p249
      %p251 = scmp.ne.s32.totalorder %s239, %s240
      %p252 = scmp.eq.s32.totalorder %s26, 1
      %p253 = por %p251, %p252
      %p255 = scmp.ne.s32.totalorder %s240, %s254
      %p256 = scmp.eq.s32.totalorder %s26, 0
      %p257 = por %p255, %p256
      %p258 = scmp.le.s32.totalorder 1, %s20
      %p259 = scmp.lt.s32.totalorder %s20, 3
      %p260 = pnand %p258, %p259
      %p261 = pneg %p260
      // Predicated region
      $region9: #{tpu_custom_call.1} parent=5 // pred_check
        _
      $region10: #{tpu_custom_call.1} parent=5 // pred_check_branch
        %263 = sbr.rel (%p260) target = $region12
      $region11: #{tpu_custom_call.1} parent=5 // pred_region
        %s264 = ssub.s32 %s20, 1
        // Predicated region
        $region13: #{tpu_custom_call.1} parent=11 // pred_check
          %p265 = pneg %p41
        $region14: #{tpu_custom_call.1} parent=11 // pred_check_branch
          %267 = sbr.rel (%p265) target = $region16
        $region15: #{tpu_custom_call.1} parent=11 // pred_region
          %269 = vsyncadd [#allocation6], 0
          %s270 = sshll.u32 %s0, 4
          %s271 = int_to_ptr.hbm [resolvable:$true] %s270
          %s272 = sshll.u32 [#allocation5], 4
          %s273 = int_to_ptr.vmem [resolvable:$true] %s272
          %278 = dma.hbm_to_vmem [thread:$0]  %s271, 16384, %s273, [#allocation6], 1024, 1024, 64
        $region16: #{tpu_custom_call.1} parent=11 // pred_fallthru
          _
        // Predicated region
        $region17: #{tpu_custom_call.1} parent=11 // pred_check
          %p279 = pneg %p62
        $region18: #{tpu_custom_call.1} parent=11 // pred_check_branch
          %281 = sbr.rel (%p279) target = $region20
        $region19: #{tpu_custom_call.1} parent=11 // pred_region
          %283 = vsyncadd [#allocation8], 0
          %s285 = sshll.u32 %s1, 4
          %s286 = int_to_ptr.hbm [resolvable:$true] %s285
          %s287 = sshll.u32 [#allocation7], 4
          %s288 = int_to_ptr.vmem [resolvable:$true] %s287
          %290 = dma.hbm_to_vmem [thread:$0]  %s286, 64, %s288, [#allocation8]
        $region20: #{tpu_custom_call.1} parent=11 // pred_fallthru
          _
        // Predicated region
        $region21: #{tpu_custom_call.1} parent=11 // pred_check
          %p291 = pneg %p187
        $region22: #{tpu_custom_call.1} parent=11 // pred_check_branch
          %293 = sbr.rel (%p291) target = $region24
        $region23: #{tpu_custom_call.1} parent=11 // pred_region
          %295 = vsyncadd [#allocation8], 0
          %s297 = sshll.u32 %s6, 4
          %s298 = int_to_ptr.hbm [resolvable:$true] %s297
          %s299 = sshll.u32 [#allocation13], 4
          %s300 = int_to_ptr.vmem [resolvable:$true] %s299
          %302 = dma.hbm_to_vmem [thread:$0]  %s298, 64, %s300, [#allocation8]
        $region24: #{tpu_custom_call.1} parent=11 // pred_fallthru
          _
        // Predicated region
        $region25: #{tpu_custom_call.1} parent=11 // pred_check
          %p303 = pneg %p208
        $region26: #{tpu_custom_call.1} parent=11 // pred_check_branch
          %305 = sbr.rel (%p303) target = $region28
        $region27: #{tpu_custom_call.1} parent=11 // pred_region
          %307 = vsyncadd [#allocation15], 0
          %s309 = sshll.u32 %s7, 4
          %s310 = int_to_ptr.hbm [resolvable:$true] %s309
          %s311 = sshll.u32 [#allocation14], 4
          %s312 = int_to_ptr.vmem [resolvable:$true] %s311
          %314 = dma.hbm_to_vmem [thread:$0]  %s310, 64, %s312, [#allocation15]
        $region28: #{tpu_custom_call.1} parent=11 // pred_fallthru
          _
        // Predicated region
        $region29: #{tpu_custom_call.1} parent=11 // pred_check
          %p315 = pneg %p229
        $region30: #{tpu_custom_call.1} parent=11 // pred_check_branch
          %317 = sbr.rel (%p315) target = $region32
        $region31: #{tpu_custom_call.1} parent=11 // pred_region
          _
        $region32: #{tpu_custom_call.1} parent=11 // pred_fallthru
          _
      $region12: #{tpu_custom_call.1} parent=5 // pred_fallthru
        _
      %p318 = scmp.lt.s32.totalorder %s20, 2
      // Predicated region
      $region33: #{tpu_custom_call.1} parent=5 // pred_check
        %p319 = pneg %p318
      $region34: #{tpu_custom_call.1} parent=5 // pred_check_branch
        %321 = sbr.rel (%p319) target = $region36
      $region35: #{tpu_custom_call.1} parent=5 // pred_region
        // Predicated region
        $region37: #{tpu_custom_call.1} parent=35 // pred_check
          %p322 = pneg %p82
        $region38: #{tpu_custom_call.1} parent=35 // pred_check_branch
          %324 = sbr.rel (%p322) target = $region40
        $region39: #{tpu_custom_call.1} parent=35 // pred_region
          %s325 = sand.u32 %s20, 1
          %s326 = scalar_lea.sflag [#allocation6], %s325
          %s327 = sand.u32 %s72, 1
          %s328 = smul.addr %s327, 8192
          %s329 = scalar_lea.vmem [#allocation9], %s328
          %s330 = smul.u32 8, %s20
          %332 = vsyncadd %s326, 0
          %s333 = smul.addr %s330, 4
          %s334 = scalar_lea.hbm %s2, %s333
          %s335 = sshll.u32 %s334, 4
          %s336 = int_to_ptr.hbm [resolvable:$true] %s335
          %s337 = sshll.u32 %s329, 4
          %s338 = int_to_ptr.vmem [resolvable:$true] %s337
          %343 = dma.hbm_to_vmem [thread:$0]  %s336, 131072, %s338, %s326, 1024, 512, 32
        $region40: #{tpu_custom_call.1} parent=35 // pred_fallthru
          _
        // Predicated region
        $region41: #{tpu_custom_call.1} parent=35 // pred_check
          %p344 = pneg %p108
        $region42: #{tpu_custom_call.1} parent=35 // pred_check_branch
          %346 = sbr.rel (%p344) target = $region44
        $region43: #{tpu_custom_call.1} parent=35 // pred_region
          %s347 = sand.u32 %s20, 1
          %s348 = scalar_lea.sflag [#allocation6], %s347
          %s349 = sand.u32 %s98, 1
          %s350 = smul.addr %s349, 512
          %s351 = scalar_lea.vmem [#allocation10], %s350
          %s352 = smul.u32 8, %s20
          %354 = vsyncadd %s348, 0
          %s355 = smul.addr %s352, 4
          %s356 = scalar_lea.hbm %s3, %s355
          %s357 = sshll.u32 %s356, 4
          %s358 = int_to_ptr.hbm [resolvable:$true] %s357
          %s359 = sshll.u32 %s351, 4
          %s360 = int_to_ptr.vmem [resolvable:$true] %s359
          %365 = dma.hbm_to_vmem [thread:$0]  %s358, 8192, %s360, %s348, 1024, 512, 32
        $region44: #{tpu_custom_call.1} parent=35 // pred_fallthru
          _
        // Predicated region
        $region45: #{tpu_custom_call.1} parent=35 // pred_check
          %p366 = pneg %p134
        $region46: #{tpu_custom_call.1} parent=35 // pred_check_branch
          %368 = sbr.rel (%p366) target = $region48
        $region47: #{tpu_custom_call.1} parent=35 // pred_region
          %s369 = sand.u32 %s20, 1
          %s370 = scalar_lea.sflag [#allocation6], %s369
          %s371 = sand.u32 %s124, 1
          %s372 = smul.addr %s371, 8
          %s373 = scalar_lea.vmem [#allocation11], %s372
          %s374 = smul.u32 8, %s20
          %376 = vsyncadd %s370, 0
          %s377 = scalar_lea.hbm %s4, %s374
          %s379 = sshll.u32 %s377, 4
          %s380 = int_to_ptr.hbm [resolvable:$true] %s379
          %s381 = sshll.u32 %s373, 4
          %s382 = int_to_ptr.vmem [resolvable:$true] %s381
          %384 = dma.hbm_to_vmem [thread:$0]  %s380, 128, %s382, %s370
        $region48: #{tpu_custom_call.1} parent=35 // pred_fallthru
          _
        // Predicated region
        $region49: #{tpu_custom_call.1} parent=35 // pred_check
          %p385 = pneg %p160
        $region50: #{tpu_custom_call.1} parent=35 // pred_check_branch
          %387 = sbr.rel (%p385) target = $region52
        $region51: #{tpu_custom_call.1} parent=35 // pred_region
          %s388 = sand.u32 %s20, 1
          %s389 = scalar_lea.sflag [#allocation6], %s388
          %s390 = sand.u32 %s150, 1
          %s391 = smul.addr %s390, 2048
          %s392 = scalar_lea.vmem [#allocation12], %s391
          %s393 = smul.u32 128, %s20
          %395 = vsyncadd %s389, 0
          %s396 = smul.addr %s393, 4
          %s397 = smul.addr %s396, 4
          %s398 = scalar_lea.hbm %s5, %s397
          %s399 = sshll.u32 %s398, 4
          %s400 = int_to_ptr.hbm [resolvable:$true] %s399
          %s401 = sshll.u32 %s392, 4
          %s402 = int_to_ptr.vmem [resolvable:$true] %s401
          %407 = dma.hbm_to_vmem [thread:$0]  %s400, 32768, %s402, %s389, 256, 256, 16
        $region52: #{tpu_custom_call.1} parent=35 // pred_fallthru
          _
      $region36: #{tpu_custom_call.1} parent=5 // pred_fallthru
        _
      %p408 = scmp.le.s32.totalorder 1, %s20
      %p409 = scmp.lt.s32.totalorder %s20, 3
      %p410 = pnand %p408, %p409
      %p411 = pneg %p410
      // Predicated region
      $region53: #{tpu_custom_call.1} parent=5 // pred_check
        _
      $region54: #{tpu_custom_call.1} parent=5 // pred_check_branch
        %413 = sbr.rel (%p410) target = $region56
      $region55: #{tpu_custom_call.1} parent=5 // pred_region
        %s414 = ssub.s32 %s20, 1
        // Predicated region
        $region57: #{tpu_custom_call.1} parent=55 // pred_check
          %p415 = pneg %p41
        $region58: #{tpu_custom_call.1} parent=55 // pred_check_branch
          %417 = sbr.rel (%p415) target = $region60
        $region59: #{tpu_custom_call.1} parent=55 // pred_region
          %419 = dma.done [#allocation6], 16384
        $region60: #{tpu_custom_call.1} parent=55 // pred_fallthru
          _
        // Predicated region
        $region61: #{tpu_custom_call.1} parent=55 // pred_check
          %p420 = pneg %p62
        $region62: #{tpu_custom_call.1} parent=55 // pred_check_branch
          %422 = sbr.rel (%p420) target = $region64
        $region63: #{tpu_custom_call.1} parent=55 // pred_region
          %424 = dma.done [#allocation8], 64
        $region64: #{tpu_custom_call.1} parent=55 // pred_fallthru
          _
        %s425 = sand.u32 %s25, 1
        %s426 = scalar_lea.sflag [#allocation6], %s425
        %s427 = sand.u32 %s75, 1
        %s428 = smul.addr %s427, 8192
        %s429 = scalar_lea.vmem [#allocation9], %s428
        // Predicated region
        $region65: #{tpu_custom_call.1} parent=55 // pred_check
          %p430 = pneg %p88
        $region66: #{tpu_custom_call.1} parent=55 // pred_check_branch
          %432 = sbr.rel (%p430) target = $region68
        $region67: #{tpu_custom_call.1} parent=55 // pred_region
          %434 = dma.done %s426, 131072
        $region68: #{tpu_custom_call.1} parent=55 // pred_fallthru
          _
        %s435 = sand.u32 %s25, 1
        %s436 = scalar_lea.sflag [#allocation6], %s435
        %s437 = sand.u32 %s101, 1
        %s438 = smul.addr %s437, 512
        %s439 = scalar_lea.vmem [#allocation10], %s438
        // Predicated region
        $region69: #{tpu_custom_call.1} parent=55 // pred_check
          %p440 = pneg %p114
        $region70: #{tpu_custom_call.1} parent=55 // pred_check_branch
          %442 = sbr.rel (%p440) target = $region72
        $region71: #{tpu_custom_call.1} parent=55 // pred_region
          %444 = dma.done %s436, 8192
        $region72: #{tpu_custom_call.1} parent=55 // pred_fallthru
          _
        %s445 = sand.u32 %s25, 1
        %s446 = scalar_lea.sflag [#allocation6], %s445
        %s447 = sand.u32 %s127, 1
        %s448 = smul.addr %s447, 8
        %s449 = scalar_lea.vmem [#allocation11], %s448
        // Predicated region
        $region73: #{tpu_custom_call.1} parent=55 // pred_check
          %p450 = pneg %p140
        $region74: #{tpu_custom_call.1} parent=55 // pred_check_branch
          %452 = sbr.rel (%p450) target = $region76
        $region75: #{tpu_custom_call.1} parent=55 // pred_region
          %454 = dma.done %s446, 128
        $region76: #{tpu_custom_call.1} parent=55 // pred_fallthru
          _
        %s455 = sand.u32 %s25, 1
        %s456 = scalar_lea.sflag [#allocation6], %s455
        %s457 = sand.u32 %s153, 1
        %s458 = smul.addr %s457, 2048
        %s459 = scalar_lea.vmem [#allocation12], %s458
        // Predicated region
        $region77: #{tpu_custom_call.1} parent=55 // pred_check
          %p460 = pneg %p166
        $region78: #{tpu_custom_call.1} parent=55 // pred_check_branch
          %462 = sbr.rel (%p460) target = $region80
        $region79: #{tpu_custom_call.1} parent=55 // pred_region
          %464 = dma.done %s456, 32768
        $region80: #{tpu_custom_call.1} parent=55 // pred_fallthru
          _
        // Predicated region
        $region81: #{tpu_custom_call.1} parent=55 // pred_check
          %p465 = pneg %p187
        $region82: #{tpu_custom_call.1} parent=55 // pred_check_branch
          %467 = sbr.rel (%p465) target = $region84
        $region83: #{tpu_custom_call.1} parent=55 // pred_region
          %469 = dma.done [#allocation8], 64
        $region84: #{tpu_custom_call.1} parent=55 // pred_fallthru
          _
        // Predicated region
        $region85: #{tpu_custom_call.1} parent=55 // pred_check
          %p470 = pneg %p208
        $region86: #{tpu_custom_call.1} parent=55 // pred_check_branch
          %472 = sbr.rel (%p470) target = $region88
        $region87: #{tpu_custom_call.1} parent=55 // pred_region
          %474 = dma.done [#allocation15], 64
        $region88: #{tpu_custom_call.1} parent=55 // pred_fallthru
          _
        %p475 = pneg %p41
        %p476 = pneg %p38
        %p477 = pneg %p62
        %p478 = pneg %p59
        %s479 = sand.u32 %s25, 1
        %s480 = scalar_lea.sflag [#allocation6], %s479
        %s481 = sand.u32 %s75, 1
        %s482 = smul.addr %s481, 8192
        %s483 = scalar_lea.vmem [#allocation9], %s482
        %p484 = pneg %p88
        %p485 = pneg %p85
        %s486 = sand.u32 %s25, 1
        %s487 = scalar_lea.sflag [#allocation6], %s486
        %s488 = sand.u32 %s101, 1
        %s489 = smul.addr %s488, 512
        %s490 = scalar_lea.vmem [#allocation10], %s489
        %p491 = pneg %p114
        %p492 = pneg %p111
        %s493 = sand.u32 %s25, 1
        %s494 = scalar_lea.sflag [#allocation6], %s493
        %s495 = sand.u32 %s127, 1
        %s496 = smul.addr %s495, 8
        %s497 = scalar_lea.vmem [#allocation11], %s496
        %p498 = pneg %p140
        %p499 = pneg %p137
        %s500 = sand.u32 %s25, 1
        %s501 = scalar_lea.sflag [#allocation6], %s500
        %s502 = sand.u32 %s153, 1
        %s503 = smul.addr %s502, 2048
        %s504 = scalar_lea.vmem [#allocation12], %s503
        %p505 = pneg %p166
        %p506 = pneg %p163
        %p507 = pneg %p187
        %p508 = pneg %p184
        %p509 = pneg %p208
        %p510 = pneg %p205
        %p511 = pneg %p229
        %p512 = pneg %p226
        %p513 = pneg %p250
        %p514 = pneg %p247
        %s515 = smul.u32 8, %s25
        %s516 = smul.u32 8, %s25
        %s517 = smul.u32 8, %s25
        %s518 = smul.u32 128, %s25
        %p519 = scmp.eq.s32.totalorder %s25, 0
        // Predicated region
        $region89: #{tpu_custom_call.1} parent=55 // pred_check
          %p520 = pneg %p519
        $region90: #{tpu_custom_call.1} parent=55 // pred_check_branch
          %522 = sbr.rel (%p520) target = $region92
        $region91: #{tpu_custom_call.1} parent=55 // pred_region
          %v523 = vld [vmem:[#allocation5] sm:$0xff]
          %v524 = vld [vmem:[#allocation5 + $0x8] sm:$0xff]
          %v525 = vld [vmem:[#allocation5 + $0x10] sm:$0xff]
          %v526 = vld [vmem:[#allocation5 + $0x18] sm:$0xff]
          %v527 = vld [vmem:[#allocation5 + $0x20] sm:$0xff]
          %v528 = vld [vmem:[#allocation5 + $0x28] sm:$0xff]
          %v529 = vld [vmem:[#allocation5 + $0x30] sm:$0xff]
          %v530 = vld [vmem:[#allocation5 + $0x38] sm:$0xff]
          %v531 = vld [vmem:[#allocation5 + $0x40] sm:$0xff]
          %v532 = vld [vmem:[#allocation5 + $0x48] sm:$0xff]
          %v533 = vld [vmem:[#allocation5 + $0x50] sm:$0xff]
          %v534 = vld [vmem:[#allocation5 + $0x58] sm:$0xff]
          %v535 = vld [vmem:[#allocation5 + $0x60] sm:$0xff]
          %v536 = vld [vmem:[#allocation5 + $0x68] sm:$0xff]
          %v537 = vld [vmem:[#allocation5 + $0x70] sm:$0xff]
          %v538 = vld [vmem:[#allocation5 + $0x78] sm:$0xff]
          %v539 = vld [vmem:[#allocation5 + $0x80] sm:$0xff]
          %v540 = vld [vmem:[#allocation5 + $0x88] sm:$0xff]
          %v541 = vld [vmem:[#allocation5 + $0x90] sm:$0xff]
          %v542 = vld [vmem:[#allocation5 + $0x98] sm:$0xff]
          %v543 = vld [vmem:[#allocation5 + $0xa0] sm:$0xff]
          %v544 = vld [vmem:[#allocation5 + $0xa8] sm:$0xff]
          %v545 = vld [vmem:[#allocation5 + $0xb0] sm:$0xff]
          %v546 = vld [vmem:[#allocation5 + $0xb8] sm:$0xff]
          %v547 = vld [vmem:[#allocation5 + $0xc0] sm:$0xff]
          %v548 = vld [vmem:[#allocation5 + $0xc8] sm:$0xff]
          %v549 = vld [vmem:[#allocation5 + $0xd0] sm:$0xff]
          %v550 = vld [vmem:[#allocation5 + $0xd8] sm:$0xff]
          %v551 = vld [vmem:[#allocation5 + $0xe0] sm:$0xff]
          %v552 = vld [vmem:[#allocation5 + $0xe8] sm:$0xff]
          %v553 = vld [vmem:[#allocation5 + $0xf0] sm:$0xff]
          %v554 = vld [vmem:[#allocation5 + $0xf8] sm:$0xff]
          %v555 = vld [vmem:[#allocation5 + $0x100] sm:$0xff]
          %v556 = vld [vmem:[#allocation5 + $0x108] sm:$0xff]
          %v557 = vld [vmem:[#allocation5 + $0x110] sm:$0xff]
          %v558 = vld [vmem:[#allocation5 + $0x118] sm:$0xff]
          %v559 = vld [vmem:[#allocation5 + $0x120] sm:$0xff]
          %v560 = vld [vmem:[#allocation5 + $0x128] sm:$0xff]
          %v561 = vld [vmem:[#allocation5 + $0x130] sm:$0xff]
          %v562 = vld [vmem:[#allocation5 + $0x138] sm:$0xff]
          %v563 = vld [vmem:[#allocation5 + $0x140] sm:$0xff]
          %v564 = vld [vmem:[#allocation5 + $0x148] sm:$0xff]
          %v565 = vld [vmem:[#allocation5 + $0x150] sm:$0xff]
          %v566 = vld [vmem:[#allocation5 + $0x158] sm:$0xff]
          %v567 = vld [vmem:[#allocation5 + $0x160] sm:$0xff]
          %v568 = vld [vmem:[#allocation5 + $0x168] sm:$0xff]
          %v569 = vld [vmem:[#allocation5 + $0x170] sm:$0xff]
          %v570 = vld [vmem:[#allocation5 + $0x178] sm:$0xff]
          %v571 = vld [vmem:[#allocation5 + $0x180] sm:$0xff]
          %v572 = vld [vmem:[#allocation5 + $0x188] sm:$0xff]
          %v573 = vld [vmem:[#allocation5 + $0x190] sm:$0xff]
          %v574 = vld [vmem:[#allocation5 + $0x198] sm:$0xff]
          %v575 = vld [vmem:[#allocation5 + $0x1a0] sm:$0xff]
          %v576 = vld [vmem:[#allocation5 + $0x1a8] sm:$0xff]
          %v577 = vld [vmem:[#allocation5 + $0x1b0] sm:$0xff]
          %v578 = vld [vmem:[#allocation5 + $0x1b8] sm:$0xff]
          %v579 = vld [vmem:[#allocation5 + $0x1c0] sm:$0xff]
          %v580 = vld [vmem:[#allocation5 + $0x1c8] sm:$0xff]
          %v581 = vld [vmem:[#allocation5 + $0x1d0] sm:$0xff]
          %v582 = vld [vmem:[#allocation5 + $0x1d8] sm:$0xff]
          %v583 = vld [vmem:[#allocation5 + $0x1e0] sm:$0xff]
          %v584 = vld [vmem:[#allocation5 + $0x1e8] sm:$0xff]
          %v585 = vld [vmem:[#allocation5 + $0x1f0] sm:$0xff]
          %v586 = vld [vmem:[#allocation5 + $0x1f8] sm:$0xff]
          %v587 = vld [vmem:[#allocation5 + $0x200] sm:$0xff]
          %v588 = vld [vmem:[#allocation5 + $0x208] sm:$0xff]
          %v589 = vld [vmem:[#allocation5 + $0x210] sm:$0xff]
          %v590 = vld [vmem:[#allocation5 + $0x218] sm:$0xff]
          %v591 = vld [vmem:[#allocation5 + $0x220] sm:$0xff]
          %v592 = vld [vmem:[#allocation5 + $0x228] sm:$0xff]
          %v593 = vld [vmem:[#allocation5 + $0x230] sm:$0xff]
          %v594 = vld [vmem:[#allocation5 + $0x238] sm:$0xff]
          %v595 = vld [vmem:[#allocation5 + $0x240] sm:$0xff]
          %v596 = vld [vmem:[#allocation5 + $0x248] sm:$0xff]
          %v597 = vld [vmem:[#allocation5 + $0x250] sm:$0xff]
          %v598 = vld [vmem:[#allocation5 + $0x258] sm:$0xff]
          %v599 = vld [vmem:[#allocation5 + $0x260] sm:$0xff]
          %v600 = vld [vmem:[#allocation5 + $0x268] sm:$0xff]
          %v601 = vld [vmem:[#allocation5 + $0x270] sm:$0xff]
          %v602 = vld [vmem:[#allocation5 + $0x278] sm:$0xff]
          %v603 = vld [vmem:[#allocation5 + $0x280] sm:$0xff]
          %v604 = vld [vmem:[#allocation5 + $0x288] sm:$0xff]
          %v605 = vld [vmem:[#allocation5 + $0x290] sm:$0xff]
          %v606 = vld [vmem:[#allocation5 + $0x298] sm:$0xff]
          %v607 = vld [vmem:[#allocation5 + $0x2a0] sm:$0xff]
          %v608 = vld [vmem:[#allocation5 + $0x2a8] sm:$0xff]
          %v609 = vld [vmem:[#allocation5 + $0x2b0] sm:$0xff]
          %v610 = vld [vmem:[#allocation5 + $0x2b8] sm:$0xff]
          %v611 = vld [vmem:[#allocation5 + $0x2c0] sm:$0xff]
          %v612 = vld [vmem:[#allocation5 + $0x2c8] sm:$0xff]
          %v613 = vld [vmem:[#allocation5 + $0x2d0] sm:$0xff]
          %v614 = vld [vmem:[#allocation5 + $0x2d8] sm:$0xff]
          %v615 = vld [vmem:[#allocation5 + $0x2e0] sm:$0xff]
          %v616 = vld [vmem:[#allocation5 + $0x2e8] sm:$0xff]
          %v617 = vld [vmem:[#allocation5 + $0x2f0] sm:$0xff]
          %v618 = vld [vmem:[#allocation5 + $0x2f8] sm:$0xff]
          %v619 = vld [vmem:[#allocation5 + $0x300] sm:$0xff]
          %v620 = vld [vmem:[#allocation5 + $0x308] sm:$0xff]
          %v621 = vld [vmem:[#allocation5 + $0x310] sm:$0xff]
          %v622 = vld [vmem:[#allocation5 + $0x318] sm:$0xff]
          %v623 = vld [vmem:[#allocation5 + $0x320] sm:$0xff]
          %v624 = vld [vmem:[#allocation5 + $0x328] sm:$0xff]
          %v625 = vld [vmem:[#allocation5 + $0x330] sm:$0xff]
          %v626 = vld [vmem:[#allocation5 + $0x338] sm:$0xff]
          %v627 = vld [vmem:[#allocation5 + $0x340] sm:$0xff]
          %v628 = vld [vmem:[#allocation5 + $0x348] sm:$0xff]
          %v629 = vld [vmem:[#allocation5 + $0x350] sm:$0xff]
          %v630 = vld [vmem:[#allocation5 + $0x358] sm:$0xff]
          %v631 = vld [vmem:[#allocation5 + $0x360] sm:$0xff]
          %v632 = vld [vmem:[#allocation5 + $0x368] sm:$0xff]
          %v633 = vld [vmem:[#allocation5 + $0x370] sm:$0xff]
          %v634 = vld [vmem:[#allocation5 + $0x378] sm:$0xff]
          %v635 = vld [vmem:[#allocation5 + $0x380] sm:$0xff]
          %v636 = vld [vmem:[#allocation5 + $0x388] sm:$0xff]
          %v637 = vld [vmem:[#allocation5 + $0x390] sm:$0xff]
          %v638 = vld [vmem:[#allocation5 + $0x398] sm:$0xff]
          %v639 = vld [vmem:[#allocation5 + $0x3a0] sm:$0xff]
          %v640 = vld [vmem:[#allocation5 + $0x3a8] sm:$0xff]
          %v641 = vld [vmem:[#allocation5 + $0x3b0] sm:$0xff]
          %v642 = vld [vmem:[#allocation5 + $0x3b8] sm:$0xff]
          %v643 = vld [vmem:[#allocation5 + $0x3c0] sm:$0xff]
          %v644 = vld [vmem:[#allocation5 + $0x3c8] sm:$0xff]
          %v645 = vld [vmem:[#allocation5 + $0x3d0] sm:$0xff]
          %v646 = vld [vmem:[#allocation5 + $0x3d8] sm:$0xff]
          %v647 = vld [vmem:[#allocation5 + $0x3e0] sm:$0xff]
          %v648 = vld [vmem:[#allocation5 + $0x3e8] sm:$0xff]
          %v649 = vld [vmem:[#allocation5 + $0x3f0] sm:$0xff]
          %v650 = vld [vmem:[#allocation5 + $0x3f8] sm:$0xff]
          %v651 = vunpack.c.l.bf16 %v523
          %v652 = vunpack.c.h.bf16 %v523
          %v653 = vunpack.c.l.bf16 %v524
          %v654 = vunpack.c.h.bf16 %v524
          %v655 = vunpack.c.l.bf16 %v525
          %v656 = vunpack.c.h.bf16 %v525
          %v657 = vunpack.c.l.bf16 %v526
          %v658 = vunpack.c.h.bf16 %v526
          %v659 = vunpack.c.l.bf16 %v527
          %v660 = vunpack.c.h.bf16 %v527
          %v661 = vunpack.c.l.bf16 %v528
          %v662 = vunpack.c.h.bf16 %v528
          %v663 = vunpack.c.l.bf16 %v529
          %v664 = vunpack.c.h.bf16 %v529
          %v665 = vunpack.c.l.bf16 %v530
          %v666 = vunpack.c.h.bf16 %v530
          %v667 = vunpack.c.l.bf16 %v531
          %v668 = vunpack.c.h.bf16 %v531
          %v669 = vunpack.c.l.bf16 %v532
          %v670 = vunpack.c.h.bf16 %v532
          %v671 = vunpack.c.l.bf16 %v533
          %v672 = vunpack.c.h.bf16 %v533
          %v673 = vunpack.c.l.bf16 %v534
          %v674 = vunpack.c.h.bf16 %v534
          %v675 = vunpack.c.l.bf16 %v535
          %v676 = vunpack.c.h.bf16 %v535
          %v677 = vunpack.c.l.bf16 %v536
          %v678 = vunpack.c.h.bf16 %v536
          %v679 = vunpack.c.l.bf16 %v537
          %v680 = vunpack.c.h.bf16 %v537
          %v681 = vunpack.c.l.bf16 %v538
          %v682 = vunpack.c.h.bf16 %v538
          %v683 = vunpack.c.l.bf16 %v539
          %v684 = vunpack.c.h.bf16 %v539
          %v685 = vunpack.c.l.bf16 %v540
          %v686 = vunpack.c.h.bf16 %v540
          %v687 = vunpack.c.l.bf16 %v541
          %v688 = vunpack.c.h.bf16 %v541
          %v689 = vunpack.c.l.bf16 %v542
          %v690 = vunpack.c.h.bf16 %v542
          %v691 = vunpack.c.l.bf16 %v543
          %v692 = vunpack.c.h.bf16 %v543
          %v693 = vunpack.c.l.bf16 %v544
          %v694 = vunpack.c.h.bf16 %v544
          %v695 = vunpack.c.l.bf16 %v545
          %v696 = vunpack.c.h.bf16 %v545
          %v697 = vunpack.c.l.bf16 %v546
          %v698 = vunpack.c.h.bf16 %v546
          %v699 = vunpack.c.l.bf16 %v547
          %v700 = vunpack.c.h.bf16 %v547
          %v701 = vunpack.c.l.bf16 %v548
          %v702 = vunpack.c.h.bf16 %v548
          %v703 = vunpack.c.l.bf16 %v549
          %v704 = vunpack.c.h.bf16 %v549
          %v705 = vunpack.c.l.bf16 %v550
          %v706 = vunpack.c.h.bf16 %v550
          %v707 = vunpack.c.l.bf16 %v551
          %v708 = vunpack.c.h.bf16 %v551
          %v709 = vunpack.c.l.bf16 %v552
          %v710 = vunpack.c.h.bf16 %v552
          %v711 = vunpack.c.l.bf16 %v553
          %v712 = vunpack.c.h.bf16 %v553
          %v713 = vunpack.c.l.bf16 %v554
          %v714 = vunpack.c.h.bf16 %v554
          %v715 = vunpack.c.l.bf16 %v555
          %v716 = vunpack.c.h.bf16 %v555
          %v717 = vunpack.c.l.bf16 %v556
          %v718 = vunpack.c.h.bf16 %v556
          %v719 = vunpack.c.l.bf16 %v557
          %v720 = vunpack.c.h.bf16 %v557
          %v721 = vunpack.c.l.bf16 %v558
          %v722 = vunpack.c.h.bf16 %v558
          %v723 = vunpack.c.l.bf16 %v559
          %v724 = vunpack.c.h.bf16 %v559
          %v725 = vunpack.c.l.bf16 %v560
          %v726 = vunpack.c.h.bf16 %v560
          %v727 = vunpack.c.l.bf16 %v561
          %v728 = vunpack.c.h.bf16 %v561
          %v729 = vunpack.c.l.bf16 %v562
          %v730 = vunpack.c.h.bf16 %v562
          %v731 = vunpack.c.l.bf16 %v563
          %v732 = vunpack.c.h.bf16 %v563
          %v733 = vunpack.c.l.bf16 %v564
          %v734 = vunpack.c.h.bf16 %v564
          %v735 = vunpack.c.l.bf16 %v565
          %v736 = vunpack.c.h.bf16 %v565
          %v737 = vunpack.c.l.bf16 %v566
          %v738 = vunpack.c.h.bf16 %v566
          %v739 = vunpack.c.l.bf16 %v567
          %v740 = vunpack.c.h.bf16 %v567
          %v741 = vunpack.c.l.bf16 %v568
          %v742 = vunpack.c.h.bf16 %v568
          %v743 = vunpack.c.l.bf16 %v569
          %v744 = vunpack.c.h.bf16 %v569
          %v745 = vunpack.c.l.bf16 %v570
          %v746 = vunpack.c.h.bf16 %v570
          %v747 = vunpack.c.l.bf16 %v571
          %v748 = vunpack.c.h.bf16 %v571
          %v749 = vunpack.c.l.bf16 %v572
          %v750 = vunpack.c.h.bf16 %v572
          %v751 = vunpack.c.l.bf16 %v573
          %v752 = vunpack.c.h.bf16 %v573
          %v753 = vunpack.c.l.bf16 %v574
          %v754 = vunpack.c.h.bf16 %v574
          %v755 = vunpack.c.l.bf16 %v575
          %v756 = vunpack.c.h.bf16 %v575
          %v757 = vunpack.c.l.bf16 %v576
          %v758 = vunpack.c.h.bf16 %v576
          %v759 = vunpack.c.l.bf16 %v577
          %v760 = vunpack.c.h.bf16 %v577
          %v761 = vunpack.c.l.bf16 %v578
          %v762 = vunpack.c.h.bf16 %v578
          %v763 = vunpack.c.l.bf16 %v579
          %v764 = vunpack.c.h.bf16 %v579
          %v765 = vunpack.c.l.bf16 %v580
          %v766 = vunpack.c.h.bf16 %v580
          %v767 = vunpack.c.l.bf16 %v581
          %v768 = vunpack.c.h.bf16 %v581
          %v769 = vunpack.c.l.bf16 %v582
          %v770 = vunpack.c.h.bf16 %v582
          %v771 = vunpack.c.l.bf16 %v583
          %v772 = vunpack.c.h.bf16 %v583
          %v773 = vunpack.c.l.bf16 %v584
          %v774 = vunpack.c.h.bf16 %v584
          %v775 = vunpack.c.l.bf16 %v585
          %v776 = vunpack.c.h.bf16 %v585
          %v777 = vunpack.c.l.bf16 %v586
          %v778 = vunpack.c.h.bf16 %v586
          %v779 = vunpack.c.l.bf16 %v587
          %v780 = vunpack.c.h.bf16 %v587
          %v781 = vunpack.c.l.bf16 %v588
          %v782 = vunpack.c.h.bf16 %v588
          %v783 = vunpack.c.l.bf16 %v589
          %v784 = vunpack.c.h.bf16 %v589
          %v785 = vunpack.c.l.bf16 %v590
          %v786 = vunpack.c.h.bf16 %v590
          %v787 = vunpack.c.l.bf16 %v591
          %v788 = vunpack.c.h.bf16 %v591
          %v789 = vunpack.c.l.bf16 %v592
          %v790 = vunpack.c.h.bf16 %v592
          %v791 = vunpack.c.l.bf16 %v593
          %v792 = vunpack.c.h.bf16 %v593
          %v793 = vunpack.c.l.bf16 %v594
          %v794 = vunpack.c.h.bf16 %v594
          %v795 = vunpack.c.l.bf16 %v595
          %v796 = vunpack.c.h.bf16 %v595
          %v797 = vunpack.c.l.bf16 %v596
          %v798 = vunpack.c.h.bf16 %v596
          %v799 = vunpack.c.l.bf16 %v597
          %v800 = vunpack.c.h.bf16 %v597
          %v801 = vunpack.c.l.bf16 %v598
          %v802 = vunpack.c.h.bf16 %v598
          %v803 = vunpack.c.l.bf16 %v599
          %v804 = vunpack.c.h.bf16 %v599
          %v805 = vunpack.c.l.bf16 %v600
          %v806 = vunpack.c.h.bf16 %v600
          %v807 = vunpack.c.l.bf16 %v601
          %v808 = vunpack.c.h.bf16 %v601
          %v809 = vunpack.c.l.bf16 %v602
          %v810 = vunpack.c.h.bf16 %v602
          %v811 = vunpack.c.l.bf16 %v603
          %v812 = vunpack.c.h.bf16 %v603
          %v813 = vunpack.c.l.bf16 %v604
          %v814 = vunpack.c.h.bf16 %v604
          %v815 = vunpack.c.l.bf16 %v605
          %v816 = vunpack.c.h.bf16 %v605
          %v817 = vunpack.c.l.bf16 %v606
          %v818 = vunpack.c.h.bf16 %v606
          %v819 = vunpack.c.l.bf16 %v607
          %v820 = vunpack.c.h.bf16 %v607
          %v821 = vunpack.c.l.bf16 %v608
          %v822 = vunpack.c.h.bf16 %v608
          %v823 = vunpack.c.l.bf16 %v609
          %v824 = vunpack.c.h.bf16 %v609
          %v825 = vunpack.c.l.bf16 %v610
          %v826 = vunpack.c.h.bf16 %v610
          %v827 = vunpack.c.l.bf16 %v611
          %v828 = vunpack.c.h.bf16 %v611
          %v829 = vunpack.c.l.bf16 %v612
          %v830 = vunpack.c.h.bf16 %v612
          %v831 = vunpack.c.l.bf16 %v613
          %v832 = vunpack.c.h.bf16 %v613
          %v833 = vunpack.c.l.bf16 %v614
          %v834 = vunpack.c.h.bf16 %v614
          %v835 = vunpack.c.l.bf16 %v615
          %v836 = vunpack.c.h.bf16 %v615
          %v837 = vunpack.c.l.bf16 %v616
          %v838 = vunpack.c.h.bf16 %v616
          %v839 = vunpack.c.l.bf16 %v617
          %v840 = vunpack.c.h.bf16 %v617
          %v841 = vunpack.c.l.bf16 %v618
          %v842 = vunpack.c.h.bf16 %v618
          %v843 = vunpack.c.l.bf16 %v619
          %v844 = vunpack.c.h.bf16 %v619
          %v845 = vunpack.c.l.bf16 %v620
          %v846 = vunpack.c.h.bf16 %v620
          %v847 = vunpack.c.l.bf16 %v621
          %v848 = vunpack.c.h.bf16 %v621
          %v849 = vunpack.c.l.bf16 %v622
          %v850 = vunpack.c.h.bf16 %v622
          %v851 = vunpack.c.l.bf16 %v623
          %v852 = vunpack.c.h.bf16 %v623
          %v853 = vunpack.c.l.bf16 %v624
          %v854 = vunpack.c.h.bf16 %v624
          %v855 = vunpack.c.l.bf16 %v625
          %v856 = vunpack.c.h.bf16 %v625
          %v857 = vunpack.c.l.bf16 %v626
          %v858 = vunpack.c.h.bf16 %v626
          %v859 = vunpack.c.l.bf16 %v627
          %v860 = vunpack.c.h.bf16 %v627
          %v861 = vunpack.c.l.bf16 %v628
          %v862 = vunpack.c.h.bf16 %v628
          %v863 = vunpack.c.l.bf16 %v629
          %v864 = vunpack.c.h.bf16 %v629
          %v865 = vunpack.c.l.bf16 %v630
          %v866 = vunpack.c.h.bf16 %v630
          %v867 = vunpack.c.l.bf16 %v631
          %v868 = vunpack.c.h.bf16 %v631
          %v869 = vunpack.c.l.bf16 %v632
          %v870 = vunpack.c.h.bf16 %v632
          %v871 = vunpack.c.l.bf16 %v633
          %v872 = vunpack.c.h.bf16 %v633
          %v873 = vunpack.c.l.bf16 %v634
          %v874 = vunpack.c.h.bf16 %v634
          %v875 = vunpack.c.l.bf16 %v635
          %v876 = vunpack.c.h.bf16 %v635
          %v877 = vunpack.c.l.bf16 %v636
          %v878 = vunpack.c.h.bf16 %v636
          %v879 = vunpack.c.l.bf16 %v637
          %v880 = vunpack.c.h.bf16 %v637
          %v881 = vunpack.c.l.bf16 %v638
          %v882 = vunpack.c.h.bf16 %v638
          %v883 = vunpack.c.l.bf16 %v639
          %v884 = vunpack.c.h.bf16 %v639
          %v885 = vunpack.c.l.bf16 %v640
          %v886 = vunpack.c.h.bf16 %v640
          %v887 = vunpack.c.l.bf16 %v641
          %v888 = vunpack.c.h.bf16 %v641
          %v889 = vunpack.c.l.bf16 %v642
          %v890 = vunpack.c.h.bf16 %v642
          %v891 = vunpack.c.l.bf16 %v643
          %v892 = vunpack.c.h.bf16 %v643
          %v893 = vunpack.c.l.bf16 %v644
          %v894 = vunpack.c.h.bf16 %v644
          %v895 = vunpack.c.l.bf16 %v645
          %v896 = vunpack.c.h.bf16 %v645
          %v897 = vunpack.c.l.bf16 %v646
          %v898 = vunpack.c.h.bf16 %v646
          %v899 = vunpack.c.l.bf16 %v647
          %v900 = vunpack.c.h.bf16 %v647
          %v901 = vunpack.c.l.bf16 %v648
          %v902 = vunpack.c.h.bf16 %v648
          %v903 = vunpack.c.l.bf16 %v649
          %v904 = vunpack.c.h.bf16 %v649
          %v905 = vunpack.c.l.bf16 %v650
          %v906 = vunpack.c.h.bf16 %v650
          %v907 = vadd.f32 %v651, %v667
          %v908 = vrot.slane %v907, 4
          %v909 = vadd.f32 %v907, %v908
          %v910 = vrot.slane %v909, 2
          %v911 = vadd.f32 %v909, %v910
          %v912 = vrot.slane %v911, 1
          %v913 = vadd.f32 %v911, %v912
          %v914 = vadd.f32 %v652, %v668
          %v915 = vrot.slane %v914, 4
          %v916 = vadd.f32 %v914, %v915
          %v917 = vrot.slane %v916, 2
          %v918 = vadd.f32 %v916, %v917
          %v919 = vrot.slane %v918, 1
          %v920 = vadd.f32 %v918, %v919
          %v921 = vadd.f32 %v653, %v669
          %v922 = vrot.slane %v921, 4
          %v923 = vadd.f32 %v921, %v922
          %v924 = vrot.slane %v923, 2
          %v925 = vadd.f32 %v923, %v924
          %v926 = vrot.slane %v925, 1
          %v927 = vadd.f32 %v925, %v926
          %v928 = vadd.f32 %v654, %v670
          %v929 = vrot.slane %v928, 4
          %v930 = vadd.f32 %v928, %v929
          %v931 = vrot.slane %v930, 2
          %v932 = vadd.f32 %v930, %v931
          %v933 = vrot.slane %v932, 1
          %v934 = vadd.f32 %v932, %v933
          %v935 = vadd.f32 %v655, %v671
          %v936 = vrot.slane %v935, 4
          %v937 = vadd.f32 %v935, %v936
          %v938 = vrot.slane %v937, 2
          %v939 = vadd.f32 %v937, %v938
          %v940 = vrot.slane %v939, 1
          %v941 = vadd.f32 %v939, %v940
          %v942 = vadd.f32 %v656, %v672
          %v943 = vrot.slane %v942, 4
          %v944 = vadd.f32 %v942, %v943
          %v945 = vrot.slane %v944, 2
          %v946 = vadd.f32 %v944, %v945
          %v947 = vrot.slane %v946, 1
          %v948 = vadd.f32 %v946, %v947
          %v949 = vadd.f32 %v657, %v673
          %v950 = vrot.slane %v949, 4
          %v951 = vadd.f32 %v949, %v950
          %v952 = vrot.slane %v951, 2
          %v953 = vadd.f32 %v951, %v952
          %v954 = vrot.slane %v953, 1
          %v955 = vadd.f32 %v953, %v954
          %v956 = vadd.f32 %v658, %v674
          %v957 = vrot.slane %v956, 4
          %v958 = vadd.f32 %v956, %v957
          %v959 = vrot.slane %v958, 2
          %v960 = vadd.f32 %v958, %v959
          %v961 = vrot.slane %v960, 1
          %v962 = vadd.f32 %v960, %v961
          %v963 = vadd.f32 %v659, %v675
          %v964 = vrot.slane %v963, 4
          %v965 = vadd.f32 %v963, %v964
          %v966 = vrot.slane %v965, 2
          %v967 = vadd.f32 %v965, %v966
          %v968 = vrot.slane %v967, 1
          %v969 = vadd.f32 %v967, %v968
          %v970 = vadd.f32 %v660, %v676
          %v971 = vrot.slane %v970, 4
          %v972 = vadd.f32 %v970, %v971
          %v973 = vrot.slane %v972, 2
          %v974 = vadd.f32 %v972, %v973
          %v975 = vrot.slane %v974, 1
          %v976 = vadd.f32 %v974, %v975
          %v977 = vadd.f32 %v661, %v677
          %v978 = vrot.slane %v977, 4
          %v979 = vadd.f32 %v977, %v978
          %v980 = vrot.slane %v979, 2
          %v981 = vadd.f32 %v979, %v980
          %v982 = vrot.slane %v981, 1
          %v983 = vadd.f32 %v981, %v982
          %v984 = vadd.f32 %v662, %v678
          %v985 = vrot.slane %v984, 4
          %v986 = vadd.f32 %v984, %v985
          %v987 = vrot.slane %v986, 2
          %v988 = vadd.f32 %v986, %v987
          %v989 = vrot.slane %v988, 1
          %v990 = vadd.f32 %v988, %v989
          %v991 = vadd.f32 %v663, %v679
          %v992 = vrot.slane %v991, 4
          %v993 = vadd.f32 %v991, %v992
          %v994 = vrot.slane %v993, 2
          %v995 = vadd.f32 %v993, %v994
          %v996 = vrot.slane %v995, 1
          %v997 = vadd.f32 %v995, %v996
          %v998 = vadd.f32 %v664, %v680
          %v999 = vrot.slane %v998, 4
          %v1000 = vadd.f32 %v998, %v999
          %v1001 = vrot.slane %v1000, 2
          %v1002 = vadd.f32 %v1000, %v1001
          %v1003 = vrot.slane %v1002, 1
          %v1004 = vadd.f32 %v1002, %v1003
          %v1005 = vadd.f32 %v665, %v681
          %v1006 = vrot.slane %v1005, 4
          %v1007 = vadd.f32 %v1005, %v1006
          %v1008 = vrot.slane %v1007, 2
          %v1009 = vadd.f32 %v1007, %v1008
          %v1010 = vrot.slane %v1009, 1
          %v1011 = vadd.f32 %v1009, %v1010
          %v1012 = vadd.f32 %v666, %v682
          %v1013 = vrot.slane %v1012, 4
          %v1014 = vadd.f32 %v1012, %v1013
          %v1015 = vrot.slane %v1014, 2
          %v1016 = vadd.f32 %v1014, %v1015
          %v1017 = vrot.slane %v1016, 1
          %v1018 = vadd.f32 %v1016, %v1017
          %v1019 = vadd.f32 %v683, %v699
          %v1020 = vrot.slane %v1019, 4
          %v1021 = vadd.f32 %v1019, %v1020
          %v1022 = vrot.slane %v1021, 2
          %v1023 = vadd.f32 %v1021, %v1022
          %v1024 = vrot.slane %v1023, 1
          %v1025 = vadd.f32 %v1023, %v1024
          %v1026 = vadd.f32 %v684, %v700
          %v1027 = vrot.slane %v1026, 4
          %v1028 = vadd.f32 %v1026, %v1027
          %v1029 = vrot.slane %v1028, 2
          %v1030 = vadd.f32 %v1028, %v1029
          %v1031 = vrot.slane %v1030, 1
          %v1032 = vadd.f32 %v1030, %v1031
          %v1033 = vadd.f32 %v685, %v701
          %v1034 = vrot.slane %v1033, 4
          %v1035 = vadd.f32 %v1033, %v1034
          %v1036 = vrot.slane %v1035, 2
          %v1037 = vadd.f32 %v1035, %v1036
          %v1038 = vrot.slane %v1037, 1
          %v1039 = vadd.f32 %v1037, %v1038
          %v1040 = vadd.f32 %v686, %v702
          %v1041 = vrot.slane %v1040, 4
          %v1042 = vadd.f32 %v1040, %v1041
          %v1043 = vrot.slane %v1042, 2
          %v1044 = vadd.f32 %v1042, %v1043
          %v1045 = vrot.slane %v1044, 1
          %v1046 = vadd.f32 %v1044, %v1045
          %v1047 = vadd.f32 %v687, %v703
          %v1048 = vrot.slane %v1047, 4
          %v1049 = vadd.f32 %v1047, %v1048
          %v1050 = vrot.slane %v1049, 2
          %v1051 = vadd.f32 %v1049, %v1050
          %v1052 = vrot.slane %v1051, 1
          %v1053 = vadd.f32 %v1051, %v1052
          %v1054 = vadd.f32 %v688, %v704
          %v1055 = vrot.slane %v1054, 4
          %v1056 = vadd.f32 %v1054, %v1055
          %v1057 = vrot.slane %v1056, 2
          %v1058 = vadd.f32 %v1056, %v1057
          %v1059 = vrot.slane %v1058, 1
          %v1060 = vadd.f32 %v1058, %v1059
          %v1061 = vadd.f32 %v689, %v705
          %v1062 = vrot.slane %v1061, 4
          %v1063 = vadd.f32 %v1061, %v1062
          %v1064 = vrot.slane %v1063, 2
          %v1065 = vadd.f32 %v1063, %v1064
          %v1066 = vrot.slane %v1065, 1
          %v1067 = vadd.f32 %v1065, %v1066
          %v1068 = vadd.f32 %v690, %v706
          %v1069 = vrot.slane %v1068, 4
          %v1070 = vadd.f32 %v1068, %v1069
          %v1071 = vrot.slane %v1070, 2
          %v1072 = vadd.f32 %v1070, %v1071
          %v1073 = vrot.slane %v1072, 1
          %v1074 = vadd.f32 %v1072, %v1073
          %v1075 = vadd.f32 %v691, %v707
          %v1076 = vrot.slane %v1075, 4
          %v1077 = vadd.f32 %v1075, %v1076
          %v1078 = vrot.slane %v1077, 2
          %v1079 = vadd.f32 %v1077, %v1078
          %v1080 = vrot.slane %v1079, 1
          %v1081 = vadd.f32 %v1079, %v1080
          %v1082 = vadd.f32 %v692, %v708
          %v1083 = vrot.slane %v1082, 4
          %v1084 = vadd.f32 %v1082, %v1083
          %v1085 = vrot.slane %v1084, 2
          %v1086 = vadd.f32 %v1084, %v1085
          %v1087 = vrot.slane %v1086, 1
          %v1088 = vadd.f32 %v1086, %v1087
          %v1089 = vadd.f32 %v693, %v709
          %v1090 = vrot.slane %v1089, 4
          %v1091 = vadd.f32 %v1089, %v1090
          %v1092 = vrot.slane %v1091, 2
          %v1093 = vadd.f32 %v1091, %v1092
          %v1094 = vrot.slane %v1093, 1
          %v1095 = vadd.f32 %v1093, %v1094
          %v1096 = vadd.f32 %v694, %v710
          %v1097 = vrot.slane %v1096, 4
          %v1098 = vadd.f32 %v1096, %v1097
          %v1099 = vrot.slane %v1098, 2
          %v1100 = vadd.f32 %v1098, %v1099
          %v1101 = vrot.slane %v1100, 1
          %v1102 = vadd.f32 %v1100, %v1101
          %v1103 = vadd.f32 %v695, %v711
          %v1104 = vrot.slane %v1103, 4
          %v1105 = vadd.f32 %v1103, %v1104
          %v1106 = vrot.slane %v1105, 2
          %v1107 = vadd.f32 %v1105, %v1106
          %v1108 = vrot.slane %v1107, 1
          %v1109 = vadd.f32 %v1107, %v1108
          %v1110 = vadd.f32 %v696, %v712
          %v1111 = vrot.slane %v1110, 4
          %v1112 = vadd.f32 %v1110, %v1111
          %v1113 = vrot.slane %v1112, 2
          %v1114 = vadd.f32 %v1112, %v1113
          %v1115 = vrot.slane %v1114, 1
          %v1116 = vadd.f32 %v1114, %v1115
          %v1117 = vadd.f32 %v697, %v713
          %v1118 = vrot.slane %v1117, 4
          %v1119 = vadd.f32 %v1117, %v1118
          %v1120 = vrot.slane %v1119, 2
          %v1121 = vadd.f32 %v1119, %v1120
          %v1122 = vrot.slane %v1121, 1
          %v1123 = vadd.f32 %v1121, %v1122
          %v1124 = vadd.f32 %v698, %v714
          %v1125 = vrot.slane %v1124, 4
          %v1126 = vadd.f32 %v1124, %v1125
          %v1127 = vrot.slane %v1126, 2
          %v1128 = vadd.f32 %v1126, %v1127
          %v1129 = vrot.slane %v1128, 1
          %v1130 = vadd.f32 %v1128, %v1129
          %v1131 = vadd.f32 %v715, %v731
          %v1132 = vrot.slane %v1131, 4
          %v1133 = vadd.f32 %v1131, %v1132
          %v1134 = vrot.slane %v1133, 2
          %v1135 = vadd.f32 %v1133, %v1134
          %v1136 = vrot.slane %v1135, 1
          %v1137 = vadd.f32 %v1135, %v1136
          %v1138 = vadd.f32 %v716, %v732
          %v1139 = vrot.slane %v1138, 4
          %v1140 = vadd.f32 %v1138, %v1139
          %v1141 = vrot.slane %v1140, 2
          %v1142 = vadd.f32 %v1140, %v1141
          %v1143 = vrot.slane %v1142, 1
          %v1144 = vadd.f32 %v1142, %v1143
          %v1145 = vadd.f32 %v717, %v733
          %v1146 = vrot.slane %v1145, 4
          %v1147 = vadd.f32 %v1145, %v1146
          %v1148 = vrot.slane %v1147, 2
          %v1149 = vadd.f32 %v1147, %v1148
          %v1150 = vrot.slane %v1149, 1
          %v1151 = vadd.f32 %v1149, %v1150
          %v1152 = vadd.f32 %v718, %v734
          %v1153 = vrot.slane %v1152, 4
          %v1154 = vadd.f32 %v1152, %v1153
          %v1155 = vrot.slane %v1154, 2
          %v1156 = vadd.f32 %v1154, %v1155
          %v1157 = vrot.slane %v1156, 1
          %v1158 = vadd.f32 %v1156, %v1157
          %v1159 = vadd.f32 %v719, %v735
          %v1160 = vrot.slane %v1159, 4
          %v1161 = vadd.f32 %v1159, %v1160
          %v1162 = vrot.slane %v1161, 2
          %v1163 = vadd.f32 %v1161, %v1162
          %v1164 = vrot.slane %v1163, 1
          %v1165 = vadd.f32 %v1163, %v1164
          %v1166 = vadd.f32 %v720, %v736
          %v1167 = vrot.slane %v1166, 4
          %v1168 = vadd.f32 %v1166, %v1167
          %v1169 = vrot.slane %v1168, 2
          %v1170 = vadd.f32 %v1168, %v1169
          %v1171 = vrot.slane %v1170, 1
          %v1172 = vadd.f32 %v1170, %v1171
          %v1173 = vadd.f32 %v721, %v737
          %v1174 = vrot.slane %v1173, 4
          %v1175 = vadd.f32 %v1173, %v1174
          %v1176 = vrot.slane %v1175, 2
          %v1177 = vadd.f32 %v1175, %v1176
          %v1178 = vrot.slane %v1177, 1
          %v1179 = vadd.f32 %v1177, %v1178
          %v1180 = vadd.f32 %v722, %v738
          %v1181 = vrot.slane %v1180, 4
          %v1182 = vadd.f32 %v1180, %v1181
          %v1183 = vrot.slane %v1182, 2
          %v1184 = vadd.f32 %v1182, %v1183
          %v1185 = vrot.slane %v1184, 1
          %v1186 = vadd.f32 %v1184, %v1185
          %v1187 = vadd.f32 %v723, %v739
          %v1188 = vrot.slane %v1187, 4
          %v1189 = vadd.f32 %v1187, %v1188
          %v1190 = vrot.slane %v1189, 2
          %v1191 = vadd.f32 %v1189, %v1190
          %v1192 = vrot.slane %v1191, 1
          %v1193 = vadd.f32 %v1191, %v1192
          %v1194 = vadd.f32 %v724, %v740
          %v1195 = vrot.slane %v1194, 4
          %v1196 = vadd.f32 %v1194, %v1195
          %v1197 = vrot.slane %v1196, 2
          %v1198 = vadd.f32 %v1196, %v1197
          %v1199 = vrot.slane %v1198, 1
          %v1200 = vadd.f32 %v1198, %v1199
          %v1201 = vadd.f32 %v725, %v741
          %v1202 = vrot.slane %v1201, 4
          %v1203 = vadd.f32 %v1201, %v1202
          %v1204 = vrot.slane %v1203, 2
          %v1205 = vadd.f32 %v1203, %v1204
          %v1206 = vrot.slane %v1205, 1
          %v1207 = vadd.f32 %v1205, %v1206
          %v1208 = vadd.f32 %v726, %v742
          %v1209 = vrot.slane %v1208, 4
          %v1210 = vadd.f32 %v1208, %v1209
          %v1211 = vrot.slane %v1210, 2
          %v1212 = vadd.f32 %v1210, %v1211
          %v1213 = vrot.slane %v1212, 1
          %v1214 = vadd.f32 %v1212, %v1213
          %v1215 = vadd.f32 %v727, %v743
          %v1216 = vrot.slane %v1215, 4
          %v1217 = vadd.f32 %v1215, %v1216
          %v1218 = vrot.slane %v1217, 2
          %v1219 = vadd.f32 %v1217, %v1218
          %v1220 = vrot.slane %v1219, 1
          %v1221 = vadd.f32 %v1219, %v1220
          %v1222 = vadd.f32 %v728, %v744
          %v1223 = vrot.slane %v1222, 4
          %v1224 = vadd.f32 %v1222, %v1223
          %v1225 = vrot.slane %v1224, 2
          %v1226 = vadd.f32 %v1224, %v1225
          %v1227 = vrot.slane %v1226, 1
          %v1228 = vadd.f32 %v1226, %v1227
          %v1229 = vadd.f32 %v729, %v745
          %v1230 = vrot.slane %v1229, 4
          %v1231 = vadd.f32 %v1229, %v1230
          %v1232 = vrot.slane %v1231, 2
          %v1233 = vadd.f32 %v1231, %v1232
          %v1234 = vrot.slane %v1233, 1
          %v1235 = vadd.f32 %v1233, %v1234
          %v1236 = vadd.f32 %v730, %v746
          %v1237 = vrot.slane %v1236, 4
          %v1238 = vadd.f32 %v1236, %v1237
          %v1239 = vrot.slane %v1238, 2
          %v1240 = vadd.f32 %v1238, %v1239
          %v1241 = vrot.slane %v1240, 1
          %v1242 = vadd.f32 %v1240, %v1241
          %v1243 = vadd.f32 %v747, %v763
          %v1244 = vrot.slane %v1243, 4
          %v1245 = vadd.f32 %v1243, %v1244
          %v1246 = vrot.slane %v1245, 2
          %v1247 = vadd.f32 %v1245, %v1246
          %v1248 = vrot.slane %v1247, 1
          %v1249 = vadd.f32 %v1247, %v1248
          %v1250 = vadd.f32 %v748, %v764
          %v1251 = vrot.slane %v1250, 4
          %v1252 = vadd.f32 %v1250, %v1251
          %v1253 = vrot.slane %v1252, 2
          %v1254 = vadd.f32 %v1252, %v1253
          %v1255 = vrot.slane %v1254, 1
          %v1256 = vadd.f32 %v1254, %v1255
          %v1257 = vadd.f32 %v749, %v765
          %v1258 = vrot.slane %v1257, 4
          %v1259 = vadd.f32 %v1257, %v1258
          %v1260 = vrot.slane %v1259, 2
          %v1261 = vadd.f32 %v1259, %v1260
          %v1262 = vrot.slane %v1261, 1
          %v1263 = vadd.f32 %v1261, %v1262
          %v1264 = vadd.f32 %v750, %v766
          %v1265 = vrot.slane %v1264, 4
          %v1266 = vadd.f32 %v1264, %v1265
          %v1267 = vrot.slane %v1266, 2
          %v1268 = vadd.f32 %v1266, %v1267
          %v1269 = vrot.slane %v1268, 1
          %v1270 = vadd.f32 %v1268, %v1269
          %v1271 = vadd.f32 %v751, %v767
          %v1272 = vrot.slane %v1271, 4
          %v1273 = vadd.f32 %v1271, %v1272
          %v1274 = vrot.slane %v1273, 2
          %v1275 = vadd.f32 %v1273, %v1274
          %v1276 = vrot.slane %v1275, 1
          %v1277 = vadd.f32 %v1275, %v1276
          %v1278 = vadd.f32 %v752, %v768
          %v1279 = vrot.slane %v1278, 4
          %v1280 = vadd.f32 %v1278, %v1279
          %v1281 = vrot.slane %v1280, 2
          %v1282 = vadd.f32 %v1280, %v1281
          %v1283 = vrot.slane %v1282, 1
          %v1284 = vadd.f32 %v1282, %v1283
          %v1285 = vadd.f32 %v753, %v769
          %v1286 = vrot.slane %v1285, 4
          %v1287 = vadd.f32 %v1285, %v1286
          %v1288 = vrot.slane %v1287, 2
          %v1289 = vadd.f32 %v1287, %v1288
          %v1290 = vrot.slane %v1289, 1
          %v1291 = vadd.f32 %v1289, %v1290
          %v1292 = vadd.f32 %v754, %v770
          %v1293 = vrot.slane %v1292, 4
          %v1294 = vadd.f32 %v1292, %v1293
          %v1295 = vrot.slane %v1294, 2
          %v1296 = vadd.f32 %v1294, %v1295
          %v1297 = vrot.slane %v1296, 1
          %v1298 = vadd.f32 %v1296, %v1297
          %v1299 = vadd.f32 %v755, %v771
          %v1300 = vrot.slane %v1299, 4
          %v1301 = vadd.f32 %v1299, %v1300
          %v1302 = vrot.slane %v1301, 2
          %v1303 = vadd.f32 %v1301, %v1302
          %v1304 = vrot.slane %v1303, 1
          %v1305 = vadd.f32 %v1303, %v1304
          %v1306 = vadd.f32 %v756, %v772
          %v1307 = vrot.slane %v1306, 4
          %v1308 = vadd.f32 %v1306, %v1307
          %v1309 = vrot.slane %v1308, 2
          %v1310 = vadd.f32 %v1308, %v1309
          %v1311 = vrot.slane %v1310, 1
          %v1312 = vadd.f32 %v1310, %v1311
          %v1313 = vadd.f32 %v757, %v773
          %v1314 = vrot.slane %v1313, 4
          %v1315 = vadd.f32 %v1313, %v1314
          %v1316 = vrot.slane %v1315, 2
          %v1317 = vadd.f32 %v1315, %v1316
          %v1318 = vrot.slane %v1317, 1
          %v1319 = vadd.f32 %v1317, %v1318
          %v1320 = vadd.f32 %v758, %v774
          %v1321 = vrot.slane %v1320, 4
          %v1322 = vadd.f32 %v1320, %v1321
          %v1323 = vrot.slane %v1322, 2
          %v1324 = vadd.f32 %v1322, %v1323
          %v1325 = vrot.slane %v1324, 1
          %v1326 = vadd.f32 %v1324, %v1325
          %v1327 = vadd.f32 %v759, %v775
          %v1328 = vrot.slane %v1327, 4
          %v1329 = vadd.f32 %v1327, %v1328
          %v1330 = vrot.slane %v1329, 2
          %v1331 = vadd.f32 %v1329, %v1330
          %v1332 = vrot.slane %v1331, 1
          %v1333 = vadd.f32 %v1331, %v1332
          %v1334 = vadd.f32 %v760, %v776
          %v1335 = vrot.slane %v1334, 4
          %v1336 = vadd.f32 %v1334, %v1335
          %v1337 = vrot.slane %v1336, 2
          %v1338 = vadd.f32 %v1336, %v1337
          %v1339 = vrot.slane %v1338, 1
          %v1340 = vadd.f32 %v1338, %v1339
          %v1341 = vadd.f32 %v761, %v777
          %v1342 = vrot.slane %v1341, 4
          %v1343 = vadd.f32 %v1341, %v1342
          %v1344 = vrot.slane %v1343, 2
          %v1345 = vadd.f32 %v1343, %v1344
          %v1346 = vrot.slane %v1345, 1
          %v1347 = vadd.f32 %v1345, %v1346
          %v1348 = vadd.f32 %v762, %v778
          %v1349 = vrot.slane %v1348, 4
          %v1350 = vadd.f32 %v1348, %v1349
          %v1351 = vrot.slane %v1350, 2
          %v1352 = vadd.f32 %v1350, %v1351
          %v1353 = vrot.slane %v1352, 1
          %v1354 = vadd.f32 %v1352, %v1353
          %v1355 = vadd.f32 %v779, %v795
          %v1356 = vrot.slane %v1355, 4
          %v1357 = vadd.f32 %v1355, %v1356
          %v1358 = vrot.slane %v1357, 2
          %v1359 = vadd.f32 %v1357, %v1358
          %v1360 = vrot.slane %v1359, 1
          %v1361 = vadd.f32 %v1359, %v1360
          %v1362 = vadd.f32 %v780, %v796
          %v1363 = vrot.slane %v1362, 4
          %v1364 = vadd.f32 %v1362, %v1363
          %v1365 = vrot.slane %v1364, 2
          %v1366 = vadd.f32 %v1364, %v1365
          %v1367 = vrot.slane %v1366, 1
          %v1368 = vadd.f32 %v1366, %v1367
          %v1369 = vadd.f32 %v781, %v797
          %v1370 = vrot.slane %v1369, 4
          %v1371 = vadd.f32 %v1369, %v1370
          %v1372 = vrot.slane %v1371, 2
          %v1373 = vadd.f32 %v1371, %v1372
          %v1374 = vrot.slane %v1373, 1
          %v1375 = vadd.f32 %v1373, %v1374
          %v1376 = vadd.f32 %v782, %v798
          %v1377 = vrot.slane %v1376, 4
          %v1378 = vadd.f32 %v1376, %v1377
          %v1379 = vrot.slane %v1378, 2
          %v1380 = vadd.f32 %v1378, %v1379
          %v1381 = vrot.slane %v1380, 1
          %v1382 = vadd.f32 %v1380, %v1381
          %v1383 = vadd.f32 %v783, %v799
          %v1384 = vrot.slane %v1383, 4
          %v1385 = vadd.f32 %v1383, %v1384
          %v1386 = vrot.slane %v1385, 2
          %v1387 = vadd.f32 %v1385, %v1386
          %v1388 = vrot.slane %v1387, 1
          %v1389 = vadd.f32 %v1387, %v1388
          %v1390 = vadd.f32 %v784, %v800
          %v1391 = vrot.slane %v1390, 4
          %v1392 = vadd.f32 %v1390, %v1391
          %v1393 = vrot.slane %v1392, 2
          %v1394 = vadd.f32 %v1392, %v1393
          %v1395 = vrot.slane %v1394, 1
          %v1396 = vadd.f32 %v1394, %v1395
          %v1397 = vadd.f32 %v785, %v801
          %v1398 = vrot.slane %v1397, 4
          %v1399 = vadd.f32 %v1397, %v1398
          %v1400 = vrot.slane %v1399, 2
          %v1401 = vadd.f32 %v1399, %v1400
          %v1402 = vrot.slane %v1401, 1
          %v1403 = vadd.f32 %v1401, %v1402
          %v1404 = vadd.f32 %v786, %v802
          %v1405 = vrot.slane %v1404, 4
          %v1406 = vadd.f32 %v1404, %v1405
          %v1407 = vrot.slane %v1406, 2
          %v1408 = vadd.f32 %v1406, %v1407
          %v1409 = vrot.slane %v1408, 1
          %v1410 = vadd.f32 %v1408, %v1409
          %v1411 = vadd.f32 %v787, %v803
          %v1412 = vrot.slane %v1411, 4
          %v1413 = vadd.f32 %v1411, %v1412
          %v1414 = vrot.slane %v1413, 2
          %v1415 = vadd.f32 %v1413, %v1414
          %v1416 = vrot.slane %v1415, 1
          %v1417 = vadd.f32 %v1415, %v1416
          %v1418 = vadd.f32 %v788, %v804
          %v1419 = vrot.slane %v1418, 4
          %v1420 = vadd.f32 %v1418, %v1419
          %v1421 = vrot.slane %v1420, 2
          %v1422 = vadd.f32 %v1420, %v1421
          %v1423 = vrot.slane %v1422, 1
          %v1424 = vadd.f32 %v1422, %v1423
          %v1425 = vadd.f32 %v789, %v805
          %v1426 = vrot.slane %v1425, 4
          %v1427 = vadd.f32 %v1425, %v1426
          %v1428 = vrot.slane %v1427, 2
          %v1429 = vadd.f32 %v1427, %v1428
          %v1430 = vrot.slane %v1429, 1
          %v1431 = vadd.f32 %v1429, %v1430
          %v1432 = vadd.f32 %v790, %v806
          %v1433 = vrot.slane %v1432, 4
          %v1434 = vadd.f32 %v1432, %v1433
          %v1435 = vrot.slane %v1434, 2
          %v1436 = vadd.f32 %v1434, %v1435
          %v1437 = vrot.slane %v1436, 1
          %v1438 = vadd.f32 %v1436, %v1437
          %v1439 = vadd.f32 %v791, %v807
          %v1440 = vrot.slane %v1439, 4
          %v1441 = vadd.f32 %v1439, %v1440
          %v1442 = vrot.slane %v1441, 2
          %v1443 = vadd.f32 %v1441, %v1442
          %v1444 = vrot.slane %v1443, 1
          %v1445 = vadd.f32 %v1443, %v1444
          %v1446 = vadd.f32 %v792, %v808
          %v1447 = vrot.slane %v1446, 4
          %v1448 = vadd.f32 %v1446, %v1447
          %v1449 = vrot.slane %v1448, 2
          %v1450 = vadd.f32 %v1448, %v1449
          %v1451 = vrot.slane %v1450, 1
          %v1452 = vadd.f32 %v1450, %v1451
          %v1453 = vadd.f32 %v793, %v809
          %v1454 = vrot.slane %v1453, 4
          %v1455 = vadd.f32 %v1453, %v1454
          %v1456 = vrot.slane %v1455, 2
          %v1457 = vadd.f32 %v1455, %v1456
          %v1458 = vrot.slane %v1457, 1
          %v1459 = vadd.f32 %v1457, %v1458
          %v1460 = vadd.f32 %v794, %v810
          %v1461 = vrot.slane %v1460, 4
          %v1462 = vadd.f32 %v1460, %v1461
          %v1463 = vrot.slane %v1462, 2
          %v1464 = vadd.f32 %v1462, %v1463
          %v1465 = vrot.slane %v1464, 1
          %v1466 = vadd.f32 %v1464, %v1465
          %v1467 = vadd.f32 %v811, %v827
          %v1468 = vrot.slane %v1467, 4
          %v1469 = vadd.f32 %v1467, %v1468
          %v1470 = vrot.slane %v1469, 2
          %v1471 = vadd.f32 %v1469, %v1470
          %v1472 = vrot.slane %v1471, 1
          %v1473 = vadd.f32 %v1471, %v1472
          %v1474 = vadd.f32 %v812, %v828
          %v1475 = vrot.slane %v1474, 4
          %v1476 = vadd.f32 %v1474, %v1475
          %v1477 = vrot.slane %v1476, 2
          %v1478 = vadd.f32 %v1476, %v1477
          %v1479 = vrot.slane %v1478, 1
          %v1480 = vadd.f32 %v1478, %v1479
          %v1481 = vadd.f32 %v813, %v829
          %v1482 = vrot.slane %v1481, 4
          %v1483 = vadd.f32 %v1481, %v1482
          %v1484 = vrot.slane %v1483, 2
          %v1485 = vadd.f32 %v1483, %v1484
          %v1486 = vrot.slane %v1485, 1
          %v1487 = vadd.f32 %v1485, %v1486
          %v1488 = vadd.f32 %v814, %v830
          %v1489 = vrot.slane %v1488, 4
          %v1490 = vadd.f32 %v1488, %v1489
          %v1491 = vrot.slane %v1490, 2
          %v1492 = vadd.f32 %v1490, %v1491
          %v1493 = vrot.slane %v1492, 1
          %v1494 = vadd.f32 %v1492, %v1493
          %v1495 = vadd.f32 %v815, %v831
          %v1496 = vrot.slane %v1495, 4
          %v1497 = vadd.f32 %v1495, %v1496
          %v1498 = vrot.slane %v1497, 2
          %v1499 = vadd.f32 %v1497, %v1498
          %v1500 = vrot.slane %v1499, 1
          %v1501 = vadd.f32 %v1499, %v1500
          %v1502 = vadd.f32 %v816, %v832
          %v1503 = vrot.slane %v1502, 4
          %v1504 = vadd.f32 %v1502, %v1503
          %v1505 = vrot.slane %v1504, 2
          %v1506 = vadd.f32 %v1504, %v1505
          %v1507 = vrot.slane %v1506, 1
          %v1508 = vadd.f32 %v1506, %v1507
          %v1509 = vadd.f32 %v817, %v833
          %v1510 = vrot.slane %v1509, 4
          %v1511 = vadd.f32 %v1509, %v1510
          %v1512 = vrot.slane %v1511, 2
          %v1513 = vadd.f32 %v1511, %v1512
          %v1514 = vrot.slane %v1513, 1
          %v1515 = vadd.f32 %v1513, %v1514
          %v1516 = vadd.f32 %v818, %v834
          %v1517 = vrot.slane %v1516, 4
          %v1518 = vadd.f32 %v1516, %v1517
          %v1519 = vrot.slane %v1518, 2
          %v1520 = vadd.f32 %v1518, %v1519
          %v1521 = vrot.slane %v1520, 1
          %v1522 = vadd.f32 %v1520, %v1521
          %v1523 = vadd.f32 %v819, %v835
          %v1524 = vrot.slane %v1523, 4
          %v1525 = vadd.f32 %v1523, %v1524
          %v1526 = vrot.slane %v1525, 2
          %v1527 = vadd.f32 %v1525, %v1526
          %v1528 = vrot.slane %v1527, 1
          %v1529 = vadd.f32 %v1527, %v1528
          %v1530 = vadd.f32 %v820, %v836
          %v1531 = vrot.slane %v1530, 4
          %v1532 = vadd.f32 %v1530, %v1531
          %v1533 = vrot.slane %v1532, 2
          %v1534 = vadd.f32 %v1532, %v1533
          %v1535 = vrot.slane %v1534, 1
          %v1536 = vadd.f32 %v1534, %v1535
          %v1537 = vadd.f32 %v821, %v837
          %v1538 = vrot.slane %v1537, 4
          %v1539 = vadd.f32 %v1537, %v1538
          %v1540 = vrot.slane %v1539, 2
          %v1541 = vadd.f32 %v1539, %v1540
          %v1542 = vrot.slane %v1541, 1
          %v1543 = vadd.f32 %v1541, %v1542
          %v1544 = vadd.f32 %v822, %v838
          %v1545 = vrot.slane %v1544, 4
          %v1546 = vadd.f32 %v1544, %v1545
          %v1547 = vrot.slane %v1546, 2
          %v1548 = vadd.f32 %v1546, %v1547
          %v1549 = vrot.slane %v1548, 1
          %v1550 = vadd.f32 %v1548, %v1549
          %v1551 = vadd.f32 %v823, %v839
          %v1552 = vrot.slane %v1551, 4
          %v1553 = vadd.f32 %v1551, %v1552
          %v1554 = vrot.slane %v1553, 2
          %v1555 = vadd.f32 %v1553, %v1554
          %v1556 = vrot.slane %v1555, 1
          %v1557 = vadd.f32 %v1555, %v1556
          %v1558 = vadd.f32 %v824, %v840
          %v1559 = vrot.slane %v1558, 4
          %v1560 = vadd.f32 %v1558, %v1559
          %v1561 = vrot.slane %v1560, 2
          %v1562 = vadd.f32 %v1560, %v1561
          %v1563 = vrot.slane %v1562, 1
          %v1564 = vadd.f32 %v1562, %v1563
          %v1565 = vadd.f32 %v825, %v841
          %v1566 = vrot.slane %v1565, 4
          %v1567 = vadd.f32 %v1565, %v1566
          %v1568 = vrot.slane %v1567, 2
          %v1569 = vadd.f32 %v1567, %v1568
          %v1570 = vrot.slane %v1569, 1
          %v1571 = vadd.f32 %v1569, %v1570
          %v1572 = vadd.f32 %v826, %v842
          %v1573 = vrot.slane %v1572, 4
          %v1574 = vadd.f32 %v1572, %v1573
          %v1575 = vrot.slane %v1574, 2
          %v1576 = vadd.f32 %v1574, %v1575
          %v1577 = vrot.slane %v1576, 1
          %v1578 = vadd.f32 %v1576, %v1577
          %v1579 = vadd.f32 %v843, %v859
          %v1580 = vrot.slane %v1579, 4
          %v1581 = vadd.f32 %v1579, %v1580
          %v1582 = vrot.slane %v1581, 2
          %v1583 = vadd.f32 %v1581, %v1582
          %v1584 = vrot.slane %v1583, 1
          %v1585 = vadd.f32 %v1583, %v1584
          %v1586 = vadd.f32 %v844, %v860
          %v1587 = vrot.slane %v1586, 4
          %v1588 = vadd.f32 %v1586, %v1587
          %v1589 = vrot.slane %v1588, 2
          %v1590 = vadd.f32 %v1588, %v1589
          %v1591 = vrot.slane %v1590, 1
          %v1592 = vadd.f32 %v1590, %v1591
          %v1593 = vadd.f32 %v845, %v861
          %v1594 = vrot.slane %v1593, 4
          %v1595 = vadd.f32 %v1593, %v1594
          %v1596 = vrot.slane %v1595, 2
          %v1597 = vadd.f32 %v1595, %v1596
          %v1598 = vrot.slane %v1597, 1
          %v1599 = vadd.f32 %v1597, %v1598
          %v1600 = vadd.f32 %v846, %v862
          %v1601 = vrot.slane %v1600, 4
          %v1602 = vadd.f32 %v1600, %v1601
          %v1603 = vrot.slane %v1602, 2
          %v1604 = vadd.f32 %v1602, %v1603
          %v1605 = vrot.slane %v1604, 1
          %v1606 = vadd.f32 %v1604, %v1605
          %v1607 = vadd.f32 %v847, %v863
          %v1608 = vrot.slane %v1607, 4
          %v1609 = vadd.f32 %v1607, %v1608
          %v1610 = vrot.slane %v1609, 2
          %v1611 = vadd.f32 %v1609, %v1610
          %v1612 = vrot.slane %v1611, 1
          %v1613 = vadd.f32 %v1611, %v1612
          %v1614 = vadd.f32 %v848, %v864
          %v1615 = vrot.slane %v1614, 4
          %v1616 = vadd.f32 %v1614, %v1615
          %v1617 = vrot.slane %v1616, 2
          %v1618 = vadd.f32 %v1616, %v1617
          %v1619 = vrot.slane %v1618, 1
          %v1620 = vadd.f32 %v1618, %v1619
          %v1621 = vadd.f32 %v849, %v865
          %v1622 = vrot.slane %v1621, 4
          %v1623 = vadd.f32 %v1621, %v1622
          %v1624 = vrot.slane %v1623, 2
          %v1625 = vadd.f32 %v1623, %v1624
          %v1626 = vrot.slane %v1625, 1
          %v1627 = vadd.f32 %v1625, %v1626
          %v1628 = vadd.f32 %v850, %v866
          %v1629 = vrot.slane %v1628, 4
          %v1630 = vadd.f32 %v1628, %v1629
          %v1631 = vrot.slane %v1630, 2
          %v1632 = vadd.f32 %v1630, %v1631
          %v1633 = vrot.slane %v1632, 1
          %v1634 = vadd.f32 %v1632, %v1633
          %v1635 = vadd.f32 %v851, %v867
          %v1636 = vrot.slane %v1635, 4
          %v1637 = vadd.f32 %v1635, %v1636
          %v1638 = vrot.slane %v1637, 2
          %v1639 = vadd.f32 %v1637, %v1638
          %v1640 = vrot.slane %v1639, 1
          %v1641 = vadd.f32 %v1639, %v1640
          %v1642 = vadd.f32 %v852, %v868
          %v1643 = vrot.slane %v1642, 4
          %v1644 = vadd.f32 %v1642, %v1643
          %v1645 = vrot.slane %v1644, 2
          %v1646 = vadd.f32 %v1644, %v1645
          %v1647 = vrot.slane %v1646, 1
          %v1648 = vadd.f32 %v1646, %v1647
          %v1649 = vadd.f32 %v853, %v869
          %v1650 = vrot.slane %v1649, 4
          %v1651 = vadd.f32 %v1649, %v1650
          %v1652 = vrot.slane %v1651, 2
          %v1653 = vadd.f32 %v1651, %v1652
          %v1654 = vrot.slane %v1653, 1
          %v1655 = vadd.f32 %v1653, %v1654
          %v1656 = vadd.f32 %v854, %v870
          %v1657 = vrot.slane %v1656, 4
          %v1658 = vadd.f32 %v1656, %v1657
          %v1659 = vrot.slane %v1658, 2
          %v1660 = vadd.f32 %v1658, %v1659
          %v1661 = vrot.slane %v1660, 1
          %v1662 = vadd.f32 %v1660, %v1661
          %v1663 = vadd.f32 %v855, %v871
          %v1664 = vrot.slane %v1663, 4
          %v1665 = vadd.f32 %v1663, %v1664
          %v1666 = vrot.slane %v1665, 2
          %v1667 = vadd.f32 %v1665, %v1666
          %v1668 = vrot.slane %v1667, 1
          %v1669 = vadd.f32 %v1667, %v1668
          %v1670 = vadd.f32 %v856, %v872
          %v1671 = vrot.slane %v1670, 4
          %v1672 = vadd.f32 %v1670, %v1671
          %v1673 = vrot.slane %v1672, 2
          %v1674 = vadd.f32 %v1672, %v1673
          %v1675 = vrot.slane %v1674, 1
          %v1676 = vadd.f32 %v1674, %v1675
          %v1677 = vadd.f32 %v857, %v873
          %v1678 = vrot.slane %v1677, 4
          %v1679 = vadd.f32 %v1677, %v1678
          %v1680 = vrot.slane %v1679, 2
          %v1681 = vadd.f32 %v1679, %v1680
          %v1682 = vrot.slane %v1681, 1
          %v1683 = vadd.f32 %v1681, %v1682
          %v1684 = vadd.f32 %v858, %v874
          %v1685 = vrot.slane %v1684, 4
          %v1686 = vadd.f32 %v1684, %v1685
          %v1687 = vrot.slane %v1686, 2
          %v1688 = vadd.f32 %v1686, %v1687
          %v1689 = vrot.slane %v1688, 1
          %v1690 = vadd.f32 %v1688, %v1689
          %v1691 = vadd.f32 %v875, %v891
          %v1692 = vrot.slane %v1691, 4
          %v1693 = vadd.f32 %v1691, %v1692
          %v1694 = vrot.slane %v1693, 2
          %v1695 = vadd.f32 %v1693, %v1694
          %v1696 = vrot.slane %v1695, 1
          %v1697 = vadd.f32 %v1695, %v1696
          %v1698 = vadd.f32 %v876, %v892
          %v1699 = vrot.slane %v1698, 4
          %v1700 = vadd.f32 %v1698, %v1699
          %v1701 = vrot.slane %v1700, 2
          %v1702 = vadd.f32 %v1700, %v1701
          %v1703 = vrot.slane %v1702, 1
          %v1704 = vadd.f32 %v1702, %v1703
          %v1705 = vadd.f32 %v877, %v893
          %v1706 = vrot.slane %v1705, 4
          %v1707 = vadd.f32 %v1705, %v1706
          %v1708 = vrot.slane %v1707, 2
          %v1709 = vadd.f32 %v1707, %v1708
          %v1710 = vrot.slane %v1709, 1
          %v1711 = vadd.f32 %v1709, %v1710
          %v1712 = vadd.f32 %v878, %v894
          %v1713 = vrot.slane %v1712, 4
          %v1714 = vadd.f32 %v1712, %v1713
          %v1715 = vrot.slane %v1714, 2
          %v1716 = vadd.f32 %v1714, %v1715
          %v1717 = vrot.slane %v1716, 1
          %v1718 = vadd.f32 %v1716, %v1717
          %v1719 = vadd.f32 %v879, %v895
          %v1720 = vrot.slane %v1719, 4
          %v1721 = vadd.f32 %v1719, %v1720
          %v1722 = vrot.slane %v1721, 2
          %v1723 = vadd.f32 %v1721, %v1722
          %v1724 = vrot.slane %v1723, 1
          %v1725 = vadd.f32 %v1723, %v1724
          %v1726 = vadd.f32 %v880, %v896
          %v1727 = vrot.slane %v1726, 4
          %v1728 = vadd.f32 %v1726, %v1727
          %v1729 = vrot.slane %v1728, 2
          %v1730 = vadd.f32 %v1728, %v1729
          %v1731 = vrot.slane %v1730, 1
          %v1732 = vadd.f32 %v1730, %v1731
          %v1733 = vadd.f32 %v881, %v897
          %v1734 = vrot.slane %v1733, 4
          %v1735 = vadd.f32 %v1733, %v1734
          %v1736 = vrot.slane %v1735, 2
          %v1737 = vadd.f32 %v1735, %v1736
          %v1738 = vrot.slane %v1737, 1
          %v1739 = vadd.f32 %v1737, %v1738
          %v1740 = vadd.f32 %v882, %v898
          %v1741 = vrot.slane %v1740, 4
          %v1742 = vadd.f32 %v1740, %v1741
          %v1743 = vrot.slane %v1742, 2
          %v1744 = vadd.f32 %v1742, %v1743
          %v1745 = vrot.slane %v1744, 1
          %v1746 = vadd.f32 %v1744, %v1745
          %v1747 = vadd.f32 %v883, %v899
          %v1748 = vrot.slane %v1747, 4
          %v1749 = vadd.f32 %v1747, %v1748
          %v1750 = vrot.slane %v1749, 2
          %v1751 = vadd.f32 %v1749, %v1750
          %v1752 = vrot.slane %v1751, 1
          %v1753 = vadd.f32 %v1751, %v1752
          %v1754 = vadd.f32 %v884, %v900
          %v1755 = vrot.slane %v1754, 4
          %v1756 = vadd.f32 %v1754, %v1755
          %v1757 = vrot.slane %v1756, 2
          %v1758 = vadd.f32 %v1756, %v1757
          %v1759 = vrot.slane %v1758, 1
          %v1760 = vadd.f32 %v1758, %v1759
          %v1761 = vadd.f32 %v885, %v901
          %v1762 = vrot.slane %v1761, 4
          %v1763 = vadd.f32 %v1761, %v1762
          %v1764 = vrot.slane %v1763, 2
          %v1765 = vadd.f32 %v1763, %v1764
          %v1766 = vrot.slane %v1765, 1
          %v1767 = vadd.f32 %v1765, %v1766
          %v1768 = vadd.f32 %v886, %v902
          %v1769 = vrot.slane %v1768, 4
          %v1770 = vadd.f32 %v1768, %v1769
          %v1771 = vrot.slane %v1770, 2
          %v1772 = vadd.f32 %v1770, %v1771
          %v1773 = vrot.slane %v1772, 1
          %v1774 = vadd.f32 %v1772, %v1773
          %v1775 = vadd.f32 %v887, %v903
          %v1776 = vrot.slane %v1775, 4
          %v1777 = vadd.f32 %v1775, %v1776
          %v1778 = vrot.slane %v1777, 2
          %v1779 = vadd.f32 %v1777, %v1778
          %v1780 = vrot.slane %v1779, 1
          %v1781 = vadd.f32 %v1779, %v1780
          %v1782 = vadd.f32 %v888, %v904
          %v1783 = vrot.slane %v1782, 4
          %v1784 = vadd.f32 %v1782, %v1783
          %v1785 = vrot.slane %v1784, 2
          %v1786 = vadd.f32 %v1784, %v1785
          %v1787 = vrot.slane %v1786, 1
          %v1788 = vadd.f32 %v1786, %v1787
          %v1789 = vadd.f32 %v889, %v905
          %v1790 = vrot.slane %v1789, 4
          %v1791 = vadd.f32 %v1789, %v1790
          %v1792 = vrot.slane %v1791, 2
          %v1793 = vadd.f32 %v1791, %v1792
          %v1794 = vrot.slane %v1793, 1
          %v1795 = vadd.f32 %v1793, %v1794
          %v1796 = vadd.f32 %v890, %v906
          %v1797 = vrot.slane %v1796, 4
          %v1798 = vadd.f32 %v1796, %v1797
          %v1799 = vrot.slane %v1798, 2
          %v1800 = vadd.f32 %v1798, %v1799
          %v1801 = vrot.slane %v1800, 1
          %v1802 = vadd.f32 %v1800, %v1801
          %v1803 = vmul.f32 %v913, 0.0625
          %v1804 = vmul.f32 %v920, 0.0625
          %v1805 = vmul.f32 %v927, 0.0625
          %v1806 = vmul.f32 %v934, 0.0625
          %v1807 = vmul.f32 %v941, 0.0625
          %v1808 = vmul.f32 %v948, 0.0625
          %v1809 = vmul.f32 %v955, 0.0625
          %v1810 = vmul.f32 %v962, 0.0625
          %v1811 = vmul.f32 %v969, 0.0625
          %v1812 = vmul.f32 %v976, 0.0625
          %v1813 = vmul.f32 %v983, 0.0625
          %v1814 = vmul.f32 %v990, 0.0625
          %v1815 = vmul.f32 %v997, 0.0625
          %v1816 = vmul.f32 %v1004, 0.0625
          %v1817 = vmul.f32 %v1011, 0.0625
          %v1818 = vmul.f32 %v1018, 0.0625
          %v1819 = vmul.f32 %v1025, 0.0625
          %v1820 = vmul.f32 %v1032, 0.0625
          %v1821 = vmul.f32 %v1039, 0.0625
          %v1822 = vmul.f32 %v1046, 0.0625
          %v1823 = vmul.f32 %v1053, 0.0625
          %v1824 = vmul.f32 %v1060, 0.0625
          %v1825 = vmul.f32 %v1067, 0.0625
          %v1826 = vmul.f32 %v1074, 0.0625
          %v1827 = vmul.f32 %v1081, 0.0625
          %v1828 = vmul.f32 %v1088, 0.0625
          %v1829 = vmul.f32 %v1095, 0.0625
          %v1830 = vmul.f32 %v1102, 0.0625
          %v1831 = vmul.f32 %v1109, 0.0625
          %v1832 = vmul.f32 %v1116, 0.0625
          %v1833 = vmul.f32 %v1123, 0.0625
          %v1834 = vmul.f32 %v1130, 0.0625
          %v1835 = vmul.f32 %v1137, 0.0625
          %v1836 = vmul.f32 %v1144, 0.0625
          %v1837 = vmul.f32 %v1151, 0.0625
          %v1838 = vmul.f32 %v1158, 0.0625
          %v1839 = vmul.f32 %v1165, 0.0625
          %v1840 = vmul.f32 %v1172, 0.0625
          %v1841 = vmul.f32 %v1179, 0.0625
          %v1842 = vmul.f32 %v1186, 0.0625
          %v1843 = vmul.f32 %v1193, 0.0625
          %v1844 = vmul.f32 %v1200, 0.0625
          %v1845 = vmul.f32 %v1207, 0.0625
          %v1846 = vmul.f32 %v1214, 0.0625
          %v1847 = vmul.f32 %v1221, 0.0625
          %v1848 = vmul.f32 %v1228, 0.0625
          %v1849 = vmul.f32 %v1235, 0.0625
          %v1850 = vmul.f32 %v1242, 0.0625
          %v1851 = vmul.f32 %v1249, 0.0625
          %v1852 = vmul.f32 %v1256, 0.0625
          %v1853 = vmul.f32 %v1263, 0.0625
          %v1854 = vmul.f32 %v1270, 0.0625
          %v1855 = vmul.f32 %v1277, 0.0625
          %v1856 = vmul.f32 %v1284, 0.0625
          %v1857 = vmul.f32 %v1291, 0.0625
          %v1858 = vmul.f32 %v1298, 0.0625
          %v1859 = vmul.f32 %v1305, 0.0625
          %v1860 = vmul.f32 %v1312, 0.0625
          %v1861 = vmul.f32 %v1319, 0.0625
          %v1862 = vmul.f32 %v1326, 0.0625
          %v1863 = vmul.f32 %v1333, 0.0625
          %v1864 = vmul.f32 %v1340, 0.0625
          %v1865 = vmul.f32 %v1347, 0.0625
          %v1866 = vmul.f32 %v1354, 0.0625
          %v1867 = vmul.f32 %v1361, 0.0625
          %v1868 = vmul.f32 %v1368, 0.0625
          %v1869 = vmul.f32 %v1375, 0.0625
          %v1870 = vmul.f32 %v1382, 0.0625
          %v1871 = vmul.f32 %v1389, 0.0625
          %v1872 = vmul.f32 %v1396, 0.0625
          %v1873 = vmul.f32 %v1403, 0.0625
          %v1874 = vmul.f32 %v1410, 0.0625
          %v1875 = vmul.f32 %v1417, 0.0625
          %v1876 = vmul.f32 %v1424, 0.0625
          %v1877 = vmul.f32 %v1431, 0.0625
          %v1878 = vmul.f32 %v1438, 0.0625
          %v1879 = vmul.f32 %v1445, 0.0625
          %v1880 = vmul.f32 %v1452, 0.0625
          %v1881 = vmul.f32 %v1459, 0.0625
          %v1882 = vmul.f32 %v1466, 0.0625
          %v1883 = vmul.f32 %v1473, 0.0625
          %v1884 = vmul.f32 %v1480, 0.0625
          %v1885 = vmul.f32 %v1487, 0.0625
          %v1886 = vmul.f32 %v1494, 0.0625
          %v1887 = vmul.f32 %v1501, 0.0625
          %v1888 = vmul.f32 %v1508, 0.0625
          %v1889 = vmul.f32 %v1515, 0.0625
          %v1890 = vmul.f32 %v1522, 0.0625
          %v1891 = vmul.f32 %v1529, 0.0625
          %v1892 = vmul.f32 %v1536, 0.0625
          %v1893 = vmul.f32 %v1543, 0.0625
          %v1894 = vmul.f32 %v1550, 0.0625
          %v1895 = vmul.f32 %v1557, 0.0625
          %v1896 = vmul.f32 %v1564, 0.0625
          %v1897 = vmul.f32 %v1571, 0.0625
          %v1898 = vmul.f32 %v1578, 0.0625
          %v1899 = vmul.f32 %v1585, 0.0625
          %v1900 = vmul.f32 %v1592, 0.0625
          %v1901 = vmul.f32 %v1599, 0.0625
          %v1902 = vmul.f32 %v1606, 0.0625
          %v1903 = vmul.f32 %v1613, 0.0625
          %v1904 = vmul.f32 %v1620, 0.0625
          %v1905 = vmul.f32 %v1627, 0.0625
          %v1906 = vmul.f32 %v1634, 0.0625
          %v1907 = vmul.f32 %v1641, 0.0625
          %v1908 = vmul.f32 %v1648, 0.0625
          %v1909 = vmul.f32 %v1655, 0.0625
          %v1910 = vmul.f32 %v1662, 0.0625
          %v1911 = vmul.f32 %v1669, 0.0625
          %v1912 = vmul.f32 %v1676, 0.0625
          %v1913 = vmul.f32 %v1683, 0.0625
          %v1914 = vmul.f32 %v1690, 0.0625
          %v1915 = vmul.f32 %v1697, 0.0625
          %v1916 = vmul.f32 %v1704, 0.0625
          %v1917 = vmul.f32 %v1711, 0.0625
          %v1918 = vmul.f32 %v1718, 0.0625
          %v1919 = vmul.f32 %v1725, 0.0625
          %v1920 = vmul.f32 %v1732, 0.0625
          %v1921 = vmul.f32 %v1739, 0.0625
          %v1922 = vmul.f32 %v1746, 0.0625
          %v1923 = vmul.f32 %v1753, 0.0625
          %v1924 = vmul.f32 %v1760, 0.0625
          %v1925 = vmul.f32 %v1767, 0.0625
          %v1926 = vmul.f32 %v1774, 0.0625
          %v1927 = vmul.f32 %v1781, 0.0625
          %v1928 = vmul.f32 %v1788, 0.0625
          %v1929 = vmul.f32 %v1795, 0.0625
          %v1930 = vmul.f32 %v1802, 0.0625
          %v1931 = vpack.c.bf16 %v1804, %v1803
          %v1932 = vpack.c.bf16 %v1806, %v1805
          %v1933 = vpack.c.bf16 %v1808, %v1807
          %v1934 = vpack.c.bf16 %v1810, %v1809
          %v1935 = vpack.c.bf16 %v1812, %v1811
          %v1936 = vpack.c.bf16 %v1814, %v1813
          %v1937 = vpack.c.bf16 %v1816, %v1815
          %v1938 = vpack.c.bf16 %v1818, %v1817
          %v1939 = vpack.c.bf16 %v1820, %v1819
          %v1940 = vpack.c.bf16 %v1822, %v1821
          %v1941 = vpack.c.bf16 %v1824, %v1823
          %v1942 = vpack.c.bf16 %v1826, %v1825
          %v1943 = vpack.c.bf16 %v1828, %v1827
          %v1944 = vpack.c.bf16 %v1830, %v1829
          %v1945 = vpack.c.bf16 %v1832, %v1831
          %v1946 = vpack.c.bf16 %v1834, %v1833
          %v1947 = vpack.c.bf16 %v1836, %v1835
          %v1948 = vpack.c.bf16 %v1838, %v1837
          %v1949 = vpack.c.bf16 %v1840, %v1839
          %v1950 = vpack.c.bf16 %v1842, %v1841
          %v1951 = vpack.c.bf16 %v1844, %v1843
          %v1952 = vpack.c.bf16 %v1846, %v1845
          %v1953 = vpack.c.bf16 %v1848, %v1847
          %v1954 = vpack.c.bf16 %v1850, %v1849
          %v1955 = vpack.c.bf16 %v1852, %v1851
          %v1956 = vpack.c.bf16 %v1854, %v1853
          %v1957 = vpack.c.bf16 %v1856, %v1855
          %v1958 = vpack.c.bf16 %v1858, %v1857
          %v1959 = vpack.c.bf16 %v1860, %v1859
          %v1960 = vpack.c.bf16 %v1862, %v1861
          %v1961 = vpack.c.bf16 %v1864, %v1863
          %v1962 = vpack.c.bf16 %v1866, %v1865
          %v1963 = vpack.c.bf16 %v1868, %v1867
          %v1964 = vpack.c.bf16 %v1870, %v1869
          %v1965 = vpack.c.bf16 %v1872, %v1871
          %v1966 = vpack.c.bf16 %v1874, %v1873
          %v1967 = vpack.c.bf16 %v1876, %v1875
          %v1968 = vpack.c.bf16 %v1878, %v1877
          %v1969 = vpack.c.bf16 %v1880, %v1879
          %v1970 = vpack.c.bf16 %v1882, %v1881
          %v1971 = vpack.c.bf16 %v1884, %v1883
          %v1972 = vpack.c.bf16 %v1886, %v1885
          %v1973 = vpack.c.bf16 %v1888, %v1887
          %v1974 = vpack.c.bf16 %v1890, %v1889
          %v1975 = vpack.c.bf16 %v1892, %v1891
          %v1976 = vpack.c.bf16 %v1894, %v1893
          %v1977 = vpack.c.bf16 %v1896, %v1895
          %v1978 = vpack.c.bf16 %v1898, %v1897
          %v1979 = vpack.c.bf16 %v1900, %v1899
          %v1980 = vpack.c.bf16 %v1902, %v1901
          %v1981 = vpack.c.bf16 %v1904, %v1903
          %v1982 = vpack.c.bf16 %v1906, %v1905
          %v1983 = vpack.c.bf16 %v1908, %v1907
          %v1984 = vpack.c.bf16 %v1910, %v1909
          %v1985 = vpack.c.bf16 %v1912, %v1911
          %v1986 = vpack.c.bf16 %v1914, %v1913
          %v1987 = vpack.c.bf16 %v1916, %v1915
          %v1988 = vpack.c.bf16 %v1918, %v1917
          %v1989 = vpack.c.bf16 %v1920, %v1919
          %v1990 = vpack.c.bf16 %v1922, %v1921
          %v1991 = vpack.c.bf16 %v1924, %v1923
          %v1992 = vpack.c.bf16 %v1926, %v1925
          %v1993 = vpack.c.bf16 %v1928, %v1927
          %v1994 = vpack.c.bf16 %v1930, %v1929
          %v2059 = vunpack.c.l.b16 %v1931
          %v2060 = vunpack.c.h.b16 %v1931
          %v2061 = vunpack.c.l.b16 %v1932
          %v2062 = vunpack.c.h.b16 %v1932
          %v2063 = vunpack.c.l.b16 %v1933
          %v2064 = vunpack.c.h.b16 %v1933
          %v2065 = vunpack.c.l.b16 %v1934
          %v2066 = vunpack.c.h.b16 %v1934
          %v2067 = vunpack.c.l.b16 %v1935
          %v2068 = vunpack.c.h.b16 %v1935
          %v2069 = vunpack.c.l.b16 %v1936
          %v2070 = vunpack.c.h.b16 %v1936
          %v2071 = vunpack.c.l.b16 %v1937
          %v2072 = vunpack.c.h.b16 %v1937
          %v2073 = vunpack.c.l.b16 %v1938
          %v2074 = vunpack.c.h.b16 %v1938
          %v2075 = vunpack.c.l.b16 %v1939
          %v2076 = vunpack.c.h.b16 %v1939
          %v2077 = vunpack.c.l.b16 %v1940
          %v2078 = vunpack.c.h.b16 %v1940
          %v2079 = vunpack.c.l.b16 %v1941
          %v2080 = vunpack.c.h.b16 %v1941
          %v2081 = vunpack.c.l.b16 %v1942
          %v2082 = vunpack.c.h.b16 %v1942
          %v2083 = vunpack.c.l.b16 %v1943
          %v2084 = vunpack.c.h.b16 %v1943
          %v2085 = vunpack.c.l.b16 %v1944
          %v2086 = vunpack.c.h.b16 %v1944
          %v2087 = vunpack.c.l.b16 %v1945
          %v2088 = vunpack.c.h.b16 %v1945
          %v2089 = vunpack.c.l.b16 %v1946
          %v2090 = vunpack.c.h.b16 %v1946
          %v2091 = vunpack.c.l.b16 %v1947
          %v2092 = vunpack.c.h.b16 %v1947
          %v2093 = vunpack.c.l.b16 %v1948
          %v2094 = vunpack.c.h.b16 %v1948
          %v2095 = vunpack.c.l.b16 %v1949
          %v2096 = vunpack.c.h.b16 %v1949
          %v2097 = vunpack.c.l.b16 %v1950
          %v2098 = vunpack.c.h.b16 %v1950
          %v2099 = vunpack.c.l.b16 %v1951
          %v2100 = vunpack.c.h.b16 %v1951
          %v2101 = vunpack.c.l.b16 %v1952
          %v2102 = vunpack.c.h.b16 %v1952
          %v2103 = vunpack.c.l.b16 %v1953
          %v2104 = vunpack.c.h.b16 %v1953
          %v2105 = vunpack.c.l.b16 %v1954
          %v2106 = vunpack.c.h.b16 %v1954
          %v2107 = vunpack.c.l.b16 %v1955
          %v2108 = vunpack.c.h.b16 %v1955
          %v2109 = vunpack.c.l.b16 %v1956
          %v2110 = vunpack.c.h.b16 %v1956
          %v2111 = vunpack.c.l.b16 %v1957
          %v2112 = vunpack.c.h.b16 %v1957
          %v2113 = vunpack.c.l.b16 %v1958
          %v2114 = vunpack.c.h.b16 %v1958
          %v2115 = vunpack.c.l.b16 %v1959
          %v2116 = vunpack.c.h.b16 %v1959
          %v2117 = vunpack.c.l.b16 %v1960
          %v2118 = vunpack.c.h.b16 %v1960
          %v2119 = vunpack.c.l.b16 %v1961
          %v2120 = vunpack.c.h.b16 %v1961
          %v2121 = vunpack.c.l.b16 %v1962
          %v2122 = vunpack.c.h.b16 %v1962
          %v2123 = vunpack.c.l.b16 %v1963
          %v2124 = vunpack.c.h.b16 %v1963
          %v2125 = vunpack.c.l.b16 %v1964
          %v2126 = vunpack.c.h.b16 %v1964
          %v2127 = vunpack.c.l.b16 %v1965
          %v2128 = vunpack.c.h.b16 %v1965
          %v2129 = vunpack.c.l.b16 %v1966
          %v2130 = vunpack.c.h.b16 %v1966
          %v2131 = vunpack.c.l.b16 %v1967
          %v2132 = vunpack.c.h.b16 %v1967
          %v2133 = vunpack.c.l.b16 %v1968
          %v2134 = vunpack.c.h.b16 %v1968
          %v2135 = vunpack.c.l.b16 %v1969
          %v2136 = vunpack.c.h.b16 %v1969
          %v2137 = vunpack.c.l.b16 %v1970
          %v2138 = vunpack.c.h.b16 %v1970
          %v2139 = vunpack.c.l.b16 %v1971
          %v2140 = vunpack.c.h.b16 %v1971
          %v2141 = vunpack.c.l.b16 %v1972
          %v2142 = vunpack.c.h.b16 %v1972
          %v2143 = vunpack.c.l.b16 %v1973
          %v2144 = vunpack.c.h.b16 %v1973
          %v2145 = vunpack.c.l.b16 %v1974
          %v2146 = vunpack.c.h.b16 %v1974
          %v2147 = vunpack.c.l.b16 %v1975
          %v2148 = vunpack.c.h.b16 %v1975
          %v2149 = vunpack.c.l.b16 %v1976
          %v2150 = vunpack.c.h.b16 %v1976
          %v2151 = vunpack.c.l.b16 %v1977
          %v2152 = vunpack.c.h.b16 %v1977
          %v2153 = vunpack.c.l.b16 %v1978
          %v2154 = vunpack.c.h.b16 %v1978
          %v2155 = vunpack.c.l.b16 %v1979
          %v2156 = vunpack.c.h.b16 %v1979
          %v2157 = vunpack.c.l.b16 %v1980
          %v2158 = vunpack.c.h.b16 %v1980
          %v2159 = vunpack.c.l.b16 %v1981
          %v2160 = vunpack.c.h.b16 %v1981
          %v2161 = vunpack.c.l.b16 %v1982
          %v2162 = vunpack.c.h.b16 %v1982
          %v2163 = vunpack.c.l.b16 %v1983
          %v2164 = vunpack.c.h.b16 %v1983
          %v2165 = vunpack.c.l.b16 %v1984
          %v2166 = vunpack.c.h.b16 %v1984
          %v2167 = vunpack.c.l.b16 %v1985
          %v2168 = vunpack.c.h.b16 %v1985
          %v2169 = vunpack.c.l.b16 %v1986
          %v2170 = vunpack.c.h.b16 %v1986
          %v2171 = vunpack.c.l.b16 %v1987
          %v2172 = vunpack.c.h.b16 %v1987
          %v2173 = vunpack.c.l.b16 %v1988
          %v2174 = vunpack.c.h.b16 %v1988
          %v2175 = vunpack.c.l.b16 %v1989
          %v2176 = vunpack.c.h.b16 %v1989
          %v2177 = vunpack.c.l.b16 %v1990
          %v2178 = vunpack.c.h.b16 %v1990
          %v2179 = vunpack.c.l.b16 %v1991
          %v2180 = vunpack.c.h.b16 %v1991
          %v2181 = vunpack.c.l.b16 %v1992
          %v2182 = vunpack.c.h.b16 %v1992
          %v2183 = vunpack.c.l.b16 %v1993
          %v2184 = vunpack.c.h.b16 %v1993
          %v2185 = vunpack.c.l.b16 %v1994
          %v2186 = vunpack.c.h.b16 %v1994
          %vm2187 = vcmask 1041409
          %v2188 = vsel %vm2187, %v2075, %v2059
          %vm2189 = vcmask 1042434
          %v2190 = vsel %vm2189, %v2091, %v2188
          %vm2191 = vcmask 1043459
          %v2192 = vsel %vm2191, %v2107, %v2190
          %vm2193 = vcmask 1044484
          %v2194 = vsel %vm2193, %v2123, %v2192
          %vm2195 = vcmask 1045509
          %v2196 = vsel %vm2195, %v2139, %v2194
          %vm2197 = vcmask 1046534
          %v2198 = vsel %vm2197, %v2155, %v2196
          %vm2199 = vcmask 1047559
          %v2200 = vsel %vm2199, %v2171, %v2198
          %v2201 = vsel %vm2187, %v2076, %v2060
          %v2202 = vsel %vm2189, %v2092, %v2201
          %v2203 = vsel %vm2191, %v2108, %v2202
          %v2204 = vsel %vm2193, %v2124, %v2203
          %v2205 = vsel %vm2195, %v2140, %v2204
          %v2206 = vsel %vm2197, %v2156, %v2205
          %v2207 = vsel %vm2199, %v2172, %v2206
          %v2208 = vsel %vm2187, %v2077, %v2061
          %v2209 = vsel %vm2189, %v2093, %v2208
          %v2210 = vsel %vm2191, %v2109, %v2209
          %v2211 = vsel %vm2193, %v2125, %v2210
          %v2212 = vsel %vm2195, %v2141, %v2211
          %v2213 = vsel %vm2197, %v2157, %v2212
          %v2214 = vsel %vm2199, %v2173, %v2213
          %v2215 = vsel %vm2187, %v2078, %v2062
          %v2216 = vsel %vm2189, %v2094, %v2215
          %v2217 = vsel %vm2191, %v2110, %v2216
          %v2218 = vsel %vm2193, %v2126, %v2217
          %v2219 = vsel %vm2195, %v2142, %v2218
          %v2220 = vsel %vm2197, %v2158, %v2219
          %v2221 = vsel %vm2199, %v2174, %v2220
          %v2222 = vsel %vm2187, %v2079, %v2063
          %v2223 = vsel %vm2189, %v2095, %v2222
          %v2224 = vsel %vm2191, %v2111, %v2223
          %v2225 = vsel %vm2193, %v2127, %v2224
          %v2226 = vsel %vm2195, %v2143, %v2225
          %v2227 = vsel %vm2197, %v2159, %v2226
          %v2228 = vsel %vm2199, %v2175, %v2227
          %v2229 = vsel %vm2187, %v2080, %v2064
          %v2230 = vsel %vm2189, %v2096, %v2229
          %v2231 = vsel %vm2191, %v2112, %v2230
          %v2232 = vsel %vm2193, %v2128, %v2231
          %v2233 = vsel %vm2195, %v2144, %v2232
          %v2234 = vsel %vm2197, %v2160, %v2233
          %v2235 = vsel %vm2199, %v2176, %v2234
          %v2236 = vsel %vm2187, %v2081, %v2065
          %v2237 = vsel %vm2189, %v2097, %v2236
          %v2238 = vsel %vm2191, %v2113, %v2237
          %v2239 = vsel %vm2193, %v2129, %v2238
          %v2240 = vsel %vm2195, %v2145, %v2239
          %v2241 = vsel %vm2197, %v2161, %v2240
          %v2242 = vsel %vm2199, %v2177, %v2241
          %v2243 = vsel %vm2187, %v2082, %v2066
          %v2244 = vsel %vm2189, %v2098, %v2243
          %v2245 = vsel %vm2191, %v2114, %v2244
          %v2246 = vsel %vm2193, %v2130, %v2245
          %v2247 = vsel %vm2195, %v2146, %v2246
          %v2248 = vsel %vm2197, %v2162, %v2247
          %v2249 = vsel %vm2199, %v2178, %v2248
          %v2250 = vsel %vm2187, %v2083, %v2067
          %v2251 = vsel %vm2189, %v2099, %v2250
          %v2252 = vsel %vm2191, %v2115, %v2251
          %v2253 = vsel %vm2193, %v2131, %v2252
          %v2254 = vsel %vm2195, %v2147, %v2253
          %v2255 = vsel %vm2197, %v2163, %v2254
          %v2256 = vsel %vm2199, %v2179, %v2255
          %v2257 = vsel %vm2187, %v2084, %v2068
          %v2258 = vsel %vm2189, %v2100, %v2257
          %v2259 = vsel %vm2191, %v2116, %v2258
          %v2260 = vsel %vm2193, %v2132, %v2259
          %v2261 = vsel %vm2195, %v2148, %v2260
          %v2262 = vsel %vm2197, %v2164, %v2261
          %v2263 = vsel %vm2199, %v2180, %v2262
          %v2264 = vsel %vm2187, %v2085, %v2069
          %v2265 = vsel %vm2189, %v2101, %v2264
          %v2266 = vsel %vm2191, %v2117, %v2265
          %v2267 = vsel %vm2193, %v2133, %v2266
          %v2268 = vsel %vm2195, %v2149, %v2267
          %v2269 = vsel %vm2197, %v2165, %v2268
          %v2270 = vsel %vm2199, %v2181, %v2269
          %v2271 = vsel %vm2187, %v2086, %v2070
          %v2272 = vsel %vm2189, %v2102, %v2271
          %v2273 = vsel %vm2191, %v2118, %v2272
          %v2274 = vsel %vm2193, %v2134, %v2273
          %v2275 = vsel %vm2195, %v2150, %v2274
          %v2276 = vsel %vm2197, %v2166, %v2275
          %v2277 = vsel %vm2199, %v2182, %v2276
          %v2278 = vsel %vm2187, %v2087, %v2071
          %v2279 = vsel %vm2189, %v2103, %v2278
          %v2280 = vsel %vm2191, %v2119, %v2279
          %v2281 = vsel %vm2193, %v2135, %v2280
          %v2282 = vsel %vm2195, %v2151, %v2281
          %v2283 = vsel %vm2197, %v2167, %v2282
          %v2284 = vsel %vm2199, %v2183, %v2283
          %v2285 = vsel %vm2187, %v2088, %v2072
          %v2286 = vsel %vm2189, %v2104, %v2285
          %v2287 = vsel %vm2191, %v2120, %v2286
          %v2288 = vsel %vm2193, %v2136, %v2287
          %v2289 = vsel %vm2195, %v2152, %v2288
          %v2290 = vsel %vm2197, %v2168, %v2289
          %v2291 = vsel %vm2199, %v2184, %v2290
          %v2292 = vsel %vm2187, %v2089, %v2073
          %v2293 = vsel %vm2189, %v2105, %v2292
          %v2294 = vsel %vm2191, %v2121, %v2293
          %v2295 = vsel %vm2193, %v2137, %v2294
          %v2296 = vsel %vm2195, %v2153, %v2295
          %v2297 = vsel %vm2197, %v2169, %v2296
          %v2298 = vsel %vm2199, %v2185, %v2297
          %v2299 = vsel %vm2187, %v2090, %v2074
          %v2300 = vsel %vm2189, %v2106, %v2299
          %v2301 = vsel %vm2191, %v2122, %v2300
          %v2302 = vsel %vm2193, %v2138, %v2301
          %v2303 = vsel %vm2195, %v2154, %v2302
          %v2304 = vsel %vm2197, %v2170, %v2303
          %v2305 = vsel %vm2199, %v2186, %v2304
          %v2306 = vpack.c.b16 %v2207, %v2200
          %v2307 = vpack.c.b16 %v2221, %v2214
          %v2308 = vpack.c.b16 %v2235, %v2228
          %v2309 = vpack.c.b16 %v2249, %v2242
          %v2310 = vpack.c.b16 %v2263, %v2256
          %v2311 = vpack.c.b16 %v2277, %v2270
          %v2312 = vpack.c.b16 %v2291, %v2284
          %v2313 = vpack.c.b16 %v2305, %v2298
          %2322 = vst [vmem:[#allocation2] sm:$0xff] %v2306
          %2323 = vst [vmem:[#allocation2 + $0x8] sm:$0xff] %v2307
          %2324 = vst [vmem:[#allocation2 + $0x10] sm:$0xff] %v2308
          %2325 = vst [vmem:[#allocation2 + $0x18] sm:$0xff] %v2309
          %2326 = vst [vmem:[#allocation2 + $0x20] sm:$0xff] %v2310
          %2327 = vst [vmem:[#allocation2 + $0x28] sm:$0xff] %v2311
          %2328 = vst [vmem:[#allocation2 + $0x30] sm:$0xff] %v2312
          %2329 = vst [vmem:[#allocation2 + $0x38] sm:$0xff] %v2313
          %2330 = vst [vmem:[#allocation3] sm:$0xff] 0.0
          %2331 = vst [vmem:[#allocation3 + $0x8] sm:$0xff] 0.0
          %2332 = vst [vmem:[#allocation3 + $0x10] sm:$0xff] 0.0
          %2333 = vst [vmem:[#allocation3 + $0x18] sm:$0xff] 0.0
        $region92: #{tpu_custom_call.1} parent=55 // pred_fallthru
          _
        %v2334 = vld [vmem:[#allocation2] sm:$0xff]
        %v2335 = vld [vmem:[#allocation2 + $0x8] sm:$0xff]
        %v2336 = vld [vmem:[#allocation2 + $0x10] sm:$0xff]
        %v2337 = vld [vmem:[#allocation2 + $0x18] sm:$0xff]
        %v2338 = vld [vmem:[#allocation2 + $0x20] sm:$0xff]
        %v2339 = vld [vmem:[#allocation2 + $0x28] sm:$0xff]
        %v2340 = vld [vmem:[#allocation2 + $0x30] sm:$0xff]
        %v2341 = vld [vmem:[#allocation2 + $0x38] sm:$0xff]
        %v2342 = vld [vmem:[%s429] sm:$0xff]
        %v2343 = vld [vmem:[%s429 + $0x8] sm:$0xff]
        %v2344 = vld [vmem:[%s429 + $0x10] sm:$0xff]
        %v2345 = vld [vmem:[%s429 + $0x18] sm:$0xff]
        %v2346 = vld [vmem:[%s429 + $0x20] sm:$0xff]
        %v2347 = vld [vmem:[%s429 + $0x28] sm:$0xff]
        %v2348 = vld [vmem:[%s429 + $0x30] sm:$0xff]
        %v2349 = vld [vmem:[%s429 + $0x38] sm:$0xff]
        %v2350 = vld [vmem:[%s429 + $0x40] sm:$0xff]
        %v2351 = vld [vmem:[%s429 + $0x48] sm:$0xff]
        %v2352 = vld [vmem:[%s429 + $0x50] sm:$0xff]
        %v2353 = vld [vmem:[%s429 + $0x58] sm:$0xff]
        %v2354 = vld [vmem:[%s429 + $0x60] sm:$0xff]
        %v2355 = vld [vmem:[%s429 + $0x68] sm:$0xff]
        %v2356 = vld [vmem:[%s429 + $0x70] sm:$0xff]
        %v2357 = vld [vmem:[%s429 + $0x78] sm:$0xff]
        %v2358 = vld [vmem:[%s429 + $0x80] sm:$0xff]
        %v2359 = vld [vmem:[%s429 + $0x88] sm:$0xff]
        %v2360 = vld [vmem:[%s429 + $0x90] sm:$0xff]
        %v2361 = vld [vmem:[%s429 + $0x98] sm:$0xff]
        %v2362 = vld [vmem:[%s429 + $0xa0] sm:$0xff]
        %v2363 = vld [vmem:[%s429 + $0xa8] sm:$0xff]
        %v2364 = vld [vmem:[%s429 + $0xb0] sm:$0xff]
        %v2365 = vld [vmem:[%s429 + $0xb8] sm:$0xff]
        %v2366 = vld [vmem:[%s429 + $0xc0] sm:$0xff]
        %v2367 = vld [vmem:[%s429 + $0xc8] sm:$0xff]
        %v2368 = vld [vmem:[%s429 + $0xd0] sm:$0xff]
        %v2369 = vld [vmem:[%s429 + $0xd8] sm:$0xff]
        %v2370 = vld [vmem:[%s429 + $0xe0] sm:$0xff]
        %v2371 = vld [vmem:[%s429 + $0xe8] sm:$0xff]
        %v2372 = vld [vmem:[%s429 + $0xf0] sm:$0xff]
        %v2373 = vld [vmem:[%s429 + $0xf8] sm:$0xff]
        %v2374 = vld [vmem:[%s429 + $0x100] sm:$0xff]
        %v2375 = vld [vmem:[%s429 + $0x108] sm:$0xff]
        %v2376 = vld [vmem:[%s429 + $0x110] sm:$0xff]
        %v2377 = vld [vmem:[%s429 + $0x118] sm:$0xff]
        %v2378 = vld [vmem:[%s429 + $0x120] sm:$0xff]
        %v2379 = vld [vmem:[%s429 + $0x128] sm:$0xff]
        %v2380 = vld [vmem:[%s429 + $0x130] sm:$0xff]
        %v2381 = vld [vmem:[%s429 + $0x138] sm:$0xff]
        %v2382 = vld [vmem:[%s429 + $0x140] sm:$0xff]
        %v2383 = vld [vmem:[%s429 + $0x148] sm:$0xff]
        %v2384 = vld [vmem:[%s429 + $0x150] sm:$0xff]
        %v2385 = vld [vmem:[%s429 + $0x158] sm:$0xff]
        %v2386 = vld [vmem:[%s429 + $0x160] sm:$0xff]
        %v2387 = vld [vmem:[%s429 + $0x168] sm:$0xff]
        %v2388 = vld [vmem:[%s429 + $0x170] sm:$0xff]
        %v2389 = vld [vmem:[%s429 + $0x178] sm:$0xff]
        %v2390 = vld [vmem:[%s429 + $0x180] sm:$0xff]
        %v2391 = vld [vmem:[%s429 + $0x188] sm:$0xff]
        %v2392 = vld [vmem:[%s429 + $0x190] sm:$0xff]
        %v2393 = vld [vmem:[%s429 + $0x198] sm:$0xff]
        %v2394 = vld [vmem:[%s429 + $0x1a0] sm:$0xff]
        %v2395 = vld [vmem:[%s429 + $0x1a8] sm:$0xff]
        %v2396 = vld [vmem:[%s429 + $0x1b0] sm:$0xff]
        %v2397 = vld [vmem:[%s429 + $0x1b8] sm:$0xff]
        %v2398 = vld [vmem:[%s429 + $0x1c0] sm:$0xff]
        %v2399 = vld [vmem:[%s429 + $0x1c8] sm:$0xff]
        %v2400 = vld [vmem:[%s429 + $0x1d0] sm:$0xff]
        %v2401 = vld [vmem:[%s429 + $0x1d8] sm:$0xff]
        %v2402 = vld [vmem:[%s429 + $0x1e0] sm:$0xff]
        %v2403 = vld [vmem:[%s429 + $0x1e8] sm:$0xff]
        %v2404 = vld [vmem:[%s429 + $0x1f0] sm:$0xff]
        %v2405 = vld [vmem:[%s429 + $0x1f8] sm:$0xff]
        %v2406 = vld [vmem:[%s429 + $0x200] sm:$0xff]
        %v2407 = vld [vmem:[%s429 + $0x208] sm:$0xff]
        %v2408 = vld [vmem:[%s429 + $0x210] sm:$0xff]
        %v2409 = vld [vmem:[%s429 + $0x218] sm:$0xff]
        %v2410 = vld [vmem:[%s429 + $0x220] sm:$0xff]
        %v2411 = vld [vmem:[%s429 + $0x228] sm:$0xff]
        %v2412 = vld [vmem:[%s429 + $0x230] sm:$0xff]
        %v2413 = vld [vmem:[%s429 + $0x238] sm:$0xff]
        %v2414 = vld [vmem:[%s429 + $0x240] sm:$0xff]
        %v2415 = vld [vmem:[%s429 + $0x248] sm:$0xff]
        %v2416 = vld [vmem:[%s429 + $0x250] sm:$0xff]
        %v2417 = vld [vmem:[%s429 + $0x258] sm:$0xff]
        %v2418 = vld [vmem:[%s429 + $0x260] sm:$0xff]
        %v2419 = vld [vmem:[%s429 + $0x268] sm:$0xff]
        %v2420 = vld [vmem:[%s429 + $0x270] sm:$0xff]
        %v2421 = vld [vmem:[%s429 + $0x278] sm:$0xff]
        %v2422 = vld [vmem:[%s429 + $0x280] sm:$0xff]
        %v2423 = vld [vmem:[%s429 + $0x288] sm:$0xff]
        %v2424 = vld [vmem:[%s429 + $0x290] sm:$0xff]
        %v2425 = vld [vmem:[%s429 + $0x298] sm:$0xff]
        %v2426 = vld [vmem:[%s429 + $0x2a0] sm:$0xff]
        %v2427 = vld [vmem:[%s429 + $0x2a8] sm:$0xff]
        %v2428 = vld [vmem:[%s429 + $0x2b0] sm:$0xff]
        %v2429 = vld [vmem:[%s429 + $0x2b8] sm:$0xff]
        %v2430 = vld [vmem:[%s429 + $0x2c0] sm:$0xff]
        %v2431 = vld [vmem:[%s429 + $0x2c8] sm:$0xff]
        %v2432 = vld [vmem:[%s429 + $0x2d0] sm:$0xff]
        %v2433 = vld [vmem:[%s429 + $0x2d8] sm:$0xff]
        %v2434 = vld [vmem:[%s429 + $0x2e0] sm:$0xff]
        %v2435 = vld [vmem:[%s429 + $0x2e8] sm:$0xff]
        %v2436 = vld [vmem:[%s429 + $0x2f0] sm:$0xff]
        %v2437 = vld [vmem:[%s429 + $0x2f8] sm:$0xff]
        %v2438 = vld [vmem:[%s429 + $0x300] sm:$0xff]
        %v2439 = vld [vmem:[%s429 + $0x308] sm:$0xff]
        %v2440 = vld [vmem:[%s429 + $0x310] sm:$0xff]
        %v2441 = vld [vmem:[%s429 + $0x318] sm:$0xff]
        %v2442 = vld [vmem:[%s429 + $0x320] sm:$0xff]
        %v2443 = vld [vmem:[%s429 + $0x328] sm:$0xff]
        %v2444 = vld [vmem:[%s429 + $0x330] sm:$0xff]
        %v2445 = vld [vmem:[%s429 + $0x338] sm:$0xff]
        %v2446 = vld [vmem:[%s429 + $0x340] sm:$0xff]
        %v2447 = vld [vmem:[%s429 + $0x348] sm:$0xff]
        %v2448 = vld [vmem:[%s429 + $0x350] sm:$0xff]
        %v2449 = vld [vmem:[%s429 + $0x358] sm:$0xff]
        %v2450 = vld [vmem:[%s429 + $0x360] sm:$0xff]
        %v2451 = vld [vmem:[%s429 + $0x368] sm:$0xff]
        %v2452 = vld [vmem:[%s429 + $0x370] sm:$0xff]
        %v2453 = vld [vmem:[%s429 + $0x378] sm:$0xff]
        %v2454 = vld [vmem:[%s429 + $0x380] sm:$0xff]
        %v2455 = vld [vmem:[%s429 + $0x388] sm:$0xff]
        %v2456 = vld [vmem:[%s429 + $0x390] sm:$0xff]
        %v2457 = vld [vmem:[%s429 + $0x398] sm:$0xff]
        %v2458 = vld [vmem:[%s429 + $0x3a0] sm:$0xff]
        %v2459 = vld [vmem:[%s429 + $0x3a8] sm:$0xff]
        %v2460 = vld [vmem:[%s429 + $0x3b0] sm:$0xff]
        %v2461 = vld [vmem:[%s429 + $0x3b8] sm:$0xff]
        %v2462 = vld [vmem:[%s429 + $0x3c0] sm:$0xff]
        %v2463 = vld [vmem:[%s429 + $0x3c8] sm:$0xff]
        %v2464 = vld [vmem:[%s429 + $0x3d0] sm:$0xff]
        %v2465 = vld [vmem:[%s429 + $0x3d8] sm:$0xff]
        %v2466 = vld [vmem:[%s429 + $0x3e0] sm:$0xff]
        %v2467 = vld [vmem:[%s429 + $0x3e8] sm:$0xff]
        %v2468 = vld [vmem:[%s429 + $0x3f0] sm:$0xff]
        %v2469 = vld [vmem:[%s429 + $0x3f8] sm:$0xff]
        %v2470 = vld [vmem:[%s429 + $0x400] sm:$0xff]
        %v2471 = vld [vmem:[%s429 + $0x408] sm:$0xff]
        %v2472 = vld [vmem:[%s429 + $0x410] sm:$0xff]
        %v2473 = vld [vmem:[%s429 + $0x418] sm:$0xff]
        %v2474 = vld [vmem:[%s429 + $0x420] sm:$0xff]
        %v2475 = vld [vmem:[%s429 + $0x428] sm:$0xff]
        %v2476 = vld [vmem:[%s429 + $0x430] sm:$0xff]
        %v2477 = vld [vmem:[%s429 + $0x438] sm:$0xff]
        %v2478 = vld [vmem:[%s429 + $0x440] sm:$0xff]
        %v2479 = vld [vmem:[%s429 + $0x448] sm:$0xff]
        %v2480 = vld [vmem:[%s429 + $0x450] sm:$0xff]
        %v2481 = vld [vmem:[%s429 + $0x458] sm:$0xff]
        %v2482 = vld [vmem:[%s429 + $0x460] sm:$0xff]
        %v2483 = vld [vmem:[%s429 + $0x468] sm:$0xff]
        %v2484 = vld [vmem:[%s429 + $0x470] sm:$0xff]
        %v2485 = vld [vmem:[%s429 + $0x478] sm:$0xff]
        %v2486 = vld [vmem:[%s429 + $0x480] sm:$0xff]
        %v2487 = vld [vmem:[%s429 + $0x488] sm:$0xff]
        %v2488 = vld [vmem:[%s429 + $0x490] sm:$0xff]
        %v2489 = vld [vmem:[%s429 + $0x498] sm:$0xff]
        %v2490 = vld [vmem:[%s429 + $0x4a0] sm:$0xff]
        %v2491 = vld [vmem:[%s429 + $0x4a8] sm:$0xff]
        %v2492 = vld [vmem:[%s429 + $0x4b0] sm:$0xff]
        %v2493 = vld [vmem:[%s429 + $0x4b8] sm:$0xff]
        %v2494 = vld [vmem:[%s429 + $0x4c0] sm:$0xff]
        %v2495 = vld [vmem:[%s429 + $0x4c8] sm:$0xff]
        %v2496 = vld [vmem:[%s429 + $0x4d0] sm:$0xff]
        %v2497 = vld [vmem:[%s429 + $0x4d8] sm:$0xff]
        %v2498 = vld [vmem:[%s429 + $0x4e0] sm:$0xff]
        %v2499 = vld [vmem:[%s429 + $0x4e8] sm:$0xff]
        %v2500 = vld [vmem:[%s429 + $0x4f0] sm:$0xff]
        %v2501 = vld [vmem:[%s429 + $0x4f8] sm:$0xff]
        %v2502 = vld [vmem:[%s429 + $0x500] sm:$0xff]
        %v2503 = vld [vmem:[%s429 + $0x508] sm:$0xff]
        %v2504 = vld [vmem:[%s429 + $0x510] sm:$0xff]
        %v2505 = vld [vmem:[%s429 + $0x518] sm:$0xff]
        %v2506 = vld [vmem:[%s429 + $0x520] sm:$0xff]
        %v2507 = vld [vmem:[%s429 + $0x528] sm:$0xff]
        %v2508 = vld [vmem:[%s429 + $0x530] sm:$0xff]
        %v2509 = vld [vmem:[%s429 + $0x538] sm:$0xff]
        %v2510 = vld [vmem:[%s429 + $0x540] sm:$0xff]
        %v2511 = vld [vmem:[%s429 + $0x548] sm:$0xff]
        %v2512 = vld [vmem:[%s429 + $0x550] sm:$0xff]
        %v2513 = vld [vmem:[%s429 + $0x558] sm:$0xff]
        %v2514 = vld [vmem:[%s429 + $0x560] sm:$0xff]
        %v2515 = vld [vmem:[%s429 + $0x568] sm:$0xff]
        %v2516 = vld [vmem:[%s429 + $0x570] sm:$0xff]
        %v2517 = vld [vmem:[%s429 + $0x578] sm:$0xff]
        %v2518 = vld [vmem:[%s429 + $0x580] sm:$0xff]
        %v2519 = vld [vmem:[%s429 + $0x588] sm:$0xff]
        %v2520 = vld [vmem:[%s429 + $0x590] sm:$0xff]
        %v2521 = vld [vmem:[%s429 + $0x598] sm:$0xff]
        %v2522 = vld [vmem:[%s429 + $0x5a0] sm:$0xff]
        %v2523 = vld [vmem:[%s429 + $0x5a8] sm:$0xff]
        %v2524 = vld [vmem:[%s429 + $0x5b0] sm:$0xff]
        %v2525 = vld [vmem:[%s429 + $0x5b8] sm:$0xff]
        %v2526 = vld [vmem:[%s429 + $0x5c0] sm:$0xff]
        %v2527 = vld [vmem:[%s429 + $0x5c8] sm:$0xff]
        %v2528 = vld [vmem:[%s429 + $0x5d0] sm:$0xff]
        %v2529 = vld [vmem:[%s429 + $0x5d8] sm:$0xff]
        %v2530 = vld [vmem:[%s429 + $0x5e0] sm:$0xff]
        %v2531 = vld [vmem:[%s429 + $0x5e8] sm:$0xff]
        %v2532 = vld [vmem:[%s429 + $0x5f0] sm:$0xff]
        %v2533 = vld [vmem:[%s429 + $0x5f8] sm:$0xff]
        %v2534 = vld [vmem:[%s429 + $0x600] sm:$0xff]
        %v2535 = vld [vmem:[%s429 + $0x608] sm:$0xff]
        %v2536 = vld [vmem:[%s429 + $0x610] sm:$0xff]
        %v2537 = vld [vmem:[%s429 + $0x618] sm:$0xff]
        %v2538 = vld [vmem:[%s429 + $0x620] sm:$0xff]
        %v2539 = vld [vmem:[%s429 + $0x628] sm:$0xff]
        %v2540 = vld [vmem:[%s429 + $0x630] sm:$0xff]
        %v2541 = vld [vmem:[%s429 + $0x638] sm:$0xff]
        %v2542 = vld [vmem:[%s429 + $0x640] sm:$0xff]
        %v2543 = vld [vmem:[%s429 + $0x648] sm:$0xff]
        %v2544 = vld [vmem:[%s429 + $0x650] sm:$0xff]
        %v2545 = vld [vmem:[%s429 + $0x658] sm:$0xff]
        %v2546 = vld [vmem:[%s429 + $0x660] sm:$0xff]
        %v2547 = vld [vmem:[%s429 + $0x668] sm:$0xff]
        %v2548 = vld [vmem:[%s429 + $0x670] sm:$0xff]
        %v2549 = vld [vmem:[%s429 + $0x678] sm:$0xff]
        %v2550 = vld [vmem:[%s429 + $0x680] sm:$0xff]
        %v2551 = vld [vmem:[%s429 + $0x688] sm:$0xff]
        %v2552 = vld [vmem:[%s429 + $0x690] sm:$0xff]
        %v2553 = vld [vmem:[%s429 + $0x698] sm:$0xff]
        %v2554 = vld [vmem:[%s429 + $0x6a0] sm:$0xff]
        %v2555 = vld [vmem:[%s429 + $0x6a8] sm:$0xff]
        %v2556 = vld [vmem:[%s429 + $0x6b0] sm:$0xff]
        %v2557 = vld [vmem:[%s429 + $0x6b8] sm:$0xff]
        %v2558 = vld [vmem:[%s429 + $0x6c0] sm:$0xff]
        %v2559 = vld [vmem:[%s429 + $0x6c8] sm:$0xff]
        %v2560 = vld [vmem:[%s429 + $0x6d0] sm:$0xff]
        %v2561 = vld [vmem:[%s429 + $0x6d8] sm:$0xff]
        %v2562 = vld [vmem:[%s429 + $0x6e0] sm:$0xff]
        %v2563 = vld [vmem:[%s429 + $0x6e8] sm:$0xff]
        %v2564 = vld [vmem:[%s429 + $0x6f0] sm:$0xff]
        %v2565 = vld [vmem:[%s429 + $0x6f8] sm:$0xff]
        %v2566 = vld [vmem:[%s429 + $0x700] sm:$0xff]
        %v2567 = vld [vmem:[%s429 + $0x708] sm:$0xff]
        %v2568 = vld [vmem:[%s429 + $0x710] sm:$0xff]
        %v2569 = vld [vmem:[%s429 + $0x718] sm:$0xff]
        %v2570 = vld [vmem:[%s429 + $0x720] sm:$0xff]
        %v2571 = vld [vmem:[%s429 + $0x728] sm:$0xff]
        %v2572 = vld [vmem:[%s429 + $0x730] sm:$0xff]
        %v2573 = vld [vmem:[%s429 + $0x738] sm:$0xff]
        %v2574 = vld [vmem:[%s429 + $0x740] sm:$0xff]
        %v2575 = vld [vmem:[%s429 + $0x748] sm:$0xff]
        %v2576 = vld [vmem:[%s429 + $0x750] sm:$0xff]
        %v2577 = vld [vmem:[%s429 + $0x758] sm:$0xff]
        %v2578 = vld [vmem:[%s429 + $0x760] sm:$0xff]
        %v2579 = vld [vmem:[%s429 + $0x768] sm:$0xff]
        %v2580 = vld [vmem:[%s429 + $0x770] sm:$0xff]
        %v2581 = vld [vmem:[%s429 + $0x778] sm:$0xff]
        %v2582 = vld [vmem:[%s429 + $0x780] sm:$0xff]
        %v2583 = vld [vmem:[%s429 + $0x788] sm:$0xff]
        %v2584 = vld [vmem:[%s429 + $0x790] sm:$0xff]
        %v2585 = vld [vmem:[%s429 + $0x798] sm:$0xff]
        %v2586 = vld [vmem:[%s429 + $0x7a0] sm:$0xff]
        %v2587 = vld [vmem:[%s429 + $0x7a8] sm:$0xff]
        %v2588 = vld [vmem:[%s429 + $0x7b0] sm:$0xff]
        %v2589 = vld [vmem:[%s429 + $0x7b8] sm:$0xff]
        %v2590 = vld [vmem:[%s429 + $0x7c0] sm:$0xff]
        %v2591 = vld [vmem:[%s429 + $0x7c8] sm:$0xff]
        %v2592 = vld [vmem:[%s429 + $0x7d0] sm:$0xff]
        %v2593 = vld [vmem:[%s429 + $0x7d8] sm:$0xff]
        %v2594 = vld [vmem:[%s429 + $0x7e0] sm:$0xff]
        %v2595 = vld [vmem:[%s429 + $0x7e8] sm:$0xff]
        %v2596 = vld [vmem:[%s429 + $0x7f0] sm:$0xff]
        %v2597 = vld [vmem:[%s429 + $0x7f8] sm:$0xff]
        %v2598 = vld [vmem:[%s429 + $0x800] sm:$0xff]
        %v2599 = vld [vmem:[%s429 + $0x808] sm:$0xff]
        %v2600 = vld [vmem:[%s429 + $0x810] sm:$0xff]
        %v2601 = vld [vmem:[%s429 + $0x818] sm:$0xff]
        %v2602 = vld [vmem:[%s429 + $0x820] sm:$0xff]
        %v2603 = vld [vmem:[%s429 + $0x828] sm:$0xff]
        %v2604 = vld [vmem:[%s429 + $0x830] sm:$0xff]
        %v2605 = vld [vmem:[%s429 + $0x838] sm:$0xff]
        %v2606 = vld [vmem:[%s429 + $0x840] sm:$0xff]
        %v2607 = vld [vmem:[%s429 + $0x848] sm:$0xff]
        %v2608 = vld [vmem:[%s429 + $0x850] sm:$0xff]
        %v2609 = vld [vmem:[%s429 + $0x858] sm:$0xff]
        %v2610 = vld [vmem:[%s429 + $0x860] sm:$0xff]
        %v2611 = vld [vmem:[%s429 + $0x868] sm:$0xff]
        %v2612 = vld [vmem:[%s429 + $0x870] sm:$0xff]
        %v2613 = vld [vmem:[%s429 + $0x878] sm:$0xff]
        %v2614 = vld [vmem:[%s429 + $0x880] sm:$0xff]
        %v2615 = vld [vmem:[%s429 + $0x888] sm:$0xff]
        %v2616 = vld [vmem:[%s429 + $0x890] sm:$0xff]
        %v2617 = vld [vmem:[%s429 + $0x898] sm:$0xff]
        %v2618 = vld [vmem:[%s429 + $0x8a0] sm:$0xff]
        %v2619 = vld [vmem:[%s429 + $0x8a8] sm:$0xff]
        %v2620 = vld [vmem:[%s429 + $0x8b0] sm:$0xff]
        %v2621 = vld [vmem:[%s429 + $0x8b8] sm:$0xff]
        %v2622 = vld [vmem:[%s429 + $0x8c0] sm:$0xff]
        %v2623 = vld [vmem:[%s429 + $0x8c8] sm:$0xff]
        %v2624 = vld [vmem:[%s429 + $0x8d0] sm:$0xff]
        %v2625 = vld [vmem:[%s429 + $0x8d8] sm:$0xff]
        %v2626 = vld [vmem:[%s429 + $0x8e0] sm:$0xff]
        %v2627 = vld [vmem:[%s429 + $0x8e8] sm:$0xff]
        %v2628 = vld [vmem:[%s429 + $0x8f0] sm:$0xff]
        %v2629 = vld [vmem:[%s429 + $0x8f8] sm:$0xff]
        %v2630 = vld [vmem:[%s429 + $0x900] sm:$0xff]
        %v2631 = vld [vmem:[%s429 + $0x908] sm:$0xff]
        %v2632 = vld [vmem:[%s429 + $0x910] sm:$0xff]
        %v2633 = vld [vmem:[%s429 + $0x918] sm:$0xff]
        %v2634 = vld [vmem:[%s429 + $0x920] sm:$0xff]
        %v2635 = vld [vmem:[%s429 + $0x928] sm:$0xff]
        %v2636 = vld [vmem:[%s429 + $0x930] sm:$0xff]
        %v2637 = vld [vmem:[%s429 + $0x938] sm:$0xff]
        %v2638 = vld [vmem:[%s429 + $0x940] sm:$0xff]
        %v2639 = vld [vmem:[%s429 + $0x948] sm:$0xff]
        %v2640 = vld [vmem:[%s429 + $0x950] sm:$0xff]
        %v2641 = vld [vmem:[%s429 + $0x958] sm:$0xff]
        %v2642 = vld [vmem:[%s429 + $0x960] sm:$0xff]
        %v2643 = vld [vmem:[%s429 + $0x968] sm:$0xff]
        %v2644 = vld [vmem:[%s429 + $0x970] sm:$0xff]
        %v2645 = vld [vmem:[%s429 + $0x978] sm:$0xff]
        %v2646 = vld [vmem:[%s429 + $0x980] sm:$0xff]
        %v2647 = vld [vmem:[%s429 + $0x988] sm:$0xff]
        %v2648 = vld [vmem:[%s429 + $0x990] sm:$0xff]
        %v2649 = vld [vmem:[%s429 + $0x998] sm:$0xff]
        %v2650 = vld [vmem:[%s429 + $0x9a0] sm:$0xff]
        %v2651 = vld [vmem:[%s429 + $0x9a8] sm:$0xff]
        %v2652 = vld [vmem:[%s429 + $0x9b0] sm:$0xff]
        %v2653 = vld [vmem:[%s429 + $0x9b8] sm:$0xff]
        %v2654 = vld [vmem:[%s429 + $0x9c0] sm:$0xff]
        %v2655 = vld [vmem:[%s429 + $0x9c8] sm:$0xff]
        %v2656 = vld [vmem:[%s429 + $0x9d0] sm:$0xff]
        %v2657 = vld [vmem:[%s429 + $0x9d8] sm:$0xff]
        %v2658 = vld [vmem:[%s429 + $0x9e0] sm:$0xff]
        %v2659 = vld [vmem:[%s429 + $0x9e8] sm:$0xff]
        %v2660 = vld [vmem:[%s429 + $0x9f0] sm:$0xff]
        %v2661 = vld [vmem:[%s429 + $0x9f8] sm:$0xff]
        %v2662 = vld [vmem:[%s429 + $0xa00] sm:$0xff]
        %v2663 = vld [vmem:[%s429 + $0xa08] sm:$0xff]
        %v2664 = vld [vmem:[%s429 + $0xa10] sm:$0xff]
        %v2665 = vld [vmem:[%s429 + $0xa18] sm:$0xff]
        %v2666 = vld [vmem:[%s429 + $0xa20] sm:$0xff]
        %v2667 = vld [vmem:[%s429 + $0xa28] sm:$0xff]
        %v2668 = vld [vmem:[%s429 + $0xa30] sm:$0xff]
        %v2669 = vld [vmem:[%s429 + $0xa38] sm:$0xff]
        %v2670 = vld [vmem:[%s429 + $0xa40] sm:$0xff]
        %v2671 = vld [vmem:[%s429 + $0xa48] sm:$0xff]
        %v2672 = vld [vmem:[%s429 + $0xa50] sm:$0xff]
        %v2673 = vld [vmem:[%s429 + $0xa58] sm:$0xff]
        %v2674 = vld [vmem:[%s429 + $0xa60] sm:$0xff]
        %v2675 = vld [vmem:[%s429 + $0xa68] sm:$0xff]
        %v2676 = vld [vmem:[%s429 + $0xa70] sm:$0xff]
        %v2677 = vld [vmem:[%s429 + $0xa78] sm:$0xff]
        %v2678 = vld [vmem:[%s429 + $0xa80] sm:$0xff]
        %v2679 = vld [vmem:[%s429 + $0xa88] sm:$0xff]
        %v2680 = vld [vmem:[%s429 + $0xa90] sm:$0xff]
        %v2681 = vld [vmem:[%s429 + $0xa98] sm:$0xff]
        %v2682 = vld [vmem:[%s429 + $0xaa0] sm:$0xff]
        %v2683 = vld [vmem:[%s429 + $0xaa8] sm:$0xff]
        %v2684 = vld [vmem:[%s429 + $0xab0] sm:$0xff]
        %v2685 = vld [vmem:[%s429 + $0xab8] sm:$0xff]
        %v2686 = vld [vmem:[%s429 + $0xac0] sm:$0xff]
        %v2687 = vld [vmem:[%s429 + $0xac8] sm:$0xff]
        %v2688 = vld [vmem:[%s429 + $0xad0] sm:$0xff]
        %v2689 = vld [vmem:[%s429 + $0xad8] sm:$0xff]
        %v2690 = vld [vmem:[%s429 + $0xae0] sm:$0xff]
        %v2691 = vld [vmem:[%s429 + $0xae8] sm:$0xff]
        %v2692 = vld [vmem:[%s429 + $0xaf0] sm:$0xff]
        %v2693 = vld [vmem:[%s429 + $0xaf8] sm:$0xff]
        %v2694 = vld [vmem:[%s429 + $0xb00] sm:$0xff]
        %v2695 = vld [vmem:[%s429 + $0xb08] sm:$0xff]
        %v2696 = vld [vmem:[%s429 + $0xb10] sm:$0xff]
        %v2697 = vld [vmem:[%s429 + $0xb18] sm:$0xff]
        %v2698 = vld [vmem:[%s429 + $0xb20] sm:$0xff]
        %v2699 = vld [vmem:[%s429 + $0xb28] sm:$0xff]
        %v2700 = vld [vmem:[%s429 + $0xb30] sm:$0xff]
        %v2701 = vld [vmem:[%s429 + $0xb38] sm:$0xff]
        %v2702 = vld [vmem:[%s429 + $0xb40] sm:$0xff]
        %v2703 = vld [vmem:[%s429 + $0xb48] sm:$0xff]
        %v2704 = vld [vmem:[%s429 + $0xb50] sm:$0xff]
        %v2705 = vld [vmem:[%s429 + $0xb58] sm:$0xff]
        %v2706 = vld [vmem:[%s429 + $0xb60] sm:$0xff]
        %v2707 = vld [vmem:[%s429 + $0xb68] sm:$0xff]
        %v2708 = vld [vmem:[%s429 + $0xb70] sm:$0xff]
        %v2709 = vld [vmem:[%s429 + $0xb78] sm:$0xff]
        %v2710 = vld [vmem:[%s429 + $0xb80] sm:$0xff]
        %v2711 = vld [vmem:[%s429 + $0xb88] sm:$0xff]
        %v2712 = vld [vmem:[%s429 + $0xb90] sm:$0xff]
        %v2713 = vld [vmem:[%s429 + $0xb98] sm:$0xff]
        %v2714 = vld [vmem:[%s429 + $0xba0] sm:$0xff]
        %v2715 = vld [vmem:[%s429 + $0xba8] sm:$0xff]
        %v2716 = vld [vmem:[%s429 + $0xbb0] sm:$0xff]
        %v2717 = vld [vmem:[%s429 + $0xbb8] sm:$0xff]
        %v2718 = vld [vmem:[%s429 + $0xbc0] sm:$0xff]
        %v2719 = vld [vmem:[%s429 + $0xbc8] sm:$0xff]
        %v2720 = vld [vmem:[%s429 + $0xbd0] sm:$0xff]
        %v2721 = vld [vmem:[%s429 + $0xbd8] sm:$0xff]
        %v2722 = vld [vmem:[%s429 + $0xbe0] sm:$0xff]
        %v2723 = vld [vmem:[%s429 + $0xbe8] sm:$0xff]
        %v2724 = vld [vmem:[%s429 + $0xbf0] sm:$0xff]
        %v2725 = vld [vmem:[%s429 + $0xbf8] sm:$0xff]
        %v2726 = vld [vmem:[%s429 + $0xc00] sm:$0xff]
        %v2727 = vld [vmem:[%s429 + $0xc08] sm:$0xff]
        %v2728 = vld [vmem:[%s429 + $0xc10] sm:$0xff]
        %v2729 = vld [vmem:[%s429 + $0xc18] sm:$0xff]
        %v2730 = vld [vmem:[%s429 + $0xc20] sm:$0xff]
        %v2731 = vld [vmem:[%s429 + $0xc28] sm:$0xff]
        %v2732 = vld [vmem:[%s429 + $0xc30] sm:$0xff]
        %v2733 = vld [vmem:[%s429 + $0xc38] sm:$0xff]
        %v2734 = vld [vmem:[%s429 + $0xc40] sm:$0xff]
        %v2735 = vld [vmem:[%s429 + $0xc48] sm:$0xff]
        %v2736 = vld [vmem:[%s429 + $0xc50] sm:$0xff]
        %v2737 = vld [vmem:[%s429 + $0xc58] sm:$0xff]
        %v2738 = vld [vmem:[%s429 + $0xc60] sm:$0xff]
        %v2739 = vld [vmem:[%s429 + $0xc68] sm:$0xff]
        %v2740 = vld [vmem:[%s429 + $0xc70] sm:$0xff]
        %v2741 = vld [vmem:[%s429 + $0xc78] sm:$0xff]
        %v2742 = vld [vmem:[%s429 + $0xc80] sm:$0xff]
        %v2743 = vld [vmem:[%s429 + $0xc88] sm:$0xff]
        %v2744 = vld [vmem:[%s429 + $0xc90] sm:$0xff]
        %v2745 = vld [vmem:[%s429 + $0xc98] sm:$0xff]
        %v2746 = vld [vmem:[%s429 + $0xca0] sm:$0xff]
        %v2747 = vld [vmem:[%s429 + $0xca8] sm:$0xff]
        %v2748 = vld [vmem:[%s429 + $0xcb0] sm:$0xff]
        %v2749 = vld [vmem:[%s429 + $0xcb8] sm:$0xff]
        %v2750 = vld [vmem:[%s429 + $0xcc0] sm:$0xff]
        %v2751 = vld [vmem:[%s429 + $0xcc8] sm:$0xff]
        %v2752 = vld [vmem:[%s429 + $0xcd0] sm:$0xff]
        %v2753 = vld [vmem:[%s429 + $0xcd8] sm:$0xff]
        %v2754 = vld [vmem:[%s429 + $0xce0] sm:$0xff]
        %v2755 = vld [vmem:[%s429 + $0xce8] sm:$0xff]
        %v2756 = vld [vmem:[%s429 + $0xcf0] sm:$0xff]
        %v2757 = vld [vmem:[%s429 + $0xcf8] sm:$0xff]
        %v2758 = vld [vmem:[%s429 + $0xd00] sm:$0xff]
        %v2759 = vld [vmem:[%s429 + $0xd08] sm:$0xff]
        %v2760 = vld [vmem:[%s429 + $0xd10] sm:$0xff]
        %v2761 = vld [vmem:[%s429 + $0xd18] sm:$0xff]
        %v2762 = vld [vmem:[%s429 + $0xd20] sm:$0xff]
        %v2763 = vld [vmem:[%s429 + $0xd28] sm:$0xff]
        %v2764 = vld [vmem:[%s429 + $0xd30] sm:$0xff]
        %v2765 = vld [vmem:[%s429 + $0xd38] sm:$0xff]
        %v2766 = vld [vmem:[%s429 + $0xd40] sm:$0xff]
        %v2767 = vld [vmem:[%s429 + $0xd48] sm:$0xff]
        %v2768 = vld [vmem:[%s429 + $0xd50] sm:$0xff]
        %v2769 = vld [vmem:[%s429 + $0xd58] sm:$0xff]
        %v2770 = vld [vmem:[%s429 + $0xd60] sm:$0xff]
        %v2771 = vld [vmem:[%s429 + $0xd68] sm:$0xff]
        %v2772 = vld [vmem:[%s429 + $0xd70] sm:$0xff]
        %v2773 = vld [vmem:[%s429 + $0xd78] sm:$0xff]
        %v2774 = vld [vmem:[%s429 + $0xd80] sm:$0xff]
        %v2775 = vld [vmem:[%s429 + $0xd88] sm:$0xff]
        %v2776 = vld [vmem:[%s429 + $0xd90] sm:$0xff]
        %v2777 = vld [vmem:[%s429 + $0xd98] sm:$0xff]
        %v2778 = vld [vmem:[%s429 + $0xda0] sm:$0xff]
        %v2779 = vld [vmem:[%s429 + $0xda8] sm:$0xff]
        %v2780 = vld [vmem:[%s429 + $0xdb0] sm:$0xff]
        %v2781 = vld [vmem:[%s429 + $0xdb8] sm:$0xff]
        %v2782 = vld [vmem:[%s429 + $0xdc0] sm:$0xff]
        %v2783 = vld [vmem:[%s429 + $0xdc8] sm:$0xff]
        %v2784 = vld [vmem:[%s429 + $0xdd0] sm:$0xff]
        %v2785 = vld [vmem:[%s429 + $0xdd8] sm:$0xff]
        %v2786 = vld [vmem:[%s429 + $0xde0] sm:$0xff]
        %v2787 = vld [vmem:[%s429 + $0xde8] sm:$0xff]
        %v2788 = vld [vmem:[%s429 + $0xdf0] sm:$0xff]
        %v2789 = vld [vmem:[%s429 + $0xdf8] sm:$0xff]
        %v2790 = vld [vmem:[%s429 + $0xe00] sm:$0xff]
        %v2791 = vld [vmem:[%s429 + $0xe08] sm:$0xff]
        %v2792 = vld [vmem:[%s429 + $0xe10] sm:$0xff]
        %v2793 = vld [vmem:[%s429 + $0xe18] sm:$0xff]
        %v2794 = vld [vmem:[%s429 + $0xe20] sm:$0xff]
        %v2795 = vld [vmem:[%s429 + $0xe28] sm:$0xff]
        %v2796 = vld [vmem:[%s429 + $0xe30] sm:$0xff]
        %v2797 = vld [vmem:[%s429 + $0xe38] sm:$0xff]
        %v2798 = vld [vmem:[%s429 + $0xe40] sm:$0xff]
        %v2799 = vld [vmem:[%s429 + $0xe48] sm:$0xff]
        %v2800 = vld [vmem:[%s429 + $0xe50] sm:$0xff]
        %v2801 = vld [vmem:[%s429 + $0xe58] sm:$0xff]
        %v2802 = vld [vmem:[%s429 + $0xe60] sm:$0xff]
        %v2803 = vld [vmem:[%s429 + $0xe68] sm:$0xff]
        %v2804 = vld [vmem:[%s429 + $0xe70] sm:$0xff]
        %v2805 = vld [vmem:[%s429 + $0xe78] sm:$0xff]
        %v2806 = vld [vmem:[%s429 + $0xe80] sm:$0xff]
        %v2807 = vld [vmem:[%s429 + $0xe88] sm:$0xff]
        %v2808 = vld [vmem:[%s429 + $0xe90] sm:$0xff]
        %v2809 = vld [vmem:[%s429 + $0xe98] sm:$0xff]
        %v2810 = vld [vmem:[%s429 + $0xea0] sm:$0xff]
        %v2811 = vld [vmem:[%s429 + $0xea8] sm:$0xff]
        %v2812 = vld [vmem:[%s429 + $0xeb0] sm:$0xff]
        %v2813 = vld [vmem:[%s429 + $0xeb8] sm:$0xff]
        %v2814 = vld [vmem:[%s429 + $0xec0] sm:$0xff]
        %v2815 = vld [vmem:[%s429 + $0xec8] sm:$0xff]
        %v2816 = vld [vmem:[%s429 + $0xed0] sm:$0xff]
        %v2817 = vld [vmem:[%s429 + $0xed8] sm:$0xff]
        %v2818 = vld [vmem:[%s429 + $0xee0] sm:$0xff]
        %v2819 = vld [vmem:[%s429 + $0xee8] sm:$0xff]
        %v2820 = vld [vmem:[%s429 + $0xef0] sm:$0xff]
        %v2821 = vld [vmem:[%s429 + $0xef8] sm:$0xff]
        %v2822 = vld [vmem:[%s429 + $0xf00] sm:$0xff]
        %v2823 = vld [vmem:[%s429 + $0xf08] sm:$0xff]
        %v2824 = vld [vmem:[%s429 + $0xf10] sm:$0xff]
        %v2825 = vld [vmem:[%s429 + $0xf18] sm:$0xff]
        %v2826 = vld [vmem:[%s429 + $0xf20] sm:$0xff]
        %v2827 = vld [vmem:[%s429 + $0xf28] sm:$0xff]
        %v2828 = vld [vmem:[%s429 + $0xf30] sm:$0xff]
        %v2829 = vld [vmem:[%s429 + $0xf38] sm:$0xff]
        %v2830 = vld [vmem:[%s429 + $0xf40] sm:$0xff]
        %v2831 = vld [vmem:[%s429 + $0xf48] sm:$0xff]
        %v2832 = vld [vmem:[%s429 + $0xf50] sm:$0xff]
        %v2833 = vld [vmem:[%s429 + $0xf58] sm:$0xff]
        %v2834 = vld [vmem:[%s429 + $0xf60] sm:$0xff]
        %v2835 = vld [vmem:[%s429 + $0xf68] sm:$0xff]
        %v2836 = vld [vmem:[%s429 + $0xf70] sm:$0xff]
        %v2837 = vld [vmem:[%s429 + $0xf78] sm:$0xff]
        %v2838 = vld [vmem:[%s429 + $0xf80] sm:$0xff]
        %v2839 = vld [vmem:[%s429 + $0xf88] sm:$0xff]
        %v2840 = vld [vmem:[%s429 + $0xf90] sm:$0xff]
        %v2841 = vld [vmem:[%s429 + $0xf98] sm:$0xff]
        %v2842 = vld [vmem:[%s429 + $0xfa0] sm:$0xff]
        %v2843 = vld [vmem:[%s429 + $0xfa8] sm:$0xff]
        %v2844 = vld [vmem:[%s429 + $0xfb0] sm:$0xff]
        %v2845 = vld [vmem:[%s429 + $0xfb8] sm:$0xff]
        %v2846 = vld [vmem:[%s429 + $0xfc0] sm:$0xff]
        %v2847 = vld [vmem:[%s429 + $0xfc8] sm:$0xff]
        %v2848 = vld [vmem:[%s429 + $0xfd0] sm:$0xff]
        %v2849 = vld [vmem:[%s429 + $0xfd8] sm:$0xff]
        %v2850 = vld [vmem:[%s429 + $0xfe0] sm:$0xff]
        %v2851 = vld [vmem:[%s429 + $0xfe8] sm:$0xff]
        %v2852 = vld [vmem:[%s429 + $0xff0] sm:$0xff]
        %v2853 = vld [vmem:[%s429 + $0xff8] sm:$0xff]
        %v2854 = vld [vmem:[%s429 + $0x1000] sm:$0xff]
        %v2855 = vld [vmem:[%s429 + $0x1008] sm:$0xff]
        %v2856 = vld [vmem:[%s429 + $0x1010] sm:$0xff]
        %v2857 = vld [vmem:[%s429 + $0x1018] sm:$0xff]
        %v2858 = vld [vmem:[%s429 + $0x1020] sm:$0xff]
        %v2859 = vld [vmem:[%s429 + $0x1028] sm:$0xff]
        %v2860 = vld [vmem:[%s429 + $0x1030] sm:$0xff]
        %v2861 = vld [vmem:[%s429 + $0x1038] sm:$0xff]
        %v2862 = vld [vmem:[%s429 + $0x1040] sm:$0xff]
        %v2863 = vld [vmem:[%s429 + $0x1048] sm:$0xff]
        %v2864 = vld [vmem:[%s429 + $0x1050] sm:$0xff]
        %v2865 = vld [vmem:[%s429 + $0x1058] sm:$0xff]
        %v2866 = vld [vmem:[%s429 + $0x1060] sm:$0xff]
        %v2867 = vld [vmem:[%s429 + $0x1068] sm:$0xff]
        %v2868 = vld [vmem:[%s429 + $0x1070] sm:$0xff]
        %v2869 = vld [vmem:[%s429 + $0x1078] sm:$0xff]
        %v2870 = vld [vmem:[%s429 + $0x1080] sm:$0xff]
        %v2871 = vld [vmem:[%s429 + $0x1088] sm:$0xff]
        %v2872 = vld [vmem:[%s429 + $0x1090] sm:$0xff]
        %v2873 = vld [vmem:[%s429 + $0x1098] sm:$0xff]
        %v2874 = vld [vmem:[%s429 + $0x10a0] sm:$0xff]
        %v2875 = vld [vmem:[%s429 + $0x10a8] sm:$0xff]
        %v2876 = vld [vmem:[%s429 + $0x10b0] sm:$0xff]
        %v2877 = vld [vmem:[%s429 + $0x10b8] sm:$0xff]
        %v2878 = vld [vmem:[%s429 + $0x10c0] sm:$0xff]
        %v2879 = vld [vmem:[%s429 + $0x10c8] sm:$0xff]
        %v2880 = vld [vmem:[%s429 + $0x10d0] sm:$0xff]
        %v2881 = vld [vmem:[%s429 + $0x10d8] sm:$0xff]
        %v2882 = vld [vmem:[%s429 + $0x10e0] sm:$0xff]
        %v2883 = vld [vmem:[%s429 + $0x10e8] sm:$0xff]
        %v2884 = vld [vmem:[%s429 + $0x10f0] sm:$0xff]
        %v2885 = vld [vmem:[%s429 + $0x10f8] sm:$0xff]
        %v2886 = vld [vmem:[%s429 + $0x1100] sm:$0xff]
        %v2887 = vld [vmem:[%s429 + $0x1108] sm:$0xff]
        %v2888 = vld [vmem:[%s429 + $0x1110] sm:$0xff]
        %v2889 = vld [vmem:[%s429 + $0x1118] sm:$0xff]
        %v2890 = vld [vmem:[%s429 + $0x1120] sm:$0xff]
        %v2891 = vld [vmem:[%s429 + $0x1128] sm:$0xff]
        %v2892 = vld [vmem:[%s429 + $0x1130] sm:$0xff]
        %v2893 = vld [vmem:[%s429 + $0x1138] sm:$0xff]
        %v2894 = vld [vmem:[%s429 + $0x1140] sm:$0xff]
        %v2895 = vld [vmem:[%s429 + $0x1148] sm:$0xff]
        %v2896 = vld [vmem:[%s429 + $0x1150] sm:$0xff]
        %v2897 = vld [vmem:[%s429 + $0x1158] sm:$0xff]
        %v2898 = vld [vmem:[%s429 + $0x1160] sm:$0xff]
        %v2899 = vld [vmem:[%s429 + $0x1168] sm:$0xff]
        %v2900 = vld [vmem:[%s429 + $0x1170] sm:$0xff]
        %v2901 = vld [vmem:[%s429 + $0x1178] sm:$0xff]
        %v2902 = vld [vmem:[%s429 + $0x1180] sm:$0xff]
        %v2903 = vld [vmem:[%s429 + $0x1188] sm:$0xff]
        %v2904 = vld [vmem:[%s429 + $0x1190] sm:$0xff]
        %v2905 = vld [vmem:[%s429 + $0x1198] sm:$0xff]
        %v2906 = vld [vmem:[%s429 + $0x11a0] sm:$0xff]
        %v2907 = vld [vmem:[%s429 + $0x11a8] sm:$0xff]
        %v2908 = vld [vmem:[%s429 + $0x11b0] sm:$0xff]
        %v2909 = vld [vmem:[%s429 + $0x11b8] sm:$0xff]
        %v2910 = vld [vmem:[%s429 + $0x11c0] sm:$0xff]
        %v2911 = vld [vmem:[%s429 + $0x11c8] sm:$0xff]
        %v2912 = vld [vmem:[%s429 + $0x11d0] sm:$0xff]
        %v2913 = vld [vmem:[%s429 + $0x11d8] sm:$0xff]
        %v2914 = vld [vmem:[%s429 + $0x11e0] sm:$0xff]
        %v2915 = vld [vmem:[%s429 + $0x11e8] sm:$0xff]
        %v2916 = vld [vmem:[%s429 + $0x11f0] sm:$0xff]
        %v2917 = vld [vmem:[%s429 + $0x11f8] sm:$0xff]
        %v2918 = vld [vmem:[%s429 + $0x1200] sm:$0xff]
        %v2919 = vld [vmem:[%s429 + $0x1208] sm:$0xff]
        %v2920 = vld [vmem:[%s429 + $0x1210] sm:$0xff]
        %v2921 = vld [vmem:[%s429 + $0x1218] sm:$0xff]
        %v2922 = vld [vmem:[%s429 + $0x1220] sm:$0xff]
        %v2923 = vld [vmem:[%s429 + $0x1228] sm:$0xff]
        %v2924 = vld [vmem:[%s429 + $0x1230] sm:$0xff]
        %v2925 = vld [vmem:[%s429 + $0x1238] sm:$0xff]
        %v2926 = vld [vmem:[%s429 + $0x1240] sm:$0xff]
        %v2927 = vld [vmem:[%s429 + $0x1248] sm:$0xff]
        %v2928 = vld [vmem:[%s429 + $0x1250] sm:$0xff]
        %v2929 = vld [vmem:[%s429 + $0x1258] sm:$0xff]
        %v2930 = vld [vmem:[%s429 + $0x1260] sm:$0xff]
        %v2931 = vld [vmem:[%s429 + $0x1268] sm:$0xff]
        %v2932 = vld [vmem:[%s429 + $0x1270] sm:$0xff]
        %v2933 = vld [vmem:[%s429 + $0x1278] sm:$0xff]
        %v2934 = vld [vmem:[%s429 + $0x1280] sm:$0xff]
        %v2935 = vld [vmem:[%s429 + $0x1288] sm:$0xff]
        %v2936 = vld [vmem:[%s429 + $0x1290] sm:$0xff]
        %v2937 = vld [vmem:[%s429 + $0x1298] sm:$0xff]
        %v2938 = vld [vmem:[%s429 + $0x12a0] sm:$0xff]
        %v2939 = vld [vmem:[%s429 + $0x12a8] sm:$0xff]
        %v2940 = vld [vmem:[%s429 + $0x12b0] sm:$0xff]
        %v2941 = vld [vmem:[%s429 + $0x12b8] sm:$0xff]
        %v2942 = vld [vmem:[%s429 + $0x12c0] sm:$0xff]
        %v2943 = vld [vmem:[%s429 + $0x12c8] sm:$0xff]
        %v2944 = vld [vmem:[%s429 + $0x12d0] sm:$0xff]
        %v2945 = vld [vmem:[%s429 + $0x12d8] sm:$0xff]
        %v2946 = vld [vmem:[%s429 + $0x12e0] sm:$0xff]
        %v2947 = vld [vmem:[%s429 + $0x12e8] sm:$0xff]
        %v2948 = vld [vmem:[%s429 + $0x12f0] sm:$0xff]
        %v2949 = vld [vmem:[%s429 + $0x12f8] sm:$0xff]
        %v2950 = vld [vmem:[%s429 + $0x1300] sm:$0xff]
        %v2951 = vld [vmem:[%s429 + $0x1308] sm:$0xff]
        %v2952 = vld [vmem:[%s429 + $0x1310] sm:$0xff]
        %v2953 = vld [vmem:[%s429 + $0x1318] sm:$0xff]
        %v2954 = vld [vmem:[%s429 + $0x1320] sm:$0xff]
        %v2955 = vld [vmem:[%s429 + $0x1328] sm:$0xff]
        %v2956 = vld [vmem:[%s429 + $0x1330] sm:$0xff]
        %v2957 = vld [vmem:[%s429 + $0x1338] sm:$0xff]
        %v2958 = vld [vmem:[%s429 + $0x1340] sm:$0xff]
        %v2959 = vld [vmem:[%s429 + $0x1348] sm:$0xff]
        %v2960 = vld [vmem:[%s429 + $0x1350] sm:$0xff]
        %v2961 = vld [vmem:[%s429 + $0x1358] sm:$0xff]
        %v2962 = vld [vmem:[%s429 + $0x1360] sm:$0xff]
        %v2963 = vld [vmem:[%s429 + $0x1368] sm:$0xff]
        %v2964 = vld [vmem:[%s429 + $0x1370] sm:$0xff]
        %v2965 = vld [vmem:[%s429 + $0x1378] sm:$0xff]
        %v2966 = vld [vmem:[%s429 + $0x1380] sm:$0xff]
        %v2967 = vld [vmem:[%s429 + $0x1388] sm:$0xff]
        %v2968 = vld [vmem:[%s429 + $0x1390] sm:$0xff]
        %v2969 = vld [vmem:[%s429 + $0x1398] sm:$0xff]
        %v2970 = vld [vmem:[%s429 + $0x13a0] sm:$0xff]
        %v2971 = vld [vmem:[%s429 + $0x13a8] sm:$0xff]
        %v2972 = vld [vmem:[%s429 + $0x13b0] sm:$0xff]
        %v2973 = vld [vmem:[%s429 + $0x13b8] sm:$0xff]
        %v2974 = vld [vmem:[%s429 + $0x13c0] sm:$0xff]
        %v2975 = vld [vmem:[%s429 + $0x13c8] sm:$0xff]
        %v2976 = vld [vmem:[%s429 + $0x13d0] sm:$0xff]
        %v2977 = vld [vmem:[%s429 + $0x13d8] sm:$0xff]
        %v2978 = vld [vmem:[%s429 + $0x13e0] sm:$0xff]
        %v2979 = vld [vmem:[%s429 + $0x13e8] sm:$0xff]
        %v2980 = vld [vmem:[%s429 + $0x13f0] sm:$0xff]
        %v2981 = vld [vmem:[%s429 + $0x13f8] sm:$0xff]
        %v2982 = vld [vmem:[%s429 + $0x1400] sm:$0xff]
        %v2983 = vld [vmem:[%s429 + $0x1408] sm:$0xff]
        %v2984 = vld [vmem:[%s429 + $0x1410] sm:$0xff]
        %v2985 = vld [vmem:[%s429 + $0x1418] sm:$0xff]
        %v2986 = vld [vmem:[%s429 + $0x1420] sm:$0xff]
        %v2987 = vld [vmem:[%s429 + $0x1428] sm:$0xff]
        %v2988 = vld [vmem:[%s429 + $0x1430] sm:$0xff]
        %v2989 = vld [vmem:[%s429 + $0x1438] sm:$0xff]
        %v2990 = vld [vmem:[%s429 + $0x1440] sm:$0xff]
        %v2991 = vld [vmem:[%s429 + $0x1448] sm:$0xff]
        %v2992 = vld [vmem:[%s429 + $0x1450] sm:$0xff]
        %v2993 = vld [vmem:[%s429 + $0x1458] sm:$0xff]
        %v2994 = vld [vmem:[%s429 + $0x1460] sm:$0xff]
        %v2995 = vld [vmem:[%s429 + $0x1468] sm:$0xff]
        %v2996 = vld [vmem:[%s429 + $0x1470] sm:$0xff]
        %v2997 = vld [vmem:[%s429 + $0x1478] sm:$0xff]
        %v2998 = vld [vmem:[%s429 + $0x1480] sm:$0xff]
        %v2999 = vld [vmem:[%s429 + $0x1488] sm:$0xff]
        %v3000 = vld [vmem:[%s429 + $0x1490] sm:$0xff]
        %v3001 = vld [vmem:[%s429 + $0x1498] sm:$0xff]
        %v3002 = vld [vmem:[%s429 + $0x14a0] sm:$0xff]
        %v3003 = vld [vmem:[%s429 + $0x14a8] sm:$0xff]
        %v3004 = vld [vmem:[%s429 + $0x14b0] sm:$0xff]
        %v3005 = vld [vmem:[%s429 + $0x14b8] sm:$0xff]
        %v3006 = vld [vmem:[%s429 + $0x14c0] sm:$0xff]
        %v3007 = vld [vmem:[%s429 + $0x14c8] sm:$0xff]
        %v3008 = vld [vmem:[%s429 + $0x14d0] sm:$0xff]
        %v3009 = vld [vmem:[%s429 + $0x14d8] sm:$0xff]
        %v3010 = vld [vmem:[%s429 + $0x14e0] sm:$0xff]
        %v3011 = vld [vmem:[%s429 + $0x14e8] sm:$0xff]
        %v3012 = vld [vmem:[%s429 + $0x14f0] sm:$0xff]
        %v3013 = vld [vmem:[%s429 + $0x14f8] sm:$0xff]
        %v3014 = vld [vmem:[%s429 + $0x1500] sm:$0xff]
        %v3015 = vld [vmem:[%s429 + $0x1508] sm:$0xff]
        %v3016 = vld [vmem:[%s429 + $0x1510] sm:$0xff]
        %v3017 = vld [vmem:[%s429 + $0x1518] sm:$0xff]
        %v3018 = vld [vmem:[%s429 + $0x1520] sm:$0xff]
        %v3019 = vld [vmem:[%s429 + $0x1528] sm:$0xff]
        %v3020 = vld [vmem:[%s429 + $0x1530] sm:$0xff]
        %v3021 = vld [vmem:[%s429 + $0x1538] sm:$0xff]
        %v3022 = vld [vmem:[%s429 + $0x1540] sm:$0xff]
        %v3023 = vld [vmem:[%s429 + $0x1548] sm:$0xff]
        %v3024 = vld [vmem:[%s429 + $0x1550] sm:$0xff]
        %v3025 = vld [vmem:[%s429 + $0x1558] sm:$0xff]
        %v3026 = vld [vmem:[%s429 + $0x1560] sm:$0xff]
        %v3027 = vld [vmem:[%s429 + $0x1568] sm:$0xff]
        %v3028 = vld [vmem:[%s429 + $0x1570] sm:$0xff]
        %v3029 = vld [vmem:[%s429 + $0x1578] sm:$0xff]
        %v3030 = vld [vmem:[%s429 + $0x1580] sm:$0xff]
        %v3031 = vld [vmem:[%s429 + $0x1588] sm:$0xff]
        %v3032 = vld [vmem:[%s429 + $0x1590] sm:$0xff]
        %v3033 = vld [vmem:[%s429 + $0x1598] sm:$0xff]
        %v3034 = vld [vmem:[%s429 + $0x15a0] sm:$0xff]
        %v3035 = vld [vmem:[%s429 + $0x15a8] sm:$0xff]
        %v3036 = vld [vmem:[%s429 + $0x15b0] sm:$0xff]
        %v3037 = vld [vmem:[%s429 + $0x15b8] sm:$0xff]
        %v3038 = vld [vmem:[%s429 + $0x15c0] sm:$0xff]
        %v3039 = vld [vmem:[%s429 + $0x15c8] sm:$0xff]
        %v3040 = vld [vmem:[%s429 + $0x15d0] sm:$0xff]
        %v3041 = vld [vmem:[%s429 + $0x15d8] sm:$0xff]
        %v3042 = vld [vmem:[%s429 + $0x15e0] sm:$0xff]
        %v3043 = vld [vmem:[%s429 + $0x15e8] sm:$0xff]
        %v3044 = vld [vmem:[%s429 + $0x15f0] sm:$0xff]
        %v3045 = vld [vmem:[%s429 + $0x15f8] sm:$0xff]
        %v3046 = vld [vmem:[%s429 + $0x1600] sm:$0xff]
        %v3047 = vld [vmem:[%s429 + $0x1608] sm:$0xff]
        %v3048 = vld [vmem:[%s429 + $0x1610] sm:$0xff]
        %v3049 = vld [vmem:[%s429 + $0x1618] sm:$0xff]
        %v3050 = vld [vmem:[%s429 + $0x1620] sm:$0xff]
        %v3051 = vld [vmem:[%s429 + $0x1628] sm:$0xff]
        %v3052 = vld [vmem:[%s429 + $0x1630] sm:$0xff]
        %v3053 = vld [vmem:[%s429 + $0x1638] sm:$0xff]
        %v3054 = vld [vmem:[%s429 + $0x1640] sm:$0xff]
        %v3055 = vld [vmem:[%s429 + $0x1648] sm:$0xff]
        %v3056 = vld [vmem:[%s429 + $0x1650] sm:$0xff]
        %v3057 = vld [vmem:[%s429 + $0x1658] sm:$0xff]
        %v3058 = vld [vmem:[%s429 + $0x1660] sm:$0xff]
        %v3059 = vld [vmem:[%s429 + $0x1668] sm:$0xff]
        %v3060 = vld [vmem:[%s429 + $0x1670] sm:$0xff]
        %v3061 = vld [vmem:[%s429 + $0x1678] sm:$0xff]
        %v3062 = vld [vmem:[%s429 + $0x1680] sm:$0xff]
        %v3063 = vld [vmem:[%s429 + $0x1688] sm:$0xff]
        %v3064 = vld [vmem:[%s429 + $0x1690] sm:$0xff]
        %v3065 = vld [vmem:[%s429 + $0x1698] sm:$0xff]
        %v3066 = vld [vmem:[%s429 + $0x16a0] sm:$0xff]
        %v3067 = vld [vmem:[%s429 + $0x16a8] sm:$0xff]
        %v3068 = vld [vmem:[%s429 + $0x16b0] sm:$0xff]
        %v3069 = vld [vmem:[%s429 + $0x16b8] sm:$0xff]
        %v3070 = vld [vmem:[%s429 + $0x16c0] sm:$0xff]
        %v3071 = vld [vmem:[%s429 + $0x16c8] sm:$0xff]
        %v3072 = vld [vmem:[%s429 + $0x16d0] sm:$0xff]
        %v3073 = vld [vmem:[%s429 + $0x16d8] sm:$0xff]
        %v3074 = vld [vmem:[%s429 + $0x16e0] sm:$0xff]
        %v3075 = vld [vmem:[%s429 + $0x16e8] sm:$0xff]
        %v3076 = vld [vmem:[%s429 + $0x16f0] sm:$0xff]
        %v3077 = vld [vmem:[%s429 + $0x16f8] sm:$0xff]
        %v3078 = vld [vmem:[%s429 + $0x1700] sm:$0xff]
        %v3079 = vld [vmem:[%s429 + $0x1708] sm:$0xff]
        %v3080 = vld [vmem:[%s429 + $0x1710] sm:$0xff]
        %v3081 = vld [vmem:[%s429 + $0x1718] sm:$0xff]
        %v3082 = vld [vmem:[%s429 + $0x1720] sm:$0xff]
        %v3083 = vld [vmem:[%s429 + $0x1728] sm:$0xff]
        %v3084 = vld [vmem:[%s429 + $0x1730] sm:$0xff]
        %v3085 = vld [vmem:[%s429 + $0x1738] sm:$0xff]
        %v3086 = vld [vmem:[%s429 + $0x1740] sm:$0xff]
        %v3087 = vld [vmem:[%s429 + $0x1748] sm:$0xff]
        %v3088 = vld [vmem:[%s429 + $0x1750] sm:$0xff]
        %v3089 = vld [vmem:[%s429 + $0x1758] sm:$0xff]
        %v3090 = vld [vmem:[%s429 + $0x1760] sm:$0xff]
        %v3091 = vld [vmem:[%s429 + $0x1768] sm:$0xff]
        %v3092 = vld [vmem:[%s429 + $0x1770] sm:$0xff]
        %v3093 = vld [vmem:[%s429 + $0x1778] sm:$0xff]
        %v3094 = vld [vmem:[%s429 + $0x1780] sm:$0xff]
        %v3095 = vld [vmem:[%s429 + $0x1788] sm:$0xff]
        %v3096 = vld [vmem:[%s429 + $0x1790] sm:$0xff]
        %v3097 = vld [vmem:[%s429 + $0x1798] sm:$0xff]
        %v3098 = vld [vmem:[%s429 + $0x17a0] sm:$0xff]
        %v3099 = vld [vmem:[%s429 + $0x17a8] sm:$0xff]
        %v3100 = vld [vmem:[%s429 + $0x17b0] sm:$0xff]
        %v3101 = vld [vmem:[%s429 + $0x17b8] sm:$0xff]
        %v3102 = vld [vmem:[%s429 + $0x17c0] sm:$0xff]
        %v3103 = vld [vmem:[%s429 + $0x17c8] sm:$0xff]
        %v3104 = vld [vmem:[%s429 + $0x17d0] sm:$0xff]
        %v3105 = vld [vmem:[%s429 + $0x17d8] sm:$0xff]
        %v3106 = vld [vmem:[%s429 + $0x17e0] sm:$0xff]
        %v3107 = vld [vmem:[%s429 + $0x17e8] sm:$0xff]
        %v3108 = vld [vmem:[%s429 + $0x17f0] sm:$0xff]
        %v3109 = vld [vmem:[%s429 + $0x17f8] sm:$0xff]
        %v3110 = vld [vmem:[%s429 + $0x1800] sm:$0xff]
        %v3111 = vld [vmem:[%s429 + $0x1808] sm:$0xff]
        %v3112 = vld [vmem:[%s429 + $0x1810] sm:$0xff]
        %v3113 = vld [vmem:[%s429 + $0x1818] sm:$0xff]
        %v3114 = vld [vmem:[%s429 + $0x1820] sm:$0xff]
        %v3115 = vld [vmem:[%s429 + $0x1828] sm:$0xff]
        %v3116 = vld [vmem:[%s429 + $0x1830] sm:$0xff]
        %v3117 = vld [vmem:[%s429 + $0x1838] sm:$0xff]
        %v3118 = vld [vmem:[%s429 + $0x1840] sm:$0xff]
        %v3119 = vld [vmem:[%s429 + $0x1848] sm:$0xff]
        %v3120 = vld [vmem:[%s429 + $0x1850] sm:$0xff]
        %v3121 = vld [vmem:[%s429 + $0x1858] sm:$0xff]
        %v3122 = vld [vmem:[%s429 + $0x1860] sm:$0xff]
        %v3123 = vld [vmem:[%s429 + $0x1868] sm:$0xff]
        %v3124 = vld [vmem:[%s429 + $0x1870] sm:$0xff]
        %v3125 = vld [vmem:[%s429 + $0x1878] sm:$0xff]
        %v3126 = vld [vmem:[%s429 + $0x1880] sm:$0xff]
        %v3127 = vld [vmem:[%s429 + $0x1888] sm:$0xff]
        %v3128 = vld [vmem:[%s429 + $0x1890] sm:$0xff]
        %v3129 = vld [vmem:[%s429 + $0x1898] sm:$0xff]
        %v3130 = vld [vmem:[%s429 + $0x18a0] sm:$0xff]
        %v3131 = vld [vmem:[%s429 + $0x18a8] sm:$0xff]
        %v3132 = vld [vmem:[%s429 + $0x18b0] sm:$0xff]
        %v3133 = vld [vmem:[%s429 + $0x18b8] sm:$0xff]
        %v3134 = vld [vmem:[%s429 + $0x18c0] sm:$0xff]
        %v3135 = vld [vmem:[%s429 + $0x18c8] sm:$0xff]
        %v3136 = vld [vmem:[%s429 + $0x18d0] sm:$0xff]
        %v3137 = vld [vmem:[%s429 + $0x18d8] sm:$0xff]
        %v3138 = vld [vmem:[%s429 + $0x18e0] sm:$0xff]
        %v3139 = vld [vmem:[%s429 + $0x18e8] sm:$0xff]
        %v3140 = vld [vmem:[%s429 + $0x18f0] sm:$0xff]
        %v3141 = vld [vmem:[%s429 + $0x18f8] sm:$0xff]
        %v3142 = vld [vmem:[%s429 + $0x1900] sm:$0xff]
        %v3143 = vld [vmem:[%s429 + $0x1908] sm:$0xff]
        %v3144 = vld [vmem:[%s429 + $0x1910] sm:$0xff]
        %v3145 = vld [vmem:[%s429 + $0x1918] sm:$0xff]
        %v3146 = vld [vmem:[%s429 + $0x1920] sm:$0xff]
        %v3147 = vld [vmem:[%s429 + $0x1928] sm:$0xff]
        %v3148 = vld [vmem:[%s429 + $0x1930] sm:$0xff]
        %v3149 = vld [vmem:[%s429 + $0x1938] sm:$0xff]
        %v3150 = vld [vmem:[%s429 + $0x1940] sm:$0xff]
        %v3151 = vld [vmem:[%s429 + $0x1948] sm:$0xff]
        %v3152 = vld [vmem:[%s429 + $0x1950] sm:$0xff]
        %v3153 = vld [vmem:[%s429 + $0x1958] sm:$0xff]
        %v3154 = vld [vmem:[%s429 + $0x1960] sm:$0xff]
        %v3155 = vld [vmem:[%s429 + $0x1968] sm:$0xff]
        %v3156 = vld [vmem:[%s429 + $0x1970] sm:$0xff]
        %v3157 = vld [vmem:[%s429 + $0x1978] sm:$0xff]
        %v3158 = vld [vmem:[%s429 + $0x1980] sm:$0xff]
        %v3159 = vld [vmem:[%s429 + $0x1988] sm:$0xff]
        %v3160 = vld [vmem:[%s429 + $0x1990] sm:$0xff]
        %v3161 = vld [vmem:[%s429 + $0x1998] sm:$0xff]
        %v3162 = vld [vmem:[%s429 + $0x19a0] sm:$0xff]
        %v3163 = vld [vmem:[%s429 + $0x19a8] sm:$0xff]
        %v3164 = vld [vmem:[%s429 + $0x19b0] sm:$0xff]
        %v3165 = vld [vmem:[%s429 + $0x19b8] sm:$0xff]
        %v3166 = vld [vmem:[%s429 + $0x19c0] sm:$0xff]
        %v3167 = vld [vmem:[%s429 + $0x19c8] sm:$0xff]
        %v3168 = vld [vmem:[%s429 + $0x19d0] sm:$0xff]
        %v3169 = vld [vmem:[%s429 + $0x19d8] sm:$0xff]
        %v3170 = vld [vmem:[%s429 + $0x19e0] sm:$0xff]
        %v3171 = vld [vmem:[%s429 + $0x19e8] sm:$0xff]
        %v3172 = vld [vmem:[%s429 + $0x19f0] sm:$0xff]
        %v3173 = vld [vmem:[%s429 + $0x19f8] sm:$0xff]
        %v3174 = vld [vmem:[%s429 + $0x1a00] sm:$0xff]
        %v3175 = vld [vmem:[%s429 + $0x1a08] sm:$0xff]
        %v3176 = vld [vmem:[%s429 + $0x1a10] sm:$0xff]
        %v3177 = vld [vmem:[%s429 + $0x1a18] sm:$0xff]
        %v3178 = vld [vmem:[%s429 + $0x1a20] sm:$0xff]
        %v3179 = vld [vmem:[%s429 + $0x1a28] sm:$0xff]
        %v3180 = vld [vmem:[%s429 + $0x1a30] sm:$0xff]
        %v3181 = vld [vmem:[%s429 + $0x1a38] sm:$0xff]
        %v3182 = vld [vmem:[%s429 + $0x1a40] sm:$0xff]
        %v3183 = vld [vmem:[%s429 + $0x1a48] sm:$0xff]
        %v3184 = vld [vmem:[%s429 + $0x1a50] sm:$0xff]
        %v3185 = vld [vmem:[%s429 + $0x1a58] sm:$0xff]
        %v3186 = vld [vmem:[%s429 + $0x1a60] sm:$0xff]
        %v3187 = vld [vmem:[%s429 + $0x1a68] sm:$0xff]
        %v3188 = vld [vmem:[%s429 + $0x1a70] sm:$0xff]
        %v3189 = vld [vmem:[%s429 + $0x1a78] sm:$0xff]
        %v3190 = vld [vmem:[%s429 + $0x1a80] sm:$0xff]
        %v3191 = vld [vmem:[%s429 + $0x1a88] sm:$0xff]
        %v3192 = vld [vmem:[%s429 + $0x1a90] sm:$0xff]
        %v3193 = vld [vmem:[%s429 + $0x1a98] sm:$0xff]
        %v3194 = vld [vmem:[%s429 + $0x1aa0] sm:$0xff]
        %v3195 = vld [vmem:[%s429 + $0x1aa8] sm:$0xff]
        %v3196 = vld [vmem:[%s429 + $0x1ab0] sm:$0xff]
        %v3197 = vld [vmem:[%s429 + $0x1ab8] sm:$0xff]
        %v3198 = vld [vmem:[%s429 + $0x1ac0] sm:$0xff]
        %v3199 = vld [vmem:[%s429 + $0x1ac8] sm:$0xff]
        %v3200 = vld [vmem:[%s429 + $0x1ad0] sm:$0xff]
        %v3201 = vld [vmem:[%s429 + $0x1ad8] sm:$0xff]
        %v3202 = vld [vmem:[%s429 + $0x1ae0] sm:$0xff]
        %v3203 = vld [vmem:[%s429 + $0x1ae8] sm:$0xff]
        %v3204 = vld [vmem:[%s429 + $0x1af0] sm:$0xff]
        %v3205 = vld [vmem:[%s429 + $0x1af8] sm:$0xff]
        %v3206 = vld [vmem:[%s429 + $0x1b00] sm:$0xff]
        %v3207 = vld [vmem:[%s429 + $0x1b08] sm:$0xff]
        %v3208 = vld [vmem:[%s429 + $0x1b10] sm:$0xff]
        %v3209 = vld [vmem:[%s429 + $0x1b18] sm:$0xff]
        %v3210 = vld [vmem:[%s429 + $0x1b20] sm:$0xff]
        %v3211 = vld [vmem:[%s429 + $0x1b28] sm:$0xff]
        %v3212 = vld [vmem:[%s429 + $0x1b30] sm:$0xff]
        %v3213 = vld [vmem:[%s429 + $0x1b38] sm:$0xff]
        %v3214 = vld [vmem:[%s429 + $0x1b40] sm:$0xff]
        %v3215 = vld [vmem:[%s429 + $0x1b48] sm:$0xff]
        %v3216 = vld [vmem:[%s429 + $0x1b50] sm:$0xff]
        %v3217 = vld [vmem:[%s429 + $0x1b58] sm:$0xff]
        %v3218 = vld [vmem:[%s429 + $0x1b60] sm:$0xff]
        %v3219 = vld [vmem:[%s429 + $0x1b68] sm:$0xff]
        %v3220 = vld [vmem:[%s429 + $0x1b70] sm:$0xff]
        %v3221 = vld [vmem:[%s429 + $0x1b78] sm:$0xff]
        %v3222 = vld [vmem:[%s429 + $0x1b80] sm:$0xff]
        %v3223 = vld [vmem:[%s429 + $0x1b88] sm:$0xff]
        %v3224 = vld [vmem:[%s429 + $0x1b90] sm:$0xff]
        %v3225 = vld [vmem:[%s429 + $0x1b98] sm:$0xff]
        %v3226 = vld [vmem:[%s429 + $0x1ba0] sm:$0xff]
        %v3227 = vld [vmem:[%s429 + $0x1ba8] sm:$0xff]
        %v3228 = vld [vmem:[%s429 + $0x1bb0] sm:$0xff]
        %v3229 = vld [vmem:[%s429 + $0x1bb8] sm:$0xff]
        %v3230 = vld [vmem:[%s429 + $0x1bc0] sm:$0xff]
        %v3231 = vld [vmem:[%s429 + $0x1bc8] sm:$0xff]
        %v3232 = vld [vmem:[%s429 + $0x1bd0] sm:$0xff]
        %v3233 = vld [vmem:[%s429 + $0x1bd8] sm:$0xff]
        %v3234 = vld [vmem:[%s429 + $0x1be0] sm:$0xff]
        %v3235 = vld [vmem:[%s429 + $0x1be8] sm:$0xff]
        %v3236 = vld [vmem:[%s429 + $0x1bf0] sm:$0xff]
        %v3237 = vld [vmem:[%s429 + $0x1bf8] sm:$0xff]
        %v3238 = vld [vmem:[%s429 + $0x1c00] sm:$0xff]
        %v3239 = vld [vmem:[%s429 + $0x1c08] sm:$0xff]
        %v3240 = vld [vmem:[%s429 + $0x1c10] sm:$0xff]
        %v3241 = vld [vmem:[%s429 + $0x1c18] sm:$0xff]
        %v3242 = vld [vmem:[%s429 + $0x1c20] sm:$0xff]
        %v3243 = vld [vmem:[%s429 + $0x1c28] sm:$0xff]
        %v3244 = vld [vmem:[%s429 + $0x1c30] sm:$0xff]
        %v3245 = vld [vmem:[%s429 + $0x1c38] sm:$0xff]
        %v3246 = vld [vmem:[%s429 + $0x1c40] sm:$0xff]
        %v3247 = vld [vmem:[%s429 + $0x1c48] sm:$0xff]
        %v3248 = vld [vmem:[%s429 + $0x1c50] sm:$0xff]
        %v3249 = vld [vmem:[%s429 + $0x1c58] sm:$0xff]
        %v3250 = vld [vmem:[%s429 + $0x1c60] sm:$0xff]
        %v3251 = vld [vmem:[%s429 + $0x1c68] sm:$0xff]
        %v3252 = vld [vmem:[%s429 + $0x1c70] sm:$0xff]
        %v3253 = vld [vmem:[%s429 + $0x1c78] sm:$0xff]
        %v3254 = vld [vmem:[%s429 + $0x1c80] sm:$0xff]
        %v3255 = vld [vmem:[%s429 + $0x1c88] sm:$0xff]
        %v3256 = vld [vmem:[%s429 + $0x1c90] sm:$0xff]
        %v3257 = vld [vmem:[%s429 + $0x1c98] sm:$0xff]
        %v3258 = vld [vmem:[%s429 + $0x1ca0] sm:$0xff]
        %v3259 = vld [vmem:[%s429 + $0x1ca8] sm:$0xff]
        %v3260 = vld [vmem:[%s429 + $0x1cb0] sm:$0xff]
        %v3261 = vld [vmem:[%s429 + $0x1cb8] sm:$0xff]
        %v3262 = vld [vmem:[%s429 + $0x1cc0] sm:$0xff]
        %v3263 = vld [vmem:[%s429 + $0x1cc8] sm:$0xff]
        %v3264 = vld [vmem:[%s429 + $0x1cd0] sm:$0xff]
        %v3265 = vld [vmem:[%s429 + $0x1cd8] sm:$0xff]
        %v3266 = vld [vmem:[%s429 + $0x1ce0] sm:$0xff]
        %v3267 = vld [vmem:[%s429 + $0x1ce8] sm:$0xff]
        %v3268 = vld [vmem:[%s429 + $0x1cf0] sm:$0xff]
        %v3269 = vld [vmem:[%s429 + $0x1cf8] sm:$0xff]
        %v3270 = vld [vmem:[%s429 + $0x1d00] sm:$0xff]
        %v3271 = vld [vmem:[%s429 + $0x1d08] sm:$0xff]
        %v3272 = vld [vmem:[%s429 + $0x1d10] sm:$0xff]
        %v3273 = vld [vmem:[%s429 + $0x1d18] sm:$0xff]
        %v3274 = vld [vmem:[%s429 + $0x1d20] sm:$0xff]
        %v3275 = vld [vmem:[%s429 + $0x1d28] sm:$0xff]
        %v3276 = vld [vmem:[%s429 + $0x1d30] sm:$0xff]
        %v3277 = vld [vmem:[%s429 + $0x1d38] sm:$0xff]
        %v3278 = vld [vmem:[%s429 + $0x1d40] sm:$0xff]
        %v3279 = vld [vmem:[%s429 + $0x1d48] sm:$0xff]
        %v3280 = vld [vmem:[%s429 + $0x1d50] sm:$0xff]
        %v3281 = vld [vmem:[%s429 + $0x1d58] sm:$0xff]
        %v3282 = vld [vmem:[%s429 + $0x1d60] sm:$0xff]
        %v3283 = vld [vmem:[%s429 + $0x1d68] sm:$0xff]
        %v3284 = vld [vmem:[%s429 + $0x1d70] sm:$0xff]
        %v3285 = vld [vmem:[%s429 + $0x1d78] sm:$0xff]
        %v3286 = vld [vmem:[%s429 + $0x1d80] sm:$0xff]
        %v3287 = vld [vmem:[%s429 + $0x1d88] sm:$0xff]
        %v3288 = vld [vmem:[%s429 + $0x1d90] sm:$0xff]
        %v3289 = vld [vmem:[%s429 + $0x1d98] sm:$0xff]
        %v3290 = vld [vmem:[%s429 + $0x1da0] sm:$0xff]
        %v3291 = vld [vmem:[%s429 + $0x1da8] sm:$0xff]
        %v3292 = vld [vmem:[%s429 + $0x1db0] sm:$0xff]
        %v3293 = vld [vmem:[%s429 + $0x1db8] sm:$0xff]
        %v3294 = vld [vmem:[%s429 + $0x1dc0] sm:$0xff]
        %v3295 = vld [vmem:[%s429 + $0x1dc8] sm:$0xff]
        %v3296 = vld [vmem:[%s429 + $0x1dd0] sm:$0xff]
        %v3297 = vld [vmem:[%s429 + $0x1dd8] sm:$0xff]
        %v3298 = vld [vmem:[%s429 + $0x1de0] sm:$0xff]
        %v3299 = vld [vmem:[%s429 + $0x1de8] sm:$0xff]
        %v3300 = vld [vmem:[%s429 + $0x1df0] sm:$0xff]
        %v3301 = vld [vmem:[%s429 + $0x1df8] sm:$0xff]
        %v3302 = vld [vmem:[%s429 + $0x1e00] sm:$0xff]
        %v3303 = vld [vmem:[%s429 + $0x1e08] sm:$0xff]
        %v3304 = vld [vmem:[%s429 + $0x1e10] sm:$0xff]
        %v3305 = vld [vmem:[%s429 + $0x1e18] sm:$0xff]
        %v3306 = vld [vmem:[%s429 + $0x1e20] sm:$0xff]
        %v3307 = vld [vmem:[%s429 + $0x1e28] sm:$0xff]
        %v3308 = vld [vmem:[%s429 + $0x1e30] sm:$0xff]
        %v3309 = vld [vmem:[%s429 + $0x1e38] sm:$0xff]
        %v3310 = vld [vmem:[%s429 + $0x1e40] sm:$0xff]
        %v3311 = vld [vmem:[%s429 + $0x1e48] sm:$0xff]
        %v3312 = vld [vmem:[%s429 + $0x1e50] sm:$0xff]
        %v3313 = vld [vmem:[%s429 + $0x1e58] sm:$0xff]
        %v3314 = vld [vmem:[%s429 + $0x1e60] sm:$0xff]
        %v3315 = vld [vmem:[%s429 + $0x1e68] sm:$0xff]
        %v3316 = vld [vmem:[%s429 + $0x1e70] sm:$0xff]
        %v3317 = vld [vmem:[%s429 + $0x1e78] sm:$0xff]
        %v3318 = vld [vmem:[%s429 + $0x1e80] sm:$0xff]
        %v3319 = vld [vmem:[%s429 + $0x1e88] sm:$0xff]
        %v3320 = vld [vmem:[%s429 + $0x1e90] sm:$0xff]
        %v3321 = vld [vmem:[%s429 + $0x1e98] sm:$0xff]
        %v3322 = vld [vmem:[%s429 + $0x1ea0] sm:$0xff]
        %v3323 = vld [vmem:[%s429 + $0x1ea8] sm:$0xff]
        %v3324 = vld [vmem:[%s429 + $0x1eb0] sm:$0xff]
        %v3325 = vld [vmem:[%s429 + $0x1eb8] sm:$0xff]
        %v3326 = vld [vmem:[%s429 + $0x1ec0] sm:$0xff]
        %v3327 = vld [vmem:[%s429 + $0x1ec8] sm:$0xff]
        %v3328 = vld [vmem:[%s429 + $0x1ed0] sm:$0xff]
        %v3329 = vld [vmem:[%s429 + $0x1ed8] sm:$0xff]
        %v3330 = vld [vmem:[%s429 + $0x1ee0] sm:$0xff]
        %v3331 = vld [vmem:[%s429 + $0x1ee8] sm:$0xff]
        %v3332 = vld [vmem:[%s429 + $0x1ef0] sm:$0xff]
        %v3333 = vld [vmem:[%s429 + $0x1ef8] sm:$0xff]
        %v3334 = vld [vmem:[%s429 + $0x1f00] sm:$0xff]
        %v3335 = vld [vmem:[%s429 + $0x1f08] sm:$0xff]
        %v3336 = vld [vmem:[%s429 + $0x1f10] sm:$0xff]
        %v3337 = vld [vmem:[%s429 + $0x1f18] sm:$0xff]
        %v3338 = vld [vmem:[%s429 + $0x1f20] sm:$0xff]
        %v3339 = vld [vmem:[%s429 + $0x1f28] sm:$0xff]
        %v3340 = vld [vmem:[%s429 + $0x1f30] sm:$0xff]
        %v3341 = vld [vmem:[%s429 + $0x1f38] sm:$0xff]
        %v3342 = vld [vmem:[%s429 + $0x1f40] sm:$0xff]
        %v3343 = vld [vmem:[%s429 + $0x1f48] sm:$0xff]
        %v3344 = vld [vmem:[%s429 + $0x1f50] sm:$0xff]
        %v3345 = vld [vmem:[%s429 + $0x1f58] sm:$0xff]
        %v3346 = vld [vmem:[%s429 + $0x1f60] sm:$0xff]
        %v3347 = vld [vmem:[%s429 + $0x1f68] sm:$0xff]
        %v3348 = vld [vmem:[%s429 + $0x1f70] sm:$0xff]
        %v3349 = vld [vmem:[%s429 + $0x1f78] sm:$0xff]
        %v3350 = vld [vmem:[%s429 + $0x1f80] sm:$0xff]
        %v3351 = vld [vmem:[%s429 + $0x1f88] sm:$0xff]
        %v3352 = vld [vmem:[%s429 + $0x1f90] sm:$0xff]
        %v3353 = vld [vmem:[%s429 + $0x1f98] sm:$0xff]
        %v3354 = vld [vmem:[%s429 + $0x1fa0] sm:$0xff]
        %v3355 = vld [vmem:[%s429 + $0x1fa8] sm:$0xff]
        %v3356 = vld [vmem:[%s429 + $0x1fb0] sm:$0xff]
        %v3357 = vld [vmem:[%s429 + $0x1fb8] sm:$0xff]
        %v3358 = vld [vmem:[%s429 + $0x1fc0] sm:$0xff]
        %v3359 = vld [vmem:[%s429 + $0x1fc8] sm:$0xff]
        %v3360 = vld [vmem:[%s429 + $0x1fd0] sm:$0xff]
        %v3361 = vld [vmem:[%s429 + $0x1fd8] sm:$0xff]
        %v3362 = vld [vmem:[%s429 + $0x1fe0] sm:$0xff]
        %v3363 = vld [vmem:[%s429 + $0x1fe8] sm:$0xff]
        %v3364 = vld [vmem:[%s429 + $0x1ff0] sm:$0xff]
        %v3365 = vld [vmem:[%s429 + $0x1ff8] sm:$0xff]
        %v3366 = vld [vmem:[#allocation7] sm:$0xf]
        %v3367 = vld [vmem:[%s439] sm:$0xff]
        %v3368 = vld [vmem:[%s439 + $0x8] sm:$0xff]
        %v3369 = vld [vmem:[%s439 + $0x10] sm:$0xff]
        %v3370 = vld [vmem:[%s439 + $0x18] sm:$0xff]
        %v3371 = vld [vmem:[%s439 + $0x20] sm:$0xff]
        %v3372 = vld [vmem:[%s439 + $0x28] sm:$0xff]
        %v3373 = vld [vmem:[%s439 + $0x30] sm:$0xff]
        %v3374 = vld [vmem:[%s439 + $0x38] sm:$0xff]
        %v3375 = vld [vmem:[%s439 + $0x40] sm:$0xff]
        %v3376 = vld [vmem:[%s439 + $0x48] sm:$0xff]
        %v3377 = vld [vmem:[%s439 + $0x50] sm:$0xff]
        %v3378 = vld [vmem:[%s439 + $0x58] sm:$0xff]
        %v3379 = vld [vmem:[%s439 + $0x60] sm:$0xff]
        %v3380 = vld [vmem:[%s439 + $0x68] sm:$0xff]
        %v3381 = vld [vmem:[%s439 + $0x70] sm:$0xff]
        %v3382 = vld [vmem:[%s439 + $0x78] sm:$0xff]
        %v3383 = vld [vmem:[%s439 + $0x80] sm:$0xff]
        %v3384 = vld [vmem:[%s439 + $0x88] sm:$0xff]
        %v3385 = vld [vmem:[%s439 + $0x90] sm:$0xff]
        %v3386 = vld [vmem:[%s439 + $0x98] sm:$0xff]
        %v3387 = vld [vmem:[%s439 + $0xa0] sm:$0xff]
        %v3388 = vld [vmem:[%s439 + $0xa8] sm:$0xff]
        %v3389 = vld [vmem:[%s439 + $0xb0] sm:$0xff]
        %v3390 = vld [vmem:[%s439 + $0xb8] sm:$0xff]
        %v3391 = vld [vmem:[%s439 + $0xc0] sm:$0xff]
        %v3392 = vld [vmem:[%s439 + $0xc8] sm:$0xff]
        %v3393 = vld [vmem:[%s439 + $0xd0] sm:$0xff]
        %v3394 = vld [vmem:[%s439 + $0xd8] sm:$0xff]
        %v3395 = vld [vmem:[%s439 + $0xe0] sm:$0xff]
        %v3396 = vld [vmem:[%s439 + $0xe8] sm:$0xff]
        %v3397 = vld [vmem:[%s439 + $0xf0] sm:$0xff]
        %v3398 = vld [vmem:[%s439 + $0xf8] sm:$0xff]
        %v3399 = vld [vmem:[%s439 + $0x100] sm:$0xff]
        %v3400 = vld [vmem:[%s439 + $0x108] sm:$0xff]
        %v3401 = vld [vmem:[%s439 + $0x110] sm:$0xff]
        %v3402 = vld [vmem:[%s439 + $0x118] sm:$0xff]
        %v3403 = vld [vmem:[%s439 + $0x120] sm:$0xff]
        %v3404 = vld [vmem:[%s439 + $0x128] sm:$0xff]
        %v3405 = vld [vmem:[%s439 + $0x130] sm:$0xff]
        %v3406 = vld [vmem:[%s439 + $0x138] sm:$0xff]
        %v3407 = vld [vmem:[%s439 + $0x140] sm:$0xff]
        %v3408 = vld [vmem:[%s439 + $0x148] sm:$0xff]
        %v3409 = vld [vmem:[%s439 + $0x150] sm:$0xff]
        %v3410 = vld [vmem:[%s439 + $0x158] sm:$0xff]
        %v3411 = vld [vmem:[%s439 + $0x160] sm:$0xff]
        %v3412 = vld [vmem:[%s439 + $0x168] sm:$0xff]
        %v3413 = vld [vmem:[%s439 + $0x170] sm:$0xff]
        %v3414 = vld [vmem:[%s439 + $0x178] sm:$0xff]
        %v3415 = vld [vmem:[%s439 + $0x180] sm:$0xff]
        %v3416 = vld [vmem:[%s439 + $0x188] sm:$0xff]
        %v3417 = vld [vmem:[%s439 + $0x190] sm:$0xff]
        %v3418 = vld [vmem:[%s439 + $0x198] sm:$0xff]
        %v3419 = vld [vmem:[%s439 + $0x1a0] sm:$0xff]
        %v3420 = vld [vmem:[%s439 + $0x1a8] sm:$0xff]
        %v3421 = vld [vmem:[%s439 + $0x1b0] sm:$0xff]
        %v3422 = vld [vmem:[%s439 + $0x1b8] sm:$0xff]
        %v3423 = vld [vmem:[%s439 + $0x1c0] sm:$0xff]
        %v3424 = vld [vmem:[%s439 + $0x1c8] sm:$0xff]
        %v3425 = vld [vmem:[%s439 + $0x1d0] sm:$0xff]
        %v3426 = vld [vmem:[%s439 + $0x1d8] sm:$0xff]
        %v3427 = vld [vmem:[%s439 + $0x1e0] sm:$0xff]
        %v3428 = vld [vmem:[%s439 + $0x1e8] sm:$0xff]
        %v3429 = vld [vmem:[%s439 + $0x1f0] sm:$0xff]
        %v3430 = vld [vmem:[%s439 + $0x1f8] sm:$0xff]
        %v3495 = vunpack.c.l.b16 %v3367
        %v3496 = vunpack.c.h.b16 %v3367
        %v3497 = vunpack.c.l.b16 %v3368
        %v3498 = vunpack.c.h.b16 %v3368
        %v3499 = vunpack.c.l.b16 %v3369
        %v3500 = vunpack.c.h.b16 %v3369
        %v3501 = vunpack.c.l.b16 %v3370
        %v3502 = vunpack.c.h.b16 %v3370
        %v3503 = vunpack.c.l.b16 %v3371
        %v3504 = vunpack.c.h.b16 %v3371
        %v3505 = vunpack.c.l.b16 %v3372
        %v3506 = vunpack.c.h.b16 %v3372
        %v3507 = vunpack.c.l.b16 %v3373
        %v3508 = vunpack.c.h.b16 %v3373
        %v3509 = vunpack.c.l.b16 %v3374
        %v3510 = vunpack.c.h.b16 %v3374
        %v3511 = vunpack.c.l.b16 %v3375
        %v3512 = vunpack.c.h.b16 %v3375
        %v3513 = vunpack.c.l.b16 %v3376
        %v3514 = vunpack.c.h.b16 %v3376
        %v3515 = vunpack.c.l.b16 %v3377
        %v3516 = vunpack.c.h.b16 %v3377
        %v3517 = vunpack.c.l.b16 %v3378
        %v3518 = vunpack.c.h.b16 %v3378
        %v3519 = vunpack.c.l.b16 %v3379
        %v3520 = vunpack.c.h.b16 %v3379
        %v3521 = vunpack.c.l.b16 %v3380
        %v3522 = vunpack.c.h.b16 %v3380
        %v3523 = vunpack.c.l.b16 %v3381
        %v3524 = vunpack.c.h.b16 %v3381
        %v3525 = vunpack.c.l.b16 %v3382
        %v3526 = vunpack.c.h.b16 %v3382
        %v3527 = vunpack.c.l.b16 %v3383
        %v3528 = vunpack.c.h.b16 %v3383
        %v3529 = vunpack.c.l.b16 %v3384
        %v3530 = vunpack.c.h.b16 %v3384
        %v3531 = vunpack.c.l.b16 %v3385
        %v3532 = vunpack.c.h.b16 %v3385
        %v3533 = vunpack.c.l.b16 %v3386
        %v3534 = vunpack.c.h.b16 %v3386
        %v3535 = vunpack.c.l.b16 %v3387
        %v3536 = vunpack.c.h.b16 %v3387
        %v3537 = vunpack.c.l.b16 %v3388
        %v3538 = vunpack.c.h.b16 %v3388
        %v3539 = vunpack.c.l.b16 %v3389
        %v3540 = vunpack.c.h.b16 %v3389
        %v3541 = vunpack.c.l.b16 %v3390
        %v3542 = vunpack.c.h.b16 %v3390
        %v3543 = vunpack.c.l.b16 %v3391
        %v3544 = vunpack.c.h.b16 %v3391
        %v3545 = vunpack.c.l.b16 %v3392
        %v3546 = vunpack.c.h.b16 %v3392
        %v3547 = vunpack.c.l.b16 %v3393
        %v3548 = vunpack.c.h.b16 %v3393
        %v3549 = vunpack.c.l.b16 %v3394
        %v3550 = vunpack.c.h.b16 %v3394
        %v3551 = vunpack.c.l.b16 %v3395
        %v3552 = vunpack.c.h.b16 %v3395
        %v3553 = vunpack.c.l.b16 %v3396
        %v3554 = vunpack.c.h.b16 %v3396
        %v3555 = vunpack.c.l.b16 %v3397
        %v3556 = vunpack.c.h.b16 %v3397
        %v3557 = vunpack.c.l.b16 %v3398
        %v3558 = vunpack.c.h.b16 %v3398
        %v3559 = vunpack.c.l.b16 %v3399
        %v3560 = vunpack.c.h.b16 %v3399
        %v3561 = vunpack.c.l.b16 %v3400
        %v3562 = vunpack.c.h.b16 %v3400
        %v3563 = vunpack.c.l.b16 %v3401
        %v3564 = vunpack.c.h.b16 %v3401
        %v3565 = vunpack.c.l.b16 %v3402
        %v3566 = vunpack.c.h.b16 %v3402
        %v3567 = vunpack.c.l.b16 %v3403
        %v3568 = vunpack.c.h.b16 %v3403
        %v3569 = vunpack.c.l.b16 %v3404
        %v3570 = vunpack.c.h.b16 %v3404
        %v3571 = vunpack.c.l.b16 %v3405
        %v3572 = vunpack.c.h.b16 %v3405
        %v3573 = vunpack.c.l.b16 %v3406
        %v3574 = vunpack.c.h.b16 %v3406
        %v3575 = vunpack.c.l.b16 %v3407
        %v3576 = vunpack.c.h.b16 %v3407
        %v3577 = vunpack.c.l.b16 %v3408
        %v3578 = vunpack.c.h.b16 %v3408
        %v3579 = vunpack.c.l.b16 %v3409
        %v3580 = vunpack.c.h.b16 %v3409
        %v3581 = vunpack.c.l.b16 %v3410
        %v3582 = vunpack.c.h.b16 %v3410
        %v3583 = vunpack.c.l.b16 %v3411
        %v3584 = vunpack.c.h.b16 %v3411
        %v3585 = vunpack.c.l.b16 %v3412
        %v3586 = vunpack.c.h.b16 %v3412
        %v3587 = vunpack.c.l.b16 %v3413
        %v3588 = vunpack.c.h.b16 %v3413
        %v3589 = vunpack.c.l.b16 %v3414
        %v3590 = vunpack.c.h.b16 %v3414
        %v3591 = vunpack.c.l.b16 %v3415
        %v3592 = vunpack.c.h.b16 %v3415
        %v3593 = vunpack.c.l.b16 %v3416
        %v3594 = vunpack.c.h.b16 %v3416
        %v3595 = vunpack.c.l.b16 %v3417
        %v3596 = vunpack.c.h.b16 %v3417
        %v3597 = vunpack.c.l.b16 %v3418
        %v3598 = vunpack.c.h.b16 %v3418
        %v3599 = vunpack.c.l.b16 %v3419
        %v3600 = vunpack.c.h.b16 %v3419
        %v3601 = vunpack.c.l.b16 %v3420
        %v3602 = vunpack.c.h.b16 %v3420
        %v3603 = vunpack.c.l.b16 %v3421
        %v3604 = vunpack.c.h.b16 %v3421
        %v3605 = vunpack.c.l.b16 %v3422
        %v3606 = vunpack.c.h.b16 %v3422
        %v3607 = vunpack.c.l.b16 %v3423
        %v3608 = vunpack.c.h.b16 %v3423
        %v3609 = vunpack.c.l.b16 %v3424
        %v3610 = vunpack.c.h.b16 %v3424
        %v3611 = vunpack.c.l.b16 %v3425
        %v3612 = vunpack.c.h.b16 %v3425
        %v3613 = vunpack.c.l.b16 %v3426
        %v3614 = vunpack.c.h.b16 %v3426
        %v3615 = vunpack.c.l.b16 %v3427
        %v3616 = vunpack.c.h.b16 %v3427
        %v3617 = vunpack.c.l.b16 %v3428
        %v3618 = vunpack.c.h.b16 %v3428
        %v3619 = vunpack.c.l.b16 %v3429
        %v3620 = vunpack.c.h.b16 %v3429
        %v3621 = vunpack.c.l.b16 %v3430
        %v3622 = vunpack.c.h.b16 %v3430
        %v3623 = vpack.c.b16 %v3503, %v3495
        %v3624 = vpack.c.b16 %v3504, %v3496
        %v3625 = vpack.c.b16 %v3505, %v3497
        %v3626 = vpack.c.b16 %v3506, %v3498
        %v3627 = vpack.c.b16 %v3507, %v3499
        %v3628 = vpack.c.b16 %v3508, %v3500
        %v3629 = vpack.c.b16 %v3509, %v3501
        %v3630 = vpack.c.b16 %v3510, %v3502
        %v3631 = vpack.c.b16 %v3519, %v3511
        %v3632 = vpack.c.b16 %v3520, %v3512
        %v3633 = vpack.c.b16 %v3521, %v3513
        %v3634 = vpack.c.b16 %v3522, %v3514
        %v3635 = vpack.c.b16 %v3523, %v3515
        %v3636 = vpack.c.b16 %v3524, %v3516
        %v3637 = vpack.c.b16 %v3525, %v3517
        %v3638 = vpack.c.b16 %v3526, %v3518
        %v3639 = vpack.c.b16 %v3535, %v3527
        %v3640 = vpack.c.b16 %v3536, %v3528
        %v3641 = vpack.c.b16 %v3537, %v3529
        %v3642 = vpack.c.b16 %v3538, %v3530
        %v3643 = vpack.c.b16 %v3539, %v3531
        %v3644 = vpack.c.b16 %v3540, %v3532
        %v3645 = vpack.c.b16 %v3541, %v3533
        %v3646 = vpack.c.b16 %v3542, %v3534
        %v3647 = vpack.c.b16 %v3551, %v3543
        %v3648 = vpack.c.b16 %v3552, %v3544
        %v3649 = vpack.c.b16 %v3553, %v3545
        %v3650 = vpack.c.b16 %v3554, %v3546
        %v3651 = vpack.c.b16 %v3555, %v3547
        %v3652 = vpack.c.b16 %v3556, %v3548
        %v3653 = vpack.c.b16 %v3557, %v3549
        %v3654 = vpack.c.b16 %v3558, %v3550
        %v3655 = vpack.c.b16 %v3567, %v3559
        %v3656 = vpack.c.b16 %v3568, %v3560
        %v3657 = vpack.c.b16 %v3569, %v3561
        %v3658 = vpack.c.b16 %v3570, %v3562
        %v3659 = vpack.c.b16 %v3571, %v3563
        %v3660 = vpack.c.b16 %v3572, %v3564
        %v3661 = vpack.c.b16 %v3573, %v3565
        %v3662 = vpack.c.b16 %v3574, %v3566
        %v3663 = vpack.c.b16 %v3583, %v3575
        %v3664 = vpack.c.b16 %v3584, %v3576
        %v3665 = vpack.c.b16 %v3585, %v3577
        %v3666 = vpack.c.b16 %v3586, %v3578
        %v3667 = vpack.c.b16 %v3587, %v3579
        %v3668 = vpack.c.b16 %v3588, %v3580
        %v3669 = vpack.c.b16 %v3589, %v3581
        %v3670 = vpack.c.b16 %v3590, %v3582
        %v3671 = vpack.c.b16 %v3599, %v3591
        %v3672 = vpack.c.b16 %v3600, %v3592
        %v3673 = vpack.c.b16 %v3601, %v3593
        %v3674 = vpack.c.b16 %v3602, %v3594
        %v3675 = vpack.c.b16 %v3603, %v3595
        %v3676 = vpack.c.b16 %v3604, %v3596
        %v3677 = vpack.c.b16 %v3605, %v3597
        %v3678 = vpack.c.b16 %v3606, %v3598
        %v3679 = vpack.c.b16 %v3615, %v3607
        %v3680 = vpack.c.b16 %v3616, %v3608
        %v3681 = vpack.c.b16 %v3617, %v3609
        %v3682 = vpack.c.b16 %v3618, %v3610
        %v3683 = vpack.c.b16 %v3619, %v3611
        %v3684 = vpack.c.b16 %v3620, %v3612
        %v3685 = vpack.c.b16 %v3621, %v3613
        %v3686 = vpack.c.b16 %v3622, %v3614
        %3751 = vmatpush.bf16.msra.mxu0 %v3679
        %3752 = vmatpush.bf16.msra.mxu0 %v3671
        %3753 = vmatpush.bf16.msra.mxu0 %v3663
        %3754 = vmatpush.bf16.msra.mxu0 %v3655
        %3755 = vmatpush.bf16.msra.mxu0 %v3647
        %3756 = vmatpush.bf16.msra.mxu0 %v3639
        %3757 = vmatpush.bf16.msra.mxu0 %v3631
        %3758 = vmatpush.bf16.msra.mxu0 %v3623
        %3759 = vmatmul.bf16.gmra.mxu0 %v3366
        %v3760 = vpop.f32.mrf.mxu0
        %v3761 = vadd.f32 0.0, %v3760
        %v3762 = vpop.f32.mrf.mxu0
        %3763 = vdwg.mxu0
        %3764 = vmatpush.bf16.msra.mxu0 %v3680
        %3765 = vmatpush.bf16.msra.mxu0 %v3672
        %3766 = vmatpush.bf16.msra.mxu0 %v3664
        %3767 = vmatpush.bf16.msra.mxu0 %v3656
        %3768 = vmatpush.bf16.msra.mxu0 %v3648
        %3769 = vmatpush.bf16.msra.mxu0 %v3640
        %3770 = vmatpush.bf16.msra.mxu0 %v3632
        %3771 = vmatpush.bf16.msra.mxu0 %v3624
        %3772 = vmatmul.bf16.gmra.mxu0 %v3366
        %v3773 = vpop.f32.mrf.mxu0
        %v3774 = vadd.f32 0.0, %v3773
        %v3775 = vpop.f32.mrf.mxu0
        %3776 = vdwg.mxu0
        %3777 = vmatpush.bf16.msra.mxu0 %v3681
        %3778 = vmatpush.bf16.msra.mxu0 %v3673
        %3779 = vmatpush.bf16.msra.mxu0 %v3665
        %3780 = vmatpush.bf16.msra.mxu0 %v3657
        %3781 = vmatpush.bf16.msra.mxu0 %v3649
        %3782 = vmatpush.bf16.msra.mxu0 %v3641
        %3783 = vmatpush.bf16.msra.mxu0 %v3633
        %3784 = vmatpush.bf16.msra.mxu0 %v3625
        %3785 = vmatmul.bf16.gmra.mxu0 %v3366
        %v3786 = vpop.f32.mrf.mxu0
        %v3787 = vadd.f32 0.0, %v3786
        %v3788 = vpop.f32.mrf.mxu0
        %3789 = vdwg.mxu0
        %3790 = vmatpush.bf16.msra.mxu0 %v3682
        %3791 = vmatpush.bf16.msra.mxu0 %v3674
        %3792 = vmatpush.bf16.msra.mxu0 %v3666
        %3793 = vmatpush.bf16.msra.mxu0 %v3658
        %3794 = vmatpush.bf16.msra.mxu0 %v3650
        %3795 = vmatpush.bf16.msra.mxu0 %v3642
        %3796 = vmatpush.bf16.msra.mxu0 %v3634
        %3797 = vmatpush.bf16.msra.mxu0 %v3626
        %3798 = vmatmul.bf16.gmra.mxu0 %v3366
        %v3799 = vpop.f32.mrf.mxu0
        %v3800 = vadd.f32 0.0, %v3799
        %v3801 = vpop.f32.mrf.mxu0
        %3802 = vdwg.mxu0
        %3803 = vmatpush.bf16.msra.mxu0 %v3683
        %3804 = vmatpush.bf16.msra.mxu0 %v3675
        %3805 = vmatpush.bf16.msra.mxu0 %v3667
        %3806 = vmatpush.bf16.msra.mxu0 %v3659
        %3807 = vmatpush.bf16.msra.mxu0 %v3651
        %3808 = vmatpush.bf16.msra.mxu0 %v3643
        %3809 = vmatpush.bf16.msra.mxu0 %v3635
        %3810 = vmatpush.bf16.msra.mxu0 %v3627
        %3811 = vmatmul.bf16.gmra.mxu0 %v3366
        %v3812 = vpop.f32.mrf.mxu0
        %v3813 = vadd.f32 0.0, %v3812
        %v3814 = vpop.f32.mrf.mxu0
        %3815 = vdwg.mxu0
        %3816 = vmatpush.bf16.msra.mxu0 %v3684
        %3817 = vmatpush.bf16.msra.mxu0 %v3676
        %3818 = vmatpush.bf16.msra.mxu0 %v3668
        %3819 = vmatpush.bf16.msra.mxu0 %v3660
        %3820 = vmatpush.bf16.msra.mxu0 %v3652
        %3821 = vmatpush.bf16.msra.mxu0 %v3644
        %3822 = vmatpush.bf16.msra.mxu0 %v3636
        %3823 = vmatpush.bf16.msra.mxu0 %v3628
        %3824 = vmatmul.bf16.gmra.mxu0 %v3366
        %v3825 = vpop.f32.mrf.mxu0
        %v3826 = vadd.f32 0.0, %v3825
        %v3827 = vpop.f32.mrf.mxu0
        %3828 = vdwg.mxu0
        %3829 = vmatpush.bf16.msra.mxu0 %v3685
        %3830 = vmatpush.bf16.msra.mxu0 %v3677
        %3831 = vmatpush.bf16.msra.mxu0 %v3669
        %3832 = vmatpush.bf16.msra.mxu0 %v3661
        %3833 = vmatpush.bf16.msra.mxu0 %v3653
        %3834 = vmatpush.bf16.msra.mxu0 %v3645
        %3835 = vmatpush.bf16.msra.mxu0 %v3637
        %3836 = vmatpush.bf16.msra.mxu0 %v3629
        %3837 = vmatmul.bf16.gmra.mxu0 %v3366
        %v3838 = vpop.f32.mrf.mxu0
        %v3839 = vadd.f32 0.0, %v3838
        %v3840 = vpop.f32.mrf.mxu0
        %3841 = vdwg.mxu0
        %3842 = vmatpush.bf16.msra.mxu0 %v3686
        %3843 = vmatpush.bf16.msra.mxu0 %v3678
        %3844 = vmatpush.bf16.msra.mxu0 %v3670
        %3845 = vmatpush.bf16.msra.mxu0 %v3662
        %3846 = vmatpush.bf16.msra.mxu0 %v3654
        %3847 = vmatpush.bf16.msra.mxu0 %v3646
        %3848 = vmatpush.bf16.msra.mxu0 %v3638
        %3849 = vmatpush.bf16.msra.mxu0 %v3630
        %3850 = vmatmul.bf16.gmra.mxu0 %v3366
        %v3851 = vpop.f32.mrf.mxu0
        %v3852 = vadd.f32 0.0, %v3851
        %v3853 = vpop.f32.mrf.mxu0
        %3854 = vdwg.mxu0
        %v3863 = vunpack.c.l.b16 %v2334
        %v3864 = vunpack.c.h.b16 %v2334
        %v3865 = vunpack.c.l.b16 %v2335
        %v3866 = vunpack.c.h.b16 %v2335
        %v3867 = vunpack.c.l.b16 %v2336
        %v3868 = vunpack.c.h.b16 %v2336
        %v3869 = vunpack.c.l.b16 %v2337
        %v3870 = vunpack.c.h.b16 %v2337
        %v3871 = vunpack.c.l.b16 %v2338
        %v3872 = vunpack.c.h.b16 %v2338
        %v3873 = vunpack.c.l.b16 %v2339
        %v3874 = vunpack.c.h.b16 %v2339
        %v3875 = vunpack.c.l.b16 %v2340
        %v3876 = vunpack.c.h.b16 %v2340
        %v3877 = vunpack.c.l.b16 %v2341
        %v3878 = vunpack.c.h.b16 %v2341
        %v3879 = vpack.c.b16 %v3863, %v3863
        %v3880 = vpack.c.b16 %v3864, %v3864
        %v3881 = vpack.c.b16 %v3865, %v3865
        %v3882 = vpack.c.b16 %v3866, %v3866
        %v3883 = vpack.c.b16 %v3867, %v3867
        %v3884 = vpack.c.b16 %v3868, %v3868
        %v3885 = vpack.c.b16 %v3869, %v3869
        %v3886 = vpack.c.b16 %v3870, %v3870
        %v3887 = vpack.c.b16 %v3871, %v3871
        %v3888 = vpack.c.b16 %v3872, %v3872
        %v3889 = vpack.c.b16 %v3873, %v3873
        %v3890 = vpack.c.b16 %v3874, %v3874
        %v3891 = vpack.c.b16 %v3875, %v3875
        %v3892 = vpack.c.b16 %v3876, %v3876
        %v3893 = vpack.c.b16 %v3877, %v3877
        %v3894 = vpack.c.b16 %v3878, %v3878
        %v4935 = vunpack.c.l.b16 %v2342
        %v4936 = vunpack.c.h.b16 %v2342
        %v4937 = vunpack.c.l.b16 %v2343
        %v4938 = vunpack.c.h.b16 %v2343
        %v4939 = vunpack.c.l.b16 %v2344
        %v4940 = vunpack.c.h.b16 %v2344
        %v4941 = vunpack.c.l.b16 %v2345
        %v4942 = vunpack.c.h.b16 %v2345
        %v4943 = vunpack.c.l.b16 %v2346
        %v4944 = vunpack.c.h.b16 %v2346
        %v4945 = vunpack.c.l.b16 %v2347
        %v4946 = vunpack.c.h.b16 %v2347
        %v4947 = vunpack.c.l.b16 %v2348
        %v4948 = vunpack.c.h.b16 %v2348
        %v4949 = vunpack.c.l.b16 %v2349
        %v4950 = vunpack.c.h.b16 %v2349
        %v4951 = vunpack.c.l.b16 %v2350
        %v4952 = vunpack.c.h.b16 %v2350
        %v4953 = vunpack.c.l.b16 %v2351
        %v4954 = vunpack.c.h.b16 %v2351
        %v4955 = vunpack.c.l.b16 %v2352
        %v4956 = vunpack.c.h.b16 %v2352
        %v4957 = vunpack.c.l.b16 %v2353
        %v4958 = vunpack.c.h.b16 %v2353
        %v4959 = vunpack.c.l.b16 %v2354
        %v4960 = vunpack.c.h.b16 %v2354
        %v4961 = vunpack.c.l.b16 %v2355
        %v4962 = vunpack.c.h.b16 %v2355
        %v4963 = vunpack.c.l.b16 %v2356
        %v4964 = vunpack.c.h.b16 %v2356
        %v4965 = vunpack.c.l.b16 %v2357
        %v4966 = vunpack.c.h.b16 %v2357
        %v4967 = vunpack.c.l.b16 %v2358
        %v4968 = vunpack.c.h.b16 %v2358
        %v4969 = vunpack.c.l.b16 %v2359
        %v4970 = vunpack.c.h.b16 %v2359
        %v4971 = vunpack.c.l.b16 %v2360
        %v4972 = vunpack.c.h.b16 %v2360
        %v4973 = vunpack.c.l.b16 %v2361
        %v4974 = vunpack.c.h.b16 %v2361
        %v4975 = vunpack.c.l.b16 %v2362
        %v4976 = vunpack.c.h.b16 %v2362
        %v4977 = vunpack.c.l.b16 %v2363
        %v4978 = vunpack.c.h.b16 %v2363
        %v4979 = vunpack.c.l.b16 %v2364
        %v4980 = vunpack.c.h.b16 %v2364
        %v4981 = vunpack.c.l.b16 %v2365
        %v4982 = vunpack.c.h.b16 %v2365
        %v4983 = vunpack.c.l.b16 %v2366
        %v4984 = vunpack.c.h.b16 %v2366
        %v4985 = vunpack.c.l.b16 %v2367
        %v4986 = vunpack.c.h.b16 %v2367
        %v4987 = vunpack.c.l.b16 %v2368
        %v4988 = vunpack.c.h.b16 %v2368
        %v4989 = vunpack.c.l.b16 %v2369
        %v4990 = vunpack.c.h.b16 %v2369
        %v4991 = vunpack.c.l.b16 %v2370
        %v4992 = vunpack.c.h.b16 %v2370
        %v4993 = vunpack.c.l.b16 %v2371
        %v4994 = vunpack.c.h.b16 %v2371
        %v4995 = vunpack.c.l.b16 %v2372
        %v4996 = vunpack.c.h.b16 %v2372
        %v4997 = vunpack.c.l.b16 %v2373
        %v4998 = vunpack.c.h.b16 %v2373
        %v4999 = vunpack.c.l.b16 %v2374
        %v5000 = vunpack.c.h.b16 %v2374
        %v5001 = vunpack.c.l.b16 %v2375
        %v5002 = vunpack.c.h.b16 %v2375
        %v5003 = vunpack.c.l.b16 %v2376
        %v5004 = vunpack.c.h.b16 %v2376
        %v5005 = vunpack.c.l.b16 %v2377
        %v5006 = vunpack.c.h.b16 %v2377
        %v5007 = vunpack.c.l.b16 %v2378
        %v5008 = vunpack.c.h.b16 %v2378
        %v5009 = vunpack.c.l.b16 %v2379
        %v5010 = vunpack.c.h.b16 %v2379
        %v5011 = vunpack.c.l.b16 %v2380
        %v5012 = vunpack.c.h.b16 %v2380
        %v5013 = vunpack.c.l.b16 %v2381
        %v5014 = vunpack.c.h.b16 %v2381
        %v5015 = vunpack.c.l.b16 %v2382
        %v5016 = vunpack.c.h.b16 %v2382
        %v5017 = vunpack.c.l.b16 %v2383
        %v5018 = vunpack.c.h.b16 %v2383
        %v5019 = vunpack.c.l.b16 %v2384
        %v5020 = vunpack.c.h.b16 %v2384
        %v5021 = vunpack.c.l.b16 %v2385
        %v5022 = vunpack.c.h.b16 %v2385
        %v5023 = vunpack.c.l.b16 %v2386
        %v5024 = vunpack.c.h.b16 %v2386
        %v5025 = vunpack.c.l.b16 %v2387
        %v5026 = vunpack.c.h.b16 %v2387
        %v5027 = vunpack.c.l.b16 %v2388
        %v5028 = vunpack.c.h.b16 %v2388
        %v5029 = vunpack.c.l.b16 %v2389
        %v5030 = vunpack.c.h.b16 %v2389
        %v5031 = vunpack.c.l.b16 %v2390
        %v5032 = vunpack.c.h.b16 %v2390
        %v5033 = vunpack.c.l.b16 %v2391
        %v5034 = vunpack.c.h.b16 %v2391
        %v5035 = vunpack.c.l.b16 %v2392
        %v5036 = vunpack.c.h.b16 %v2392
        %v5037 = vunpack.c.l.b16 %v2393
        %v5038 = vunpack.c.h.b16 %v2393
        %v5039 = vunpack.c.l.b16 %v2394
        %v5040 = vunpack.c.h.b16 %v2394
        %v5041 = vunpack.c.l.b16 %v2395
        %v5042 = vunpack.c.h.b16 %v2395
        %v5043 = vunpack.c.l.b16 %v2396
        %v5044 = vunpack.c.h.b16 %v2396
        %v5045 = vunpack.c.l.b16 %v2397
        %v5046 = vunpack.c.h.b16 %v2397
        %v5047 = vunpack.c.l.b16 %v2398
        %v5048 = vunpack.c.h.b16 %v2398
        %v5049 = vunpack.c.l.b16 %v2399
        %v5050 = vunpack.c.h.b16 %v2399
        %v5051 = vunpack.c.l.b16 %v2400
        %v5052 = vunpack.c.h.b16 %v2400
        %v5053 = vunpack.c.l.b16 %v2401
        %v5054 = vunpack.c.h.b16 %v2401
        %v5055 = vunpack.c.l.b16 %v2402
        %v5056 = vunpack.c.h.b16 %v2402
        %v5057 = vunpack.c.l.b16 %v2403
        %v5058 = vunpack.c.h.b16 %v2403
        %v5059 = vunpack.c.l.b16 %v2404
        %v5060 = vunpack.c.h.b16 %v2404
        %v5061 = vunpack.c.l.b16 %v2405
        %v5062 = vunpack.c.h.b16 %v2405
        %v5063 = vunpack.c.l.b16 %v2406
        %v5064 = vunpack.c.h.b16 %v2406
        %v5065 = vunpack.c.l.b16 %v2407
        %v5066 = vunpack.c.h.b16 %v2407
        %v5067 = vunpack.c.l.b16 %v2408
        %v5068 = vunpack.c.h.b16 %v2408
        %v5069 = vunpack.c.l.b16 %v2409
        %v5070 = vunpack.c.h.b16 %v2409
        %v5071 = vunpack.c.l.b16 %v2410
        %v5072 = vunpack.c.h.b16 %v2410
        %v5073 = vunpack.c.l.b16 %v2411
        %v5074 = vunpack.c.h.b16 %v2411
        %v5075 = vunpack.c.l.b16 %v2412
        %v5076 = vunpack.c.h.b16 %v2412
        %v5077 = vunpack.c.l.b16 %v2413
        %v5078 = vunpack.c.h.b16 %v2413
        %v5079 = vunpack.c.l.b16 %v2414
        %v5080 = vunpack.c.h.b16 %v2414
        %v5081 = vunpack.c.l.b16 %v2415
        %v5082 = vunpack.c.h.b16 %v2415
        %v5083 = vunpack.c.l.b16 %v2416
        %v5084 = vunpack.c.h.b16 %v2416
        %v5085 = vunpack.c.l.b16 %v2417
        %v5086 = vunpack.c.h.b16 %v2417
        %v5087 = vunpack.c.l.b16 %v2418
        %v5088 = vunpack.c.h.b16 %v2418
        %v5089 = vunpack.c.l.b16 %v2419
        %v5090 = vunpack.c.h.b16 %v2419
        %v5091 = vunpack.c.l.b16 %v2420
        %v5092 = vunpack.c.h.b16 %v2420
        %v5093 = vunpack.c.l.b16 %v2421
        %v5094 = vunpack.c.h.b16 %v2421
        %v5095 = vunpack.c.l.b16 %v2422
        %v5096 = vunpack.c.h.b16 %v2422
        %v5097 = vunpack.c.l.b16 %v2423
        %v5098 = vunpack.c.h.b16 %v2423
        %v5099 = vunpack.c.l.b16 %v2424
        %v5100 = vunpack.c.h.b16 %v2424
        %v5101 = vunpack.c.l.b16 %v2425
        %v5102 = vunpack.c.h.b16 %v2425
        %v5103 = vunpack.c.l.b16 %v2426
        %v5104 = vunpack.c.h.b16 %v2426
        %v5105 = vunpack.c.l.b16 %v2427
        %v5106 = vunpack.c.h.b16 %v2427
        %v5107 = vunpack.c.l.b16 %v2428
        %v5108 = vunpack.c.h.b16 %v2428
        %v5109 = vunpack.c.l.b16 %v2429
        %v5110 = vunpack.c.h.b16 %v2429
        %v5111 = vunpack.c.l.b16 %v2430
        %v5112 = vunpack.c.h.b16 %v2430
        %v5113 = vunpack.c.l.b16 %v2431
        %v5114 = vunpack.c.h.b16 %v2431
        %v5115 = vunpack.c.l.b16 %v2432
        %v5116 = vunpack.c.h.b16 %v2432
        %v5117 = vunpack.c.l.b16 %v2433
        %v5118 = vunpack.c.h.b16 %v2433
        %v5119 = vunpack.c.l.b16 %v2434
        %v5120 = vunpack.c.h.b16 %v2434
        %v5121 = vunpack.c.l.b16 %v2435
        %v5122 = vunpack.c.h.b16 %v2435
        %v5123 = vunpack.c.l.b16 %v2436
        %v5124 = vunpack.c.h.b16 %v2436
        %v5125 = vunpack.c.l.b16 %v2437
        %v5126 = vunpack.c.h.b16 %v2437
        %v5127 = vunpack.c.l.b16 %v2438
        %v5128 = vunpack.c.h.b16 %v2438
        %v5129 = vunpack.c.l.b16 %v2439
        %v5130 = vunpack.c.h.b16 %v2439
        %v5131 = vunpack.c.l.b16 %v2440
        %v5132 = vunpack.c.h.b16 %v2440
        %v5133 = vunpack.c.l.b16 %v2441
        %v5134 = vunpack.c.h.b16 %v2441
        %v5135 = vunpack.c.l.b16 %v2442
        %v5136 = vunpack.c.h.b16 %v2442
        %v5137 = vunpack.c.l.b16 %v2443
        %v5138 = vunpack.c.h.b16 %v2443
        %v5139 = vunpack.c.l.b16 %v2444
        %v5140 = vunpack.c.h.b16 %v2444
        %v5141 = vunpack.c.l.b16 %v2445
        %v5142 = vunpack.c.h.b16 %v2445
        %v5143 = vunpack.c.l.b16 %v2446
        %v5144 = vunpack.c.h.b16 %v2446
        %v5145 = vunpack.c.l.b16 %v2447
        %v5146 = vunpack.c.h.b16 %v2447
        %v5147 = vunpack.c.l.b16 %v2448
        %v5148 = vunpack.c.h.b16 %v2448
        %v5149 = vunpack.c.l.b16 %v2449
        %v5150 = vunpack.c.h.b16 %v2449
        %v5151 = vunpack.c.l.b16 %v2450
        %v5152 = vunpack.c.h.b16 %v2450
        %v5153 = vunpack.c.l.b16 %v2451
        %v5154 = vunpack.c.h.b16 %v2451
        %v5155 = vunpack.c.l.b16 %v2452
        %v5156 = vunpack.c.h.b16 %v2452
        %v5157 = vunpack.c.l.b16 %v2453
        %v5158 = vunpack.c.h.b16 %v2453
        %v5159 = vunpack.c.l.b16 %v2454
        %v5160 = vunpack.c.h.b16 %v2454
        %v5161 = vunpack.c.l.b16 %v2455
        %v5162 = vunpack.c.h.b16 %v2455
        %v5163 = vunpack.c.l.b16 %v2456
        %v5164 = vunpack.c.h.b16 %v2456
        %v5165 = vunpack.c.l.b16 %v2457
        %v5166 = vunpack.c.h.b16 %v2457
        %v5167 = vunpack.c.l.b16 %v2458
        %v5168 = vunpack.c.h.b16 %v2458
        %v5169 = vunpack.c.l.b16 %v2459
        %v5170 = vunpack.c.h.b16 %v2459
        %v5171 = vunpack.c.l.b16 %v2460
        %v5172 = vunpack.c.h.b16 %v2460
        %v5173 = vunpack.c.l.b16 %v2461
        %v5174 = vunpack.c.h.b16 %v2461
        %v5175 = vunpack.c.l.b16 %v2462
        %v5176 = vunpack.c.h.b16 %v2462
        %v5177 = vunpack.c.l.b16 %v2463
        %v5178 = vunpack.c.h.b16 %v2463
        %v5179 = vunpack.c.l.b16 %v2464
        %v5180 = vunpack.c.h.b16 %v2464
        %v5181 = vunpack.c.l.b16 %v2465
        %v5182 = vunpack.c.h.b16 %v2465
        %v5183 = vunpack.c.l.b16 %v2466
        %v5184 = vunpack.c.h.b16 %v2466
        %v5185 = vunpack.c.l.b16 %v2467
        %v5186 = vunpack.c.h.b16 %v2467
        %v5187 = vunpack.c.l.b16 %v2468
        %v5188 = vunpack.c.h.b16 %v2468
        %v5189 = vunpack.c.l.b16 %v2469
        %v5190 = vunpack.c.h.b16 %v2469
        %v5191 = vunpack.c.l.b16 %v2470
        %v5192 = vunpack.c.h.b16 %v2470
        %v5193 = vunpack.c.l.b16 %v2471
        %v5194 = vunpack.c.h.b16 %v2471
        %v5195 = vunpack.c.l.b16 %v2472
        %v5196 = vunpack.c.h.b16 %v2472
        %v5197 = vunpack.c.l.b16 %v2473
        %v5198 = vunpack.c.h.b16 %v2473
        %v5199 = vunpack.c.l.b16 %v2474
        %v5200 = vunpack.c.h.b16 %v2474
        %v5201 = vunpack.c.l.b16 %v2475
        %v5202 = vunpack.c.h.b16 %v2475
        %v5203 = vunpack.c.l.b16 %v2476
        %v5204 = vunpack.c.h.b16 %v2476
        %v5205 = vunpack.c.l.b16 %v2477
        %v5206 = vunpack.c.h.b16 %v2477
        %v5207 = vunpack.c.l.b16 %v2478
        %v5208 = vunpack.c.h.b16 %v2478
        %v5209 = vunpack.c.l.b16 %v2479
        %v5210 = vunpack.c.h.b16 %v2479
        %v5211 = vunpack.c.l.b16 %v2480
        %v5212 = vunpack.c.h.b16 %v2480
        %v5213 = vunpack.c.l.b16 %v2481
        %v5214 = vunpack.c.h.b16 %v2481
        %v5215 = vunpack.c.l.b16 %v2482
        %v5216 = vunpack.c.h.b16 %v2482
        %v5217 = vunpack.c.l.b16 %v2483
        %v5218 = vunpack.c.h.b16 %v2483
        %v5219 = vunpack.c.l.b16 %v2484
        %v5220 = vunpack.c.h.b16 %v2484
        %v5221 = vunpack.c.l.b16 %v2485
        %v5222 = vunpack.c.h.b16 %v2485
        %v5223 = vunpack.c.l.b16 %v2486
        %v5224 = vunpack.c.h.b16 %v2486
        %v5225 = vunpack.c.l.b16 %v2487
        %v5226 = vunpack.c.h.b16 %v2487
        %v5227 = vunpack.c.l.b16 %v2488
        %v5228 = vunpack.c.h.b16 %v2488
        %v5229 = vunpack.c.l.b16 %v2489
        %v5230 = vunpack.c.h.b16 %v2489
        %v5231 = vunpack.c.l.b16 %v2490
        %v5232 = vunpack.c.h.b16 %v2490
        %v5233 = vunpack.c.l.b16 %v2491
        %v5234 = vunpack.c.h.b16 %v2491
        %v5235 = vunpack.c.l.b16 %v2492
        %v5236 = vunpack.c.h.b16 %v2492
        %v5237 = vunpack.c.l.b16 %v2493
        %v5238 = vunpack.c.h.b16 %v2493
        %v5239 = vunpack.c.l.b16 %v2494
        %v5240 = vunpack.c.h.b16 %v2494
        %v5241 = vunpack.c.l.b16 %v2495
        %v5242 = vunpack.c.h.b16 %v2495
        %v5243 = vunpack.c.l.b16 %v2496
        %v5244 = vunpack.c.h.b16 %v2496
        %v5245 = vunpack.c.l.b16 %v2497
        %v5246 = vunpack.c.h.b16 %v2497
        %v5247 = vunpack.c.l.b16 %v2498
        %v5248 = vunpack.c.h.b16 %v2498
        %v5249 = vunpack.c.l.b16 %v2499
        %v5250 = vunpack.c.h.b16 %v2499
        %v5251 = vunpack.c.l.b16 %v2500
        %v5252 = vunpack.c.h.b16 %v2500
        %v5253 = vunpack.c.l.b16 %v2501
        %v5254 = vunpack.c.h.b16 %v2501
        %v5255 = vunpack.c.l.b16 %v2502
        %v5256 = vunpack.c.h.b16 %v2502
        %v5257 = vunpack.c.l.b16 %v2503
        %v5258 = vunpack.c.h.b16 %v2503
        %v5259 = vunpack.c.l.b16 %v2504
        %v5260 = vunpack.c.h.b16 %v2504
        %v5261 = vunpack.c.l.b16 %v2505
        %v5262 = vunpack.c.h.b16 %v2505
        %v5263 = vunpack.c.l.b16 %v2506
        %v5264 = vunpack.c.h.b16 %v2506
        %v5265 = vunpack.c.l.b16 %v2507
        %v5266 = vunpack.c.h.b16 %v2507
        %v5267 = vunpack.c.l.b16 %v2508
        %v5268 = vunpack.c.h.b16 %v2508
        %v5269 = vunpack.c.l.b16 %v2509
        %v5270 = vunpack.c.h.b16 %v2509
        %v5271 = vunpack.c.l.b16 %v2510
        %v5272 = vunpack.c.h.b16 %v2510
        %v5273 = vunpack.c.l.b16 %v2511
        %v5274 = vunpack.c.h.b16 %v2511
        %v5275 = vunpack.c.l.b16 %v2512
        %v5276 = vunpack.c.h.b16 %v2512
        %v5277 = vunpack.c.l.b16 %v2513
        %v5278 = vunpack.c.h.b16 %v2513
        %v5279 = vunpack.c.l.b16 %v2514
        %v5280 = vunpack.c.h.b16 %v2514
        %v5281 = vunpack.c.l.b16 %v2515
        %v5282 = vunpack.c.h.b16 %v2515
        %v5283 = vunpack.c.l.b16 %v2516
        %v5284 = vunpack.c.h.b16 %v2516
        %v5285 = vunpack.c.l.b16 %v2517
        %v5286 = vunpack.c.h.b16 %v2517
        %v5287 = vunpack.c.l.b16 %v2518
        %v5288 = vunpack.c.h.b16 %v2518
        %v5289 = vunpack.c.l.b16 %v2519
        %v5290 = vunpack.c.h.b16 %v2519
        %v5291 = vunpack.c.l.b16 %v2520
        %v5292 = vunpack.c.h.b16 %v2520
        %v5293 = vunpack.c.l.b16 %v2521
        %v5294 = vunpack.c.h.b16 %v2521
        %v5295 = vunpack.c.l.b16 %v2522
        %v5296 = vunpack.c.h.b16 %v2522
        %v5297 = vunpack.c.l.b16 %v2523
        %v5298 = vunpack.c.h.b16 %v2523
        %v5299 = vunpack.c.l.b16 %v2524
        %v5300 = vunpack.c.h.b16 %v2524
        %v5301 = vunpack.c.l.b16 %v2525
        %v5302 = vunpack.c.h.b16 %v2525
        %v5303 = vunpack.c.l.b16 %v2526
        %v5304 = vunpack.c.h.b16 %v2526
        %v5305 = vunpack.c.l.b16 %v2527
        %v5306 = vunpack.c.h.b16 %v2527
        %v5307 = vunpack.c.l.b16 %v2528
        %v5308 = vunpack.c.h.b16 %v2528
        %v5309 = vunpack.c.l.b16 %v2529
        %v5310 = vunpack.c.h.b16 %v2529
        %v5311 = vunpack.c.l.b16 %v2530
        %v5312 = vunpack.c.h.b16 %v2530
        %v5313 = vunpack.c.l.b16 %v2531
        %v5314 = vunpack.c.h.b16 %v2531
        %v5315 = vunpack.c.l.b16 %v2532
        %v5316 = vunpack.c.h.b16 %v2532
        %v5317 = vunpack.c.l.b16 %v2533
        %v5318 = vunpack.c.h.b16 %v2533
        %v5319 = vunpack.c.l.b16 %v2534
        %v5320 = vunpack.c.h.b16 %v2534
        %v5321 = vunpack.c.l.b16 %v2535
        %v5322 = vunpack.c.h.b16 %v2535
        %v5323 = vunpack.c.l.b16 %v2536
        %v5324 = vunpack.c.h.b16 %v2536
        %v5325 = vunpack.c.l.b16 %v2537
        %v5326 = vunpack.c.h.b16 %v2537
        %v5327 = vunpack.c.l.b16 %v2538
        %v5328 = vunpack.c.h.b16 %v2538
        %v5329 = vunpack.c.l.b16 %v2539
        %v5330 = vunpack.c.h.b16 %v2539
        %v5331 = vunpack.c.l.b16 %v2540
        %v5332 = vunpack.c.h.b16 %v2540
        %v5333 = vunpack.c.l.b16 %v2541
        %v5334 = vunpack.c.h.b16 %v2541
        %v5335 = vunpack.c.l.b16 %v2542
        %v5336 = vunpack.c.h.b16 %v2542
        %v5337 = vunpack.c.l.b16 %v2543
        %v5338 = vunpack.c.h.b16 %v2543
        %v5339 = vunpack.c.l.b16 %v2544
        %v5340 = vunpack.c.h.b16 %v2544
        %v5341 = vunpack.c.l.b16 %v2545
        %v5342 = vunpack.c.h.b16 %v2545
        %v5343 = vunpack.c.l.b16 %v2546
        %v5344 = vunpack.c.h.b16 %v2546
        %v5345 = vunpack.c.l.b16 %v2547
        %v5346 = vunpack.c.h.b16 %v2547
        %v5347 = vunpack.c.l.b16 %v2548
        %v5348 = vunpack.c.h.b16 %v2548
        %v5349 = vunpack.c.l.b16 %v2549
        %v5350 = vunpack.c.h.b16 %v2549
        %v5351 = vunpack.c.l.b16 %v2550
        %v5352 = vunpack.c.h.b16 %v2550
        %v5353 = vunpack.c.l.b16 %v2551
        %v5354 = vunpack.c.h.b16 %v2551
        %v5355 = vunpack.c.l.b16 %v2552
        %v5356 = vunpack.c.h.b16 %v2552
        %v5357 = vunpack.c.l.b16 %v2553
        %v5358 = vunpack.c.h.b16 %v2553
        %v5359 = vunpack.c.l.b16 %v2554
        %v5360 = vunpack.c.h.b16 %v2554
        %v5361 = vunpack.c.l.b16 %v2555
        %v5362 = vunpack.c.h.b16 %v2555
        %v5363 = vunpack.c.l.b16 %v2556
        %v5364 = vunpack.c.h.b16 %v2556
        %v5365 = vunpack.c.l.b16 %v2557
        %v5366 = vunpack.c.h.b16 %v2557
        %v5367 = vunpack.c.l.b16 %v2558
        %v5368 = vunpack.c.h.b16 %v2558
        %v5369 = vunpack.c.l.b16 %v2559
        %v5370 = vunpack.c.h.b16 %v2559
        %v5371 = vunpack.c.l.b16 %v2560
        %v5372 = vunpack.c.h.b16 %v2560
        %v5373 = vunpack.c.l.b16 %v2561
        %v5374 = vunpack.c.h.b16 %v2561
        %v5375 = vunpack.c.l.b16 %v2562
        %v5376 = vunpack.c.h.b16 %v2562
        %v5377 = vunpack.c.l.b16 %v2563
        %v5378 = vunpack.c.h.b16 %v2563
        %v5379 = vunpack.c.l.b16 %v2564
        %v5380 = vunpack.c.h.b16 %v2564
        %v5381 = vunpack.c.l.b16 %v2565
        %v5382 = vunpack.c.h.b16 %v2565
        %v5383 = vunpack.c.l.b16 %v2566
        %v5384 = vunpack.c.h.b16 %v2566
        %v5385 = vunpack.c.l.b16 %v2567
        %v5386 = vunpack.c.h.b16 %v2567
        %v5387 = vunpack.c.l.b16 %v2568
        %v5388 = vunpack.c.h.b16 %v2568
        %v5389 = vunpack.c.l.b16 %v2569
        %v5390 = vunpack.c.h.b16 %v2569
        %v5391 = vunpack.c.l.b16 %v2570
        %v5392 = vunpack.c.h.b16 %v2570
        %v5393 = vunpack.c.l.b16 %v2571
        %v5394 = vunpack.c.h.b16 %v2571
        %v5395 = vunpack.c.l.b16 %v2572
        %v5396 = vunpack.c.h.b16 %v2572
        %v5397 = vunpack.c.l.b16 %v2573
        %v5398 = vunpack.c.h.b16 %v2573
        %v5399 = vunpack.c.l.b16 %v2574
        %v5400 = vunpack.c.h.b16 %v2574
        %v5401 = vunpack.c.l.b16 %v2575
        %v5402 = vunpack.c.h.b16 %v2575
        %v5403 = vunpack.c.l.b16 %v2576
        %v5404 = vunpack.c.h.b16 %v2576
        %v5405 = vunpack.c.l.b16 %v2577
        %v5406 = vunpack.c.h.b16 %v2577
        %v5407 = vunpack.c.l.b16 %v2578
        %v5408 = vunpack.c.h.b16 %v2578
        %v5409 = vunpack.c.l.b16 %v2579
        %v5410 = vunpack.c.h.b16 %v2579
        %v5411 = vunpack.c.l.b16 %v2580
        %v5412 = vunpack.c.h.b16 %v2580
        %v5413 = vunpack.c.l.b16 %v2581
        %v5414 = vunpack.c.h.b16 %v2581
        %v5415 = vunpack.c.l.b16 %v2582
        %v5416 = vunpack.c.h.b16 %v2582
        %v5417 = vunpack.c.l.b16 %v2583
        %v5418 = vunpack.c.h.b16 %v2583
        %v5419 = vunpack.c.l.b16 %v2584
        %v5420 = vunpack.c.h.b16 %v2584
        %v5421 = vunpack.c.l.b16 %v2585
        %v5422 = vunpack.c.h.b16 %v2585
        %v5423 = vunpack.c.l.b16 %v2586
        %v5424 = vunpack.c.h.b16 %v2586
        %v5425 = vunpack.c.l.b16 %v2587
        %v5426 = vunpack.c.h.b16 %v2587
        %v5427 = vunpack.c.l.b16 %v2588
        %v5428 = vunpack.c.h.b16 %v2588
        %v5429 = vunpack.c.l.b16 %v2589
        %v5430 = vunpack.c.h.b16 %v2589
        %v5431 = vunpack.c.l.b16 %v2590
        %v5432 = vunpack.c.h.b16 %v2590
        %v5433 = vunpack.c.l.b16 %v2591
        %v5434 = vunpack.c.h.b16 %v2591
        %v5435 = vunpack.c.l.b16 %v2592
        %v5436 = vunpack.c.h.b16 %v2592
        %v5437 = vunpack.c.l.b16 %v2593
        %v5438 = vunpack.c.h.b16 %v2593
        %v5439 = vunpack.c.l.b16 %v2594
        %v5440 = vunpack.c.h.b16 %v2594
        %v5441 = vunpack.c.l.b16 %v2595
        %v5442 = vunpack.c.h.b16 %v2595
        %v5443 = vunpack.c.l.b16 %v2596
        %v5444 = vunpack.c.h.b16 %v2596
        %v5445 = vunpack.c.l.b16 %v2597
        %v5446 = vunpack.c.h.b16 %v2597
        %v5447 = vunpack.c.l.b16 %v2598
        %v5448 = vunpack.c.h.b16 %v2598
        %v5449 = vunpack.c.l.b16 %v2599
        %v5450 = vunpack.c.h.b16 %v2599
        %v5451 = vunpack.c.l.b16 %v2600
        %v5452 = vunpack.c.h.b16 %v2600
        %v5453 = vunpack.c.l.b16 %v2601
        %v5454 = vunpack.c.h.b16 %v2601
        %v5455 = vunpack.c.l.b16 %v2602
        %v5456 = vunpack.c.h.b16 %v2602
        %v5457 = vunpack.c.l.b16 %v2603
        %v5458 = vunpack.c.h.b16 %v2603
        %v5459 = vunpack.c.l.b16 %v2604
        %v5460 = vunpack.c.h.b16 %v2604
        %v5461 = vunpack.c.l.b16 %v2605
        %v5462 = vunpack.c.h.b16 %v2605
        %v5463 = vunpack.c.l.b16 %v2606
        %v5464 = vunpack.c.h.b16 %v2606
        %v5465 = vunpack.c.l.b16 %v2607
        %v5466 = vunpack.c.h.b16 %v2607
        %v5467 = vunpack.c.l.b16 %v2608
        %v5468 = vunpack.c.h.b16 %v2608
        %v5469 = vunpack.c.l.b16 %v2609
        %v5470 = vunpack.c.h.b16 %v2609
        %v5471 = vunpack.c.l.b16 %v2610
        %v5472 = vunpack.c.h.b16 %v2610
        %v5473 = vunpack.c.l.b16 %v2611
        %v5474 = vunpack.c.h.b16 %v2611
        %v5475 = vunpack.c.l.b16 %v2612
        %v5476 = vunpack.c.h.b16 %v2612
        %v5477 = vunpack.c.l.b16 %v2613
        %v5478 = vunpack.c.h.b16 %v2613
        %v5479 = vunpack.c.l.b16 %v2614
        %v5480 = vunpack.c.h.b16 %v2614
        %v5481 = vunpack.c.l.b16 %v2615
        %v5482 = vunpack.c.h.b16 %v2615
        %v5483 = vunpack.c.l.b16 %v2616
        %v5484 = vunpack.c.h.b16 %v2616
        %v5485 = vunpack.c.l.b16 %v2617
        %v5486 = vunpack.c.h.b16 %v2617
        %v5487 = vunpack.c.l.b16 %v2618
        %v5488 = vunpack.c.h.b16 %v2618
        %v5489 = vunpack.c.l.b16 %v2619
        %v5490 = vunpack.c.h.b16 %v2619
        %v5491 = vunpack.c.l.b16 %v2620
        %v5492 = vunpack.c.h.b16 %v2620
        %v5493 = vunpack.c.l.b16 %v2621
        %v5494 = vunpack.c.h.b16 %v2621
        %v5495 = vunpack.c.l.b16 %v2622
        %v5496 = vunpack.c.h.b16 %v2622
        %v5497 = vunpack.c.l.b16 %v2623
        %v5498 = vunpack.c.h.b16 %v2623
        %v5499 = vunpack.c.l.b16 %v2624
        %v5500 = vunpack.c.h.b16 %v2624
        %v5501 = vunpack.c.l.b16 %v2625
        %v5502 = vunpack.c.h.b16 %v2625
        %v5503 = vunpack.c.l.b16 %v2626
        %v5504 = vunpack.c.h.b16 %v2626
        %v5505 = vunpack.c.l.b16 %v2627
        %v5506 = vunpack.c.h.b16 %v2627
        %v5507 = vunpack.c.l.b16 %v2628
        %v5508 = vunpack.c.h.b16 %v2628
        %v5509 = vunpack.c.l.b16 %v2629
        %v5510 = vunpack.c.h.b16 %v2629
        %v5511 = vunpack.c.l.b16 %v2630
        %v5512 = vunpack.c.h.b16 %v2630
        %v5513 = vunpack.c.l.b16 %v2631
        %v5514 = vunpack.c.h.b16 %v2631
        %v5515 = vunpack.c.l.b16 %v2632
        %v5516 = vunpack.c.h.b16 %v2632
        %v5517 = vunpack.c.l.b16 %v2633
        %v5518 = vunpack.c.h.b16 %v2633
        %v5519 = vunpack.c.l.b16 %v2634
        %v5520 = vunpack.c.h.b16 %v2634
        %v5521 = vunpack.c.l.b16 %v2635
        %v5522 = vunpack.c.h.b16 %v2635
        %v5523 = vunpack.c.l.b16 %v2636
        %v5524 = vunpack.c.h.b16 %v2636
        %v5525 = vunpack.c.l.b16 %v2637
        %v5526 = vunpack.c.h.b16 %v2637
        %v5527 = vunpack.c.l.b16 %v2638
        %v5528 = vunpack.c.h.b16 %v2638
        %v5529 = vunpack.c.l.b16 %v2639
        %v5530 = vunpack.c.h.b16 %v2639
        %v5531 = vunpack.c.l.b16 %v2640
        %v5532 = vunpack.c.h.b16 %v2640
        %v5533 = vunpack.c.l.b16 %v2641
        %v5534 = vunpack.c.h.b16 %v2641
        %v5535 = vunpack.c.l.b16 %v2642
        %v5536 = vunpack.c.h.b16 %v2642
        %v5537 = vunpack.c.l.b16 %v2643
        %v5538 = vunpack.c.h.b16 %v2643
        %v5539 = vunpack.c.l.b16 %v2644
        %v5540 = vunpack.c.h.b16 %v2644
        %v5541 = vunpack.c.l.b16 %v2645
        %v5542 = vunpack.c.h.b16 %v2645
        %v5543 = vunpack.c.l.b16 %v2646
        %v5544 = vunpack.c.h.b16 %v2646
        %v5545 = vunpack.c.l.b16 %v2647
        %v5546 = vunpack.c.h.b16 %v2647
        %v5547 = vunpack.c.l.b16 %v2648
        %v5548 = vunpack.c.h.b16 %v2648
        %v5549 = vunpack.c.l.b16 %v2649
        %v5550 = vunpack.c.h.b16 %v2649
        %v5551 = vunpack.c.l.b16 %v2650
        %v5552 = vunpack.c.h.b16 %v2650
        %v5553 = vunpack.c.l.b16 %v2651
        %v5554 = vunpack.c.h.b16 %v2651
        %v5555 = vunpack.c.l.b16 %v2652
        %v5556 = vunpack.c.h.b16 %v2652
        %v5557 = vunpack.c.l.b16 %v2653
        %v5558 = vunpack.c.h.b16 %v2653
        %v5559 = vunpack.c.l.b16 %v2654
        %v5560 = vunpack.c.h.b16 %v2654
        %v5561 = vunpack.c.l.b16 %v2655
        %v5562 = vunpack.c.h.b16 %v2655
        %v5563 = vunpack.c.l.b16 %v2656
        %v5564 = vunpack.c.h.b16 %v2656
        %v5565 = vunpack.c.l.b16 %v2657
        %v5566 = vunpack.c.h.b16 %v2657
        %v5567 = vunpack.c.l.b16 %v2658
        %v5568 = vunpack.c.h.b16 %v2658
        %v5569 = vunpack.c.l.b16 %v2659
        %v5570 = vunpack.c.h.b16 %v2659
        %v5571 = vunpack.c.l.b16 %v2660
        %v5572 = vunpack.c.h.b16 %v2660
        %v5573 = vunpack.c.l.b16 %v2661
        %v5574 = vunpack.c.h.b16 %v2661
        %v5575 = vunpack.c.l.b16 %v2662
        %v5576 = vunpack.c.h.b16 %v2662
        %v5577 = vunpack.c.l.b16 %v2663
        %v5578 = vunpack.c.h.b16 %v2663
        %v5579 = vunpack.c.l.b16 %v2664
        %v5580 = vunpack.c.h.b16 %v2664
        %v5581 = vunpack.c.l.b16 %v2665
        %v5582 = vunpack.c.h.b16 %v2665
        %v5583 = vunpack.c.l.b16 %v2666
        %v5584 = vunpack.c.h.b16 %v2666
        %v5585 = vunpack.c.l.b16 %v2667
        %v5586 = vunpack.c.h.b16 %v2667
        %v5587 = vunpack.c.l.b16 %v2668
        %v5588 = vunpack.c.h.b16 %v2668
        %v5589 = vunpack.c.l.b16 %v2669
        %v5590 = vunpack.c.h.b16 %v2669
        %v5591 = vunpack.c.l.b16 %v2670
        %v5592 = vunpack.c.h.b16 %v2670
        %v5593 = vunpack.c.l.b16 %v2671
        %v5594 = vunpack.c.h.b16 %v2671
        %v5595 = vunpack.c.l.b16 %v2672
        %v5596 = vunpack.c.h.b16 %v2672
        %v5597 = vunpack.c.l.b16 %v2673
        %v5598 = vunpack.c.h.b16 %v2673
        %v5599 = vunpack.c.l.b16 %v2674
        %v5600 = vunpack.c.h.b16 %v2674
        %v5601 = vunpack.c.l.b16 %v2675
        %v5602 = vunpack.c.h.b16 %v2675
        %v5603 = vunpack.c.l.b16 %v2676
        %v5604 = vunpack.c.h.b16 %v2676
        %v5605 = vunpack.c.l.b16 %v2677
        %v5606 = vunpack.c.h.b16 %v2677
        %v5607 = vunpack.c.l.b16 %v2678
        %v5608 = vunpack.c.h.b16 %v2678
        %v5609 = vunpack.c.l.b16 %v2679
        %v5610 = vunpack.c.h.b16 %v2679
        %v5611 = vunpack.c.l.b16 %v2680
        %v5612 = vunpack.c.h.b16 %v2680
        %v5613 = vunpack.c.l.b16 %v2681
        %v5614 = vunpack.c.h.b16 %v2681
        %v5615 = vunpack.c.l.b16 %v2682
        %v5616 = vunpack.c.h.b16 %v2682
        %v5617 = vunpack.c.l.b16 %v2683
        %v5618 = vunpack.c.h.b16 %v2683
        %v5619 = vunpack.c.l.b16 %v2684
        %v5620 = vunpack.c.h.b16 %v2684
        %v5621 = vunpack.c.l.b16 %v2685
        %v5622 = vunpack.c.h.b16 %v2685
        %v5623 = vunpack.c.l.b16 %v2686
        %v5624 = vunpack.c.h.b16 %v2686
        %v5625 = vunpack.c.l.b16 %v2687
        %v5626 = vunpack.c.h.b16 %v2687
        %v5627 = vunpack.c.l.b16 %v2688
        %v5628 = vunpack.c.h.b16 %v2688
        %v5629 = vunpack.c.l.b16 %v2689
        %v5630 = vunpack.c.h.b16 %v2689
        %v5631 = vunpack.c.l.b16 %v2690
        %v5632 = vunpack.c.h.b16 %v2690
        %v5633 = vunpack.c.l.b16 %v2691
        %v5634 = vunpack.c.h.b16 %v2691
        %v5635 = vunpack.c.l.b16 %v2692
        %v5636 = vunpack.c.h.b16 %v2692
        %v5637 = vunpack.c.l.b16 %v2693
        %v5638 = vunpack.c.h.b16 %v2693
        %v5639 = vunpack.c.l.b16 %v2694
        %v5640 = vunpack.c.h.b16 %v2694
        %v5641 = vunpack.c.l.b16 %v2695
        %v5642 = vunpack.c.h.b16 %v2695
        %v5643 = vunpack.c.l.b16 %v2696
        %v5644 = vunpack.c.h.b16 %v2696
        %v5645 = vunpack.c.l.b16 %v2697
        %v5646 = vunpack.c.h.b16 %v2697
        %v5647 = vunpack.c.l.b16 %v2698
        %v5648 = vunpack.c.h.b16 %v2698
        %v5649 = vunpack.c.l.b16 %v2699
        %v5650 = vunpack.c.h.b16 %v2699
        %v5651 = vunpack.c.l.b16 %v2700
        %v5652 = vunpack.c.h.b16 %v2700
        %v5653 = vunpack.c.l.b16 %v2701
        %v5654 = vunpack.c.h.b16 %v2701
        %v5655 = vunpack.c.l.b16 %v2702
        %v5656 = vunpack.c.h.b16 %v2702
        %v5657 = vunpack.c.l.b16 %v2703
        %v5658 = vunpack.c.h.b16 %v2703
        %v5659 = vunpack.c.l.b16 %v2704
        %v5660 = vunpack.c.h.b16 %v2704
        %v5661 = vunpack.c.l.b16 %v2705
        %v5662 = vunpack.c.h.b16 %v2705
        %v5663 = vunpack.c.l.b16 %v2706
        %v5664 = vunpack.c.h.b16 %v2706
        %v5665 = vunpack.c.l.b16 %v2707
        %v5666 = vunpack.c.h.b16 %v2707
        %v5667 = vunpack.c.l.b16 %v2708
        %v5668 = vunpack.c.h.b16 %v2708
        %v5669 = vunpack.c.l.b16 %v2709
        %v5670 = vunpack.c.h.b16 %v2709
        %v5671 = vunpack.c.l.b16 %v2710
        %v5672 = vunpack.c.h.b16 %v2710
        %v5673 = vunpack.c.l.b16 %v2711
        %v5674 = vunpack.c.h.b16 %v2711
        %v5675 = vunpack.c.l.b16 %v2712
        %v5676 = vunpack.c.h.b16 %v2712
        %v5677 = vunpack.c.l.b16 %v2713
        %v5678 = vunpack.c.h.b16 %v2713
        %v5679 = vunpack.c.l.b16 %v2714
        %v5680 = vunpack.c.h.b16 %v2714
        %v5681 = vunpack.c.l.b16 %v2715
        %v5682 = vunpack.c.h.b16 %v2715
        %v5683 = vunpack.c.l.b16 %v2716
        %v5684 = vunpack.c.h.b16 %v2716
        %v5685 = vunpack.c.l.b16 %v2717
        %v5686 = vunpack.c.h.b16 %v2717
        %v5687 = vunpack.c.l.b16 %v2718
        %v5688 = vunpack.c.h.b16 %v2718
        %v5689 = vunpack.c.l.b16 %v2719
        %v5690 = vunpack.c.h.b16 %v2719
        %v5691 = vunpack.c.l.b16 %v2720
        %v5692 = vunpack.c.h.b16 %v2720
        %v5693 = vunpack.c.l.b16 %v2721
        %v5694 = vunpack.c.h.b16 %v2721
        %v5695 = vunpack.c.l.b16 %v2722
        %v5696 = vunpack.c.h.b16 %v2722
        %v5697 = vunpack.c.l.b16 %v2723
        %v5698 = vunpack.c.h.b16 %v2723
        %v5699 = vunpack.c.l.b16 %v2724
        %v5700 = vunpack.c.h.b16 %v2724
        %v5701 = vunpack.c.l.b16 %v2725
        %v5702 = vunpack.c.h.b16 %v2725
        %v5703 = vunpack.c.l.b16 %v2726
        %v5704 = vunpack.c.h.b16 %v2726
        %v5705 = vunpack.c.l.b16 %v2727
        %v5706 = vunpack.c.h.b16 %v2727
        %v5707 = vunpack.c.l.b16 %v2728
        %v5708 = vunpack.c.h.b16 %v2728
        %v5709 = vunpack.c.l.b16 %v2729
        %v5710 = vunpack.c.h.b16 %v2729
        %v5711 = vunpack.c.l.b16 %v2730
        %v5712 = vunpack.c.h.b16 %v2730
        %v5713 = vunpack.c.l.b16 %v2731
        %v5714 = vunpack.c.h.b16 %v2731
        %v5715 = vunpack.c.l.b16 %v2732
        %v5716 = vunpack.c.h.b16 %v2732
        %v5717 = vunpack.c.l.b16 %v2733
        %v5718 = vunpack.c.h.b16 %v2733
        %v5719 = vunpack.c.l.b16 %v2734
        %v5720 = vunpack.c.h.b16 %v2734
        %v5721 = vunpack.c.l.b16 %v2735
        %v5722 = vunpack.c.h.b16 %v2735
        %v5723 = vunpack.c.l.b16 %v2736
        %v5724 = vunpack.c.h.b16 %v2736
        %v5725 = vunpack.c.l.b16 %v2737
        %v5726 = vunpack.c.h.b16 %v2737
        %v5727 = vunpack.c.l.b16 %v2738
        %v5728 = vunpack.c.h.b16 %v2738
        %v5729 = vunpack.c.l.b16 %v2739
        %v5730 = vunpack.c.h.b16 %v2739
        %v5731 = vunpack.c.l.b16 %v2740
        %v5732 = vunpack.c.h.b16 %v2740
        %v5733 = vunpack.c.l.b16 %v2741
        %v5734 = vunpack.c.h.b16 %v2741
        %v5735 = vunpack.c.l.b16 %v2742
        %v5736 = vunpack.c.h.b16 %v2742
        %v5737 = vunpack.c.l.b16 %v2743
        %v5738 = vunpack.c.h.b16 %v2743
        %v5739 = vunpack.c.l.b16 %v2744
        %v5740 = vunpack.c.h.b16 %v2744
        %v5741 = vunpack.c.l.b16 %v2745
        %v5742 = vunpack.c.h.b16 %v2745
        %v5743 = vunpack.c.l.b16 %v2746
        %v5744 = vunpack.c.h.b16 %v2746
        %v5745 = vunpack.c.l.b16 %v2747
        %v5746 = vunpack.c.h.b16 %v2747
        %v5747 = vunpack.c.l.b16 %v2748
        %v5748 = vunpack.c.h.b16 %v2748
        %v5749 = vunpack.c.l.b16 %v2749
        %v5750 = vunpack.c.h.b16 %v2749
        %v5751 = vunpack.c.l.b16 %v2750
        %v5752 = vunpack.c.h.b16 %v2750
        %v5753 = vunpack.c.l.b16 %v2751
        %v5754 = vunpack.c.h.b16 %v2751
        %v5755 = vunpack.c.l.b16 %v2752
        %v5756 = vunpack.c.h.b16 %v2752
        %v5757 = vunpack.c.l.b16 %v2753
        %v5758 = vunpack.c.h.b16 %v2753
        %v5759 = vunpack.c.l.b16 %v2754
        %v5760 = vunpack.c.h.b16 %v2754
        %v5761 = vunpack.c.l.b16 %v2755
        %v5762 = vunpack.c.h.b16 %v2755
        %v5763 = vunpack.c.l.b16 %v2756
        %v5764 = vunpack.c.h.b16 %v2756
        %v5765 = vunpack.c.l.b16 %v2757
        %v5766 = vunpack.c.h.b16 %v2757
        %v5767 = vunpack.c.l.b16 %v2758
        %v5768 = vunpack.c.h.b16 %v2758
        %v5769 = vunpack.c.l.b16 %v2759
        %v5770 = vunpack.c.h.b16 %v2759
        %v5771 = vunpack.c.l.b16 %v2760
        %v5772 = vunpack.c.h.b16 %v2760
        %v5773 = vunpack.c.l.b16 %v2761
        %v5774 = vunpack.c.h.b16 %v2761
        %v5775 = vunpack.c.l.b16 %v2762
        %v5776 = vunpack.c.h.b16 %v2762
        %v5777 = vunpack.c.l.b16 %v2763
        %v5778 = vunpack.c.h.b16 %v2763
        %v5779 = vunpack.c.l.b16 %v2764
        %v5780 = vunpack.c.h.b16 %v2764
        %v5781 = vunpack.c.l.b16 %v2765
        %v5782 = vunpack.c.h.b16 %v2765
        %v5783 = vunpack.c.l.b16 %v2766
        %v5784 = vunpack.c.h.b16 %v2766
        %v5785 = vunpack.c.l.b16 %v2767
        %v5786 = vunpack.c.h.b16 %v2767
        %v5787 = vunpack.c.l.b16 %v2768
        %v5788 = vunpack.c.h.b16 %v2768
        %v5789 = vunpack.c.l.b16 %v2769
        %v5790 = vunpack.c.h.b16 %v2769
        %v5791 = vunpack.c.l.b16 %v2770
        %v5792 = vunpack.c.h.b16 %v2770
        %v5793 = vunpack.c.l.b16 %v2771
        %v5794 = vunpack.c.h.b16 %v2771
        %v5795 = vunpack.c.l.b16 %v2772
        %v5796 = vunpack.c.h.b16 %v2772
        %v5797 = vunpack.c.l.b16 %v2773
        %v5798 = vunpack.c.h.b16 %v2773
        %v5799 = vunpack.c.l.b16 %v2774
        %v5800 = vunpack.c.h.b16 %v2774
        %v5801 = vunpack.c.l.b16 %v2775
        %v5802 = vunpack.c.h.b16 %v2775
        %v5803 = vunpack.c.l.b16 %v2776
        %v5804 = vunpack.c.h.b16 %v2776
        %v5805 = vunpack.c.l.b16 %v2777
        %v5806 = vunpack.c.h.b16 %v2777
        %v5807 = vunpack.c.l.b16 %v2778
        %v5808 = vunpack.c.h.b16 %v2778
        %v5809 = vunpack.c.l.b16 %v2779
        %v5810 = vunpack.c.h.b16 %v2779
        %v5811 = vunpack.c.l.b16 %v2780
        %v5812 = vunpack.c.h.b16 %v2780
        %v5813 = vunpack.c.l.b16 %v2781
        %v5814 = vunpack.c.h.b16 %v2781
        %v5815 = vunpack.c.l.b16 %v2782
        %v5816 = vunpack.c.h.b16 %v2782
        %v5817 = vunpack.c.l.b16 %v2783
        %v5818 = vunpack.c.h.b16 %v2783
        %v5819 = vunpack.c.l.b16 %v2784
        %v5820 = vunpack.c.h.b16 %v2784
        %v5821 = vunpack.c.l.b16 %v2785
        %v5822 = vunpack.c.h.b16 %v2785
        %v5823 = vunpack.c.l.b16 %v2786
        %v5824 = vunpack.c.h.b16 %v2786
        %v5825 = vunpack.c.l.b16 %v2787
        %v5826 = vunpack.c.h.b16 %v2787
        %v5827 = vunpack.c.l.b16 %v2788
        %v5828 = vunpack.c.h.b16 %v2788
        %v5829 = vunpack.c.l.b16 %v2789
        %v5830 = vunpack.c.h.b16 %v2789
        %v5831 = vunpack.c.l.b16 %v2790
        %v5832 = vunpack.c.h.b16 %v2790
        %v5833 = vunpack.c.l.b16 %v2791
        %v5834 = vunpack.c.h.b16 %v2791
        %v5835 = vunpack.c.l.b16 %v2792
        %v5836 = vunpack.c.h.b16 %v2792
        %v5837 = vunpack.c.l.b16 %v2793
        %v5838 = vunpack.c.h.b16 %v2793
        %v5839 = vunpack.c.l.b16 %v2794
        %v5840 = vunpack.c.h.b16 %v2794
        %v5841 = vunpack.c.l.b16 %v2795
        %v5842 = vunpack.c.h.b16 %v2795
        %v5843 = vunpack.c.l.b16 %v2796
        %v5844 = vunpack.c.h.b16 %v2796
        %v5845 = vunpack.c.l.b16 %v2797
        %v5846 = vunpack.c.h.b16 %v2797
        %v5847 = vunpack.c.l.b16 %v2798
        %v5848 = vunpack.c.h.b16 %v2798
        %v5849 = vunpack.c.l.b16 %v2799
        %v5850 = vunpack.c.h.b16 %v2799
        %v5851 = vunpack.c.l.b16 %v2800
        %v5852 = vunpack.c.h.b16 %v2800
        %v5853 = vunpack.c.l.b16 %v2801
        %v5854 = vunpack.c.h.b16 %v2801
        %v5855 = vunpack.c.l.b16 %v2802
        %v5856 = vunpack.c.h.b16 %v2802
        %v5857 = vunpack.c.l.b16 %v2803
        %v5858 = vunpack.c.h.b16 %v2803
        %v5859 = vunpack.c.l.b16 %v2804
        %v5860 = vunpack.c.h.b16 %v2804
        %v5861 = vunpack.c.l.b16 %v2805
        %v5862 = vunpack.c.h.b16 %v2805
        %v5863 = vunpack.c.l.b16 %v2806
        %v5864 = vunpack.c.h.b16 %v2806
        %v5865 = vunpack.c.l.b16 %v2807
        %v5866 = vunpack.c.h.b16 %v2807
        %v5867 = vunpack.c.l.b16 %v2808
        %v5868 = vunpack.c.h.b16 %v2808
        %v5869 = vunpack.c.l.b16 %v2809
        %v5870 = vunpack.c.h.b16 %v2809
        %v5871 = vunpack.c.l.b16 %v2810
        %v5872 = vunpack.c.h.b16 %v2810
        %v5873 = vunpack.c.l.b16 %v2811
        %v5874 = vunpack.c.h.b16 %v2811
        %v5875 = vunpack.c.l.b16 %v2812
        %v5876 = vunpack.c.h.b16 %v2812
        %v5877 = vunpack.c.l.b16 %v2813
        %v5878 = vunpack.c.h.b16 %v2813
        %v5879 = vunpack.c.l.b16 %v2814
        %v5880 = vunpack.c.h.b16 %v2814
        %v5881 = vunpack.c.l.b16 %v2815
        %v5882 = vunpack.c.h.b16 %v2815
        %v5883 = vunpack.c.l.b16 %v2816
        %v5884 = vunpack.c.h.b16 %v2816
        %v5885 = vunpack.c.l.b16 %v2817
        %v5886 = vunpack.c.h.b16 %v2817
        %v5887 = vunpack.c.l.b16 %v2818
        %v5888 = vunpack.c.h.b16 %v2818
        %v5889 = vunpack.c.l.b16 %v2819
        %v5890 = vunpack.c.h.b16 %v2819
        %v5891 = vunpack.c.l.b16 %v2820
        %v5892 = vunpack.c.h.b16 %v2820
        %v5893 = vunpack.c.l.b16 %v2821
        %v5894 = vunpack.c.h.b16 %v2821
        %v5895 = vunpack.c.l.b16 %v2822
        %v5896 = vunpack.c.h.b16 %v2822
        %v5897 = vunpack.c.l.b16 %v2823
        %v5898 = vunpack.c.h.b16 %v2823
        %v5899 = vunpack.c.l.b16 %v2824
        %v5900 = vunpack.c.h.b16 %v2824
        %v5901 = vunpack.c.l.b16 %v2825
        %v5902 = vunpack.c.h.b16 %v2825
        %v5903 = vunpack.c.l.b16 %v2826
        %v5904 = vunpack.c.h.b16 %v2826
        %v5905 = vunpack.c.l.b16 %v2827
        %v5906 = vunpack.c.h.b16 %v2827
        %v5907 = vunpack.c.l.b16 %v2828
        %v5908 = vunpack.c.h.b16 %v2828
        %v5909 = vunpack.c.l.b16 %v2829
        %v5910 = vunpack.c.h.b16 %v2829
        %v5911 = vunpack.c.l.b16 %v2830
        %v5912 = vunpack.c.h.b16 %v2830
        %v5913 = vunpack.c.l.b16 %v2831
        %v5914 = vunpack.c.h.b16 %v2831
        %v5915 = vunpack.c.l.b16 %v2832
        %v5916 = vunpack.c.h.b16 %v2832
        %v5917 = vunpack.c.l.b16 %v2833
        %v5918 = vunpack.c.h.b16 %v2833
        %v5919 = vunpack.c.l.b16 %v2834
        %v5920 = vunpack.c.h.b16 %v2834
        %v5921 = vunpack.c.l.b16 %v2835
        %v5922 = vunpack.c.h.b16 %v2835
        %v5923 = vunpack.c.l.b16 %v2836
        %v5924 = vunpack.c.h.b16 %v2836
        %v5925 = vunpack.c.l.b16 %v2837
        %v5926 = vunpack.c.h.b16 %v2837
        %v5927 = vunpack.c.l.b16 %v2838
        %v5928 = vunpack.c.h.b16 %v2838
        %v5929 = vunpack.c.l.b16 %v2839
        %v5930 = vunpack.c.h.b16 %v2839
        %v5931 = vunpack.c.l.b16 %v2840
        %v5932 = vunpack.c.h.b16 %v2840
        %v5933 = vunpack.c.l.b16 %v2841
        %v5934 = vunpack.c.h.b16 %v2841
        %v5935 = vunpack.c.l.b16 %v2842
        %v5936 = vunpack.c.h.b16 %v2842
        %v5937 = vunpack.c.l.b16 %v2843
        %v5938 = vunpack.c.h.b16 %v2843
        %v5939 = vunpack.c.l.b16 %v2844
        %v5940 = vunpack.c.h.b16 %v2844
        %v5941 = vunpack.c.l.b16 %v2845
        %v5942 = vunpack.c.h.b16 %v2845
        %v5943 = vunpack.c.l.b16 %v2846
        %v5944 = vunpack.c.h.b16 %v2846
        %v5945 = vunpack.c.l.b16 %v2847
        %v5946 = vunpack.c.h.b16 %v2847
        %v5947 = vunpack.c.l.b16 %v2848
        %v5948 = vunpack.c.h.b16 %v2848
        %v5949 = vunpack.c.l.b16 %v2849
        %v5950 = vunpack.c.h.b16 %v2849
        %v5951 = vunpack.c.l.b16 %v2850
        %v5952 = vunpack.c.h.b16 %v2850
        %v5953 = vunpack.c.l.b16 %v2851
        %v5954 = vunpack.c.h.b16 %v2851
        %v5955 = vunpack.c.l.b16 %v2852
        %v5956 = vunpack.c.h.b16 %v2852
        %v5957 = vunpack.c.l.b16 %v2853
        %v5958 = vunpack.c.h.b16 %v2853
        %v5959 = vunpack.c.l.b16 %v2854
        %v5960 = vunpack.c.h.b16 %v2854
        %v5961 = vunpack.c.l.b16 %v2855
        %v5962 = vunpack.c.h.b16 %v2855
        %v5963 = vunpack.c.l.b16 %v2856
        %v5964 = vunpack.c.h.b16 %v2856
        %v5965 = vunpack.c.l.b16 %v2857
        %v5966 = vunpack.c.h.b16 %v2857
        %v5967 = vunpack.c.l.b16 %v2858
        %v5968 = vunpack.c.h.b16 %v2858
        %v5969 = vunpack.c.l.b16 %v2859
        %v5970 = vunpack.c.h.b16 %v2859
        %v5971 = vunpack.c.l.b16 %v2860
        %v5972 = vunpack.c.h.b16 %v2860
        %v5973 = vunpack.c.l.b16 %v2861
        %v5974 = vunpack.c.h.b16 %v2861
        %v5975 = vunpack.c.l.b16 %v2862
        %v5976 = vunpack.c.h.b16 %v2862
        %v5977 = vunpack.c.l.b16 %v2863
        %v5978 = vunpack.c.h.b16 %v2863
        %v5979 = vunpack.c.l.b16 %v2864
        %v5980 = vunpack.c.h.b16 %v2864
        %v5981 = vunpack.c.l.b16 %v2865
        %v5982 = vunpack.c.h.b16 %v2865
        %v5983 = vunpack.c.l.b16 %v2866
        %v5984 = vunpack.c.h.b16 %v2866
        %v5985 = vunpack.c.l.b16 %v2867
        %v5986 = vunpack.c.h.b16 %v2867
        %v5987 = vunpack.c.l.b16 %v2868
        %v5988 = vunpack.c.h.b16 %v2868
        %v5989 = vunpack.c.l.b16 %v2869
        %v5990 = vunpack.c.h.b16 %v2869
        %v5991 = vunpack.c.l.b16 %v2870
        %v5992 = vunpack.c.h.b16 %v2870
        %v5993 = vunpack.c.l.b16 %v2871
        %v5994 = vunpack.c.h.b16 %v2871
        %v5995 = vunpack.c.l.b16 %v2872
        %v5996 = vunpack.c.h.b16 %v2872
        %v5997 = vunpack.c.l.b16 %v2873
        %v5998 = vunpack.c.h.b16 %v2873
        %v5999 = vunpack.c.l.b16 %v2874
        %v6000 = vunpack.c.h.b16 %v2874
        %v6001 = vunpack.c.l.b16 %v2875
        %v6002 = vunpack.c.h.b16 %v2875
        %v6003 = vunpack.c.l.b16 %v2876
        %v6004 = vunpack.c.h.b16 %v2876
        %v6005 = vunpack.c.l.b16 %v2877
        %v6006 = vunpack.c.h.b16 %v2877
        %v6007 = vunpack.c.l.b16 %v2878
        %v6008 = vunpack.c.h.b16 %v2878
        %v6009 = vunpack.c.l.b16 %v2879
        %v6010 = vunpack.c.h.b16 %v2879
        %v6011 = vunpack.c.l.b16 %v2880
        %v6012 = vunpack.c.h.b16 %v2880
        %v6013 = vunpack.c.l.b16 %v2881
        %v6014 = vunpack.c.h.b16 %v2881
        %v6015 = vunpack.c.l.b16 %v2882
        %v6016 = vunpack.c.h.b16 %v2882
        %v6017 = vunpack.c.l.b16 %v2883
        %v6018 = vunpack.c.h.b16 %v2883
        %v6019 = vunpack.c.l.b16 %v2884
        %v6020 = vunpack.c.h.b16 %v2884
        %v6021 = vunpack.c.l.b16 %v2885
        %v6022 = vunpack.c.h.b16 %v2885
        %v6023 = vunpack.c.l.b16 %v2886
        %v6024 = vunpack.c.h.b16 %v2886
        %v6025 = vunpack.c.l.b16 %v2887
        %v6026 = vunpack.c.h.b16 %v2887
        %v6027 = vunpack.c.l.b16 %v2888
        %v6028 = vunpack.c.h.b16 %v2888
        %v6029 = vunpack.c.l.b16 %v2889
        %v6030 = vunpack.c.h.b16 %v2889
        %v6031 = vunpack.c.l.b16 %v2890
        %v6032 = vunpack.c.h.b16 %v2890
        %v6033 = vunpack.c.l.b16 %v2891
        %v6034 = vunpack.c.h.b16 %v2891
        %v6035 = vunpack.c.l.b16 %v2892
        %v6036 = vunpack.c.h.b16 %v2892
        %v6037 = vunpack.c.l.b16 %v2893
        %v6038 = vunpack.c.h.b16 %v2893
        %v6039 = vunpack.c.l.b16 %v2894
        %v6040 = vunpack.c.h.b16 %v2894
        %v6041 = vunpack.c.l.b16 %v2895
        %v6042 = vunpack.c.h.b16 %v2895
        %v6043 = vunpack.c.l.b16 %v2896
        %v6044 = vunpack.c.h.b16 %v2896
        %v6045 = vunpack.c.l.b16 %v2897
        %v6046 = vunpack.c.h.b16 %v2897
        %v6047 = vunpack.c.l.b16 %v2898
        %v6048 = vunpack.c.h.b16 %v2898
        %v6049 = vunpack.c.l.b16 %v2899
        %v6050 = vunpack.c.h.b16 %v2899
        %v6051 = vunpack.c.l.b16 %v2900
        %v6052 = vunpack.c.h.b16 %v2900
        %v6053 = vunpack.c.l.b16 %v2901
        %v6054 = vunpack.c.h.b16 %v2901
        %v6055 = vunpack.c.l.b16 %v2902
        %v6056 = vunpack.c.h.b16 %v2902
        %v6057 = vunpack.c.l.b16 %v2903
        %v6058 = vunpack.c.h.b16 %v2903
        %v6059 = vunpack.c.l.b16 %v2904
        %v6060 = vunpack.c.h.b16 %v2904
        %v6061 = vunpack.c.l.b16 %v2905
        %v6062 = vunpack.c.h.b16 %v2905
        %v6063 = vunpack.c.l.b16 %v2906
        %v6064 = vunpack.c.h.b16 %v2906
        %v6065 = vunpack.c.l.b16 %v2907
        %v6066 = vunpack.c.h.b16 %v2907
        %v6067 = vunpack.c.l.b16 %v2908
        %v6068 = vunpack.c.h.b16 %v2908
        %v6069 = vunpack.c.l.b16 %v2909
        %v6070 = vunpack.c.h.b16 %v2909
        %v6071 = vunpack.c.l.b16 %v2910
        %v6072 = vunpack.c.h.b16 %v2910
        %v6073 = vunpack.c.l.b16 %v2911
        %v6074 = vunpack.c.h.b16 %v2911
        %v6075 = vunpack.c.l.b16 %v2912
        %v6076 = vunpack.c.h.b16 %v2912
        %v6077 = vunpack.c.l.b16 %v2913
        %v6078 = vunpack.c.h.b16 %v2913
        %v6079 = vunpack.c.l.b16 %v2914
        %v6080 = vunpack.c.h.b16 %v2914
        %v6081 = vunpack.c.l.b16 %v2915
        %v6082 = vunpack.c.h.b16 %v2915
        %v6083 = vunpack.c.l.b16 %v2916
        %v6084 = vunpack.c.h.b16 %v2916
        %v6085 = vunpack.c.l.b16 %v2917
        %v6086 = vunpack.c.h.b16 %v2917
        %v6087 = vunpack.c.l.b16 %v2918
        %v6088 = vunpack.c.h.b16 %v2918
        %v6089 = vunpack.c.l.b16 %v2919
        %v6090 = vunpack.c.h.b16 %v2919
        %v6091 = vunpack.c.l.b16 %v2920
        %v6092 = vunpack.c.h.b16 %v2920
        %v6093 = vunpack.c.l.b16 %v2921
        %v6094 = vunpack.c.h.b16 %v2921
        %v6095 = vunpack.c.l.b16 %v2922
        %v6096 = vunpack.c.h.b16 %v2922
        %v6097 = vunpack.c.l.b16 %v2923
        %v6098 = vunpack.c.h.b16 %v2923
        %v6099 = vunpack.c.l.b16 %v2924
        %v6100 = vunpack.c.h.b16 %v2924
        %v6101 = vunpack.c.l.b16 %v2925
        %v6102 = vunpack.c.h.b16 %v2925
        %v6103 = vunpack.c.l.b16 %v2926
        %v6104 = vunpack.c.h.b16 %v2926
        %v6105 = vunpack.c.l.b16 %v2927
        %v6106 = vunpack.c.h.b16 %v2927
        %v6107 = vunpack.c.l.b16 %v2928
        %v6108 = vunpack.c.h.b16 %v2928
        %v6109 = vunpack.c.l.b16 %v2929
        %v6110 = vunpack.c.h.b16 %v2929
        %v6111 = vunpack.c.l.b16 %v2930
        %v6112 = vunpack.c.h.b16 %v2930
        %v6113 = vunpack.c.l.b16 %v2931
        %v6114 = vunpack.c.h.b16 %v2931
        %v6115 = vunpack.c.l.b16 %v2932
        %v6116 = vunpack.c.h.b16 %v2932
        %v6117 = vunpack.c.l.b16 %v2933
        %v6118 = vunpack.c.h.b16 %v2933
        %v6119 = vunpack.c.l.b16 %v2934
        %v6120 = vunpack.c.h.b16 %v2934
        %v6121 = vunpack.c.l.b16 %v2935
        %v6122 = vunpack.c.h.b16 %v2935
        %v6123 = vunpack.c.l.b16 %v2936
        %v6124 = vunpack.c.h.b16 %v2936
        %v6125 = vunpack.c.l.b16 %v2937
        %v6126 = vunpack.c.h.b16 %v2937
        %v6127 = vunpack.c.l.b16 %v2938
        %v6128 = vunpack.c.h.b16 %v2938
        %v6129 = vunpack.c.l.b16 %v2939
        %v6130 = vunpack.c.h.b16 %v2939
        %v6131 = vunpack.c.l.b16 %v2940
        %v6132 = vunpack.c.h.b16 %v2940
        %v6133 = vunpack.c.l.b16 %v2941
        %v6134 = vunpack.c.h.b16 %v2941
        %v6135 = vunpack.c.l.b16 %v2942
        %v6136 = vunpack.c.h.b16 %v2942
        %v6137 = vunpack.c.l.b16 %v2943
        %v6138 = vunpack.c.h.b16 %v2943
        %v6139 = vunpack.c.l.b16 %v2944
        %v6140 = vunpack.c.h.b16 %v2944
        %v6141 = vunpack.c.l.b16 %v2945
        %v6142 = vunpack.c.h.b16 %v2945
        %v6143 = vunpack.c.l.b16 %v2946
        %v6144 = vunpack.c.h.b16 %v2946
        %v6145 = vunpack.c.l.b16 %v2947
        %v6146 = vunpack.c.h.b16 %v2947
        %v6147 = vunpack.c.l.b16 %v2948
        %v6148 = vunpack.c.h.b16 %v2948
        %v6149 = vunpack.c.l.b16 %v2949
        %v6150 = vunpack.c.h.b16 %v2949
        %v6151 = vunpack.c.l.b16 %v2950
        %v6152 = vunpack.c.h.b16 %v2950
        %v6153 = vunpack.c.l.b16 %v2951
        %v6154 = vunpack.c.h.b16 %v2951
        %v6155 = vunpack.c.l.b16 %v2952
        %v6156 = vunpack.c.h.b16 %v2952
        %v6157 = vunpack.c.l.b16 %v2953
        %v6158 = vunpack.c.h.b16 %v2953
        %v6159 = vunpack.c.l.b16 %v2954
        %v6160 = vunpack.c.h.b16 %v2954
        %v6161 = vunpack.c.l.b16 %v2955
        %v6162 = vunpack.c.h.b16 %v2955
        %v6163 = vunpack.c.l.b16 %v2956
        %v6164 = vunpack.c.h.b16 %v2956
        %v6165 = vunpack.c.l.b16 %v2957
        %v6166 = vunpack.c.h.b16 %v2957
        %v6167 = vunpack.c.l.b16 %v2958
        %v6168 = vunpack.c.h.b16 %v2958
        %v6169 = vunpack.c.l.b16 %v2959
        %v6170 = vunpack.c.h.b16 %v2959
        %v6171 = vunpack.c.l.b16 %v2960
        %v6172 = vunpack.c.h.b16 %v2960
        %v6173 = vunpack.c.l.b16 %v2961
        %v6174 = vunpack.c.h.b16 %v2961
        %v6175 = vunpack.c.l.b16 %v2962
        %v6176 = vunpack.c.h.b16 %v2962
        %v6177 = vunpack.c.l.b16 %v2963
        %v6178 = vunpack.c.h.b16 %v2963
        %v6179 = vunpack.c.l.b16 %v2964
        %v6180 = vunpack.c.h.b16 %v2964
        %v6181 = vunpack.c.l.b16 %v2965
        %v6182 = vunpack.c.h.b16 %v2965
        %v6183 = vunpack.c.l.b16 %v2966
        %v6184 = vunpack.c.h.b16 %v2966
        %v6185 = vunpack.c.l.b16 %v2967
        %v6186 = vunpack.c.h.b16 %v2967
        %v6187 = vunpack.c.l.b16 %v2968
        %v6188 = vunpack.c.h.b16 %v2968
        %v6189 = vunpack.c.l.b16 %v2969
        %v6190 = vunpack.c.h.b16 %v2969
        %v6191 = vunpack.c.l.b16 %v2970
        %v6192 = vunpack.c.h.b16 %v2970
        %v6193 = vunpack.c.l.b16 %v2971
        %v6194 = vunpack.c.h.b16 %v2971
        %v6195 = vunpack.c.l.b16 %v2972
        %v6196 = vunpack.c.h.b16 %v2972
        %v6197 = vunpack.c.l.b16 %v2973
        %v6198 = vunpack.c.h.b16 %v2973
        %v6199 = vunpack.c.l.b16 %v2974
        %v6200 = vunpack.c.h.b16 %v2974
        %v6201 = vunpack.c.l.b16 %v2975
        %v6202 = vunpack.c.h.b16 %v2975
        %v6203 = vunpack.c.l.b16 %v2976
        %v6204 = vunpack.c.h.b16 %v2976
        %v6205 = vunpack.c.l.b16 %v2977
        %v6206 = vunpack.c.h.b16 %v2977
        %v6207 = vunpack.c.l.b16 %v2978
        %v6208 = vunpack.c.h.b16 %v2978
        %v6209 = vunpack.c.l.b16 %v2979
        %v6210 = vunpack.c.h.b16 %v2979
        %v6211 = vunpack.c.l.b16 %v2980
        %v6212 = vunpack.c.h.b16 %v2980
        %v6213 = vunpack.c.l.b16 %v2981
        %v6214 = vunpack.c.h.b16 %v2981
        %v6215 = vunpack.c.l.b16 %v2982
        %v6216 = vunpack.c.h.b16 %v2982
        %v6217 = vunpack.c.l.b16 %v2983
        %v6218 = vunpack.c.h.b16 %v2983
        %v6219 = vunpack.c.l.b16 %v2984
        %v6220 = vunpack.c.h.b16 %v2984
        %v6221 = vunpack.c.l.b16 %v2985
        %v6222 = vunpack.c.h.b16 %v2985
        %v6223 = vunpack.c.l.b16 %v2986
        %v6224 = vunpack.c.h.b16 %v2986
        %v6225 = vunpack.c.l.b16 %v2987
        %v6226 = vunpack.c.h.b16 %v2987
        %v6227 = vunpack.c.l.b16 %v2988
        %v6228 = vunpack.c.h.b16 %v2988
        %v6229 = vunpack.c.l.b16 %v2989
        %v6230 = vunpack.c.h.b16 %v2989
        %v6231 = vunpack.c.l.b16 %v2990
        %v6232 = vunpack.c.h.b16 %v2990
        %v6233 = vunpack.c.l.b16 %v2991
        %v6234 = vunpack.c.h.b16 %v2991
        %v6235 = vunpack.c.l.b16 %v2992
        %v6236 = vunpack.c.h.b16 %v2992
        %v6237 = vunpack.c.l.b16 %v2993
        %v6238 = vunpack.c.h.b16 %v2993
        %v6239 = vunpack.c.l.b16 %v2994
        %v6240 = vunpack.c.h.b16 %v2994
        %v6241 = vunpack.c.l.b16 %v2995
        %v6242 = vunpack.c.h.b16 %v2995
        %v6243 = vunpack.c.l.b16 %v2996
        %v6244 = vunpack.c.h.b16 %v2996
        %v6245 = vunpack.c.l.b16 %v2997
        %v6246 = vunpack.c.h.b16 %v2997
        %v6247 = vunpack.c.l.b16 %v2998
        %v6248 = vunpack.c.h.b16 %v2998
        %v6249 = vunpack.c.l.b16 %v2999
        %v6250 = vunpack.c.h.b16 %v2999
        %v6251 = vunpack.c.l.b16 %v3000
        %v6252 = vunpack.c.h.b16 %v3000
        %v6253 = vunpack.c.l.b16 %v3001
        %v6254 = vunpack.c.h.b16 %v3001
        %v6255 = vunpack.c.l.b16 %v3002
        %v6256 = vunpack.c.h.b16 %v3002
        %v6257 = vunpack.c.l.b16 %v3003
        %v6258 = vunpack.c.h.b16 %v3003
        %v6259 = vunpack.c.l.b16 %v3004
        %v6260 = vunpack.c.h.b16 %v3004
        %v6261 = vunpack.c.l.b16 %v3005
        %v6262 = vunpack.c.h.b16 %v3005
        %v6263 = vunpack.c.l.b16 %v3006
        %v6264 = vunpack.c.h.b16 %v3006
        %v6265 = vunpack.c.l.b16 %v3007
        %v6266 = vunpack.c.h.b16 %v3007
        %v6267 = vunpack.c.l.b16 %v3008
        %v6268 = vunpack.c.h.b16 %v3008
        %v6269 = vunpack.c.l.b16 %v3009
        %v6270 = vunpack.c.h.b16 %v3009
        %v6271 = vunpack.c.l.b16 %v3010
        %v6272 = vunpack.c.h.b16 %v3010
        %v6273 = vunpack.c.l.b16 %v3011
        %v6274 = vunpack.c.h.b16 %v3011
        %v6275 = vunpack.c.l.b16 %v3012
        %v6276 = vunpack.c.h.b16 %v3012
        %v6277 = vunpack.c.l.b16 %v3013
        %v6278 = vunpack.c.h.b16 %v3013
        %v6279 = vunpack.c.l.b16 %v3014
        %v6280 = vunpack.c.h.b16 %v3014
        %v6281 = vunpack.c.l.b16 %v3015
        %v6282 = vunpack.c.h.b16 %v3015
        %v6283 = vunpack.c.l.b16 %v3016
        %v6284 = vunpack.c.h.b16 %v3016
        %v6285 = vunpack.c.l.b16 %v3017
        %v6286 = vunpack.c.h.b16 %v3017
        %v6287 = vunpack.c.l.b16 %v3018
        %v6288 = vunpack.c.h.b16 %v3018
        %v6289 = vunpack.c.l.b16 %v3019
        %v6290 = vunpack.c.h.b16 %v3019
        %v6291 = vunpack.c.l.b16 %v3020
        %v6292 = vunpack.c.h.b16 %v3020
        %v6293 = vunpack.c.l.b16 %v3021
        %v6294 = vunpack.c.h.b16 %v3021
        %v6295 = vunpack.c.l.b16 %v3022
        %v6296 = vunpack.c.h.b16 %v3022
        %v6297 = vunpack.c.l.b16 %v3023
        %v6298 = vunpack.c.h.b16 %v3023
        %v6299 = vunpack.c.l.b16 %v3024
        %v6300 = vunpack.c.h.b16 %v3024
        %v6301 = vunpack.c.l.b16 %v3025
        %v6302 = vunpack.c.h.b16 %v3025
        %v6303 = vunpack.c.l.b16 %v3026
        %v6304 = vunpack.c.h.b16 %v3026
        %v6305 = vunpack.c.l.b16 %v3027
        %v6306 = vunpack.c.h.b16 %v3027
        %v6307 = vunpack.c.l.b16 %v3028
        %v6308 = vunpack.c.h.b16 %v3028
        %v6309 = vunpack.c.l.b16 %v3029
        %v6310 = vunpack.c.h.b16 %v3029
        %v6311 = vunpack.c.l.b16 %v3030
        %v6312 = vunpack.c.h.b16 %v3030
        %v6313 = vunpack.c.l.b16 %v3031
        %v6314 = vunpack.c.h.b16 %v3031
        %v6315 = vunpack.c.l.b16 %v3032
        %v6316 = vunpack.c.h.b16 %v3032
        %v6317 = vunpack.c.l.b16 %v3033
        %v6318 = vunpack.c.h.b16 %v3033
        %v6319 = vunpack.c.l.b16 %v3034
        %v6320 = vunpack.c.h.b16 %v3034
        %v6321 = vunpack.c.l.b16 %v3035
        %v6322 = vunpack.c.h.b16 %v3035
        %v6323 = vunpack.c.l.b16 %v3036
        %v6324 = vunpack.c.h.b16 %v3036
        %v6325 = vunpack.c.l.b16 %v3037
        %v6326 = vunpack.c.h.b16 %v3037
        %v6327 = vunpack.c.l.b16 %v3038
        %v6328 = vunpack.c.h.b16 %v3038
        %v6329 = vunpack.c.l.b16 %v3039
        %v6330 = vunpack.c.h.b16 %v3039
        %v6331 = vunpack.c.l.b16 %v3040
        %v6332 = vunpack.c.h.b16 %v3040
        %v6333 = vunpack.c.l.b16 %v3041
        %v6334 = vunpack.c.h.b16 %v3041
        %v6335 = vunpack.c.l.b16 %v3042
        %v6336 = vunpack.c.h.b16 %v3042
        %v6337 = vunpack.c.l.b16 %v3043
        %v6338 = vunpack.c.h.b16 %v3043
        %v6339 = vunpack.c.l.b16 %v3044
        %v6340 = vunpack.c.h.b16 %v3044
        %v6341 = vunpack.c.l.b16 %v3045
        %v6342 = vunpack.c.h.b16 %v3045
        %v6343 = vunpack.c.l.b16 %v3046
        %v6344 = vunpack.c.h.b16 %v3046
        %v6345 = vunpack.c.l.b16 %v3047
        %v6346 = vunpack.c.h.b16 %v3047
        %v6347 = vunpack.c.l.b16 %v3048
        %v6348 = vunpack.c.h.b16 %v3048
        %v6349 = vunpack.c.l.b16 %v3049
        %v6350 = vunpack.c.h.b16 %v3049
        %v6351 = vunpack.c.l.b16 %v3050
        %v6352 = vunpack.c.h.b16 %v3050
        %v6353 = vunpack.c.l.b16 %v3051
        %v6354 = vunpack.c.h.b16 %v3051
        %v6355 = vunpack.c.l.b16 %v3052
        %v6356 = vunpack.c.h.b16 %v3052
        %v6357 = vunpack.c.l.b16 %v3053
        %v6358 = vunpack.c.h.b16 %v3053
        %v6359 = vunpack.c.l.b16 %v3054
        %v6360 = vunpack.c.h.b16 %v3054
        %v6361 = vunpack.c.l.b16 %v3055
        %v6362 = vunpack.c.h.b16 %v3055
        %v6363 = vunpack.c.l.b16 %v3056
        %v6364 = vunpack.c.h.b16 %v3056
        %v6365 = vunpack.c.l.b16 %v3057
        %v6366 = vunpack.c.h.b16 %v3057
        %v6367 = vunpack.c.l.b16 %v3058
        %v6368 = vunpack.c.h.b16 %v3058
        %v6369 = vunpack.c.l.b16 %v3059
        %v6370 = vunpack.c.h.b16 %v3059
        %v6371 = vunpack.c.l.b16 %v3060
        %v6372 = vunpack.c.h.b16 %v3060
        %v6373 = vunpack.c.l.b16 %v3061
        %v6374 = vunpack.c.h.b16 %v3061
        %v6375 = vunpack.c.l.b16 %v3062
        %v6376 = vunpack.c.h.b16 %v3062
        %v6377 = vunpack.c.l.b16 %v3063
        %v6378 = vunpack.c.h.b16 %v3063
        %v6379 = vunpack.c.l.b16 %v3064
        %v6380 = vunpack.c.h.b16 %v3064
        %v6381 = vunpack.c.l.b16 %v3065
        %v6382 = vunpack.c.h.b16 %v3065
        %v6383 = vunpack.c.l.b16 %v3066
        %v6384 = vunpack.c.h.b16 %v3066
        %v6385 = vunpack.c.l.b16 %v3067
        %v6386 = vunpack.c.h.b16 %v3067
        %v6387 = vunpack.c.l.b16 %v3068
        %v6388 = vunpack.c.h.b16 %v3068
        %v6389 = vunpack.c.l.b16 %v3069
        %v6390 = vunpack.c.h.b16 %v3069
        %v6391 = vunpack.c.l.b16 %v3070
        %v6392 = vunpack.c.h.b16 %v3070
        %v6393 = vunpack.c.l.b16 %v3071
        %v6394 = vunpack.c.h.b16 %v3071
        %v6395 = vunpack.c.l.b16 %v3072
        %v6396 = vunpack.c.h.b16 %v3072
        %v6397 = vunpack.c.l.b16 %v3073
        %v6398 = vunpack.c.h.b16 %v3073
        %v6399 = vunpack.c.l.b16 %v3074
        %v6400 = vunpack.c.h.b16 %v3074
        %v6401 = vunpack.c.l.b16 %v3075
        %v6402 = vunpack.c.h.b16 %v3075
        %v6403 = vunpack.c.l.b16 %v3076
        %v6404 = vunpack.c.h.b16 %v3076
        %v6405 = vunpack.c.l.b16 %v3077
        %v6406 = vunpack.c.h.b16 %v3077
        %v6407 = vunpack.c.l.b16 %v3078
        %v6408 = vunpack.c.h.b16 %v3078
        %v6409 = vunpack.c.l.b16 %v3079
        %v6410 = vunpack.c.h.b16 %v3079
        %v6411 = vunpack.c.l.b16 %v3080
        %v6412 = vunpack.c.h.b16 %v3080
        %v6413 = vunpack.c.l.b16 %v3081
        %v6414 = vunpack.c.h.b16 %v3081
        %v6415 = vunpack.c.l.b16 %v3082
        %v6416 = vunpack.c.h.b16 %v3082
        %v6417 = vunpack.c.l.b16 %v3083
        %v6418 = vunpack.c.h.b16 %v3083
        %v6419 = vunpack.c.l.b16 %v3084
        %v6420 = vunpack.c.h.b16 %v3084
        %v6421 = vunpack.c.l.b16 %v3085
        %v6422 = vunpack.c.h.b16 %v3085
        %v6423 = vunpack.c.l.b16 %v3086
        %v6424 = vunpack.c.h.b16 %v3086
        %v6425 = vunpack.c.l.b16 %v3087
        %v6426 = vunpack.c.h.b16 %v3087
        %v6427 = vunpack.c.l.b16 %v3088
        %v6428 = vunpack.c.h.b16 %v3088
        %v6429 = vunpack.c.l.b16 %v3089
        %v6430 = vunpack.c.h.b16 %v3089
        %v6431 = vunpack.c.l.b16 %v3090
        %v6432 = vunpack.c.h.b16 %v3090
        %v6433 = vunpack.c.l.b16 %v3091
        %v6434 = vunpack.c.h.b16 %v3091
        %v6435 = vunpack.c.l.b16 %v3092
        %v6436 = vunpack.c.h.b16 %v3092
        %v6437 = vunpack.c.l.b16 %v3093
        %v6438 = vunpack.c.h.b16 %v3093
        %v6439 = vunpack.c.l.b16 %v3094
        %v6440 = vunpack.c.h.b16 %v3094
        %v6441 = vunpack.c.l.b16 %v3095
        %v6442 = vunpack.c.h.b16 %v3095
        %v6443 = vunpack.c.l.b16 %v3096
        %v6444 = vunpack.c.h.b16 %v3096
        %v6445 = vunpack.c.l.b16 %v3097
        %v6446 = vunpack.c.h.b16 %v3097
        %v6447 = vunpack.c.l.b16 %v3098
        %v6448 = vunpack.c.h.b16 %v3098
        %v6449 = vunpack.c.l.b16 %v3099
        %v6450 = vunpack.c.h.b16 %v3099
        %v6451 = vunpack.c.l.b16 %v3100
        %v6452 = vunpack.c.h.b16 %v3100
        %v6453 = vunpack.c.l.b16 %v3101
        %v6454 = vunpack.c.h.b16 %v3101
        %v6455 = vunpack.c.l.b16 %v3102
        %v6456 = vunpack.c.h.b16 %v3102
        %v6457 = vunpack.c.l.b16 %v3103
        %v6458 = vunpack.c.h.b16 %v3103
        %v6459 = vunpack.c.l.b16 %v3104
        %v6460 = vunpack.c.h.b16 %v3104
        %v6461 = vunpack.c.l.b16 %v3105
        %v6462 = vunpack.c.h.b16 %v3105
        %v6463 = vunpack.c.l.b16 %v3106
        %v6464 = vunpack.c.h.b16 %v3106
        %v6465 = vunpack.c.l.b16 %v3107
        %v6466 = vunpack.c.h.b16 %v3107
        %v6467 = vunpack.c.l.b16 %v3108
        %v6468 = vunpack.c.h.b16 %v3108
        %v6469 = vunpack.c.l.b16 %v3109
        %v6470 = vunpack.c.h.b16 %v3109
        %v6471 = vunpack.c.l.b16 %v3110
        %v6472 = vunpack.c.h.b16 %v3110
        %v6473 = vunpack.c.l.b16 %v3111
        %v6474 = vunpack.c.h.b16 %v3111
        %v6475 = vunpack.c.l.b16 %v3112
        %v6476 = vunpack.c.h.b16 %v3112
        %v6477 = vunpack.c.l.b16 %v3113
        %v6478 = vunpack.c.h.b16 %v3113
        %v6479 = vunpack.c.l.b16 %v3114
        %v6480 = vunpack.c.h.b16 %v3114
        %v6481 = vunpack.c.l.b16 %v3115
        %v6482 = vunpack.c.h.b16 %v3115
        %v6483 = vunpack.c.l.b16 %v3116
        %v6484 = vunpack.c.h.b16 %v3116
        %v6485 = vunpack.c.l.b16 %v3117
        %v6486 = vunpack.c.h.b16 %v3117
        %v6487 = vunpack.c.l.b16 %v3118
        %v6488 = vunpack.c.h.b16 %v3118
        %v6489 = vunpack.c.l.b16 %v3119
        %v6490 = vunpack.c.h.b16 %v3119
        %v6491 = vunpack.c.l.b16 %v3120
        %v6492 = vunpack.c.h.b16 %v3120
        %v6493 = vunpack.c.l.b16 %v3121
        %v6494 = vunpack.c.h.b16 %v3121
        %v6495 = vunpack.c.l.b16 %v3122
        %v6496 = vunpack.c.h.b16 %v3122
        %v6497 = vunpack.c.l.b16 %v3123
        %v6498 = vunpack.c.h.b16 %v3123
        %v6499 = vunpack.c.l.b16 %v3124
        %v6500 = vunpack.c.h.b16 %v3124
        %v6501 = vunpack.c.l.b16 %v3125
        %v6502 = vunpack.c.h.b16 %v3125
        %v6503 = vunpack.c.l.b16 %v3126
        %v6504 = vunpack.c.h.b16 %v3126
        %v6505 = vunpack.c.l.b16 %v3127
        %v6506 = vunpack.c.h.b16 %v3127
        %v6507 = vunpack.c.l.b16 %v3128
        %v6508 = vunpack.c.h.b16 %v3128
        %v6509 = vunpack.c.l.b16 %v3129
        %v6510 = vunpack.c.h.b16 %v3129
        %v6511 = vunpack.c.l.b16 %v3130
        %v6512 = vunpack.c.h.b16 %v3130
        %v6513 = vunpack.c.l.b16 %v3131
        %v6514 = vunpack.c.h.b16 %v3131
        %v6515 = vunpack.c.l.b16 %v3132
        %v6516 = vunpack.c.h.b16 %v3132
        %v6517 = vunpack.c.l.b16 %v3133
        %v6518 = vunpack.c.h.b16 %v3133
        %v6519 = vunpack.c.l.b16 %v3134
        %v6520 = vunpack.c.h.b16 %v3134
        %v6521 = vunpack.c.l.b16 %v3135
        %v6522 = vunpack.c.h.b16 %v3135
        %v6523 = vunpack.c.l.b16 %v3136
        %v6524 = vunpack.c.h.b16 %v3136
        %v6525 = vunpack.c.l.b16 %v3137
        %v6526 = vunpack.c.h.b16 %v3137
        %v6527 = vunpack.c.l.b16 %v3138
        %v6528 = vunpack.c.h.b16 %v3138
        %v6529 = vunpack.c.l.b16 %v3139
        %v6530 = vunpack.c.h.b16 %v3139
        %v6531 = vunpack.c.l.b16 %v3140
        %v6532 = vunpack.c.h.b16 %v3140
        %v6533 = vunpack.c.l.b16 %v3141
        %v6534 = vunpack.c.h.b16 %v3141
        %v6535 = vunpack.c.l.b16 %v3142
        %v6536 = vunpack.c.h.b16 %v3142
        %v6537 = vunpack.c.l.b16 %v3143
        %v6538 = vunpack.c.h.b16 %v3143
        %v6539 = vunpack.c.l.b16 %v3144
        %v6540 = vunpack.c.h.b16 %v3144
        %v6541 = vunpack.c.l.b16 %v3145
        %v6542 = vunpack.c.h.b16 %v3145
        %v6543 = vunpack.c.l.b16 %v3146
        %v6544 = vunpack.c.h.b16 %v3146
        %v6545 = vunpack.c.l.b16 %v3147
        %v6546 = vunpack.c.h.b16 %v3147
        %v6547 = vunpack.c.l.b16 %v3148
        %v6548 = vunpack.c.h.b16 %v3148
        %v6549 = vunpack.c.l.b16 %v3149
        %v6550 = vunpack.c.h.b16 %v3149
        %v6551 = vunpack.c.l.b16 %v3150
        %v6552 = vunpack.c.h.b16 %v3150
        %v6553 = vunpack.c.l.b16 %v3151
        %v6554 = vunpack.c.h.b16 %v3151
        %v6555 = vunpack.c.l.b16 %v3152
        %v6556 = vunpack.c.h.b16 %v3152
        %v6557 = vunpack.c.l.b16 %v3153
        %v6558 = vunpack.c.h.b16 %v3153
        %v6559 = vunpack.c.l.b16 %v3154
        %v6560 = vunpack.c.h.b16 %v3154
        %v6561 = vunpack.c.l.b16 %v3155
        %v6562 = vunpack.c.h.b16 %v3155
        %v6563 = vunpack.c.l.b16 %v3156
        %v6564 = vunpack.c.h.b16 %v3156
        %v6565 = vunpack.c.l.b16 %v3157
        %v6566 = vunpack.c.h.b16 %v3157
        %v6567 = vunpack.c.l.b16 %v3158
        %v6568 = vunpack.c.h.b16 %v3158
        %v6569 = vunpack.c.l.b16 %v3159
        %v6570 = vunpack.c.h.b16 %v3159
        %v6571 = vunpack.c.l.b16 %v3160
        %v6572 = vunpack.c.h.b16 %v3160
        %v6573 = vunpack.c.l.b16 %v3161
        %v6574 = vunpack.c.h.b16 %v3161
        %v6575 = vunpack.c.l.b16 %v3162
        %v6576 = vunpack.c.h.b16 %v3162
        %v6577 = vunpack.c.l.b16 %v3163
        %v6578 = vunpack.c.h.b16 %v3163
        %v6579 = vunpack.c.l.b16 %v3164
        %v6580 = vunpack.c.h.b16 %v3164
        %v6581 = vunpack.c.l.b16 %v3165
        %v6582 = vunpack.c.h.b16 %v3165
        %v6583 = vunpack.c.l.b16 %v3166
        %v6584 = vunpack.c.h.b16 %v3166
        %v6585 = vunpack.c.l.b16 %v3167
        %v6586 = vunpack.c.h.b16 %v3167
        %v6587 = vunpack.c.l.b16 %v3168
        %v6588 = vunpack.c.h.b16 %v3168
        %v6589 = vunpack.c.l.b16 %v3169
        %v6590 = vunpack.c.h.b16 %v3169
        %v6591 = vunpack.c.l.b16 %v3170
        %v6592 = vunpack.c.h.b16 %v3170
        %v6593 = vunpack.c.l.b16 %v3171
        %v6594 = vunpack.c.h.b16 %v3171
        %v6595 = vunpack.c.l.b16 %v3172
        %v6596 = vunpack.c.h.b16 %v3172
        %v6597 = vunpack.c.l.b16 %v3173
        %v6598 = vunpack.c.h.b16 %v3173
        %v6599 = vunpack.c.l.b16 %v3174
        %v6600 = vunpack.c.h.b16 %v3174
        %v6601 = vunpack.c.l.b16 %v3175
        %v6602 = vunpack.c.h.b16 %v3175
        %v6603 = vunpack.c.l.b16 %v3176
        %v6604 = vunpack.c.h.b16 %v3176
        %v6605 = vunpack.c.l.b16 %v3177
        %v6606 = vunpack.c.h.b16 %v3177
        %v6607 = vunpack.c.l.b16 %v3178
        %v6608 = vunpack.c.h.b16 %v3178
        %v6609 = vunpack.c.l.b16 %v3179
        %v6610 = vunpack.c.h.b16 %v3179
        %v6611 = vunpack.c.l.b16 %v3180
        %v6612 = vunpack.c.h.b16 %v3180
        %v6613 = vunpack.c.l.b16 %v3181
        %v6614 = vunpack.c.h.b16 %v3181
        %v6615 = vunpack.c.l.b16 %v3182
        %v6616 = vunpack.c.h.b16 %v3182
        %v6617 = vunpack.c.l.b16 %v3183
        %v6618 = vunpack.c.h.b16 %v3183
        %v6619 = vunpack.c.l.b16 %v3184
        %v6620 = vunpack.c.h.b16 %v3184
        %v6621 = vunpack.c.l.b16 %v3185
        %v6622 = vunpack.c.h.b16 %v3185
        %v6623 = vunpack.c.l.b16 %v3186
        %v6624 = vunpack.c.h.b16 %v3186
        %v6625 = vunpack.c.l.b16 %v3187
        %v6626 = vunpack.c.h.b16 %v3187
        %v6627 = vunpack.c.l.b16 %v3188
        %v6628 = vunpack.c.h.b16 %v3188
        %v6629 = vunpack.c.l.b16 %v3189
        %v6630 = vunpack.c.h.b16 %v3189
        %v6631 = vunpack.c.l.b16 %v3190
        %v6632 = vunpack.c.h.b16 %v3190
        %v6633 = vunpack.c.l.b16 %v3191
        %v6634 = vunpack.c.h.b16 %v3191
        %v6635 = vunpack.c.l.b16 %v3192
        %v6636 = vunpack.c.h.b16 %v3192
        %v6637 = vunpack.c.l.b16 %v3193
        %v6638 = vunpack.c.h.b16 %v3193
        %v6639 = vunpack.c.l.b16 %v3194
        %v6640 = vunpack.c.h.b16 %v3194
        %v6641 = vunpack.c.l.b16 %v3195
        %v6642 = vunpack.c.h.b16 %v3195
        %v6643 = vunpack.c.l.b16 %v3196
        %v6644 = vunpack.c.h.b16 %v3196
        %v6645 = vunpack.c.l.b16 %v3197
        %v6646 = vunpack.c.h.b16 %v3197
        %v6647 = vunpack.c.l.b16 %v3198
        %v6648 = vunpack.c.h.b16 %v3198
        %v6649 = vunpack.c.l.b16 %v3199
        %v6650 = vunpack.c.h.b16 %v3199
        %v6651 = vunpack.c.l.b16 %v3200
        %v6652 = vunpack.c.h.b16 %v3200
        %v6653 = vunpack.c.l.b16 %v3201
        %v6654 = vunpack.c.h.b16 %v3201
        %v6655 = vunpack.c.l.b16 %v3202
        %v6656 = vunpack.c.h.b16 %v3202
        %v6657 = vunpack.c.l.b16 %v3203
        %v6658 = vunpack.c.h.b16 %v3203
        %v6659 = vunpack.c.l.b16 %v3204
        %v6660 = vunpack.c.h.b16 %v3204
        %v6661 = vunpack.c.l.b16 %v3205
        %v6662 = vunpack.c.h.b16 %v3205
        %v6663 = vunpack.c.l.b16 %v3206
        %v6664 = vunpack.c.h.b16 %v3206
        %v6665 = vunpack.c.l.b16 %v3207
        %v6666 = vunpack.c.h.b16 %v3207
        %v6667 = vunpack.c.l.b16 %v3208
        %v6668 = vunpack.c.h.b16 %v3208
        %v6669 = vunpack.c.l.b16 %v3209
        %v6670 = vunpack.c.h.b16 %v3209
        %v6671 = vunpack.c.l.b16 %v3210
        %v6672 = vunpack.c.h.b16 %v3210
        %v6673 = vunpack.c.l.b16 %v3211
        %v6674 = vunpack.c.h.b16 %v3211
        %v6675 = vunpack.c.l.b16 %v3212
        %v6676 = vunpack.c.h.b16 %v3212
        %v6677 = vunpack.c.l.b16 %v3213
        %v6678 = vunpack.c.h.b16 %v3213
        %v6679 = vunpack.c.l.b16 %v3214
        %v6680 = vunpack.c.h.b16 %v3214
        %v6681 = vunpack.c.l.b16 %v3215
        %v6682 = vunpack.c.h.b16 %v3215
        %v6683 = vunpack.c.l.b16 %v3216
        %v6684 = vunpack.c.h.b16 %v3216
        %v6685 = vunpack.c.l.b16 %v3217
        %v6686 = vunpack.c.h.b16 %v3217
        %v6687 = vunpack.c.l.b16 %v3218
        %v6688 = vunpack.c.h.b16 %v3218
        %v6689 = vunpack.c.l.b16 %v3219
        %v6690 = vunpack.c.h.b16 %v3219
        %v6691 = vunpack.c.l.b16 %v3220
        %v6692 = vunpack.c.h.b16 %v3220
        %v6693 = vunpack.c.l.b16 %v3221
        %v6694 = vunpack.c.h.b16 %v3221
        %v6695 = vunpack.c.l.b16 %v3222
        %v6696 = vunpack.c.h.b16 %v3222
        %v6697 = vunpack.c.l.b16 %v3223
        %v6698 = vunpack.c.h.b16 %v3223
        %v6699 = vunpack.c.l.b16 %v3224
        %v6700 = vunpack.c.h.b16 %v3224
        %v6701 = vunpack.c.l.b16 %v3225
        %v6702 = vunpack.c.h.b16 %v3225
        %v6703 = vunpack.c.l.b16 %v3226
        %v6704 = vunpack.c.h.b16 %v3226
        %v6705 = vunpack.c.l.b16 %v3227
        %v6706 = vunpack.c.h.b16 %v3227
        %v6707 = vunpack.c.l.b16 %v3228
        %v6708 = vunpack.c.h.b16 %v3228
        %v6709 = vunpack.c.l.b16 %v3229
        %v6710 = vunpack.c.h.b16 %v3229
        %v6711 = vunpack.c.l.b16 %v3230
        %v6712 = vunpack.c.h.b16 %v3230
        %v6713 = vunpack.c.l.b16 %v3231
        %v6714 = vunpack.c.h.b16 %v3231
        %v6715 = vunpack.c.l.b16 %v3232
        %v6716 = vunpack.c.h.b16 %v3232
        %v6717 = vunpack.c.l.b16 %v3233
        %v6718 = vunpack.c.h.b16 %v3233
        %v6719 = vunpack.c.l.b16 %v3234
        %v6720 = vunpack.c.h.b16 %v3234
        %v6721 = vunpack.c.l.b16 %v3235
        %v6722 = vunpack.c.h.b16 %v3235
        %v6723 = vunpack.c.l.b16 %v3236
        %v6724 = vunpack.c.h.b16 %v3236
        %v6725 = vunpack.c.l.b16 %v3237
        %v6726 = vunpack.c.h.b16 %v3237
        %v6727 = vunpack.c.l.b16 %v3238
        %v6728 = vunpack.c.h.b16 %v3238
        %v6729 = vunpack.c.l.b16 %v3239
        %v6730 = vunpack.c.h.b16 %v3239
        %v6731 = vunpack.c.l.b16 %v3240
        %v6732 = vunpack.c.h.b16 %v3240
        %v6733 = vunpack.c.l.b16 %v3241
        %v6734 = vunpack.c.h.b16 %v3241
        %v6735 = vunpack.c.l.b16 %v3242
        %v6736 = vunpack.c.h.b16 %v3242
        %v6737 = vunpack.c.l.b16 %v3243
        %v6738 = vunpack.c.h.b16 %v3243
        %v6739 = vunpack.c.l.b16 %v3244
        %v6740 = vunpack.c.h.b16 %v3244
        %v6741 = vunpack.c.l.b16 %v3245
        %v6742 = vunpack.c.h.b16 %v3245
        %v6743 = vunpack.c.l.b16 %v3246
        %v6744 = vunpack.c.h.b16 %v3246
        %v6745 = vunpack.c.l.b16 %v3247
        %v6746 = vunpack.c.h.b16 %v3247
        %v6747 = vunpack.c.l.b16 %v3248
        %v6748 = vunpack.c.h.b16 %v3248
        %v6749 = vunpack.c.l.b16 %v3249
        %v6750 = vunpack.c.h.b16 %v3249
        %v6751 = vunpack.c.l.b16 %v3250
        %v6752 = vunpack.c.h.b16 %v3250
        %v6753 = vunpack.c.l.b16 %v3251
        %v6754 = vunpack.c.h.b16 %v3251
        %v6755 = vunpack.c.l.b16 %v3252
        %v6756 = vunpack.c.h.b16 %v3252
        %v6757 = vunpack.c.l.b16 %v3253
        %v6758 = vunpack.c.h.b16 %v3253
        %v6759 = vunpack.c.l.b16 %v3254
        %v6760 = vunpack.c.h.b16 %v3254
        %v6761 = vunpack.c.l.b16 %v3255
        %v6762 = vunpack.c.h.b16 %v3255
        %v6763 = vunpack.c.l.b16 %v3256
        %v6764 = vunpack.c.h.b16 %v3256
        %v6765 = vunpack.c.l.b16 %v3257
        %v6766 = vunpack.c.h.b16 %v3257
        %v6767 = vunpack.c.l.b16 %v3258
        %v6768 = vunpack.c.h.b16 %v3258
        %v6769 = vunpack.c.l.b16 %v3259
        %v6770 = vunpack.c.h.b16 %v3259
        %v6771 = vunpack.c.l.b16 %v3260
        %v6772 = vunpack.c.h.b16 %v3260
        %v6773 = vunpack.c.l.b16 %v3261
        %v6774 = vunpack.c.h.b16 %v3261
        %v6775 = vunpack.c.l.b16 %v3262
        %v6776 = vunpack.c.h.b16 %v3262
        %v6777 = vunpack.c.l.b16 %v3263
        %v6778 = vunpack.c.h.b16 %v3263
        %v6779 = vunpack.c.l.b16 %v3264
        %v6780 = vunpack.c.h.b16 %v3264
        %v6781 = vunpack.c.l.b16 %v3265
        %v6782 = vunpack.c.h.b16 %v3265
        %v6783 = vunpack.c.l.b16 %v3266
        %v6784 = vunpack.c.h.b16 %v3266
        %v6785 = vunpack.c.l.b16 %v3267
        %v6786 = vunpack.c.h.b16 %v3267
        %v6787 = vunpack.c.l.b16 %v3268
        %v6788 = vunpack.c.h.b16 %v3268
        %v6789 = vunpack.c.l.b16 %v3269
        %v6790 = vunpack.c.h.b16 %v3269
        %v6791 = vunpack.c.l.b16 %v3270
        %v6792 = vunpack.c.h.b16 %v3270
        %v6793 = vunpack.c.l.b16 %v3271
        %v6794 = vunpack.c.h.b16 %v3271
        %v6795 = vunpack.c.l.b16 %v3272
        %v6796 = vunpack.c.h.b16 %v3272
        %v6797 = vunpack.c.l.b16 %v3273
        %v6798 = vunpack.c.h.b16 %v3273
        %v6799 = vunpack.c.l.b16 %v3274
        %v6800 = vunpack.c.h.b16 %v3274
        %v6801 = vunpack.c.l.b16 %v3275
        %v6802 = vunpack.c.h.b16 %v3275
        %v6803 = vunpack.c.l.b16 %v3276
        %v6804 = vunpack.c.h.b16 %v3276
        %v6805 = vunpack.c.l.b16 %v3277
        %v6806 = vunpack.c.h.b16 %v3277
        %v6807 = vunpack.c.l.b16 %v3278
        %v6808 = vunpack.c.h.b16 %v3278
        %v6809 = vunpack.c.l.b16 %v3279
        %v6810 = vunpack.c.h.b16 %v3279
        %v6811 = vunpack.c.l.b16 %v3280
        %v6812 = vunpack.c.h.b16 %v3280
        %v6813 = vunpack.c.l.b16 %v3281
        %v6814 = vunpack.c.h.b16 %v3281
        %v6815 = vunpack.c.l.b16 %v3282
        %v6816 = vunpack.c.h.b16 %v3282
        %v6817 = vunpack.c.l.b16 %v3283
        %v6818 = vunpack.c.h.b16 %v3283
        %v6819 = vunpack.c.l.b16 %v3284
        %v6820 = vunpack.c.h.b16 %v3284
        %v6821 = vunpack.c.l.b16 %v3285
        %v6822 = vunpack.c.h.b16 %v3285
        %v6823 = vunpack.c.l.b16 %v3286
        %v6824 = vunpack.c.h.b16 %v3286
        %v6825 = vunpack.c.l.b16 %v3287
        %v6826 = vunpack.c.h.b16 %v3287
        %v6827 = vunpack.c.l.b16 %v3288
        %v6828 = vunpack.c.h.b16 %v3288
        %v6829 = vunpack.c.l.b16 %v3289
        %v6830 = vunpack.c.h.b16 %v3289
        %v6831 = vunpack.c.l.b16 %v3290
        %v6832 = vunpack.c.h.b16 %v3290
        %v6833 = vunpack.c.l.b16 %v3291
        %v6834 = vunpack.c.h.b16 %v3291
        %v6835 = vunpack.c.l.b16 %v3292
        %v6836 = vunpack.c.h.b16 %v3292
        %v6837 = vunpack.c.l.b16 %v3293
        %v6838 = vunpack.c.h.b16 %v3293
        %v6839 = vunpack.c.l.b16 %v3294
        %v6840 = vunpack.c.h.b16 %v3294
        %v6841 = vunpack.c.l.b16 %v3295
        %v6842 = vunpack.c.h.b16 %v3295
        %v6843 = vunpack.c.l.b16 %v3296
        %v6844 = vunpack.c.h.b16 %v3296
        %v6845 = vunpack.c.l.b16 %v3297
        %v6846 = vunpack.c.h.b16 %v3297
        %v6847 = vunpack.c.l.b16 %v3298
        %v6848 = vunpack.c.h.b16 %v3298
        %v6849 = vunpack.c.l.b16 %v3299
        %v6850 = vunpack.c.h.b16 %v3299
        %v6851 = vunpack.c.l.b16 %v3300
        %v6852 = vunpack.c.h.b16 %v3300
        %v6853 = vunpack.c.l.b16 %v3301
        %v6854 = vunpack.c.h.b16 %v3301
        %v6855 = vunpack.c.l.b16 %v3302
        %v6856 = vunpack.c.h.b16 %v3302
        %v6857 = vunpack.c.l.b16 %v3303
        %v6858 = vunpack.c.h.b16 %v3303
        %v6859 = vunpack.c.l.b16 %v3304
        %v6860 = vunpack.c.h.b16 %v3304
        %v6861 = vunpack.c.l.b16 %v3305
        %v6862 = vunpack.c.h.b16 %v3305
        %v6863 = vunpack.c.l.b16 %v3306
        %v6864 = vunpack.c.h.b16 %v3306
        %v6865 = vunpack.c.l.b16 %v3307
        %v6866 = vunpack.c.h.b16 %v3307
        %v6867 = vunpack.c.l.b16 %v3308
        %v6868 = vunpack.c.h.b16 %v3308
        %v6869 = vunpack.c.l.b16 %v3309
        %v6870 = vunpack.c.h.b16 %v3309
        %v6871 = vunpack.c.l.b16 %v3310
        %v6872 = vunpack.c.h.b16 %v3310
        %v6873 = vunpack.c.l.b16 %v3311
        %v6874 = vunpack.c.h.b16 %v3311
        %v6875 = vunpack.c.l.b16 %v3312
        %v6876 = vunpack.c.h.b16 %v3312
        %v6877 = vunpack.c.l.b16 %v3313
        %v6878 = vunpack.c.h.b16 %v3313
        %v6879 = vunpack.c.l.b16 %v3314
        %v6880 = vunpack.c.h.b16 %v3314
        %v6881 = vunpack.c.l.b16 %v3315
        %v6882 = vunpack.c.h.b16 %v3315
        %v6883 = vunpack.c.l.b16 %v3316
        %v6884 = vunpack.c.h.b16 %v3316
        %v6885 = vunpack.c.l.b16 %v3317
        %v6886 = vunpack.c.h.b16 %v3317
        %v6887 = vunpack.c.l.b16 %v3318
        %v6888 = vunpack.c.h.b16 %v3318
        %v6889 = vunpack.c.l.b16 %v3319
        %v6890 = vunpack.c.h.b16 %v3319
        %v6891 = vunpack.c.l.b16 %v3320
        %v6892 = vunpack.c.h.b16 %v3320
        %v6893 = vunpack.c.l.b16 %v3321
        %v6894 = vunpack.c.h.b16 %v3321
        %v6895 = vunpack.c.l.b16 %v3322
        %v6896 = vunpack.c.h.b16 %v3322
        %v6897 = vunpack.c.l.b16 %v3323
        %v6898 = vunpack.c.h.b16 %v3323
        %v6899 = vunpack.c.l.b16 %v3324
        %v6900 = vunpack.c.h.b16 %v3324
        %v6901 = vunpack.c.l.b16 %v3325
        %v6902 = vunpack.c.h.b16 %v3325
        %v6903 = vunpack.c.l.b16 %v3326
        %v6904 = vunpack.c.h.b16 %v3326
        %v6905 = vunpack.c.l.b16 %v3327
        %v6906 = vunpack.c.h.b16 %v3327
        %v6907 = vunpack.c.l.b16 %v3328
        %v6908 = vunpack.c.h.b16 %v3328
        %v6909 = vunpack.c.l.b16 %v3329
        %v6910 = vunpack.c.h.b16 %v3329
        %v6911 = vunpack.c.l.b16 %v3330
        %v6912 = vunpack.c.h.b16 %v3330
        %v6913 = vunpack.c.l.b16 %v3331
        %v6914 = vunpack.c.h.b16 %v3331
        %v6915 = vunpack.c.l.b16 %v3332
        %v6916 = vunpack.c.h.b16 %v3332
        %v6917 = vunpack.c.l.b16 %v3333
        %v6918 = vunpack.c.h.b16 %v3333
        %v6919 = vunpack.c.l.b16 %v3334
        %v6920 = vunpack.c.h.b16 %v3334
        %v6921 = vunpack.c.l.b16 %v3335
        %v6922 = vunpack.c.h.b16 %v3335
        %v6923 = vunpack.c.l.b16 %v3336
        %v6924 = vunpack.c.h.b16 %v3336
        %v6925 = vunpack.c.l.b16 %v3337
        %v6926 = vunpack.c.h.b16 %v3337
        %v6927 = vunpack.c.l.b16 %v3338
        %v6928 = vunpack.c.h.b16 %v3338
        %v6929 = vunpack.c.l.b16 %v3339
        %v6930 = vunpack.c.h.b16 %v3339
        %v6931 = vunpack.c.l.b16 %v3340
        %v6932 = vunpack.c.h.b16 %v3340
        %v6933 = vunpack.c.l.b16 %v3341
        %v6934 = vunpack.c.h.b16 %v3341
        %v6935 = vunpack.c.l.b16 %v3342
        %v6936 = vunpack.c.h.b16 %v3342
        %v6937 = vunpack.c.l.b16 %v3343
        %v6938 = vunpack.c.h.b16 %v3343
        %v6939 = vunpack.c.l.b16 %v3344
        %v6940 = vunpack.c.h.b16 %v3344
        %v6941 = vunpack.c.l.b16 %v3345
        %v6942 = vunpack.c.h.b16 %v3345
        %v6943 = vunpack.c.l.b16 %v3346
        %v6944 = vunpack.c.h.b16 %v3346
        %v6945 = vunpack.c.l.b16 %v3347
        %v6946 = vunpack.c.h.b16 %v3347
        %v6947 = vunpack.c.l.b16 %v3348
        %v6948 = vunpack.c.h.b16 %v3348
        %v6949 = vunpack.c.l.b16 %v3349
        %v6950 = vunpack.c.h.b16 %v3349
        %v6951 = vunpack.c.l.b16 %v3350
        %v6952 = vunpack.c.h.b16 %v3350
        %v6953 = vunpack.c.l.b16 %v3351
        %v6954 = vunpack.c.h.b16 %v3351
        %v6955 = vunpack.c.l.b16 %v3352
        %v6956 = vunpack.c.h.b16 %v3352
        %v6957 = vunpack.c.l.b16 %v3353
        %v6958 = vunpack.c.h.b16 %v3353
        %v6959 = vunpack.c.l.b16 %v3354
        %v6960 = vunpack.c.h.b16 %v3354
        %v6961 = vunpack.c.l.b16 %v3355
        %v6962 = vunpack.c.h.b16 %v3355
        %v6963 = vunpack.c.l.b16 %v3356
        %v6964 = vunpack.c.h.b16 %v3356
        %v6965 = vunpack.c.l.b16 %v3357
        %v6966 = vunpack.c.h.b16 %v3357
        %v6967 = vunpack.c.l.b16 %v3358
        %v6968 = vunpack.c.h.b16 %v3358
        %v6969 = vunpack.c.l.b16 %v3359
        %v6970 = vunpack.c.h.b16 %v3359
        %v6971 = vunpack.c.l.b16 %v3360
        %v6972 = vunpack.c.h.b16 %v3360
        %v6973 = vunpack.c.l.b16 %v3361
        %v6974 = vunpack.c.h.b16 %v3361
        %v6975 = vunpack.c.l.b16 %v3362
        %v6976 = vunpack.c.h.b16 %v3362
        %v6977 = vunpack.c.l.b16 %v3363
        %v6978 = vunpack.c.h.b16 %v3363
        %v6979 = vunpack.c.l.b16 %v3364
        %v6980 = vunpack.c.h.b16 %v3364
        %v6981 = vunpack.c.l.b16 %v3365
        %v6982 = vunpack.c.h.b16 %v3365
        %v6983 = vpack.c.b16 %v4943, %v4935
        %v6984 = vpack.c.b16 %v4944, %v4936
        %v6985 = vpack.c.b16 %v4945, %v4937
        %v6986 = vpack.c.b16 %v4946, %v4938
        %v6987 = vpack.c.b16 %v4947, %v4939
        %v6988 = vpack.c.b16 %v4948, %v4940
        %v6989 = vpack.c.b16 %v4949, %v4941
        %v6990 = vpack.c.b16 %v4950, %v4942
        %v6991 = vpack.c.b16 %v4959, %v4951
        %v6992 = vpack.c.b16 %v4960, %v4952
        %v6993 = vpack.c.b16 %v4961, %v4953
        %v6994 = vpack.c.b16 %v4962, %v4954
        %v6995 = vpack.c.b16 %v4963, %v4955
        %v6996 = vpack.c.b16 %v4964, %v4956
        %v6997 = vpack.c.b16 %v4965, %v4957
        %v6998 = vpack.c.b16 %v4966, %v4958
        %v6999 = vpack.c.b16 %v4975, %v4967
        %v7000 = vpack.c.b16 %v4976, %v4968
        %v7001 = vpack.c.b16 %v4977, %v4969
        %v7002 = vpack.c.b16 %v4978, %v4970
        %v7003 = vpack.c.b16 %v4979, %v4971
        %v7004 = vpack.c.b16 %v4980, %v4972
        %v7005 = vpack.c.b16 %v4981, %v4973
        %v7006 = vpack.c.b16 %v4982, %v4974
        %v7007 = vpack.c.b16 %v4991, %v4983
        %v7008 = vpack.c.b16 %v4992, %v4984
        %v7009 = vpack.c.b16 %v4993, %v4985
        %v7010 = vpack.c.b16 %v4994, %v4986
        %v7011 = vpack.c.b16 %v4995, %v4987
        %v7012 = vpack.c.b16 %v4996, %v4988
        %v7013 = vpack.c.b16 %v4997, %v4989
        %v7014 = vpack.c.b16 %v4998, %v4990
        %v7015 = vpack.c.b16 %v5007, %v4999
        %v7016 = vpack.c.b16 %v5008, %v5000
        %v7017 = vpack.c.b16 %v5009, %v5001
        %v7018 = vpack.c.b16 %v5010, %v5002
        %v7019 = vpack.c.b16 %v5011, %v5003
        %v7020 = vpack.c.b16 %v5012, %v5004
        %v7021 = vpack.c.b16 %v5013, %v5005
        %v7022 = vpack.c.b16 %v5014, %v5006
        %v7023 = vpack.c.b16 %v5023, %v5015
        %v7024 = vpack.c.b16 %v5024, %v5016
        %v7025 = vpack.c.b16 %v5025, %v5017
        %v7026 = vpack.c.b16 %v5026, %v5018
        %v7027 = vpack.c.b16 %v5027, %v5019
        %v7028 = vpack.c.b16 %v5028, %v5020
        %v7029 = vpack.c.b16 %v5029, %v5021
        %v7030 = vpack.c.b16 %v5030, %v5022
        %v7031 = vpack.c.b16 %v5039, %v5031
        %v7032 = vpack.c.b16 %v5040, %v5032
        %v7033 = vpack.c.b16 %v5041, %v5033
        %v7034 = vpack.c.b16 %v5042, %v5034
        %v7035 = vpack.c.b16 %v5043, %v5035
        %v7036 = vpack.c.b16 %v5044, %v5036
        %v7037 = vpack.c.b16 %v5045, %v5037
        %v7038 = vpack.c.b16 %v5046, %v5038
        %v7039 = vpack.c.b16 %v5055, %v5047
        %v7040 = vpack.c.b16 %v5056, %v5048
        %v7041 = vpack.c.b16 %v5057, %v5049
        %v7042 = vpack.c.b16 %v5058, %v5050
        %v7043 = vpack.c.b16 %v5059, %v5051
        %v7044 = vpack.c.b16 %v5060, %v5052
        %v7045 = vpack.c.b16 %v5061, %v5053
        %v7046 = vpack.c.b16 %v5062, %v5054
        %v7047 = vpack.c.b16 %v5071, %v5063
        %v7048 = vpack.c.b16 %v5072, %v5064
        %v7049 = vpack.c.b16 %v5073, %v5065
        %v7050 = vpack.c.b16 %v5074, %v5066
        %v7051 = vpack.c.b16 %v5075, %v5067
        %v7052 = vpack.c.b16 %v5076, %v5068
        %v7053 = vpack.c.b16 %v5077, %v5069
        %v7054 = vpack.c.b16 %v5078, %v5070
        %v7055 = vpack.c.b16 %v5087, %v5079
        %v7056 = vpack.c.b16 %v5088, %v5080
        %v7057 = vpack.c.b16 %v5089, %v5081
        %v7058 = vpack.c.b16 %v5090, %v5082
        %v7059 = vpack.c.b16 %v5091, %v5083
        %v7060 = vpack.c.b16 %v5092, %v5084
        %v7061 = vpack.c.b16 %v5093, %v5085
        %v7062 = vpack.c.b16 %v5094, %v5086
        %v7063 = vpack.c.b16 %v5103, %v5095
        %v7064 = vpack.c.b16 %v5104, %v5096
        %v7065 = vpack.c.b16 %v5105, %v5097
        %v7066 = vpack.c.b16 %v5106, %v5098
        %v7067 = vpack.c.b16 %v5107, %v5099
        %v7068 = vpack.c.b16 %v5108, %v5100
        %v7069 = vpack.c.b16 %v5109, %v5101
        %v7070 = vpack.c.b16 %v5110, %v5102
        %v7071 = vpack.c.b16 %v5119, %v5111
        %v7072 = vpack.c.b16 %v5120, %v5112
        %v7073 = vpack.c.b16 %v5121, %v5113
        %v7074 = vpack.c.b16 %v5122, %v5114
        %v7075 = vpack.c.b16 %v5123, %v5115
        %v7076 = vpack.c.b16 %v5124, %v5116
        %v7077 = vpack.c.b16 %v5125, %v5117
        %v7078 = vpack.c.b16 %v5126, %v5118
        %v7079 = vpack.c.b16 %v5135, %v5127
        %v7080 = vpack.c.b16 %v5136, %v5128
        %v7081 = vpack.c.b16 %v5137, %v5129
        %v7082 = vpack.c.b16 %v5138, %v5130
        %v7083 = vpack.c.b16 %v5139, %v5131
        %v7084 = vpack.c.b16 %v5140, %v5132
        %v7085 = vpack.c.b16 %v5141, %v5133
        %v7086 = vpack.c.b16 %v5142, %v5134
        %v7087 = vpack.c.b16 %v5151, %v5143
        %v7088 = vpack.c.b16 %v5152, %v5144
        %v7089 = vpack.c.b16 %v5153, %v5145
        %v7090 = vpack.c.b16 %v5154, %v5146
        %v7091 = vpack.c.b16 %v5155, %v5147
        %v7092 = vpack.c.b16 %v5156, %v5148
        %v7093 = vpack.c.b16 %v5157, %v5149
        %v7094 = vpack.c.b16 %v5158, %v5150
        %v7095 = vpack.c.b16 %v5167, %v5159
        %v7096 = vpack.c.b16 %v5168, %v5160
        %v7097 = vpack.c.b16 %v5169, %v5161
        %v7098 = vpack.c.b16 %v5170, %v5162
        %v7099 = vpack.c.b16 %v5171, %v5163
        %v7100 = vpack.c.b16 %v5172, %v5164
        %v7101 = vpack.c.b16 %v5173, %v5165
        %v7102 = vpack.c.b16 %v5174, %v5166
        %v7103 = vpack.c.b16 %v5183, %v5175
        %v7104 = vpack.c.b16 %v5184, %v5176
        %v7105 = vpack.c.b16 %v5185, %v5177
        %v7106 = vpack.c.b16 %v5186, %v5178
        %v7107 = vpack.c.b16 %v5187, %v5179
        %v7108 = vpack.c.b16 %v5188, %v5180
        %v7109 = vpack.c.b16 %v5189, %v5181
        %v7110 = vpack.c.b16 %v5190, %v5182
        %v7111 = vpack.c.b16 %v5199, %v5191
        %v7112 = vpack.c.b16 %v5200, %v5192
        %v7113 = vpack.c.b16 %v5201, %v5193
        %v7114 = vpack.c.b16 %v5202, %v5194
        %v7115 = vpack.c.b16 %v5203, %v5195
        %v7116 = vpack.c.b16 %v5204, %v5196
        %v7117 = vpack.c.b16 %v5205, %v5197
        %v7118 = vpack.c.b16 %v5206, %v5198
        %v7119 = vpack.c.b16 %v5215, %v5207
        %v7120 = vpack.c.b16 %v5216, %v5208
        %v7121 = vpack.c.b16 %v5217, %v5209
        %v7122 = vpack.c.b16 %v5218, %v5210
        %v7123 = vpack.c.b16 %v5219, %v5211
        %v7124 = vpack.c.b16 %v5220, %v5212
        %v7125 = vpack.c.b16 %v5221, %v5213
        %v7126 = vpack.c.b16 %v5222, %v5214
        %v7127 = vpack.c.b16 %v5231, %v5223
        %v7128 = vpack.c.b16 %v5232, %v5224
        %v7129 = vpack.c.b16 %v5233, %v5225
        %v7130 = vpack.c.b16 %v5234, %v5226
        %v7131 = vpack.c.b16 %v5235, %v5227
        %v7132 = vpack.c.b16 %v5236, %v5228
        %v7133 = vpack.c.b16 %v5237, %v5229
        %v7134 = vpack.c.b16 %v5238, %v5230
        %v7135 = vpack.c.b16 %v5247, %v5239
        %v7136 = vpack.c.b16 %v5248, %v5240
        %v7137 = vpack.c.b16 %v5249, %v5241
        %v7138 = vpack.c.b16 %v5250, %v5242
        %v7139 = vpack.c.b16 %v5251, %v5243
        %v7140 = vpack.c.b16 %v5252, %v5244
        %v7141 = vpack.c.b16 %v5253, %v5245
        %v7142 = vpack.c.b16 %v5254, %v5246
        %v7143 = vpack.c.b16 %v5263, %v5255
        %v7144 = vpack.c.b16 %v5264, %v5256
        %v7145 = vpack.c.b16 %v5265, %v5257
        %v7146 = vpack.c.b16 %v5266, %v5258
        %v7147 = vpack.c.b16 %v5267, %v5259
        %v7148 = vpack.c.b16 %v5268, %v5260
        %v7149 = vpack.c.b16 %v5269, %v5261
        %v7150 = vpack.c.b16 %v5270, %v5262
        %v7151 = vpack.c.b16 %v5279, %v5271
        %v7152 = vpack.c.b16 %v5280, %v5272
        %v7153 = vpack.c.b16 %v5281, %v5273
        %v7154 = vpack.c.b16 %v5282, %v5274
        %v7155 = vpack.c.b16 %v5283, %v5275
        %v7156 = vpack.c.b16 %v5284, %v5276
        %v7157 = vpack.c.b16 %v5285, %v5277
        %v7158 = vpack.c.b16 %v5286, %v5278
        %v7159 = vpack.c.b16 %v5295, %v5287
        %v7160 = vpack.c.b16 %v5296, %v5288
        %v7161 = vpack.c.b16 %v5297, %v5289
        %v7162 = vpack.c.b16 %v5298, %v5290
        %v7163 = vpack.c.b16 %v5299, %v5291
        %v7164 = vpack.c.b16 %v5300, %v5292
        %v7165 = vpack.c.b16 %v5301, %v5293
        %v7166 = vpack.c.b16 %v5302, %v5294
        %v7167 = vpack.c.b16 %v5311, %v5303
        %v7168 = vpack.c.b16 %v5312, %v5304
        %v7169 = vpack.c.b16 %v5313, %v5305
        %v7170 = vpack.c.b16 %v5314, %v5306
        %v7171 = vpack.c.b16 %v5315, %v5307
        %v7172 = vpack.c.b16 %v5316, %v5308
        %v7173 = vpack.c.b16 %v5317, %v5309
        %v7174 = vpack.c.b16 %v5318, %v5310
        %v7175 = vpack.c.b16 %v5327, %v5319
        %v7176 = vpack.c.b16 %v5328, %v5320
        %v7177 = vpack.c.b16 %v5329, %v5321
        %v7178 = vpack.c.b16 %v5330, %v5322
        %v7179 = vpack.c.b16 %v5331, %v5323
        %v7180 = vpack.c.b16 %v5332, %v5324
        %v7181 = vpack.c.b16 %v5333, %v5325
        %v7182 = vpack.c.b16 %v5334, %v5326
        %v7183 = vpack.c.b16 %v5343, %v5335
        %v7184 = vpack.c.b16 %v5344, %v5336
        %v7185 = vpack.c.b16 %v5345, %v5337
        %v7186 = vpack.c.b16 %v5346, %v5338
        %v7187 = vpack.c.b16 %v5347, %v5339
        %v7188 = vpack.c.b16 %v5348, %v5340
        %v7189 = vpack.c.b16 %v5349, %v5341
        %v7190 = vpack.c.b16 %v5350, %v5342
        %v7191 = vpack.c.b16 %v5359, %v5351
        %v7192 = vpack.c.b16 %v5360, %v5352
        %v7193 = vpack.c.b16 %v5361, %v5353
        %v7194 = vpack.c.b16 %v5362, %v5354
        %v7195 = vpack.c.b16 %v5363, %v5355
        %v7196 = vpack.c.b16 %v5364, %v5356
        %v7197 = vpack.c.b16 %v5365, %v5357
        %v7198 = vpack.c.b16 %v5366, %v5358
        %v7199 = vpack.c.b16 %v5375, %v5367
        %v7200 = vpack.c.b16 %v5376, %v5368
        %v7201 = vpack.c.b16 %v5377, %v5369
        %v7202 = vpack.c.b16 %v5378, %v5370
        %v7203 = vpack.c.b16 %v5379, %v5371
        %v7204 = vpack.c.b16 %v5380, %v5372
        %v7205 = vpack.c.b16 %v5381, %v5373
        %v7206 = vpack.c.b16 %v5382, %v5374
        %v7207 = vpack.c.b16 %v5391, %v5383
        %v7208 = vpack.c.b16 %v5392, %v5384
        %v7209 = vpack.c.b16 %v5393, %v5385
        %v7210 = vpack.c.b16 %v5394, %v5386
        %v7211 = vpack.c.b16 %v5395, %v5387
        %v7212 = vpack.c.b16 %v5396, %v5388
        %v7213 = vpack.c.b16 %v5397, %v5389
        %v7214 = vpack.c.b16 %v5398, %v5390
        %v7215 = vpack.c.b16 %v5407, %v5399
        %v7216 = vpack.c.b16 %v5408, %v5400
        %v7217 = vpack.c.b16 %v5409, %v5401
        %v7218 = vpack.c.b16 %v5410, %v5402
        %v7219 = vpack.c.b16 %v5411, %v5403
        %v7220 = vpack.c.b16 %v5412, %v5404
        %v7221 = vpack.c.b16 %v5413, %v5405
        %v7222 = vpack.c.b16 %v5414, %v5406
        %v7223 = vpack.c.b16 %v5423, %v5415
        %v7224 = vpack.c.b16 %v5424, %v5416
        %v7225 = vpack.c.b16 %v5425, %v5417
        %v7226 = vpack.c.b16 %v5426, %v5418
        %v7227 = vpack.c.b16 %v5427, %v5419
        %v7228 = vpack.c.b16 %v5428, %v5420
        %v7229 = vpack.c.b16 %v5429, %v5421
        %v7230 = vpack.c.b16 %v5430, %v5422
        %v7231 = vpack.c.b16 %v5439, %v5431
        %v7232 = vpack.c.b16 %v5440, %v5432
        %v7233 = vpack.c.b16 %v5441, %v5433
        %v7234 = vpack.c.b16 %v5442, %v5434
        %v7235 = vpack.c.b16 %v5443, %v5435
        %v7236 = vpack.c.b16 %v5444, %v5436
        %v7237 = vpack.c.b16 %v5445, %v5437
        %v7238 = vpack.c.b16 %v5446, %v5438
        %v7239 = vpack.c.b16 %v5455, %v5447
        %v7240 = vpack.c.b16 %v5456, %v5448
        %v7241 = vpack.c.b16 %v5457, %v5449
        %v7242 = vpack.c.b16 %v5458, %v5450
        %v7243 = vpack.c.b16 %v5459, %v5451
        %v7244 = vpack.c.b16 %v5460, %v5452
        %v7245 = vpack.c.b16 %v5461, %v5453
        %v7246 = vpack.c.b16 %v5462, %v5454
        %v7247 = vpack.c.b16 %v5471, %v5463
        %v7248 = vpack.c.b16 %v5472, %v5464
        %v7249 = vpack.c.b16 %v5473, %v5465
        %v7250 = vpack.c.b16 %v5474, %v5466
        %v7251 = vpack.c.b16 %v5475, %v5467
        %v7252 = vpack.c.b16 %v5476, %v5468
        %v7253 = vpack.c.b16 %v5477, %v5469
        %v7254 = vpack.c.b16 %v5478, %v5470
        %v7255 = vpack.c.b16 %v5487, %v5479
        %v7256 = vpack.c.b16 %v5488, %v5480
        %v7257 = vpack.c.b16 %v5489, %v5481
        %v7258 = vpack.c.b16 %v5490, %v5482
        %v7259 = vpack.c.b16 %v5491, %v5483
        %v7260 = vpack.c.b16 %v5492, %v5484
        %v7261 = vpack.c.b16 %v5493, %v5485
        %v7262 = vpack.c.b16 %v5494, %v5486
        %v7263 = vpack.c.b16 %v5503, %v5495
        %v7264 = vpack.c.b16 %v5504, %v5496
        %v7265 = vpack.c.b16 %v5505, %v5497
        %v7266 = vpack.c.b16 %v5506, %v5498
        %v7267 = vpack.c.b16 %v5507, %v5499
        %v7268 = vpack.c.b16 %v5508, %v5500
        %v7269 = vpack.c.b16 %v5509, %v5501
        %v7270 = vpack.c.b16 %v5510, %v5502
        %v7271 = vpack.c.b16 %v5519, %v5511
        %v7272 = vpack.c.b16 %v5520, %v5512
        %v7273 = vpack.c.b16 %v5521, %v5513
        %v7274 = vpack.c.b16 %v5522, %v5514
        %v7275 = vpack.c.b16 %v5523, %v5515
        %v7276 = vpack.c.b16 %v5524, %v5516
        %v7277 = vpack.c.b16 %v5525, %v5517
        %v7278 = vpack.c.b16 %v5526, %v5518
        %v7279 = vpack.c.b16 %v5535, %v5527
        %v7280 = vpack.c.b16 %v5536, %v5528
        %v7281 = vpack.c.b16 %v5537, %v5529
        %v7282 = vpack.c.b16 %v5538, %v5530
        %v7283 = vpack.c.b16 %v5539, %v5531
        %v7284 = vpack.c.b16 %v5540, %v5532
        %v7285 = vpack.c.b16 %v5541, %v5533
        %v7286 = vpack.c.b16 %v5542, %v5534
        %v7287 = vpack.c.b16 %v5551, %v5543
        %v7288 = vpack.c.b16 %v5552, %v5544
        %v7289 = vpack.c.b16 %v5553, %v5545
        %v7290 = vpack.c.b16 %v5554, %v5546
        %v7291 = vpack.c.b16 %v5555, %v5547
        %v7292 = vpack.c.b16 %v5556, %v5548
        %v7293 = vpack.c.b16 %v5557, %v5549
        %v7294 = vpack.c.b16 %v5558, %v5550
        %v7295 = vpack.c.b16 %v5567, %v5559
        %v7296 = vpack.c.b16 %v5568, %v5560
        %v7297 = vpack.c.b16 %v5569, %v5561
        %v7298 = vpack.c.b16 %v5570, %v5562
        %v7299 = vpack.c.b16 %v5571, %v5563
        %v7300 = vpack.c.b16 %v5572, %v5564
        %v7301 = vpack.c.b16 %v5573, %v5565
        %v7302 = vpack.c.b16 %v5574, %v5566
        %v7303 = vpack.c.b16 %v5583, %v5575
        %v7304 = vpack.c.b16 %v5584, %v5576
        %v7305 = vpack.c.b16 %v5585, %v5577
        %v7306 = vpack.c.b16 %v5586, %v5578
        %v7307 = vpack.c.b16 %v5587, %v5579
        %v7308 = vpack.c.b16 %v5588, %v5580
        %v7309 = vpack.c.b16 %v5589, %v5581
        %v7310 = vpack.c.b16 %v5590, %v5582
        %v7311 = vpack.c.b16 %v5599, %v5591
        %v7312 = vpack.c.b16 %v5600, %v5592
        %v7313 = vpack.c.b16 %v5601, %v5593
        %v7314 = vpack.c.b16 %v5602, %v5594
        %v7315 = vpack.c.b16 %v5603, %v5595
        %v7316 = vpack.c.b16 %v5604, %v5596
        %v7317 = vpack.c.b16 %v5605, %v5597
        %v7318 = vpack.c.b16 %v5606, %v5598
        %v7319 = vpack.c.b16 %v5615, %v5607
        %v7320 = vpack.c.b16 %v5616, %v5608
        %v7321 = vpack.c.b16 %v5617, %v5609
        %v7322 = vpack.c.b16 %v5618, %v5610
        %v7323 = vpack.c.b16 %v5619, %v5611
        %v7324 = vpack.c.b16 %v5620, %v5612
        %v7325 = vpack.c.b16 %v5621, %v5613
        %v7326 = vpack.c.b16 %v5622, %v5614
        %v7327 = vpack.c.b16 %v5631, %v5623
        %v7328 = vpack.c.b16 %v5632, %v5624
        %v7329 = vpack.c.b16 %v5633, %v5625
        %v7330 = vpack.c.b16 %v5634, %v5626
        %v7331 = vpack.c.b16 %v5635, %v5627
        %v7332 = vpack.c.b16 %v5636, %v5628
        %v7333 = vpack.c.b16 %v5637, %v5629
        %v7334 = vpack.c.b16 %v5638, %v5630
        %v7335 = vpack.c.b16 %v5647, %v5639
        %v7336 = vpack.c.b16 %v5648, %v5640
        %v7337 = vpack.c.b16 %v5649, %v5641
        %v7338 = vpack.c.b16 %v5650, %v5642
        %v7339 = vpack.c.b16 %v5651, %v5643
        %v7340 = vpack.c.b16 %v5652, %v5644
        %v7341 = vpack.c.b16 %v5653, %v5645
        %v7342 = vpack.c.b16 %v5654, %v5646
        %v7343 = vpack.c.b16 %v5663, %v5655
        %v7344 = vpack.c.b16 %v5664, %v5656
        %v7345 = vpack.c.b16 %v5665, %v5657
        %v7346 = vpack.c.b16 %v5666, %v5658
        %v7347 = vpack.c.b16 %v5667, %v5659
        %v7348 = vpack.c.b16 %v5668, %v5660
        %v7349 = vpack.c.b16 %v5669, %v5661
        %v7350 = vpack.c.b16 %v5670, %v5662
        %v7351 = vpack.c.b16 %v5679, %v5671
        %v7352 = vpack.c.b16 %v5680, %v5672
        %v7353 = vpack.c.b16 %v5681, %v5673
        %v7354 = vpack.c.b16 %v5682, %v5674
        %v7355 = vpack.c.b16 %v5683, %v5675
        %v7356 = vpack.c.b16 %v5684, %v5676
        %v7357 = vpack.c.b16 %v5685, %v5677
        %v7358 = vpack.c.b16 %v5686, %v5678
        %v7359 = vpack.c.b16 %v5695, %v5687
        %v7360 = vpack.c.b16 %v5696, %v5688
        %v7361 = vpack.c.b16 %v5697, %v5689
        %v7362 = vpack.c.b16 %v5698, %v5690
        %v7363 = vpack.c.b16 %v5699, %v5691
        %v7364 = vpack.c.b16 %v5700, %v5692
        %v7365 = vpack.c.b16 %v5701, %v5693
        %v7366 = vpack.c.b16 %v5702, %v5694
        %v7367 = vpack.c.b16 %v5711, %v5703
        %v7368 = vpack.c.b16 %v5712, %v5704
        %v7369 = vpack.c.b16 %v5713, %v5705
        %v7370 = vpack.c.b16 %v5714, %v5706
        %v7371 = vpack.c.b16 %v5715, %v5707
        %v7372 = vpack.c.b16 %v5716, %v5708
        %v7373 = vpack.c.b16 %v5717, %v5709
        %v7374 = vpack.c.b16 %v5718, %v5710
        %v7375 = vpack.c.b16 %v5727, %v5719
        %v7376 = vpack.c.b16 %v5728, %v5720
        %v7377 = vpack.c.b16 %v5729, %v5721
        %v7378 = vpack.c.b16 %v5730, %v5722
        %v7379 = vpack.c.b16 %v5731, %v5723
        %v7380 = vpack.c.b16 %v5732, %v5724
        %v7381 = vpack.c.b16 %v5733, %v5725
        %v7382 = vpack.c.b16 %v5734, %v5726
        %v7383 = vpack.c.b16 %v5743, %v5735
        %v7384 = vpack.c.b16 %v5744, %v5736
        %v7385 = vpack.c.b16 %v5745, %v5737
        %v7386 = vpack.c.b16 %v5746, %v5738
        %v7387 = vpack.c.b16 %v5747, %v5739
        %v7388 = vpack.c.b16 %v5748, %v5740
        %v7389 = vpack.c.b16 %v5749, %v5741
        %v7390 = vpack.c.b16 %v5750, %v5742
        %v7391 = vpack.c.b16 %v5759, %v5751
        %v7392 = vpack.c.b16 %v5760, %v5752
        %v7393 = vpack.c.b16 %v5761, %v5753
        %v7394 = vpack.c.b16 %v5762, %v5754
        %v7395 = vpack.c.b16 %v5763, %v5755
        %v7396 = vpack.c.b16 %v5764, %v5756
        %v7397 = vpack.c.b16 %v5765, %v5757
        %v7398 = vpack.c.b16 %v5766, %v5758
        %v7399 = vpack.c.b16 %v5775, %v5767
        %v7400 = vpack.c.b16 %v5776, %v5768
        %v7401 = vpack.c.b16 %v5777, %v5769
        %v7402 = vpack.c.b16 %v5778, %v5770
        %v7403 = vpack.c.b16 %v5779, %v5771
        %v7404 = vpack.c.b16 %v5780, %v5772
        %v7405 = vpack.c.b16 %v5781, %v5773
        %v7406 = vpack.c.b16 %v5782, %v5774
        %v7407 = vpack.c.b16 %v5791, %v5783
        %v7408 = vpack.c.b16 %v5792, %v5784
        %v7409 = vpack.c.b16 %v5793, %v5785
        %v7410 = vpack.c.b16 %v5794, %v5786
        %v7411 = vpack.c.b16 %v5795, %v5787
        %v7412 = vpack.c.b16 %v5796, %v5788
        %v7413 = vpack.c.b16 %v5797, %v5789
        %v7414 = vpack.c.b16 %v5798, %v5790
        %v7415 = vpack.c.b16 %v5807, %v5799
        %v7416 = vpack.c.b16 %v5808, %v5800
        %v7417 = vpack.c.b16 %v5809, %v5801
        %v7418 = vpack.c.b16 %v5810, %v5802
        %v7419 = vpack.c.b16 %v5811, %v5803
        %v7420 = vpack.c.b16 %v5812, %v5804
        %v7421 = vpack.c.b16 %v5813, %v5805
        %v7422 = vpack.c.b16 %v5814, %v5806
        %v7423 = vpack.c.b16 %v5823, %v5815
        %v7424 = vpack.c.b16 %v5824, %v5816
        %v7425 = vpack.c.b16 %v5825, %v5817
        %v7426 = vpack.c.b16 %v5826, %v5818
        %v7427 = vpack.c.b16 %v5827, %v5819
        %v7428 = vpack.c.b16 %v5828, %v5820
        %v7429 = vpack.c.b16 %v5829, %v5821
        %v7430 = vpack.c.b16 %v5830, %v5822
        %v7431 = vpack.c.b16 %v5839, %v5831
        %v7432 = vpack.c.b16 %v5840, %v5832
        %v7433 = vpack.c.b16 %v5841, %v5833
        %v7434 = vpack.c.b16 %v5842, %v5834
        %v7435 = vpack.c.b16 %v5843, %v5835
        %v7436 = vpack.c.b16 %v5844, %v5836
        %v7437 = vpack.c.b16 %v5845, %v5837
        %v7438 = vpack.c.b16 %v5846, %v5838
        %v7439 = vpack.c.b16 %v5855, %v5847
        %v7440 = vpack.c.b16 %v5856, %v5848
        %v7441 = vpack.c.b16 %v5857, %v5849
        %v7442 = vpack.c.b16 %v5858, %v5850
        %v7443 = vpack.c.b16 %v5859, %v5851
        %v7444 = vpack.c.b16 %v5860, %v5852
        %v7445 = vpack.c.b16 %v5861, %v5853
        %v7446 = vpack.c.b16 %v5862, %v5854
        %v7447 = vpack.c.b16 %v5871, %v5863
        %v7448 = vpack.c.b16 %v5872, %v5864
        %v7449 = vpack.c.b16 %v5873, %v5865
        %v7450 = vpack.c.b16 %v5874, %v5866
        %v7451 = vpack.c.b16 %v5875, %v5867
        %v7452 = vpack.c.b16 %v5876, %v5868
        %v7453 = vpack.c.b16 %v5877, %v5869
        %v7454 = vpack.c.b16 %v5878, %v5870
        %v7455 = vpack.c.b16 %v5887, %v5879
        %v7456 = vpack.c.b16 %v5888, %v5880
        %v7457 = vpack.c.b16 %v5889, %v5881
        %v7458 = vpack.c.b16 %v5890, %v5882
        %v7459 = vpack.c.b16 %v5891, %v5883
        %v7460 = vpack.c.b16 %v5892, %v5884
        %v7461 = vpack.c.b16 %v5893, %v5885
        %v7462 = vpack.c.b16 %v5894, %v5886
        %v7463 = vpack.c.b16 %v5903, %v5895
        %v7464 = vpack.c.b16 %v5904, %v5896
        %v7465 = vpack.c.b16 %v5905, %v5897
        %v7466 = vpack.c.b16 %v5906, %v5898
        %v7467 = vpack.c.b16 %v5907, %v5899
        %v7468 = vpack.c.b16 %v5908, %v5900
        %v7469 = vpack.c.b16 %v5909, %v5901
        %v7470 = vpack.c.b16 %v5910, %v5902
        %v7471 = vpack.c.b16 %v5919, %v5911
        %v7472 = vpack.c.b16 %v5920, %v5912
        %v7473 = vpack.c.b16 %v5921, %v5913
        %v7474 = vpack.c.b16 %v5922, %v5914
        %v7475 = vpack.c.b16 %v5923, %v5915
        %v7476 = vpack.c.b16 %v5924, %v5916
        %v7477 = vpack.c.b16 %v5925, %v5917
        %v7478 = vpack.c.b16 %v5926, %v5918
        %v7479 = vpack.c.b16 %v5935, %v5927
        %v7480 = vpack.c.b16 %v5936, %v5928
        %v7481 = vpack.c.b16 %v5937, %v5929
        %v7482 = vpack.c.b16 %v5938, %v5930
        %v7483 = vpack.c.b16 %v5939, %v5931
        %v7484 = vpack.c.b16 %v5940, %v5932
        %v7485 = vpack.c.b16 %v5941, %v5933
        %v7486 = vpack.c.b16 %v5942, %v5934
        %v7487 = vpack.c.b16 %v5951, %v5943
        %v7488 = vpack.c.b16 %v5952, %v5944
        %v7489 = vpack.c.b16 %v5953, %v5945
        %v7490 = vpack.c.b16 %v5954, %v5946
        %v7491 = vpack.c.b16 %v5955, %v5947
        %v7492 = vpack.c.b16 %v5956, %v5948
        %v7493 = vpack.c.b16 %v5957, %v5949
        %v7494 = vpack.c.b16 %v5958, %v5950
        %v7495 = vpack.c.b16 %v5967, %v5959
        %v7496 = vpack.c.b16 %v5968, %v5960
        %v7497 = vpack.c.b16 %v5969, %v5961
        %v7498 = vpack.c.b16 %v5970, %v5962
        %v7499 = vpack.c.b16 %v5971, %v5963
        %v7500 = vpack.c.b16 %v5972, %v5964
        %v7501 = vpack.c.b16 %v5973, %v5965
        %v7502 = vpack.c.b16 %v5974, %v5966
        %v7503 = vpack.c.b16 %v5983, %v5975
        %v7504 = vpack.c.b16 %v5984, %v5976
        %v7505 = vpack.c.b16 %v5985, %v5977
        %v7506 = vpack.c.b16 %v5986, %v5978
        %v7507 = vpack.c.b16 %v5987, %v5979
        %v7508 = vpack.c.b16 %v5988, %v5980
        %v7509 = vpack.c.b16 %v5989, %v5981
        %v7510 = vpack.c.b16 %v5990, %v5982
        %v7511 = vpack.c.b16 %v5999, %v5991
        %v7512 = vpack.c.b16 %v6000, %v5992
        %v7513 = vpack.c.b16 %v6001, %v5993
        %v7514 = vpack.c.b16 %v6002, %v5994
        %v7515 = vpack.c.b16 %v6003, %v5995
        %v7516 = vpack.c.b16 %v6004, %v5996
        %v7517 = vpack.c.b16 %v6005, %v5997
        %v7518 = vpack.c.b16 %v6006, %v5998
        %v7519 = vpack.c.b16 %v6015, %v6007
        %v7520 = vpack.c.b16 %v6016, %v6008
        %v7521 = vpack.c.b16 %v6017, %v6009
        %v7522 = vpack.c.b16 %v6018, %v6010
        %v7523 = vpack.c.b16 %v6019, %v6011
        %v7524 = vpack.c.b16 %v6020, %v6012
        %v7525 = vpack.c.b16 %v6021, %v6013
        %v7526 = vpack.c.b16 %v6022, %v6014
        %v7527 = vpack.c.b16 %v6031, %v6023
        %v7528 = vpack.c.b16 %v6032, %v6024
        %v7529 = vpack.c.b16 %v6033, %v6025
        %v7530 = vpack.c.b16 %v6034, %v6026
        %v7531 = vpack.c.b16 %v6035, %v6027
        %v7532 = vpack.c.b16 %v6036, %v6028
        %v7533 = vpack.c.b16 %v6037, %v6029
        %v7534 = vpack.c.b16 %v6038, %v6030
        %v7535 = vpack.c.b16 %v6047, %v6039
        %v7536 = vpack.c.b16 %v6048, %v6040
        %v7537 = vpack.c.b16 %v6049, %v6041
        %v7538 = vpack.c.b16 %v6050, %v6042
        %v7539 = vpack.c.b16 %v6051, %v6043
        %v7540 = vpack.c.b16 %v6052, %v6044
        %v7541 = vpack.c.b16 %v6053, %v6045
        %v7542 = vpack.c.b16 %v6054, %v6046
        %v7543 = vpack.c.b16 %v6063, %v6055
        %v7544 = vpack.c.b16 %v6064, %v6056
        %v7545 = vpack.c.b16 %v6065, %v6057
        %v7546 = vpack.c.b16 %v6066, %v6058
        %v7547 = vpack.c.b16 %v6067, %v6059
        %v7548 = vpack.c.b16 %v6068, %v6060
        %v7549 = vpack.c.b16 %v6069, %v6061
        %v7550 = vpack.c.b16 %v6070, %v6062
        %v7551 = vpack.c.b16 %v6079, %v6071
        %v7552 = vpack.c.b16 %v6080, %v6072
        %v7553 = vpack.c.b16 %v6081, %v6073
        %v7554 = vpack.c.b16 %v6082, %v6074
        %v7555 = vpack.c.b16 %v6083, %v6075
        %v7556 = vpack.c.b16 %v6084, %v6076
        %v7557 = vpack.c.b16 %v6085, %v6077
        %v7558 = vpack.c.b16 %v6086, %v6078
        %v7559 = vpack.c.b16 %v6095, %v6087
        %v7560 = vpack.c.b16 %v6096, %v6088
        %v7561 = vpack.c.b16 %v6097, %v6089
        %v7562 = vpack.c.b16 %v6098, %v6090
        %v7563 = vpack.c.b16 %v6099, %v6091
        %v7564 = vpack.c.b16 %v6100, %v6092
        %v7565 = vpack.c.b16 %v6101, %v6093
        %v7566 = vpack.c.b16 %v6102, %v6094
        %v7567 = vpack.c.b16 %v6111, %v6103
        %v7568 = vpack.c.b16 %v6112, %v6104
        %v7569 = vpack.c.b16 %v6113, %v6105
        %v7570 = vpack.c.b16 %v6114, %v6106
        %v7571 = vpack.c.b16 %v6115, %v6107
        %v7572 = vpack.c.b16 %v6116, %v6108
        %v7573 = vpack.c.b16 %v6117, %v6109
        %v7574 = vpack.c.b16 %v6118, %v6110
        %v7575 = vpack.c.b16 %v6127, %v6119
        %v7576 = vpack.c.b16 %v6128, %v6120
        %v7577 = vpack.c.b16 %v6129, %v6121
        %v7578 = vpack.c.b16 %v6130, %v6122
        %v7579 = vpack.c.b16 %v6131, %v6123
        %v7580 = vpack.c.b16 %v6132, %v6124
        %v7581 = vpack.c.b16 %v6133, %v6125
        %v7582 = vpack.c.b16 %v6134, %v6126
        %v7583 = vpack.c.b16 %v6143, %v6135
        %v7584 = vpack.c.b16 %v6144, %v6136
        %v7585 = vpack.c.b16 %v6145, %v6137
        %v7586 = vpack.c.b16 %v6146, %v6138
        %v7587 = vpack.c.b16 %v6147, %v6139
        %v7588 = vpack.c.b16 %v6148, %v6140
        %v7589 = vpack.c.b16 %v6149, %v6141
        %v7590 = vpack.c.b16 %v6150, %v6142
        %v7591 = vpack.c.b16 %v6159, %v6151
        %v7592 = vpack.c.b16 %v6160, %v6152
        %v7593 = vpack.c.b16 %v6161, %v6153
        %v7594 = vpack.c.b16 %v6162, %v6154
        %v7595 = vpack.c.b16 %v6163, %v6155
        %v7596 = vpack.c.b16 %v6164, %v6156
        %v7597 = vpack.c.b16 %v6165, %v6157
        %v7598 = vpack.c.b16 %v6166, %v6158
        %v7599 = vpack.c.b16 %v6175, %v6167
        %v7600 = vpack.c.b16 %v6176, %v6168
        %v7601 = vpack.c.b16 %v6177, %v6169
        %v7602 = vpack.c.b16 %v6178, %v6170
        %v7603 = vpack.c.b16 %v6179, %v6171
        %v7604 = vpack.c.b16 %v6180, %v6172
        %v7605 = vpack.c.b16 %v6181, %v6173
        %v7606 = vpack.c.b16 %v6182, %v6174
        %v7607 = vpack.c.b16 %v6191, %v6183
        %v7608 = vpack.c.b16 %v6192, %v6184
        %v7609 = vpack.c.b16 %v6193, %v6185
        %v7610 = vpack.c.b16 %v6194, %v6186
        %v7611 = vpack.c.b16 %v6195, %v6187
        %v7612 = vpack.c.b16 %v6196, %v6188
        %v7613 = vpack.c.b16 %v6197, %v6189
        %v7614 = vpack.c.b16 %v6198, %v6190
        %v7615 = vpack.c.b16 %v6207, %v6199
        %v7616 = vpack.c.b16 %v6208, %v6200
        %v7617 = vpack.c.b16 %v6209, %v6201
        %v7618 = vpack.c.b16 %v6210, %v6202
        %v7619 = vpack.c.b16 %v6211, %v6203
        %v7620 = vpack.c.b16 %v6212, %v6204
        %v7621 = vpack.c.b16 %v6213, %v6205
        %v7622 = vpack.c.b16 %v6214, %v6206
        %v7623 = vpack.c.b16 %v6223, %v6215
        %v7624 = vpack.c.b16 %v6224, %v6216
        %v7625 = vpack.c.b16 %v6225, %v6217
        %v7626 = vpack.c.b16 %v6226, %v6218
        %v7627 = vpack.c.b16 %v6227, %v6219
        %v7628 = vpack.c.b16 %v6228, %v6220
        %v7629 = vpack.c.b16 %v6229, %v6221
        %v7630 = vpack.c.b16 %v6230, %v6222
        %v7631 = vpack.c.b16 %v6239, %v6231
        %v7632 = vpack.c.b16 %v6240, %v6232
        %v7633 = vpack.c.b16 %v6241, %v6233
        %v7634 = vpack.c.b16 %v6242, %v6234
        %v7635 = vpack.c.b16 %v6243, %v6235
        %v7636 = vpack.c.b16 %v6244, %v6236
        %v7637 = vpack.c.b16 %v6245, %v6237
        %v7638 = vpack.c.b16 %v6246, %v6238
        %v7639 = vpack.c.b16 %v6255, %v6247
        %v7640 = vpack.c.b16 %v6256, %v6248
        %v7641 = vpack.c.b16 %v6257, %v6249
        %v7642 = vpack.c.b16 %v6258, %v6250
        %v7643 = vpack.c.b16 %v6259, %v6251
        %v7644 = vpack.c.b16 %v6260, %v6252
        %v7645 = vpack.c.b16 %v6261, %v6253
        %v7646 = vpack.c.b16 %v6262, %v6254
        %v7647 = vpack.c.b16 %v6271, %v6263
        %v7648 = vpack.c.b16 %v6272, %v6264
        %v7649 = vpack.c.b16 %v6273, %v6265
        %v7650 = vpack.c.b16 %v6274, %v6266
        %v7651 = vpack.c.b16 %v6275, %v6267
        %v7652 = vpack.c.b16 %v6276, %v6268
        %v7653 = vpack.c.b16 %v6277, %v6269
        %v7654 = vpack.c.b16 %v6278, %v6270
        %v7655 = vpack.c.b16 %v6287, %v6279
        %v7656 = vpack.c.b16 %v6288, %v6280
        %v7657 = vpack.c.b16 %v6289, %v6281
        %v7658 = vpack.c.b16 %v6290, %v6282
        %v7659 = vpack.c.b16 %v6291, %v6283
        %v7660 = vpack.c.b16 %v6292, %v6284
        %v7661 = vpack.c.b16 %v6293, %v6285
        %v7662 = vpack.c.b16 %v6294, %v6286
        %v7663 = vpack.c.b16 %v6303, %v6295
        %v7664 = vpack.c.b16 %v6304, %v6296
        %v7665 = vpack.c.b16 %v6305, %v6297
        %v7666 = vpack.c.b16 %v6306, %v6298
        %v7667 = vpack.c.b16 %v6307, %v6299
        %v7668 = vpack.c.b16 %v6308, %v6300
        %v7669 = vpack.c.b16 %v6309, %v6301
        %v7670 = vpack.c.b16 %v6310, %v6302
        %v7671 = vpack.c.b16 %v6319, %v6311
        %v7672 = vpack.c.b16 %v6320, %v6312
        %v7673 = vpack.c.b16 %v6321, %v6313
        %v7674 = vpack.c.b16 %v6322, %v6314
        %v7675 = vpack.c.b16 %v6323, %v6315
        %v7676 = vpack.c.b16 %v6324, %v6316
        %v7677 = vpack.c.b16 %v6325, %v6317
        %v7678 = vpack.c.b16 %v6326, %v6318
        %v7679 = vpack.c.b16 %v6335, %v6327
        %v7680 = vpack.c.b16 %v6336, %v6328
        %v7681 = vpack.c.b16 %v6337, %v6329
        %v7682 = vpack.c.b16 %v6338, %v6330
        %v7683 = vpack.c.b16 %v6339, %v6331
        %v7684 = vpack.c.b16 %v6340, %v6332
        %v7685 = vpack.c.b16 %v6341, %v6333
        %v7686 = vpack.c.b16 %v6342, %v6334
        %v7687 = vpack.c.b16 %v6351, %v6343
        %v7688 = vpack.c.b16 %v6352, %v6344
        %v7689 = vpack.c.b16 %v6353, %v6345
        %v7690 = vpack.c.b16 %v6354, %v6346
        %v7691 = vpack.c.b16 %v6355, %v6347
        %v7692 = vpack.c.b16 %v6356, %v6348
        %v7693 = vpack.c.b16 %v6357, %v6349
        %v7694 = vpack.c.b16 %v6358, %v6350
        %v7695 = vpack.c.b16 %v6367, %v6359
        %v7696 = vpack.c.b16 %v6368, %v6360
        %v7697 = vpack.c.b16 %v6369, %v6361
        %v7698 = vpack.c.b16 %v6370, %v6362
        %v7699 = vpack.c.b16 %v6371, %v6363
        %v7700 = vpack.c.b16 %v6372, %v6364
        %v7701 = vpack.c.b16 %v6373, %v6365
        %v7702 = vpack.c.b16 %v6374, %v6366
        %v7703 = vpack.c.b16 %v6383, %v6375
        %v7704 = vpack.c.b16 %v6384, %v6376
        %v7705 = vpack.c.b16 %v6385, %v6377
        %v7706 = vpack.c.b16 %v6386, %v6378
        %v7707 = vpack.c.b16 %v6387, %v6379
        %v7708 = vpack.c.b16 %v6388, %v6380
        %v7709 = vpack.c.b16 %v6389, %v6381
        %v7710 = vpack.c.b16 %v6390, %v6382
        %v7711 = vpack.c.b16 %v6399, %v6391
        %v7712 = vpack.c.b16 %v6400, %v6392
        %v7713 = vpack.c.b16 %v6401, %v6393
        %v7714 = vpack.c.b16 %v6402, %v6394
        %v7715 = vpack.c.b16 %v6403, %v6395
        %v7716 = vpack.c.b16 %v6404, %v6396
        %v7717 = vpack.c.b16 %v6405, %v6397
        %v7718 = vpack.c.b16 %v6406, %v6398
        %v7719 = vpack.c.b16 %v6415, %v6407
        %v7720 = vpack.c.b16 %v6416, %v6408
        %v7721 = vpack.c.b16 %v6417, %v6409
        %v7722 = vpack.c.b16 %v6418, %v6410
        %v7723 = vpack.c.b16 %v6419, %v6411
        %v7724 = vpack.c.b16 %v6420, %v6412
        %v7725 = vpack.c.b16 %v6421, %v6413
        %v7726 = vpack.c.b16 %v6422, %v6414
        %v7727 = vpack.c.b16 %v6431, %v6423
        %v7728 = vpack.c.b16 %v6432, %v6424
        %v7729 = vpack.c.b16 %v6433, %v6425
        %v7730 = vpack.c.b16 %v6434, %v6426
        %v7731 = vpack.c.b16 %v6435, %v6427
        %v7732 = vpack.c.b16 %v6436, %v6428
        %v7733 = vpack.c.b16 %v6437, %v6429
        %v7734 = vpack.c.b16 %v6438, %v6430
        %v7735 = vpack.c.b16 %v6447, %v6439
        %v7736 = vpack.c.b16 %v6448, %v6440
        %v7737 = vpack.c.b16 %v6449, %v6441
        %v7738 = vpack.c.b16 %v6450, %v6442
        %v7739 = vpack.c.b16 %v6451, %v6443
        %v7740 = vpack.c.b16 %v6452, %v6444
        %v7741 = vpack.c.b16 %v6453, %v6445
        %v7742 = vpack.c.b16 %v6454, %v6446
        %v7743 = vpack.c.b16 %v6463, %v6455
        %v7744 = vpack.c.b16 %v6464, %v6456
        %v7745 = vpack.c.b16 %v6465, %v6457
        %v7746 = vpack.c.b16 %v6466, %v6458
        %v7747 = vpack.c.b16 %v6467, %v6459
        %v7748 = vpack.c.b16 %v6468, %v6460
        %v7749 = vpack.c.b16 %v6469, %v6461
        %v7750 = vpack.c.b16 %v6470, %v6462
        %v7751 = vpack.c.b16 %v6479, %v6471
        %v7752 = vpack.c.b16 %v6480, %v6472
        %v7753 = vpack.c.b16 %v6481, %v6473
        %v7754 = vpack.c.b16 %v6482, %v6474
        %v7755 = vpack.c.b16 %v6483, %v6475
        %v7756 = vpack.c.b16 %v6484, %v6476
        %v7757 = vpack.c.b16 %v6485, %v6477
        %v7758 = vpack.c.b16 %v6486, %v6478
        %v7759 = vpack.c.b16 %v6495, %v6487
        %v7760 = vpack.c.b16 %v6496, %v6488
        %v7761 = vpack.c.b16 %v6497, %v6489
        %v7762 = vpack.c.b16 %v6498, %v6490
        %v7763 = vpack.c.b16 %v6499, %v6491
        %v7764 = vpack.c.b16 %v6500, %v6492
        %v7765 = vpack.c.b16 %v6501, %v6493
        %v7766 = vpack.c.b16 %v6502, %v6494
        %v7767 = vpack.c.b16 %v6511, %v6503
        %v7768 = vpack.c.b16 %v6512, %v6504
        %v7769 = vpack.c.b16 %v6513, %v6505
        %v7770 = vpack.c.b16 %v6514, %v6506
        %v7771 = vpack.c.b16 %v6515, %v6507
        %v7772 = vpack.c.b16 %v6516, %v6508
        %v7773 = vpack.c.b16 %v6517, %v6509
        %v7774 = vpack.c.b16 %v6518, %v6510
        %v7775 = vpack.c.b16 %v6527, %v6519
        %v7776 = vpack.c.b16 %v6528, %v6520
        %v7777 = vpack.c.b16 %v6529, %v6521
        %v7778 = vpack.c.b16 %v6530, %v6522
        %v7779 = vpack.c.b16 %v6531, %v6523
        %v7780 = vpack.c.b16 %v6532, %v6524
        %v7781 = vpack.c.b16 %v6533, %v6525
        %v7782 = vpack.c.b16 %v6534, %v6526
        %v7783 = vpack.c.b16 %v6543, %v6535
        %v7784 = vpack.c.b16 %v6544, %v6536
        %v7785 = vpack.c.b16 %v6545, %v6537
        %v7786 = vpack.c.b16 %v6546, %v6538
        %v7787 = vpack.c.b16 %v6547, %v6539
        %v7788 = vpack.c.b16 %v6548, %v6540
        %v7789 = vpack.c.b16 %v6549, %v6541
        %v7790 = vpack.c.b16 %v6550, %v6542
        %v7791 = vpack.c.b16 %v6559, %v6551
        %v7792 = vpack.c.b16 %v6560, %v6552
        %v7793 = vpack.c.b16 %v6561, %v6553
        %v7794 = vpack.c.b16 %v6562, %v6554
        %v7795 = vpack.c.b16 %v6563, %v6555
        %v7796 = vpack.c.b16 %v6564, %v6556
        %v7797 = vpack.c.b16 %v6565, %v6557
        %v7798 = vpack.c.b16 %v6566, %v6558
        %v7799 = vpack.c.b16 %v6575, %v6567
        %v7800 = vpack.c.b16 %v6576, %v6568
        %v7801 = vpack.c.b16 %v6577, %v6569
        %v7802 = vpack.c.b16 %v6578, %v6570
        %v7803 = vpack.c.b16 %v6579, %v6571
        %v7804 = vpack.c.b16 %v6580, %v6572
        %v7805 = vpack.c.b16 %v6581, %v6573
        %v7806 = vpack.c.b16 %v6582, %v6574
        %v7807 = vpack.c.b16 %v6591, %v6583
        %v7808 = vpack.c.b16 %v6592, %v6584
        %v7809 = vpack.c.b16 %v6593, %v6585
        %v7810 = vpack.c.b16 %v6594, %v6586
        %v7811 = vpack.c.b16 %v6595, %v6587
        %v7812 = vpack.c.b16 %v6596, %v6588
        %v7813 = vpack.c.b16 %v6597, %v6589
        %v7814 = vpack.c.b16 %v6598, %v6590
        %v7815 = vpack.c.b16 %v6607, %v6599
        %v7816 = vpack.c.b16 %v6608, %v6600
        %v7817 = vpack.c.b16 %v6609, %v6601
        %v7818 = vpack.c.b16 %v6610, %v6602
        %v7819 = vpack.c.b16 %v6611, %v6603
        %v7820 = vpack.c.b16 %v6612, %v6604
        %v7821 = vpack.c.b16 %v6613, %v6605
        %v7822 = vpack.c.b16 %v6614, %v6606
        %v7823 = vpack.c.b16 %v6623, %v6615
        %v7824 = vpack.c.b16 %v6624, %v6616
        %v7825 = vpack.c.b16 %v6625, %v6617
        %v7826 = vpack.c.b16 %v6626, %v6618
        %v7827 = vpack.c.b16 %v6627, %v6619
        %v7828 = vpack.c.b16 %v6628, %v6620
        %v7829 = vpack.c.b16 %v6629, %v6621
        %v7830 = vpack.c.b16 %v6630, %v6622
        %v7831 = vpack.c.b16 %v6639, %v6631
        %v7832 = vpack.c.b16 %v6640, %v6632
        %v7833 = vpack.c.b16 %v6641, %v6633
        %v7834 = vpack.c.b16 %v6642, %v6634
        %v7835 = vpack.c.b16 %v6643, %v6635
        %v7836 = vpack.c.b16 %v6644, %v6636
        %v7837 = vpack.c.b16 %v6645, %v6637
        %v7838 = vpack.c.b16 %v6646, %v6638
        %v7839 = vpack.c.b16 %v6655, %v6647
        %v7840 = vpack.c.b16 %v6656, %v6648
        %v7841 = vpack.c.b16 %v6657, %v6649
        %v7842 = vpack.c.b16 %v6658, %v6650
        %v7843 = vpack.c.b16 %v6659, %v6651
        %v7844 = vpack.c.b16 %v6660, %v6652
        %v7845 = vpack.c.b16 %v6661, %v6653
        %v7846 = vpack.c.b16 %v6662, %v6654
        %v7847 = vpack.c.b16 %v6671, %v6663
        %v7848 = vpack.c.b16 %v6672, %v6664
        %v7849 = vpack.c.b16 %v6673, %v6665
        %v7850 = vpack.c.b16 %v6674, %v6666
        %v7851 = vpack.c.b16 %v6675, %v6667
        %v7852 = vpack.c.b16 %v6676, %v6668
        %v7853 = vpack.c.b16 %v6677, %v6669
        %v7854 = vpack.c.b16 %v6678, %v6670
        %v7855 = vpack.c.b16 %v6687, %v6679
        %v7856 = vpack.c.b16 %v6688, %v6680
        %v7857 = vpack.c.b16 %v6689, %v6681
        %v7858 = vpack.c.b16 %v6690, %v6682
        %v7859 = vpack.c.b16 %v6691, %v6683
        %v7860 = vpack.c.b16 %v6692, %v6684
        %v7861 = vpack.c.b16 %v6693, %v6685
        %v7862 = vpack.c.b16 %v6694, %v6686
        %v7863 = vpack.c.b16 %v6703, %v6695
        %v7864 = vpack.c.b16 %v6704, %v6696
        %v7865 = vpack.c.b16 %v6705, %v6697
        %v7866 = vpack.c.b16 %v6706, %v6698
        %v7867 = vpack.c.b16 %v6707, %v6699
        %v7868 = vpack.c.b16 %v6708, %v6700
        %v7869 = vpack.c.b16 %v6709, %v6701
        %v7870 = vpack.c.b16 %v6710, %v6702
        %v7871 = vpack.c.b16 %v6719, %v6711
        %v7872 = vpack.c.b16 %v6720, %v6712
        %v7873 = vpack.c.b16 %v6721, %v6713
        %v7874 = vpack.c.b16 %v6722, %v6714
        %v7875 = vpack.c.b16 %v6723, %v6715
        %v7876 = vpack.c.b16 %v6724, %v6716
        %v7877 = vpack.c.b16 %v6725, %v6717
        %v7878 = vpack.c.b16 %v6726, %v6718
        %v7879 = vpack.c.b16 %v6735, %v6727
        %v7880 = vpack.c.b16 %v6736, %v6728
        %v7881 = vpack.c.b16 %v6737, %v6729
        %v7882 = vpack.c.b16 %v6738, %v6730
        %v7883 = vpack.c.b16 %v6739, %v6731
        %v7884 = vpack.c.b16 %v6740, %v6732
        %v7885 = vpack.c.b16 %v6741, %v6733
        %v7886 = vpack.c.b16 %v6742, %v6734
        %v7887 = vpack.c.b16 %v6751, %v6743
        %v7888 = vpack.c.b16 %v6752, %v6744
        %v7889 = vpack.c.b16 %v6753, %v6745
        %v7890 = vpack.c.b16 %v6754, %v6746
        %v7891 = vpack.c.b16 %v6755, %v6747
        %v7892 = vpack.c.b16 %v6756, %v6748
        %v7893 = vpack.c.b16 %v6757, %v6749
        %v7894 = vpack.c.b16 %v6758, %v6750
        %v7895 = vpack.c.b16 %v6767, %v6759
        %v7896 = vpack.c.b16 %v6768, %v6760
        %v7897 = vpack.c.b16 %v6769, %v6761
        %v7898 = vpack.c.b16 %v6770, %v6762
        %v7899 = vpack.c.b16 %v6771, %v6763
        %v7900 = vpack.c.b16 %v6772, %v6764
        %v7901 = vpack.c.b16 %v6773, %v6765
        %v7902 = vpack.c.b16 %v6774, %v6766
        %v7903 = vpack.c.b16 %v6783, %v6775
        %v7904 = vpack.c.b16 %v6784, %v6776
        %v7905 = vpack.c.b16 %v6785, %v6777
        %v7906 = vpack.c.b16 %v6786, %v6778
        %v7907 = vpack.c.b16 %v6787, %v6779
        %v7908 = vpack.c.b16 %v6788, %v6780
        %v7909 = vpack.c.b16 %v6789, %v6781
        %v7910 = vpack.c.b16 %v6790, %v6782
        %v7911 = vpack.c.b16 %v6799, %v6791
        %v7912 = vpack.c.b16 %v6800, %v6792
        %v7913 = vpack.c.b16 %v6801, %v6793
        %v7914 = vpack.c.b16 %v6802, %v6794
        %v7915 = vpack.c.b16 %v6803, %v6795
        %v7916 = vpack.c.b16 %v6804, %v6796
        %v7917 = vpack.c.b16 %v6805, %v6797
        %v7918 = vpack.c.b16 %v6806, %v6798
        %v7919 = vpack.c.b16 %v6815, %v6807
        %v7920 = vpack.c.b16 %v6816, %v6808
        %v7921 = vpack.c.b16 %v6817, %v6809
        %v7922 = vpack.c.b16 %v6818, %v6810
        %v7923 = vpack.c.b16 %v6819, %v6811
        %v7924 = vpack.c.b16 %v6820, %v6812
        %v7925 = vpack.c.b16 %v6821, %v6813
        %v7926 = vpack.c.b16 %v6822, %v6814
        %v7927 = vpack.c.b16 %v6831, %v6823
        %v7928 = vpack.c.b16 %v6832, %v6824
        %v7929 = vpack.c.b16 %v6833, %v6825
        %v7930 = vpack.c.b16 %v6834, %v6826
        %v7931 = vpack.c.b16 %v6835, %v6827
        %v7932 = vpack.c.b16 %v6836, %v6828
        %v7933 = vpack.c.b16 %v6837, %v6829
        %v7934 = vpack.c.b16 %v6838, %v6830
        %v7935 = vpack.c.b16 %v6847, %v6839
        %v7936 = vpack.c.b16 %v6848, %v6840
        %v7937 = vpack.c.b16 %v6849, %v6841
        %v7938 = vpack.c.b16 %v6850, %v6842
        %v7939 = vpack.c.b16 %v6851, %v6843
        %v7940 = vpack.c.b16 %v6852, %v6844
        %v7941 = vpack.c.b16 %v6853, %v6845
        %v7942 = vpack.c.b16 %v6854, %v6846
        %v7943 = vpack.c.b16 %v6863, %v6855
        %v7944 = vpack.c.b16 %v6864, %v6856
        %v7945 = vpack.c.b16 %v6865, %v6857
        %v7946 = vpack.c.b16 %v6866, %v6858
        %v7947 = vpack.c.b16 %v6867, %v6859
        %v7948 = vpack.c.b16 %v6868, %v6860
        %v7949 = vpack.c.b16 %v6869, %v6861
        %v7950 = vpack.c.b16 %v6870, %v6862
        %v7951 = vpack.c.b16 %v6879, %v6871
        %v7952 = vpack.c.b16 %v6880, %v6872
        %v7953 = vpack.c.b16 %v6881, %v6873
        %v7954 = vpack.c.b16 %v6882, %v6874
        %v7955 = vpack.c.b16 %v6883, %v6875
        %v7956 = vpack.c.b16 %v6884, %v6876
        %v7957 = vpack.c.b16 %v6885, %v6877
        %v7958 = vpack.c.b16 %v6886, %v6878
        %v7959 = vpack.c.b16 %v6895, %v6887
        %v7960 = vpack.c.b16 %v6896, %v6888
        %v7961 = vpack.c.b16 %v6897, %v6889
        %v7962 = vpack.c.b16 %v6898, %v6890
        %v7963 = vpack.c.b16 %v6899, %v6891
        %v7964 = vpack.c.b16 %v6900, %v6892
        %v7965 = vpack.c.b16 %v6901, %v6893
        %v7966 = vpack.c.b16 %v6902, %v6894
        %v7967 = vpack.c.b16 %v6911, %v6903
        %v7968 = vpack.c.b16 %v6912, %v6904
        %v7969 = vpack.c.b16 %v6913, %v6905
        %v7970 = vpack.c.b16 %v6914, %v6906
        %v7971 = vpack.c.b16 %v6915, %v6907
        %v7972 = vpack.c.b16 %v6916, %v6908
        %v7973 = vpack.c.b16 %v6917, %v6909
        %v7974 = vpack.c.b16 %v6918, %v6910
        %v7975 = vpack.c.b16 %v6927, %v6919
        %v7976 = vpack.c.b16 %v6928, %v6920
        %v7977 = vpack.c.b16 %v6929, %v6921
        %v7978 = vpack.c.b16 %v6930, %v6922
        %v7979 = vpack.c.b16 %v6931, %v6923
        %v7980 = vpack.c.b16 %v6932, %v6924
        %v7981 = vpack.c.b16 %v6933, %v6925
        %v7982 = vpack.c.b16 %v6934, %v6926
        %v7983 = vpack.c.b16 %v6943, %v6935
        %v7984 = vpack.c.b16 %v6944, %v6936
        %v7985 = vpack.c.b16 %v6945, %v6937
        %v7986 = vpack.c.b16 %v6946, %v6938
        %v7987 = vpack.c.b16 %v6947, %v6939
        %v7988 = vpack.c.b16 %v6948, %v6940
        %v7989 = vpack.c.b16 %v6949, %v6941
        %v7990 = vpack.c.b16 %v6950, %v6942
        %v7991 = vpack.c.b16 %v6959, %v6951
        %v7992 = vpack.c.b16 %v6960, %v6952
        %v7993 = vpack.c.b16 %v6961, %v6953
        %v7994 = vpack.c.b16 %v6962, %v6954
        %v7995 = vpack.c.b16 %v6963, %v6955
        %v7996 = vpack.c.b16 %v6964, %v6956
        %v7997 = vpack.c.b16 %v6965, %v6957
        %v7998 = vpack.c.b16 %v6966, %v6958
        %v7999 = vpack.c.b16 %v6975, %v6967
        %v8000 = vpack.c.b16 %v6976, %v6968
        %v8001 = vpack.c.b16 %v6977, %v6969
        %v8002 = vpack.c.b16 %v6978, %v6970
        %v8003 = vpack.c.b16 %v6979, %v6971
        %v8004 = vpack.c.b16 %v6980, %v6972
        %v8005 = vpack.c.b16 %v6981, %v6973
        %v8006 = vpack.c.b16 %v6982, %v6974
        %9031 = vmatpush.bf16.msra.mxu0 %v7039
        %9032 = vmatpush.bf16.msra.mxu0 %v7031
        %9033 = vmatpush.bf16.msra.mxu0 %v7023
        %9034 = vmatpush.bf16.msra.mxu0 %v7015
        %9035 = vmatpush.bf16.msra.mxu0 %v7007
        %9036 = vmatpush.bf16.msra.mxu0 %v6999
        %9037 = vmatpush.bf16.msra.mxu0 %v6991
        %9038 = vmatpush.bf16.msra.mxu0 %v6983
        %9039 = vmatmul.bf16.gmra.mxu0 %v3879
        %v9040 = vpop.f32.mrf.mxu0
        %v9041 = vadd.f32 %v3761, %v9040
        %v9042 = vpop.f32.mrf.mxu0
        %9043 = vdwg.mxu0
        %9044 = vmatpush.bf16.msra.mxu0 %v7103
        %9045 = vmatpush.bf16.msra.mxu0 %v7095
        %9046 = vmatpush.bf16.msra.mxu0 %v7087
        %9047 = vmatpush.bf16.msra.mxu0 %v7079
        %9048 = vmatpush.bf16.msra.mxu0 %v7071
        %9049 = vmatpush.bf16.msra.mxu0 %v7063
        %9050 = vmatpush.bf16.msra.mxu0 %v7055
        %9051 = vmatpush.bf16.msra.mxu0 %v7047
        %9052 = vmatmul.bf16.gmra.mxu0 %v3880
        %v9053 = vpop.f32.mrf.mxu0
        %v9054 = vadd.f32 %v9041, %v9053
        %v9055 = vpop.f32.mrf.mxu0
        %9056 = vdwg.mxu0
        %9057 = vmatpush.bf16.msra.mxu0 %v7167
        %9058 = vmatpush.bf16.msra.mxu0 %v7159
        %9059 = vmatpush.bf16.msra.mxu0 %v7151
        %9060 = vmatpush.bf16.msra.mxu0 %v7143
        %9061 = vmatpush.bf16.msra.mxu0 %v7135
        %9062 = vmatpush.bf16.msra.mxu0 %v7127
        %9063 = vmatpush.bf16.msra.mxu0 %v7119
        %9064 = vmatpush.bf16.msra.mxu0 %v7111
        %9065 = vmatmul.bf16.gmra.mxu0 %v3881
        %v9066 = vpop.f32.mrf.mxu0
        %v9067 = vadd.f32 %v9054, %v9066
        %v9068 = vpop.f32.mrf.mxu0
        %9069 = vdwg.mxu0
        %9070 = vmatpush.bf16.msra.mxu0 %v7231
        %9071 = vmatpush.bf16.msra.mxu0 %v7223
        %9072 = vmatpush.bf16.msra.mxu0 %v7215
        %9073 = vmatpush.bf16.msra.mxu0 %v7207
        %9074 = vmatpush.bf16.msra.mxu0 %v7199
        %9075 = vmatpush.bf16.msra.mxu0 %v7191
        %9076 = vmatpush.bf16.msra.mxu0 %v7183
        %9077 = vmatpush.bf16.msra.mxu0 %v7175
        %9078 = vmatmul.bf16.gmra.mxu0 %v3882
        %v9079 = vpop.f32.mrf.mxu0
        %v9080 = vadd.f32 %v9067, %v9079
        %v9081 = vpop.f32.mrf.mxu0
        %9082 = vdwg.mxu0
        %9083 = vmatpush.bf16.msra.mxu0 %v7295
        %9084 = vmatpush.bf16.msra.mxu0 %v7287
        %9085 = vmatpush.bf16.msra.mxu0 %v7279
        %9086 = vmatpush.bf16.msra.mxu0 %v7271
        %9087 = vmatpush.bf16.msra.mxu0 %v7263
        %9088 = vmatpush.bf16.msra.mxu0 %v7255
        %9089 = vmatpush.bf16.msra.mxu0 %v7247
        %9090 = vmatpush.bf16.msra.mxu0 %v7239
        %9091 = vmatmul.bf16.gmra.mxu0 %v3883
        %v9092 = vpop.f32.mrf.mxu0
        %v9093 = vadd.f32 %v9080, %v9092
        %v9094 = vpop.f32.mrf.mxu0
        %9095 = vdwg.mxu0
        %9096 = vmatpush.bf16.msra.mxu0 %v7359
        %9097 = vmatpush.bf16.msra.mxu0 %v7351
        %9098 = vmatpush.bf16.msra.mxu0 %v7343
        %9099 = vmatpush.bf16.msra.mxu0 %v7335
        %9100 = vmatpush.bf16.msra.mxu0 %v7327
        %9101 = vmatpush.bf16.msra.mxu0 %v7319
        %9102 = vmatpush.bf16.msra.mxu0 %v7311
        %9103 = vmatpush.bf16.msra.mxu0 %v7303
        %9104 = vmatmul.bf16.gmra.mxu0 %v3884
        %v9105 = vpop.f32.mrf.mxu0
        %v9106 = vadd.f32 %v9093, %v9105
        %v9107 = vpop.f32.mrf.mxu0
        %9108 = vdwg.mxu0
        %9109 = vmatpush.bf16.msra.mxu0 %v7423
        %9110 = vmatpush.bf16.msra.mxu0 %v7415
        %9111 = vmatpush.bf16.msra.mxu0 %v7407
        %9112 = vmatpush.bf16.msra.mxu0 %v7399
        %9113 = vmatpush.bf16.msra.mxu0 %v7391
        %9114 = vmatpush.bf16.msra.mxu0 %v7383
        %9115 = vmatpush.bf16.msra.mxu0 %v7375
        %9116 = vmatpush.bf16.msra.mxu0 %v7367
        %9117 = vmatmul.bf16.gmra.mxu0 %v3885
        %v9118 = vpop.f32.mrf.mxu0
        %v9119 = vadd.f32 %v9106, %v9118
        %v9120 = vpop.f32.mrf.mxu0
        %9121 = vdwg.mxu0
        %9122 = vmatpush.bf16.msra.mxu0 %v7487
        %9123 = vmatpush.bf16.msra.mxu0 %v7479
        %9124 = vmatpush.bf16.msra.mxu0 %v7471
        %9125 = vmatpush.bf16.msra.mxu0 %v7463
        %9126 = vmatpush.bf16.msra.mxu0 %v7455
        %9127 = vmatpush.bf16.msra.mxu0 %v7447
        %9128 = vmatpush.bf16.msra.mxu0 %v7439
        %9129 = vmatpush.bf16.msra.mxu0 %v7431
        %9130 = vmatmul.bf16.gmra.mxu0 %v3886
        %v9131 = vpop.f32.mrf.mxu0
        %v9132 = vadd.f32 %v9119, %v9131
        %v9133 = vpop.f32.mrf.mxu0
        %9134 = vdwg.mxu0
        %9135 = vmatpush.bf16.msra.mxu0 %v7551
        %9136 = vmatpush.bf16.msra.mxu0 %v7543
        %9137 = vmatpush.bf16.msra.mxu0 %v7535
        %9138 = vmatpush.bf16.msra.mxu0 %v7527
        %9139 = vmatpush.bf16.msra.mxu0 %v7519
        %9140 = vmatpush.bf16.msra.mxu0 %v7511
        %9141 = vmatpush.bf16.msra.mxu0 %v7503
        %9142 = vmatpush.bf16.msra.mxu0 %v7495
        %9143 = vmatmul.bf16.gmra.mxu0 %v3887
        %v9144 = vpop.f32.mrf.mxu0
        %v9145 = vadd.f32 %v9132, %v9144
        %v9146 = vpop.f32.mrf.mxu0
        %9147 = vdwg.mxu0
        %9148 = vmatpush.bf16.msra.mxu0 %v7615
        %9149 = vmatpush.bf16.msra.mxu0 %v7607
        %9150 = vmatpush.bf16.msra.mxu0 %v7599
        %9151 = vmatpush.bf16.msra.mxu0 %v7591
        %9152 = vmatpush.bf16.msra.mxu0 %v7583
        %9153 = vmatpush.bf16.msra.mxu0 %v7575
        %9154 = vmatpush.bf16.msra.mxu0 %v7567
        %9155 = vmatpush.bf16.msra.mxu0 %v7559
        %9156 = vmatmul.bf16.gmra.mxu0 %v3888
        %v9157 = vpop.f32.mrf.mxu0
        %v9158 = vadd.f32 %v9145, %v9157
        %v9159 = vpop.f32.mrf.mxu0
        %9160 = vdwg.mxu0
        %9161 = vmatpush.bf16.msra.mxu0 %v7679
        %9162 = vmatpush.bf16.msra.mxu0 %v7671
        %9163 = vmatpush.bf16.msra.mxu0 %v7663
        %9164 = vmatpush.bf16.msra.mxu0 %v7655
        %9165 = vmatpush.bf16.msra.mxu0 %v7647
        %9166 = vmatpush.bf16.msra.mxu0 %v7639
        %9167 = vmatpush.bf16.msra.mxu0 %v7631
        %9168 = vmatpush.bf16.msra.mxu0 %v7623
        %9169 = vmatmul.bf16.gmra.mxu0 %v3889
        %v9170 = vpop.f32.mrf.mxu0
        %v9171 = vadd.f32 %v9158, %v9170
        %v9172 = vpop.f32.mrf.mxu0
        %9173 = vdwg.mxu0
        %9174 = vmatpush.bf16.msra.mxu0 %v7743
        %9175 = vmatpush.bf16.msra.mxu0 %v7735
        %9176 = vmatpush.bf16.msra.mxu0 %v7727
        %9177 = vmatpush.bf16.msra.mxu0 %v7719
        %9178 = vmatpush.bf16.msra.mxu0 %v7711
        %9179 = vmatpush.bf16.msra.mxu0 %v7703
        %9180 = vmatpush.bf16.msra.mxu0 %v7695
        %9181 = vmatpush.bf16.msra.mxu0 %v7687
        %9182 = vmatmul.bf16.gmra.mxu0 %v3890
        %v9183 = vpop.f32.mrf.mxu0
        %v9184 = vadd.f32 %v9171, %v9183
        %v9185 = vpop.f32.mrf.mxu0
        %9186 = vdwg.mxu0
        %9187 = vmatpush.bf16.msra.mxu0 %v7807
        %9188 = vmatpush.bf16.msra.mxu0 %v7799
        %9189 = vmatpush.bf16.msra.mxu0 %v7791
        %9190 = vmatpush.bf16.msra.mxu0 %v7783
        %9191 = vmatpush.bf16.msra.mxu0 %v7775
        %9192 = vmatpush.bf16.msra.mxu0 %v7767
        %9193 = vmatpush.bf16.msra.mxu0 %v7759
        %9194 = vmatpush.bf16.msra.mxu0 %v7751
        %9195 = vmatmul.bf16.gmra.mxu0 %v3891
        %v9196 = vpop.f32.mrf.mxu0
        %v9197 = vadd.f32 %v9184, %v9196
        %v9198 = vpop.f32.mrf.mxu0
        %9199 = vdwg.mxu0
        %9200 = vmatpush.bf16.msra.mxu0 %v7871
        %9201 = vmatpush.bf16.msra.mxu0 %v7863
        %9202 = vmatpush.bf16.msra.mxu0 %v7855
        %9203 = vmatpush.bf16.msra.mxu0 %v7847
        %9204 = vmatpush.bf16.msra.mxu0 %v7839
        %9205 = vmatpush.bf16.msra.mxu0 %v7831
        %9206 = vmatpush.bf16.msra.mxu0 %v7823
        %9207 = vmatpush.bf16.msra.mxu0 %v7815
        %9208 = vmatmul.bf16.gmra.mxu0 %v3892
        %v9209 = vpop.f32.mrf.mxu0
        %v9210 = vadd.f32 %v9197, %v9209
        %v9211 = vpop.f32.mrf.mxu0
        %9212 = vdwg.mxu0
        %9213 = vmatpush.bf16.msra.mxu0 %v7935
        %9214 = vmatpush.bf16.msra.mxu0 %v7927
        %9215 = vmatpush.bf16.msra.mxu0 %v7919
        %9216 = vmatpush.bf16.msra.mxu0 %v7911
        %9217 = vmatpush.bf16.msra.mxu0 %v7903
        %9218 = vmatpush.bf16.msra.mxu0 %v7895
        %9219 = vmatpush.bf16.msra.mxu0 %v7887
        %9220 = vmatpush.bf16.msra.mxu0 %v7879
        %9221 = vmatmul.bf16.gmra.mxu0 %v3893
        %v9222 = vpop.f32.mrf.mxu0
        %v9223 = vadd.f32 %v9210, %v9222
        %v9224 = vpop.f32.mrf.mxu0
        %9225 = vdwg.mxu0
        %9226 = vmatpush.bf16.msra.mxu0 %v7999
        %9227 = vmatpush.bf16.msra.mxu0 %v7991
        %9228 = vmatpush.bf16.msra.mxu0 %v7983
        %9229 = vmatpush.bf16.msra.mxu0 %v7975
        %9230 = vmatpush.bf16.msra.mxu0 %v7967
        %9231 = vmatpush.bf16.msra.mxu0 %v7959
        %9232 = vmatpush.bf16.msra.mxu0 %v7951
        %9233 = vmatpush.bf16.msra.mxu0 %v7943
        %9234 = vmatmul.bf16.gmra.mxu0 %v3894
        %v9235 = vpop.f32.mrf.mxu0
        %v9236 = vadd.f32 %v9223, %v9235
        %v9237 = vpop.f32.mrf.mxu0
        %9238 = vdwg.mxu0
        %9239 = vmatpush.bf16.msra.mxu0 %v7040
        %9240 = vmatpush.bf16.msra.mxu0 %v7032
        %9241 = vmatpush.bf16.msra.mxu0 %v7024
        %9242 = vmatpush.bf16.msra.mxu0 %v7016
        %9243 = vmatpush.bf16.msra.mxu0 %v7008
        %9244 = vmatpush.bf16.msra.mxu0 %v7000
        %9245 = vmatpush.bf16.msra.mxu0 %v6992
        %9246 = vmatpush.bf16.msra.mxu0 %v6984
        %9247 = vmatmul.bf16.gmra.mxu0 %v3879
        %v9248 = vpop.f32.mrf.mxu0
        %v9249 = vadd.f32 %v3774, %v9248
        %v9250 = vpop.f32.mrf.mxu0
        %9251 = vdwg.mxu0
        %9252 = vmatpush.bf16.msra.mxu0 %v7104
        %9253 = vmatpush.bf16.msra.mxu0 %v7096
        %9254 = vmatpush.bf16.msra.mxu0 %v7088
        %9255 = vmatpush.bf16.msra.mxu0 %v7080
        %9256 = vmatpush.bf16.msra.mxu0 %v7072
        %9257 = vmatpush.bf16.msra.mxu0 %v7064
        %9258 = vmatpush.bf16.msra.mxu0 %v7056
        %9259 = vmatpush.bf16.msra.mxu0 %v7048
        %9260 = vmatmul.bf16.gmra.mxu0 %v3880
        %v9261 = vpop.f32.mrf.mxu0
        %v9262 = vadd.f32 %v9249, %v9261
        %v9263 = vpop.f32.mrf.mxu0
        %9264 = vdwg.mxu0
        %9265 = vmatpush.bf16.msra.mxu0 %v7168
        %9266 = vmatpush.bf16.msra.mxu0 %v7160
        %9267 = vmatpush.bf16.msra.mxu0 %v7152
        %9268 = vmatpush.bf16.msra.mxu0 %v7144
        %9269 = vmatpush.bf16.msra.mxu0 %v7136
        %9270 = vmatpush.bf16.msra.mxu0 %v7128
        %9271 = vmatpush.bf16.msra.mxu0 %v7120
        %9272 = vmatpush.bf16.msra.mxu0 %v7112
        %9273 = vmatmul.bf16.gmra.mxu0 %v3881
        %v9274 = vpop.f32.mrf.mxu0
        %v9275 = vadd.f32 %v9262, %v9274
        %v9276 = vpop.f32.mrf.mxu0
        %9277 = vdwg.mxu0
        %9278 = vmatpush.bf16.msra.mxu0 %v7232
        %9279 = vmatpush.bf16.msra.mxu0 %v7224
        %9280 = vmatpush.bf16.msra.mxu0 %v7216
        %9281 = vmatpush.bf16.msra.mxu0 %v7208
        %9282 = vmatpush.bf16.msra.mxu0 %v7200
        %9283 = vmatpush.bf16.msra.mxu0 %v7192
        %9284 = vmatpush.bf16.msra.mxu0 %v7184
        %9285 = vmatpush.bf16.msra.mxu0 %v7176
        %9286 = vmatmul.bf16.gmra.mxu0 %v3882
        %v9287 = vpop.f32.mrf.mxu0
        %v9288 = vadd.f32 %v9275, %v9287
        %v9289 = vpop.f32.mrf.mxu0
        %9290 = vdwg.mxu0
        %9291 = vmatpush.bf16.msra.mxu0 %v7296
        %9292 = vmatpush.bf16.msra.mxu0 %v7288
        %9293 = vmatpush.bf16.msra.mxu0 %v7280
        %9294 = vmatpush.bf16.msra.mxu0 %v7272
        %9295 = vmatpush.bf16.msra.mxu0 %v7264
        %9296 = vmatpush.bf16.msra.mxu0 %v7256
        %9297 = vmatpush.bf16.msra.mxu0 %v7248
        %9298 = vmatpush.bf16.msra.mxu0 %v7240
        %9299 = vmatmul.bf16.gmra.mxu0 %v3883
        %v9300 = vpop.f32.mrf.mxu0
        %v9301 = vadd.f32 %v9288, %v9300
        %v9302 = vpop.f32.mrf.mxu0
        %9303 = vdwg.mxu0
        %9304 = vmatpush.bf16.msra.mxu0 %v7360
        %9305 = vmatpush.bf16.msra.mxu0 %v7352
        %9306 = vmatpush.bf16.msra.mxu0 %v7344
        %9307 = vmatpush.bf16.msra.mxu0 %v7336
        %9308 = vmatpush.bf16.msra.mxu0 %v7328
        %9309 = vmatpush.bf16.msra.mxu0 %v7320
        %9310 = vmatpush.bf16.msra.mxu0 %v7312
        %9311 = vmatpush.bf16.msra.mxu0 %v7304
        %9312 = vmatmul.bf16.gmra.mxu0 %v3884
        %v9313 = vpop.f32.mrf.mxu0
        %v9314 = vadd.f32 %v9301, %v9313
        %v9315 = vpop.f32.mrf.mxu0
        %9316 = vdwg.mxu0
        %9317 = vmatpush.bf16.msra.mxu0 %v7424
        %9318 = vmatpush.bf16.msra.mxu0 %v7416
        %9319 = vmatpush.bf16.msra.mxu0 %v7408
        %9320 = vmatpush.bf16.msra.mxu0 %v7400
        %9321 = vmatpush.bf16.msra.mxu0 %v7392
        %9322 = vmatpush.bf16.msra.mxu0 %v7384
        %9323 = vmatpush.bf16.msra.mxu0 %v7376
        %9324 = vmatpush.bf16.msra.mxu0 %v7368
        %9325 = vmatmul.bf16.gmra.mxu0 %v3885
        %v9326 = vpop.f32.mrf.mxu0
        %v9327 = vadd.f32 %v9314, %v9326
        %v9328 = vpop.f32.mrf.mxu0
        %9329 = vdwg.mxu0
        %9330 = vmatpush.bf16.msra.mxu0 %v7488
        %9331 = vmatpush.bf16.msra.mxu0 %v7480
        %9332 = vmatpush.bf16.msra.mxu0 %v7472
        %9333 = vmatpush.bf16.msra.mxu0 %v7464
        %9334 = vmatpush.bf16.msra.mxu0 %v7456
        %9335 = vmatpush.bf16.msra.mxu0 %v7448
        %9336 = vmatpush.bf16.msra.mxu0 %v7440
        %9337 = vmatpush.bf16.msra.mxu0 %v7432
        %9338 = vmatmul.bf16.gmra.mxu0 %v3886
        %v9339 = vpop.f32.mrf.mxu0
        %v9340 = vadd.f32 %v9327, %v9339
        %v9341 = vpop.f32.mrf.mxu0
        %9342 = vdwg.mxu0
        %9343 = vmatpush.bf16.msra.mxu0 %v7552
        %9344 = vmatpush.bf16.msra.mxu0 %v7544
        %9345 = vmatpush.bf16.msra.mxu0 %v7536
        %9346 = vmatpush.bf16.msra.mxu0 %v7528
        %9347 = vmatpush.bf16.msra.mxu0 %v7520
        %9348 = vmatpush.bf16.msra.mxu0 %v7512
        %9349 = vmatpush.bf16.msra.mxu0 %v7504
        %9350 = vmatpush.bf16.msra.mxu0 %v7496
        %9351 = vmatmul.bf16.gmra.mxu0 %v3887
        %v9352 = vpop.f32.mrf.mxu0
        %v9353 = vadd.f32 %v9340, %v9352
        %v9354 = vpop.f32.mrf.mxu0
        %9355 = vdwg.mxu0
        %9356 = vmatpush.bf16.msra.mxu0 %v7616
        %9357 = vmatpush.bf16.msra.mxu0 %v7608
        %9358 = vmatpush.bf16.msra.mxu0 %v7600
        %9359 = vmatpush.bf16.msra.mxu0 %v7592
        %9360 = vmatpush.bf16.msra.mxu0 %v7584
        %9361 = vmatpush.bf16.msra.mxu0 %v7576
        %9362 = vmatpush.bf16.msra.mxu0 %v7568
        %9363 = vmatpush.bf16.msra.mxu0 %v7560
        %9364 = vmatmul.bf16.gmra.mxu0 %v3888
        %v9365 = vpop.f32.mrf.mxu0
        %v9366 = vadd.f32 %v9353, %v9365
        %v9367 = vpop.f32.mrf.mxu0
        %9368 = vdwg.mxu0
        %9369 = vmatpush.bf16.msra.mxu0 %v7680
        %9370 = vmatpush.bf16.msra.mxu0 %v7672
        %9371 = vmatpush.bf16.msra.mxu0 %v7664
        %9372 = vmatpush.bf16.msra.mxu0 %v7656
        %9373 = vmatpush.bf16.msra.mxu0 %v7648
        %9374 = vmatpush.bf16.msra.mxu0 %v7640
        %9375 = vmatpush.bf16.msra.mxu0 %v7632
        %9376 = vmatpush.bf16.msra.mxu0 %v7624
        %9377 = vmatmul.bf16.gmra.mxu0 %v3889
        %v9378 = vpop.f32.mrf.mxu0
        %v9379 = vadd.f32 %v9366, %v9378
        %v9380 = vpop.f32.mrf.mxu0
        %9381 = vdwg.mxu0
        %9382 = vmatpush.bf16.msra.mxu0 %v7744
        %9383 = vmatpush.bf16.msra.mxu0 %v7736
        %9384 = vmatpush.bf16.msra.mxu0 %v7728
        %9385 = vmatpush.bf16.msra.mxu0 %v7720
        %9386 = vmatpush.bf16.msra.mxu0 %v7712
        %9387 = vmatpush.bf16.msra.mxu0 %v7704
        %9388 = vmatpush.bf16.msra.mxu0 %v7696
        %9389 = vmatpush.bf16.msra.mxu0 %v7688
        %9390 = vmatmul.bf16.gmra.mxu0 %v3890
        %v9391 = vpop.f32.mrf.mxu0
        %v9392 = vadd.f32 %v9379, %v9391
        %v9393 = vpop.f32.mrf.mxu0
        %9394 = vdwg.mxu0
        %9395 = vmatpush.bf16.msra.mxu0 %v7808
        %9396 = vmatpush.bf16.msra.mxu0 %v7800
        %9397 = vmatpush.bf16.msra.mxu0 %v7792
        %9398 = vmatpush.bf16.msra.mxu0 %v7784
        %9399 = vmatpush.bf16.msra.mxu0 %v7776
        %9400 = vmatpush.bf16.msra.mxu0 %v7768
        %9401 = vmatpush.bf16.msra.mxu0 %v7760
        %9402 = vmatpush.bf16.msra.mxu0 %v7752
        %9403 = vmatmul.bf16.gmra.mxu0 %v3891
        %v9404 = vpop.f32.mrf.mxu0
        %v9405 = vadd.f32 %v9392, %v9404
        %v9406 = vpop.f32.mrf.mxu0
        %9407 = vdwg.mxu0
        %9408 = vmatpush.bf16.msra.mxu0 %v7872
        %9409 = vmatpush.bf16.msra.mxu0 %v7864
        %9410 = vmatpush.bf16.msra.mxu0 %v7856
        %9411 = vmatpush.bf16.msra.mxu0 %v7848
        %9412 = vmatpush.bf16.msra.mxu0 %v7840
        %9413 = vmatpush.bf16.msra.mxu0 %v7832
        %9414 = vmatpush.bf16.msra.mxu0 %v7824
        %9415 = vmatpush.bf16.msra.mxu0 %v7816
        %9416 = vmatmul.bf16.gmra.mxu0 %v3892
        %v9417 = vpop.f32.mrf.mxu0
        %v9418 = vadd.f32 %v9405, %v9417
        %v9419 = vpop.f32.mrf.mxu0
        %9420 = vdwg.mxu0
        %9421 = vmatpush.bf16.msra.mxu0 %v7936
        %9422 = vmatpush.bf16.msra.mxu0 %v7928
        %9423 = vmatpush.bf16.msra.mxu0 %v7920
        %9424 = vmatpush.bf16.msra.mxu0 %v7912
        %9425 = vmatpush.bf16.msra.mxu0 %v7904
        %9426 = vmatpush.bf16.msra.mxu0 %v7896
        %9427 = vmatpush.bf16.msra.mxu0 %v7888
        %9428 = vmatpush.bf16.msra.mxu0 %v7880
        %9429 = vmatmul.bf16.gmra.mxu0 %v3893
        %v9430 = vpop.f32.mrf.mxu0
        %v9431 = vadd.f32 %v9418, %v9430
        %v9432 = vpop.f32.mrf.mxu0
        %9433 = vdwg.mxu0
        %9434 = vmatpush.bf16.msra.mxu0 %v8000
        %9435 = vmatpush.bf16.msra.mxu0 %v7992
        %9436 = vmatpush.bf16.msra.mxu0 %v7984
        %9437 = vmatpush.bf16.msra.mxu0 %v7976
        %9438 = vmatpush.bf16.msra.mxu0 %v7968
        %9439 = vmatpush.bf16.msra.mxu0 %v7960
        %9440 = vmatpush.bf16.msra.mxu0 %v7952
        %9441 = vmatpush.bf16.msra.mxu0 %v7944
        %9442 = vmatmul.bf16.gmra.mxu0 %v3894
        %v9443 = vpop.f32.mrf.mxu0
        %v9444 = vadd.f32 %v9431, %v9443
        %v9445 = vpop.f32.mrf.mxu0
        %9446 = vdwg.mxu0
        %9447 = vmatpush.bf16.msra.mxu0 %v7041
        %9448 = vmatpush.bf16.msra.mxu0 %v7033
        %9449 = vmatpush.bf16.msra.mxu0 %v7025
        %9450 = vmatpush.bf16.msra.mxu0 %v7017
        %9451 = vmatpush.bf16.msra.mxu0 %v7009
        %9452 = vmatpush.bf16.msra.mxu0 %v7001
        %9453 = vmatpush.bf16.msra.mxu0 %v6993
        %9454 = vmatpush.bf16.msra.mxu0 %v6985
        %9455 = vmatmul.bf16.gmra.mxu0 %v3879
        %v9456 = vpop.f32.mrf.mxu0
        %v9457 = vadd.f32 %v3787, %v9456
        %v9458 = vpop.f32.mrf.mxu0
        %9459 = vdwg.mxu0
        %9460 = vmatpush.bf16.msra.mxu0 %v7105
        %9461 = vmatpush.bf16.msra.mxu0 %v7097
        %9462 = vmatpush.bf16.msra.mxu0 %v7089
        %9463 = vmatpush.bf16.msra.mxu0 %v7081
        %9464 = vmatpush.bf16.msra.mxu0 %v7073
        %9465 = vmatpush.bf16.msra.mxu0 %v7065
        %9466 = vmatpush.bf16.msra.mxu0 %v7057
        %9467 = vmatpush.bf16.msra.mxu0 %v7049
        %9468 = vmatmul.bf16.gmra.mxu0 %v3880
        %v9469 = vpop.f32.mrf.mxu0
        %v9470 = vadd.f32 %v9457, %v9469
        %v9471 = vpop.f32.mrf.mxu0
        %9472 = vdwg.mxu0
        %9473 = vmatpush.bf16.msra.mxu0 %v7169
        %9474 = vmatpush.bf16.msra.mxu0 %v7161
        %9475 = vmatpush.bf16.msra.mxu0 %v7153
        %9476 = vmatpush.bf16.msra.mxu0 %v7145
        %9477 = vmatpush.bf16.msra.mxu0 %v7137
        %9478 = vmatpush.bf16.msra.mxu0 %v7129
        %9479 = vmatpush.bf16.msra.mxu0 %v7121
        %9480 = vmatpush.bf16.msra.mxu0 %v7113
        %9481 = vmatmul.bf16.gmra.mxu0 %v3881
        %v9482 = vpop.f32.mrf.mxu0
        %v9483 = vadd.f32 %v9470, %v9482
        %v9484 = vpop.f32.mrf.mxu0
        %9485 = vdwg.mxu0
        %9486 = vmatpush.bf16.msra.mxu0 %v7233
        %9487 = vmatpush.bf16.msra.mxu0 %v7225
        %9488 = vmatpush.bf16.msra.mxu0 %v7217
        %9489 = vmatpush.bf16.msra.mxu0 %v7209
        %9490 = vmatpush.bf16.msra.mxu0 %v7201
        %9491 = vmatpush.bf16.msra.mxu0 %v7193
        %9492 = vmatpush.bf16.msra.mxu0 %v7185
        %9493 = vmatpush.bf16.msra.mxu0 %v7177
        %9494 = vmatmul.bf16.gmra.mxu0 %v3882
        %v9495 = vpop.f32.mrf.mxu0
        %v9496 = vadd.f32 %v9483, %v9495
        %v9497 = vpop.f32.mrf.mxu0
        %9498 = vdwg.mxu0
        %9499 = vmatpush.bf16.msra.mxu0 %v7297
        %9500 = vmatpush.bf16.msra.mxu0 %v7289
        %9501 = vmatpush.bf16.msra.mxu0 %v7281
        %9502 = vmatpush.bf16.msra.mxu0 %v7273
        %9503 = vmatpush.bf16.msra.mxu0 %v7265
        %9504 = vmatpush.bf16.msra.mxu0 %v7257
        %9505 = vmatpush.bf16.msra.mxu0 %v7249
        %9506 = vmatpush.bf16.msra.mxu0 %v7241
        %9507 = vmatmul.bf16.gmra.mxu0 %v3883
        %v9508 = vpop.f32.mrf.mxu0
        %v9509 = vadd.f32 %v9496, %v9508
        %v9510 = vpop.f32.mrf.mxu0
        %9511 = vdwg.mxu0
        %9512 = vmatpush.bf16.msra.mxu0 %v7361
        %9513 = vmatpush.bf16.msra.mxu0 %v7353
        %9514 = vmatpush.bf16.msra.mxu0 %v7345
        %9515 = vmatpush.bf16.msra.mxu0 %v7337
        %9516 = vmatpush.bf16.msra.mxu0 %v7329
        %9517 = vmatpush.bf16.msra.mxu0 %v7321
        %9518 = vmatpush.bf16.msra.mxu0 %v7313
        %9519 = vmatpush.bf16.msra.mxu0 %v7305
        %9520 = vmatmul.bf16.gmra.mxu0 %v3884
        %v9521 = vpop.f32.mrf.mxu0
        %v9522 = vadd.f32 %v9509, %v9521
        %v9523 = vpop.f32.mrf.mxu0
        %9524 = vdwg.mxu0
        %9525 = vmatpush.bf16.msra.mxu0 %v7425
        %9526 = vmatpush.bf16.msra.mxu0 %v7417
        %9527 = vmatpush.bf16.msra.mxu0 %v7409
        %9528 = vmatpush.bf16.msra.mxu0 %v7401
        %9529 = vmatpush.bf16.msra.mxu0 %v7393
        %9530 = vmatpush.bf16.msra.mxu0 %v7385
        %9531 = vmatpush.bf16.msra.mxu0 %v7377
        %9532 = vmatpush.bf16.msra.mxu0 %v7369
        %9533 = vmatmul.bf16.gmra.mxu0 %v3885
        %v9534 = vpop.f32.mrf.mxu0
        %v9535 = vadd.f32 %v9522, %v9534
        %v9536 = vpop.f32.mrf.mxu0
        %9537 = vdwg.mxu0
        %9538 = vmatpush.bf16.msra.mxu0 %v7489
        %9539 = vmatpush.bf16.msra.mxu0 %v7481
        %9540 = vmatpush.bf16.msra.mxu0 %v7473
        %9541 = vmatpush.bf16.msra.mxu0 %v7465
        %9542 = vmatpush.bf16.msra.mxu0 %v7457
        %9543 = vmatpush.bf16.msra.mxu0 %v7449
        %9544 = vmatpush.bf16.msra.mxu0 %v7441
        %9545 = vmatpush.bf16.msra.mxu0 %v7433
        %9546 = vmatmul.bf16.gmra.mxu0 %v3886
        %v9547 = vpop.f32.mrf.mxu0
        %v9548 = vadd.f32 %v9535, %v9547
        %v9549 = vpop.f32.mrf.mxu0
        %9550 = vdwg.mxu0
        %9551 = vmatpush.bf16.msra.mxu0 %v7553
        %9552 = vmatpush.bf16.msra.mxu0 %v7545
        %9553 = vmatpush.bf16.msra.mxu0 %v7537
        %9554 = vmatpush.bf16.msra.mxu0 %v7529
        %9555 = vmatpush.bf16.msra.mxu0 %v7521
        %9556 = vmatpush.bf16.msra.mxu0 %v7513
        %9557 = vmatpush.bf16.msra.mxu0 %v7505
        %9558 = vmatpush.bf16.msra.mxu0 %v7497
        %9559 = vmatmul.bf16.gmra.mxu0 %v3887
        %v9560 = vpop.f32.mrf.mxu0
        %v9561 = vadd.f32 %v9548, %v9560
        %v9562 = vpop.f32.mrf.mxu0
        %9563 = vdwg.mxu0
        %9564 = vmatpush.bf16.msra.mxu0 %v7617
        %9565 = vmatpush.bf16.msra.mxu0 %v7609
        %9566 = vmatpush.bf16.msra.mxu0 %v7601
        %9567 = vmatpush.bf16.msra.mxu0 %v7593
        %9568 = vmatpush.bf16.msra.mxu0 %v7585
        %9569 = vmatpush.bf16.msra.mxu0 %v7577
        %9570 = vmatpush.bf16.msra.mxu0 %v7569
        %9571 = vmatpush.bf16.msra.mxu0 %v7561
        %9572 = vmatmul.bf16.gmra.mxu0 %v3888
        %v9573 = vpop.f32.mrf.mxu0
        %v9574 = vadd.f32 %v9561, %v9573
        %v9575 = vpop.f32.mrf.mxu0
        %9576 = vdwg.mxu0
        %9577 = vmatpush.bf16.msra.mxu0 %v7681
        %9578 = vmatpush.bf16.msra.mxu0 %v7673
        %9579 = vmatpush.bf16.msra.mxu0 %v7665
        %9580 = vmatpush.bf16.msra.mxu0 %v7657
        %9581 = vmatpush.bf16.msra.mxu0 %v7649
        %9582 = vmatpush.bf16.msra.mxu0 %v7641
        %9583 = vmatpush.bf16.msra.mxu0 %v7633
        %9584 = vmatpush.bf16.msra.mxu0 %v7625
        %9585 = vmatmul.bf16.gmra.mxu0 %v3889
        %v9586 = vpop.f32.mrf.mxu0
        %v9587 = vadd.f32 %v9574, %v9586
        %v9588 = vpop.f32.mrf.mxu0
        %9589 = vdwg.mxu0
        %9590 = vmatpush.bf16.msra.mxu0 %v7745
        %9591 = vmatpush.bf16.msra.mxu0 %v7737
        %9592 = vmatpush.bf16.msra.mxu0 %v7729
        %9593 = vmatpush.bf16.msra.mxu0 %v7721
        %9594 = vmatpush.bf16.msra.mxu0 %v7713
        %9595 = vmatpush.bf16.msra.mxu0 %v7705
        %9596 = vmatpush.bf16.msra.mxu0 %v7697
        %9597 = vmatpush.bf16.msra.mxu0 %v7689
        %9598 = vmatmul.bf16.gmra.mxu0 %v3890
        %v9599 = vpop.f32.mrf.mxu0
        %v9600 = vadd.f32 %v9587, %v9599
        %v9601 = vpop.f32.mrf.mxu0
        %9602 = vdwg.mxu0
        %9603 = vmatpush.bf16.msra.mxu0 %v7809
        %9604 = vmatpush.bf16.msra.mxu0 %v7801
        %9605 = vmatpush.bf16.msra.mxu0 %v7793
        %9606 = vmatpush.bf16.msra.mxu0 %v7785
        %9607 = vmatpush.bf16.msra.mxu0 %v7777
        %9608 = vmatpush.bf16.msra.mxu0 %v7769
        %9609 = vmatpush.bf16.msra.mxu0 %v7761
        %9610 = vmatpush.bf16.msra.mxu0 %v7753
        %9611 = vmatmul.bf16.gmra.mxu0 %v3891
        %v9612 = vpop.f32.mrf.mxu0
        %v9613 = vadd.f32 %v9600, %v9612
        %v9614 = vpop.f32.mrf.mxu0
        %9615 = vdwg.mxu0
        %9616 = vmatpush.bf16.msra.mxu0 %v7873
        %9617 = vmatpush.bf16.msra.mxu0 %v7865
        %9618 = vmatpush.bf16.msra.mxu0 %v7857
        %9619 = vmatpush.bf16.msra.mxu0 %v7849
        %9620 = vmatpush.bf16.msra.mxu0 %v7841
        %9621 = vmatpush.bf16.msra.mxu0 %v7833
        %9622 = vmatpush.bf16.msra.mxu0 %v7825
        %9623 = vmatpush.bf16.msra.mxu0 %v7817
        %9624 = vmatmul.bf16.gmra.mxu0 %v3892
        %v9625 = vpop.f32.mrf.mxu0
        %v9626 = vadd.f32 %v9613, %v9625
        %v9627 = vpop.f32.mrf.mxu0
        %9628 = vdwg.mxu0
        %9629 = vmatpush.bf16.msra.mxu0 %v7937
        %9630 = vmatpush.bf16.msra.mxu0 %v7929
        %9631 = vmatpush.bf16.msra.mxu0 %v7921
        %9632 = vmatpush.bf16.msra.mxu0 %v7913
        %9633 = vmatpush.bf16.msra.mxu0 %v7905
        %9634 = vmatpush.bf16.msra.mxu0 %v7897
        %9635 = vmatpush.bf16.msra.mxu0 %v7889
        %9636 = vmatpush.bf16.msra.mxu0 %v7881
        %9637 = vmatmul.bf16.gmra.mxu0 %v3893
        %v9638 = vpop.f32.mrf.mxu0
        %v9639 = vadd.f32 %v9626, %v9638
        %v9640 = vpop.f32.mrf.mxu0
        %9641 = vdwg.mxu0
        %9642 = vmatpush.bf16.msra.mxu0 %v8001
        %9643 = vmatpush.bf16.msra.mxu0 %v7993
        %9644 = vmatpush.bf16.msra.mxu0 %v7985
        %9645 = vmatpush.bf16.msra.mxu0 %v7977
        %9646 = vmatpush.bf16.msra.mxu0 %v7969
        %9647 = vmatpush.bf16.msra.mxu0 %v7961
        %9648 = vmatpush.bf16.msra.mxu0 %v7953
        %9649 = vmatpush.bf16.msra.mxu0 %v7945
        %9650 = vmatmul.bf16.gmra.mxu0 %v3894
        %v9651 = vpop.f32.mrf.mxu0
        %v9652 = vadd.f32 %v9639, %v9651
        %v9653 = vpop.f32.mrf.mxu0
        %9654 = vdwg.mxu0
        %9655 = vmatpush.bf16.msra.mxu0 %v7042
        %9656 = vmatpush.bf16.msra.mxu0 %v7034
        %9657 = vmatpush.bf16.msra.mxu0 %v7026
        %9658 = vmatpush.bf16.msra.mxu0 %v7018
        %9659 = vmatpush.bf16.msra.mxu0 %v7010
        %9660 = vmatpush.bf16.msra.mxu0 %v7002
        %9661 = vmatpush.bf16.msra.mxu0 %v6994
        %9662 = vmatpush.bf16.msra.mxu0 %v6986
        %9663 = vmatmul.bf16.gmra.mxu0 %v3879
        %v9664 = vpop.f32.mrf.mxu0
        %v9665 = vadd.f32 %v3800, %v9664
        %v9666 = vpop.f32.mrf.mxu0
        %9667 = vdwg.mxu0
        %9668 = vmatpush.bf16.msra.mxu0 %v7106
        %9669 = vmatpush.bf16.msra.mxu0 %v7098
        %9670 = vmatpush.bf16.msra.mxu0 %v7090
        %9671 = vmatpush.bf16.msra.mxu0 %v7082
        %9672 = vmatpush.bf16.msra.mxu0 %v7074
        %9673 = vmatpush.bf16.msra.mxu0 %v7066
        %9674 = vmatpush.bf16.msra.mxu0 %v7058
        %9675 = vmatpush.bf16.msra.mxu0 %v7050
        %9676 = vmatmul.bf16.gmra.mxu0 %v3880
        %v9677 = vpop.f32.mrf.mxu0
        %v9678 = vadd.f32 %v9665, %v9677
        %v9679 = vpop.f32.mrf.mxu0
        %9680 = vdwg.mxu0
        %9681 = vmatpush.bf16.msra.mxu0 %v7170
        %9682 = vmatpush.bf16.msra.mxu0 %v7162
        %9683 = vmatpush.bf16.msra.mxu0 %v7154
        %9684 = vmatpush.bf16.msra.mxu0 %v7146
        %9685 = vmatpush.bf16.msra.mxu0 %v7138
        %9686 = vmatpush.bf16.msra.mxu0 %v7130
        %9687 = vmatpush.bf16.msra.mxu0 %v7122
        %9688 = vmatpush.bf16.msra.mxu0 %v7114
        %9689 = vmatmul.bf16.gmra.mxu0 %v3881
        %v9690 = vpop.f32.mrf.mxu0
        %v9691 = vadd.f32 %v9678, %v9690
        %v9692 = vpop.f32.mrf.mxu0
        %9693 = vdwg.mxu0
        %9694 = vmatpush.bf16.msra.mxu0 %v7234
        %9695 = vmatpush.bf16.msra.mxu0 %v7226
        %9696 = vmatpush.bf16.msra.mxu0 %v7218
        %9697 = vmatpush.bf16.msra.mxu0 %v7210
        %9698 = vmatpush.bf16.msra.mxu0 %v7202
        %9699 = vmatpush.bf16.msra.mxu0 %v7194
        %9700 = vmatpush.bf16.msra.mxu0 %v7186
        %9701 = vmatpush.bf16.msra.mxu0 %v7178
        %9702 = vmatmul.bf16.gmra.mxu0 %v3882
        %v9703 = vpop.f32.mrf.mxu0
        %v9704 = vadd.f32 %v9691, %v9703
        %v9705 = vpop.f32.mrf.mxu0
        %9706 = vdwg.mxu0
        %9707 = vmatpush.bf16.msra.mxu0 %v7298
        %9708 = vmatpush.bf16.msra.mxu0 %v7290
        %9709 = vmatpush.bf16.msra.mxu0 %v7282
        %9710 = vmatpush.bf16.msra.mxu0 %v7274
        %9711 = vmatpush.bf16.msra.mxu0 %v7266
        %9712 = vmatpush.bf16.msra.mxu0 %v7258
        %9713 = vmatpush.bf16.msra.mxu0 %v7250
        %9714 = vmatpush.bf16.msra.mxu0 %v7242
        %9715 = vmatmul.bf16.gmra.mxu0 %v3883
        %v9716 = vpop.f32.mrf.mxu0
        %v9717 = vadd.f32 %v9704, %v9716
        %v9718 = vpop.f32.mrf.mxu0
        %9719 = vdwg.mxu0
        %9720 = vmatpush.bf16.msra.mxu0 %v7362
        %9721 = vmatpush.bf16.msra.mxu0 %v7354
        %9722 = vmatpush.bf16.msra.mxu0 %v7346
        %9723 = vmatpush.bf16.msra.mxu0 %v7338
        %9724 = vmatpush.bf16.msra.mxu0 %v7330
        %9725 = vmatpush.bf16.msra.mxu0 %v7322
        %9726 = vmatpush.bf16.msra.mxu0 %v7314
        %9727 = vmatpush.bf16.msra.mxu0 %v7306
        %9728 = vmatmul.bf16.gmra.mxu0 %v3884
        %v9729 = vpop.f32.mrf.mxu0
        %v9730 = vadd.f32 %v9717, %v9729
        %v9731 = vpop.f32.mrf.mxu0
        %9732 = vdwg.mxu0
        %9733 = vmatpush.bf16.msra.mxu0 %v7426
        %9734 = vmatpush.bf16.msra.mxu0 %v7418
        %9735 = vmatpush.bf16.msra.mxu0 %v7410
        %9736 = vmatpush.bf16.msra.mxu0 %v7402
        %9737 = vmatpush.bf16.msra.mxu0 %v7394
        %9738 = vmatpush.bf16.msra.mxu0 %v7386
        %9739 = vmatpush.bf16.msra.mxu0 %v7378
        %9740 = vmatpush.bf16.msra.mxu0 %v7370
        %9741 = vmatmul.bf16.gmra.mxu0 %v3885
        %v9742 = vpop.f32.mrf.mxu0
        %v9743 = vadd.f32 %v9730, %v9742
        %v9744 = vpop.f32.mrf.mxu0
        %9745 = vdwg.mxu0
        %9746 = vmatpush.bf16.msra.mxu0 %v7490
        %9747 = vmatpush.bf16.msra.mxu0 %v7482
        %9748 = vmatpush.bf16.msra.mxu0 %v7474
        %9749 = vmatpush.bf16.msra.mxu0 %v7466
        %9750 = vmatpush.bf16.msra.mxu0 %v7458
        %9751 = vmatpush.bf16.msra.mxu0 %v7450
        %9752 = vmatpush.bf16.msra.mxu0 %v7442
        %9753 = vmatpush.bf16.msra.mxu0 %v7434
        %9754 = vmatmul.bf16.gmra.mxu0 %v3886
        %v9755 = vpop.f32.mrf.mxu0
        %v9756 = vadd.f32 %v9743, %v9755
        %v9757 = vpop.f32.mrf.mxu0
        %9758 = vdwg.mxu0
        %9759 = vmatpush.bf16.msra.mxu0 %v7554
        %9760 = vmatpush.bf16.msra.mxu0 %v7546
        %9761 = vmatpush.bf16.msra.mxu0 %v7538
        %9762 = vmatpush.bf16.msra.mxu0 %v7530
        %9763 = vmatpush.bf16.msra.mxu0 %v7522
        %9764 = vmatpush.bf16.msra.mxu0 %v7514
        %9765 = vmatpush.bf16.msra.mxu0 %v7506
        %9766 = vmatpush.bf16.msra.mxu0 %v7498
        %9767 = vmatmul.bf16.gmra.mxu0 %v3887
        %v9768 = vpop.f32.mrf.mxu0
        %v9769 = vadd.f32 %v9756, %v9768
        %v9770 = vpop.f32.mrf.mxu0
        %9771 = vdwg.mxu0
        %9772 = vmatpush.bf16.msra.mxu0 %v7618
        %9773 = vmatpush.bf16.msra.mxu0 %v7610
        %9774 = vmatpush.bf16.msra.mxu0 %v7602
        %9775 = vmatpush.bf16.msra.mxu0 %v7594
        %9776 = vmatpush.bf16.msra.mxu0 %v7586
        %9777 = vmatpush.bf16.msra.mxu0 %v7578
        %9778 = vmatpush.bf16.msra.mxu0 %v7570
        %9779 = vmatpush.bf16.msra.mxu0 %v7562
        %9780 = vmatmul.bf16.gmra.mxu0 %v3888
        %v9781 = vpop.f32.mrf.mxu0
        %v9782 = vadd.f32 %v9769, %v9781
        %v9783 = vpop.f32.mrf.mxu0
        %9784 = vdwg.mxu0
        %9785 = vmatpush.bf16.msra.mxu0 %v7682
        %9786 = vmatpush.bf16.msra.mxu0 %v7674
        %9787 = vmatpush.bf16.msra.mxu0 %v7666
        %9788 = vmatpush.bf16.msra.mxu0 %v7658
        %9789 = vmatpush.bf16.msra.mxu0 %v7650
        %9790 = vmatpush.bf16.msra.mxu0 %v7642
        %9791 = vmatpush.bf16.msra.mxu0 %v7634
        %9792 = vmatpush.bf16.msra.mxu0 %v7626
        %9793 = vmatmul.bf16.gmra.mxu0 %v3889
        %v9794 = vpop.f32.mrf.mxu0
        %v9795 = vadd.f32 %v9782, %v9794
        %v9796 = vpop.f32.mrf.mxu0
        %9797 = vdwg.mxu0
        %9798 = vmatpush.bf16.msra.mxu0 %v7746
        %9799 = vmatpush.bf16.msra.mxu0 %v7738
        %9800 = vmatpush.bf16.msra.mxu0 %v7730
        %9801 = vmatpush.bf16.msra.mxu0 %v7722
        %9802 = vmatpush.bf16.msra.mxu0 %v7714
        %9803 = vmatpush.bf16.msra.mxu0 %v7706
        %9804 = vmatpush.bf16.msra.mxu0 %v7698
        %9805 = vmatpush.bf16.msra.mxu0 %v7690
        %9806 = vmatmul.bf16.gmra.mxu0 %v3890
        %v9807 = vpop.f32.mrf.mxu0
        %v9808 = vadd.f32 %v9795, %v9807
        %v9809 = vpop.f32.mrf.mxu0
        %9810 = vdwg.mxu0
        %9811 = vmatpush.bf16.msra.mxu0 %v7810
        %9812 = vmatpush.bf16.msra.mxu0 %v7802
        %9813 = vmatpush.bf16.msra.mxu0 %v7794
        %9814 = vmatpush.bf16.msra.mxu0 %v7786
        %9815 = vmatpush.bf16.msra.mxu0 %v7778
        %9816 = vmatpush.bf16.msra.mxu0 %v7770
        %9817 = vmatpush.bf16.msra.mxu0 %v7762
        %9818 = vmatpush.bf16.msra.mxu0 %v7754
        %9819 = vmatmul.bf16.gmra.mxu0 %v3891
        %v9820 = vpop.f32.mrf.mxu0
        %v9821 = vadd.f32 %v9808, %v9820
        %v9822 = vpop.f32.mrf.mxu0
        %9823 = vdwg.mxu0
        %9824 = vmatpush.bf16.msra.mxu0 %v7874
        %9825 = vmatpush.bf16.msra.mxu0 %v7866
        %9826 = vmatpush.bf16.msra.mxu0 %v7858
        %9827 = vmatpush.bf16.msra.mxu0 %v7850
        %9828 = vmatpush.bf16.msra.mxu0 %v7842
        %9829 = vmatpush.bf16.msra.mxu0 %v7834
        %9830 = vmatpush.bf16.msra.mxu0 %v7826
        %9831 = vmatpush.bf16.msra.mxu0 %v7818
        %9832 = vmatmul.bf16.gmra.mxu0 %v3892
        %v9833 = vpop.f32.mrf.mxu0
        %v9834 = vadd.f32 %v9821, %v9833
        %v9835 = vpop.f32.mrf.mxu0
        %9836 = vdwg.mxu0
        %9837 = vmatpush.bf16.msra.mxu0 %v7938
        %9838 = vmatpush.bf16.msra.mxu0 %v7930
        %9839 = vmatpush.bf16.msra.mxu0 %v7922
        %9840 = vmatpush.bf16.msra.mxu0 %v7914
        %9841 = vmatpush.bf16.msra.mxu0 %v7906
        %9842 = vmatpush.bf16.msra.mxu0 %v7898
        %9843 = vmatpush.bf16.msra.mxu0 %v7890
        %9844 = vmatpush.bf16.msra.mxu0 %v7882
        %9845 = vmatmul.bf16.gmra.mxu0 %v3893
        %v9846 = vpop.f32.mrf.mxu0
        %v9847 = vadd.f32 %v9834, %v9846
        %v9848 = vpop.f32.mrf.mxu0
        %9849 = vdwg.mxu0
        %9850 = vmatpush.bf16.msra.mxu0 %v8002
        %9851 = vmatpush.bf16.msra.mxu0 %v7994
        %9852 = vmatpush.bf16.msra.mxu0 %v7986
        %9853 = vmatpush.bf16.msra.mxu0 %v7978
        %9854 = vmatpush.bf16.msra.mxu0 %v7970
        %9855 = vmatpush.bf16.msra.mxu0 %v7962
        %9856 = vmatpush.bf16.msra.mxu0 %v7954
        %9857 = vmatpush.bf16.msra.mxu0 %v7946
        %9858 = vmatmul.bf16.gmra.mxu0 %v3894
        %v9859 = vpop.f32.mrf.mxu0
        %v9860 = vadd.f32 %v9847, %v9859
        %v9861 = vpop.f32.mrf.mxu0
        %9862 = vdwg.mxu0
        %9863 = vmatpush.bf16.msra.mxu0 %v7043
        %9864 = vmatpush.bf16.msra.mxu0 %v7035
        %9865 = vmatpush.bf16.msra.mxu0 %v7027
        %9866 = vmatpush.bf16.msra.mxu0 %v7019
        %9867 = vmatpush.bf16.msra.mxu0 %v7011
        %9868 = vmatpush.bf16.msra.mxu0 %v7003
        %9869 = vmatpush.bf16.msra.mxu0 %v6995
        %9870 = vmatpush.bf16.msra.mxu0 %v6987
        %9871 = vmatmul.bf16.gmra.mxu0 %v3879
        %v9872 = vpop.f32.mrf.mxu0
        %v9873 = vadd.f32 %v3813, %v9872
        %v9874 = vpop.f32.mrf.mxu0
        %9875 = vdwg.mxu0
        %9876 = vmatpush.bf16.msra.mxu0 %v7107
        %9877 = vmatpush.bf16.msra.mxu0 %v7099
        %9878 = vmatpush.bf16.msra.mxu0 %v7091
        %9879 = vmatpush.bf16.msra.mxu0 %v7083
        %9880 = vmatpush.bf16.msra.mxu0 %v7075
        %9881 = vmatpush.bf16.msra.mxu0 %v7067
        %9882 = vmatpush.bf16.msra.mxu0 %v7059
        %9883 = vmatpush.bf16.msra.mxu0 %v7051
        %9884 = vmatmul.bf16.gmra.mxu0 %v3880
        %v9885 = vpop.f32.mrf.mxu0
        %v9886 = vadd.f32 %v9873, %v9885
        %v9887 = vpop.f32.mrf.mxu0
        %9888 = vdwg.mxu0
        %9889 = vmatpush.bf16.msra.mxu0 %v7171
        %9890 = vmatpush.bf16.msra.mxu0 %v7163
        %9891 = vmatpush.bf16.msra.mxu0 %v7155
        %9892 = vmatpush.bf16.msra.mxu0 %v7147
        %9893 = vmatpush.bf16.msra.mxu0 %v7139
        %9894 = vmatpush.bf16.msra.mxu0 %v7131
        %9895 = vmatpush.bf16.msra.mxu0 %v7123
        %9896 = vmatpush.bf16.msra.mxu0 %v7115
        %9897 = vmatmul.bf16.gmra.mxu0 %v3881
        %v9898 = vpop.f32.mrf.mxu0
        %v9899 = vadd.f32 %v9886, %v9898
        %v9900 = vpop.f32.mrf.mxu0
        %9901 = vdwg.mxu0
        %9902 = vmatpush.bf16.msra.mxu0 %v7235
        %9903 = vmatpush.bf16.msra.mxu0 %v7227
        %9904 = vmatpush.bf16.msra.mxu0 %v7219
        %9905 = vmatpush.bf16.msra.mxu0 %v7211
        %9906 = vmatpush.bf16.msra.mxu0 %v7203
        %9907 = vmatpush.bf16.msra.mxu0 %v7195
        %9908 = vmatpush.bf16.msra.mxu0 %v7187
        %9909 = vmatpush.bf16.msra.mxu0 %v7179
        %9910 = vmatmul.bf16.gmra.mxu0 %v3882
        %v9911 = vpop.f32.mrf.mxu0
        %v9912 = vadd.f32 %v9899, %v9911
        %v9913 = vpop.f32.mrf.mxu0
        %9914 = vdwg.mxu0
        %9915 = vmatpush.bf16.msra.mxu0 %v7299
        %9916 = vmatpush.bf16.msra.mxu0 %v7291
        %9917 = vmatpush.bf16.msra.mxu0 %v7283
        %9918 = vmatpush.bf16.msra.mxu0 %v7275
        %9919 = vmatpush.bf16.msra.mxu0 %v7267
        %9920 = vmatpush.bf16.msra.mxu0 %v7259
        %9921 = vmatpush.bf16.msra.mxu0 %v7251
        %9922 = vmatpush.bf16.msra.mxu0 %v7243
        %9923 = vmatmul.bf16.gmra.mxu0 %v3883
        %v9924 = vpop.f32.mrf.mxu0
        %v9925 = vadd.f32 %v9912, %v9924
        %v9926 = vpop.f32.mrf.mxu0
        %9927 = vdwg.mxu0
        %9928 = vmatpush.bf16.msra.mxu0 %v7363
        %9929 = vmatpush.bf16.msra.mxu0 %v7355
        %9930 = vmatpush.bf16.msra.mxu0 %v7347
        %9931 = vmatpush.bf16.msra.mxu0 %v7339
        %9932 = vmatpush.bf16.msra.mxu0 %v7331
        %9933 = vmatpush.bf16.msra.mxu0 %v7323
        %9934 = vmatpush.bf16.msra.mxu0 %v7315
        %9935 = vmatpush.bf16.msra.mxu0 %v7307
        %9936 = vmatmul.bf16.gmra.mxu0 %v3884
        %v9937 = vpop.f32.mrf.mxu0
        %v9938 = vadd.f32 %v9925, %v9937
        %v9939 = vpop.f32.mrf.mxu0
        %9940 = vdwg.mxu0
        %9941 = vmatpush.bf16.msra.mxu0 %v7427
        %9942 = vmatpush.bf16.msra.mxu0 %v7419
        %9943 = vmatpush.bf16.msra.mxu0 %v7411
        %9944 = vmatpush.bf16.msra.mxu0 %v7403
        %9945 = vmatpush.bf16.msra.mxu0 %v7395
        %9946 = vmatpush.bf16.msra.mxu0 %v7387
        %9947 = vmatpush.bf16.msra.mxu0 %v7379
        %9948 = vmatpush.bf16.msra.mxu0 %v7371
        %9949 = vmatmul.bf16.gmra.mxu0 %v3885
        %v9950 = vpop.f32.mrf.mxu0
        %v9951 = vadd.f32 %v9938, %v9950
        %v9952 = vpop.f32.mrf.mxu0
        %9953 = vdwg.mxu0
        %9954 = vmatpush.bf16.msra.mxu0 %v7491
        %9955 = vmatpush.bf16.msra.mxu0 %v7483
        %9956 = vmatpush.bf16.msra.mxu0 %v7475
        %9957 = vmatpush.bf16.msra.mxu0 %v7467
        %9958 = vmatpush.bf16.msra.mxu0 %v7459
        %9959 = vmatpush.bf16.msra.mxu0 %v7451
        %9960 = vmatpush.bf16.msra.mxu0 %v7443
        %9961 = vmatpush.bf16.msra.mxu0 %v7435
        %9962 = vmatmul.bf16.gmra.mxu0 %v3886
        %v9963 = vpop.f32.mrf.mxu0
        %v9964 = vadd.f32 %v9951, %v9963
        %v9965 = vpop.f32.mrf.mxu0
        %9966 = vdwg.mxu0
        %9967 = vmatpush.bf16.msra.mxu0 %v7555
        %9968 = vmatpush.bf16.msra.mxu0 %v7547
        %9969 = vmatpush.bf16.msra.mxu0 %v7539
        %9970 = vmatpush.bf16.msra.mxu0 %v7531
        %9971 = vmatpush.bf16.msra.mxu0 %v7523
        %9972 = vmatpush.bf16.msra.mxu0 %v7515
        %9973 = vmatpush.bf16.msra.mxu0 %v7507
        %9974 = vmatpush.bf16.msra.mxu0 %v7499
        %9975 = vmatmul.bf16.gmra.mxu0 %v3887
        %v9976 = vpop.f32.mrf.mxu0
        %v9977 = vadd.f32 %v9964, %v9976
        %v9978 = vpop.f32.mrf.mxu0
        %9979 = vdwg.mxu0
        %9980 = vmatpush.bf16.msra.mxu0 %v7619
        %9981 = vmatpush.bf16.msra.mxu0 %v7611
        %9982 = vmatpush.bf16.msra.mxu0 %v7603
        %9983 = vmatpush.bf16.msra.mxu0 %v7595
        %9984 = vmatpush.bf16.msra.mxu0 %v7587
        %9985 = vmatpush.bf16.msra.mxu0 %v7579
        %9986 = vmatpush.bf16.msra.mxu0 %v7571
        %9987 = vmatpush.bf16.msra.mxu0 %v7563
        %9988 = vmatmul.bf16.gmra.mxu0 %v3888
        %v9989 = vpop.f32.mrf.mxu0
        %v9990 = vadd.f32 %v9977, %v9989
        %v9991 = vpop.f32.mrf.mxu0
        %9992 = vdwg.mxu0
        %9993 = vmatpush.bf16.msra.mxu0 %v7683
        %9994 = vmatpush.bf16.msra.mxu0 %v7675
        %9995 = vmatpush.bf16.msra.mxu0 %v7667
        %9996 = vmatpush.bf16.msra.mxu0 %v7659
        %9997 = vmatpush.bf16.msra.mxu0 %v7651
        %9998 = vmatpush.bf16.msra.mxu0 %v7643
        %9999 = vmatpush.bf16.msra.mxu0 %v7635
        %10000 = vmatpush.bf16.msra.mxu0 %v7627
        %10001 = vmatmul.bf16.gmra.mxu0 %v3889
        %v10002 = vpop.f32.mrf.mxu0
        %v10003 = vadd.f32 %v9990, %v10002
        %v10004 = vpop.f32.mrf.mxu0
        %10005 = vdwg.mxu0
        %10006 = vmatpush.bf16.msra.mxu0 %v7747
        %10007 = vmatpush.bf16.msra.mxu0 %v7739
        %10008 = vmatpush.bf16.msra.mxu0 %v7731
        %10009 = vmatpush.bf16.msra.mxu0 %v7723
        %10010 = vmatpush.bf16.msra.mxu0 %v7715
        %10011 = vmatpush.bf16.msra.mxu0 %v7707
        %10012 = vmatpush.bf16.msra.mxu0 %v7699
        %10013 = vmatpush.bf16.msra.mxu0 %v7691
        %10014 = vmatmul.bf16.gmra.mxu0 %v3890
        %v10015 = vpop.f32.mrf.mxu0
        %v10016 = vadd.f32 %v10003, %v10015
        %v10017 = vpop.f32.mrf.mxu0
        %10018 = vdwg.mxu0
        %10019 = vmatpush.bf16.msra.mxu0 %v7811
        %10020 = vmatpush.bf16.msra.mxu0 %v7803
        %10021 = vmatpush.bf16.msra.mxu0 %v7795
        %10022 = vmatpush.bf16.msra.mxu0 %v7787
        %10023 = vmatpush.bf16.msra.mxu0 %v7779
        %10024 = vmatpush.bf16.msra.mxu0 %v7771
        %10025 = vmatpush.bf16.msra.mxu0 %v7763
        %10026 = vmatpush.bf16.msra.mxu0 %v7755
        %10027 = vmatmul.bf16.gmra.mxu0 %v3891
        %v10028 = vpop.f32.mrf.mxu0
        %v10029 = vadd.f32 %v10016, %v10028
        %v10030 = vpop.f32.mrf.mxu0
        %10031 = vdwg.mxu0
        %10032 = vmatpush.bf16.msra.mxu0 %v7875
        %10033 = vmatpush.bf16.msra.mxu0 %v7867
        %10034 = vmatpush.bf16.msra.mxu0 %v7859
        %10035 = vmatpush.bf16.msra.mxu0 %v7851
        %10036 = vmatpush.bf16.msra.mxu0 %v7843
        %10037 = vmatpush.bf16.msra.mxu0 %v7835
        %10038 = vmatpush.bf16.msra.mxu0 %v7827
        %10039 = vmatpush.bf16.msra.mxu0 %v7819
        %10040 = vmatmul.bf16.gmra.mxu0 %v3892
        %v10041 = vpop.f32.mrf.mxu0
        %v10042 = vadd.f32 %v10029, %v10041
        %v10043 = vpop.f32.mrf.mxu0
        %10044 = vdwg.mxu0
        %10045 = vmatpush.bf16.msra.mxu0 %v7939
        %10046 = vmatpush.bf16.msra.mxu0 %v7931
        %10047 = vmatpush.bf16.msra.mxu0 %v7923
        %10048 = vmatpush.bf16.msra.mxu0 %v7915
        %10049 = vmatpush.bf16.msra.mxu0 %v7907
        %10050 = vmatpush.bf16.msra.mxu0 %v7899
        %10051 = vmatpush.bf16.msra.mxu0 %v7891
        %10052 = vmatpush.bf16.msra.mxu0 %v7883
        %10053 = vmatmul.bf16.gmra.mxu0 %v3893
        %v10054 = vpop.f32.mrf.mxu0
        %v10055 = vadd.f32 %v10042, %v10054
        %v10056 = vpop.f32.mrf.mxu0
        %10057 = vdwg.mxu0
        %10058 = vmatpush.bf16.msra.mxu0 %v8003
        %10059 = vmatpush.bf16.msra.mxu0 %v7995
        %10060 = vmatpush.bf16.msra.mxu0 %v7987
        %10061 = vmatpush.bf16.msra.mxu0 %v7979
        %10062 = vmatpush.bf16.msra.mxu0 %v7971
        %10063 = vmatpush.bf16.msra.mxu0 %v7963
        %10064 = vmatpush.bf16.msra.mxu0 %v7955
        %10065 = vmatpush.bf16.msra.mxu0 %v7947
        %10066 = vmatmul.bf16.gmra.mxu0 %v3894
        %v10067 = vpop.f32.mrf.mxu0
        %v10068 = vadd.f32 %v10055, %v10067
        %v10069 = vpop.f32.mrf.mxu0
        %10070 = vdwg.mxu0
        %10071 = vmatpush.bf16.msra.mxu0 %v7044
        %10072 = vmatpush.bf16.msra.mxu0 %v7036
        %10073 = vmatpush.bf16.msra.mxu0 %v7028
        %10074 = vmatpush.bf16.msra.mxu0 %v7020
        %10075 = vmatpush.bf16.msra.mxu0 %v7012
        %10076 = vmatpush.bf16.msra.mxu0 %v7004
        %10077 = vmatpush.bf16.msra.mxu0 %v6996
        %10078 = vmatpush.bf16.msra.mxu0 %v6988
        %10079 = vmatmul.bf16.gmra.mxu0 %v3879
        %v10080 = vpop.f32.mrf.mxu0
        %v10081 = vadd.f32 %v3826, %v10080
        %v10082 = vpop.f32.mrf.mxu0
        %10083 = vdwg.mxu0
        %10084 = vmatpush.bf16.msra.mxu0 %v7108
        %10085 = vmatpush.bf16.msra.mxu0 %v7100
        %10086 = vmatpush.bf16.msra.mxu0 %v7092
        %10087 = vmatpush.bf16.msra.mxu0 %v7084
        %10088 = vmatpush.bf16.msra.mxu0 %v7076
        %10089 = vmatpush.bf16.msra.mxu0 %v7068
        %10090 = vmatpush.bf16.msra.mxu0 %v7060
        %10091 = vmatpush.bf16.msra.mxu0 %v7052
        %10092 = vmatmul.bf16.gmra.mxu0 %v3880
        %v10093 = vpop.f32.mrf.mxu0
        %v10094 = vadd.f32 %v10081, %v10093
        %v10095 = vpop.f32.mrf.mxu0
        %10096 = vdwg.mxu0
        %10097 = vmatpush.bf16.msra.mxu0 %v7172
        %10098 = vmatpush.bf16.msra.mxu0 %v7164
        %10099 = vmatpush.bf16.msra.mxu0 %v7156
        %10100 = vmatpush.bf16.msra.mxu0 %v7148
        %10101 = vmatpush.bf16.msra.mxu0 %v7140
        %10102 = vmatpush.bf16.msra.mxu0 %v7132
        %10103 = vmatpush.bf16.msra.mxu0 %v7124
        %10104 = vmatpush.bf16.msra.mxu0 %v7116
        %10105 = vmatmul.bf16.gmra.mxu0 %v3881
        %v10106 = vpop.f32.mrf.mxu0
        %v10107 = vadd.f32 %v10094, %v10106
        %v10108 = vpop.f32.mrf.mxu0
        %10109 = vdwg.mxu0
        %10110 = vmatpush.bf16.msra.mxu0 %v7236
        %10111 = vmatpush.bf16.msra.mxu0 %v7228
        %10112 = vmatpush.bf16.msra.mxu0 %v7220
        %10113 = vmatpush.bf16.msra.mxu0 %v7212
        %10114 = vmatpush.bf16.msra.mxu0 %v7204
        %10115 = vmatpush.bf16.msra.mxu0 %v7196
        %10116 = vmatpush.bf16.msra.mxu0 %v7188
        %10117 = vmatpush.bf16.msra.mxu0 %v7180
        %10118 = vmatmul.bf16.gmra.mxu0 %v3882
        %v10119 = vpop.f32.mrf.mxu0
        %v10120 = vadd.f32 %v10107, %v10119
        %v10121 = vpop.f32.mrf.mxu0
        %10122 = vdwg.mxu0
        %10123 = vmatpush.bf16.msra.mxu0 %v7300
        %10124 = vmatpush.bf16.msra.mxu0 %v7292
        %10125 = vmatpush.bf16.msra.mxu0 %v7284
        %10126 = vmatpush.bf16.msra.mxu0 %v7276
        %10127 = vmatpush.bf16.msra.mxu0 %v7268
        %10128 = vmatpush.bf16.msra.mxu0 %v7260
        %10129 = vmatpush.bf16.msra.mxu0 %v7252
        %10130 = vmatpush.bf16.msra.mxu0 %v7244
        %10131 = vmatmul.bf16.gmra.mxu0 %v3883
        %v10132 = vpop.f32.mrf.mxu0
        %v10133 = vadd.f32 %v10120, %v10132
        %v10134 = vpop.f32.mrf.mxu0
        %10135 = vdwg.mxu0
        %10136 = vmatpush.bf16.msra.mxu0 %v7364
        %10137 = vmatpush.bf16.msra.mxu0 %v7356
        %10138 = vmatpush.bf16.msra.mxu0 %v7348
        %10139 = vmatpush.bf16.msra.mxu0 %v7340
        %10140 = vmatpush.bf16.msra.mxu0 %v7332
        %10141 = vmatpush.bf16.msra.mxu0 %v7324
        %10142 = vmatpush.bf16.msra.mxu0 %v7316
        %10143 = vmatpush.bf16.msra.mxu0 %v7308
        %10144 = vmatmul.bf16.gmra.mxu0 %v3884
        %v10145 = vpop.f32.mrf.mxu0
        %v10146 = vadd.f32 %v10133, %v10145
        %v10147 = vpop.f32.mrf.mxu0
        %10148 = vdwg.mxu0
        %10149 = vmatpush.bf16.msra.mxu0 %v7428
        %10150 = vmatpush.bf16.msra.mxu0 %v7420
        %10151 = vmatpush.bf16.msra.mxu0 %v7412
        %10152 = vmatpush.bf16.msra.mxu0 %v7404
        %10153 = vmatpush.bf16.msra.mxu0 %v7396
        %10154 = vmatpush.bf16.msra.mxu0 %v7388
        %10155 = vmatpush.bf16.msra.mxu0 %v7380
        %10156 = vmatpush.bf16.msra.mxu0 %v7372
        %10157 = vmatmul.bf16.gmra.mxu0 %v3885
        %v10158 = vpop.f32.mrf.mxu0
        %v10159 = vadd.f32 %v10146, %v10158
        %v10160 = vpop.f32.mrf.mxu0
        %10161 = vdwg.mxu0
        %10162 = vmatpush.bf16.msra.mxu0 %v7492
        %10163 = vmatpush.bf16.msra.mxu0 %v7484
        %10164 = vmatpush.bf16.msra.mxu0 %v7476
        %10165 = vmatpush.bf16.msra.mxu0 %v7468
        %10166 = vmatpush.bf16.msra.mxu0 %v7460
        %10167 = vmatpush.bf16.msra.mxu0 %v7452
        %10168 = vmatpush.bf16.msra.mxu0 %v7444
        %10169 = vmatpush.bf16.msra.mxu0 %v7436
        %10170 = vmatmul.bf16.gmra.mxu0 %v3886
        %v10171 = vpop.f32.mrf.mxu0
        %v10172 = vadd.f32 %v10159, %v10171
        %v10173 = vpop.f32.mrf.mxu0
        %10174 = vdwg.mxu0
        %10175 = vmatpush.bf16.msra.mxu0 %v7556
        %10176 = vmatpush.bf16.msra.mxu0 %v7548
        %10177 = vmatpush.bf16.msra.mxu0 %v7540
        %10178 = vmatpush.bf16.msra.mxu0 %v7532
        %10179 = vmatpush.bf16.msra.mxu0 %v7524
        %10180 = vmatpush.bf16.msra.mxu0 %v7516
        %10181 = vmatpush.bf16.msra.mxu0 %v7508
        %10182 = vmatpush.bf16.msra.mxu0 %v7500
        %10183 = vmatmul.bf16.gmra.mxu0 %v3887
        %v10184 = vpop.f32.mrf.mxu0
        %v10185 = vadd.f32 %v10172, %v10184
        %v10186 = vpop.f32.mrf.mxu0
        %10187 = vdwg.mxu0
        %10188 = vmatpush.bf16.msra.mxu0 %v7620
        %10189 = vmatpush.bf16.msra.mxu0 %v7612
        %10190 = vmatpush.bf16.msra.mxu0 %v7604
        %10191 = vmatpush.bf16.msra.mxu0 %v7596
        %10192 = vmatpush.bf16.msra.mxu0 %v7588
        %10193 = vmatpush.bf16.msra.mxu0 %v7580
        %10194 = vmatpush.bf16.msra.mxu0 %v7572
        %10195 = vmatpush.bf16.msra.mxu0 %v7564
        %10196 = vmatmul.bf16.gmra.mxu0 %v3888
        %v10197 = vpop.f32.mrf.mxu0
        %v10198 = vadd.f32 %v10185, %v10197
        %v10199 = vpop.f32.mrf.mxu0
        %10200 = vdwg.mxu0
        %10201 = vmatpush.bf16.msra.mxu0 %v7684
        %10202 = vmatpush.bf16.msra.mxu0 %v7676
        %10203 = vmatpush.bf16.msra.mxu0 %v7668
        %10204 = vmatpush.bf16.msra.mxu0 %v7660
        %10205 = vmatpush.bf16.msra.mxu0 %v7652
        %10206 = vmatpush.bf16.msra.mxu0 %v7644
        %10207 = vmatpush.bf16.msra.mxu0 %v7636
        %10208 = vmatpush.bf16.msra.mxu0 %v7628
        %10209 = vmatmul.bf16.gmra.mxu0 %v3889
        %v10210 = vpop.f32.mrf.mxu0
        %v10211 = vadd.f32 %v10198, %v10210
        %v10212 = vpop.f32.mrf.mxu0
        %10213 = vdwg.mxu0
        %10214 = vmatpush.bf16.msra.mxu0 %v7748
        %10215 = vmatpush.bf16.msra.mxu0 %v7740
        %10216 = vmatpush.bf16.msra.mxu0 %v7732
        %10217 = vmatpush.bf16.msra.mxu0 %v7724
        %10218 = vmatpush.bf16.msra.mxu0 %v7716
        %10219 = vmatpush.bf16.msra.mxu0 %v7708
        %10220 = vmatpush.bf16.msra.mxu0 %v7700
        %10221 = vmatpush.bf16.msra.mxu0 %v7692
        %10222 = vmatmul.bf16.gmra.mxu0 %v3890
        %v10223 = vpop.f32.mrf.mxu0
        %v10224 = vadd.f32 %v10211, %v10223
        %v10225 = vpop.f32.mrf.mxu0
        %10226 = vdwg.mxu0
        %10227 = vmatpush.bf16.msra.mxu0 %v7812
        %10228 = vmatpush.bf16.msra.mxu0 %v7804
        %10229 = vmatpush.bf16.msra.mxu0 %v7796
        %10230 = vmatpush.bf16.msra.mxu0 %v7788
        %10231 = vmatpush.bf16.msra.mxu0 %v7780
        %10232 = vmatpush.bf16.msra.mxu0 %v7772
        %10233 = vmatpush.bf16.msra.mxu0 %v7764
        %10234 = vmatpush.bf16.msra.mxu0 %v7756
        %10235 = vmatmul.bf16.gmra.mxu0 %v3891
        %v10236 = vpop.f32.mrf.mxu0
        %v10237 = vadd.f32 %v10224, %v10236
        %v10238 = vpop.f32.mrf.mxu0
        %10239 = vdwg.mxu0
        %10240 = vmatpush.bf16.msra.mxu0 %v7876
        %10241 = vmatpush.bf16.msra.mxu0 %v7868
        %10242 = vmatpush.bf16.msra.mxu0 %v7860
        %10243 = vmatpush.bf16.msra.mxu0 %v7852
        %10244 = vmatpush.bf16.msra.mxu0 %v7844
        %10245 = vmatpush.bf16.msra.mxu0 %v7836
        %10246 = vmatpush.bf16.msra.mxu0 %v7828
        %10247 = vmatpush.bf16.msra.mxu0 %v7820
        %10248 = vmatmul.bf16.gmra.mxu0 %v3892
        %v10249 = vpop.f32.mrf.mxu0
        %v10250 = vadd.f32 %v10237, %v10249
        %v10251 = vpop.f32.mrf.mxu0
        %10252 = vdwg.mxu0
        %10253 = vmatpush.bf16.msra.mxu0 %v7940
        %10254 = vmatpush.bf16.msra.mxu0 %v7932
        %10255 = vmatpush.bf16.msra.mxu0 %v7924
        %10256 = vmatpush.bf16.msra.mxu0 %v7916
        %10257 = vmatpush.bf16.msra.mxu0 %v7908
        %10258 = vmatpush.bf16.msra.mxu0 %v7900
        %10259 = vmatpush.bf16.msra.mxu0 %v7892
        %10260 = vmatpush.bf16.msra.mxu0 %v7884
        %10261 = vmatmul.bf16.gmra.mxu0 %v3893
        %v10262 = vpop.f32.mrf.mxu0
        %v10263 = vadd.f32 %v10250, %v10262
        %v10264 = vpop.f32.mrf.mxu0
        %10265 = vdwg.mxu0
        %10266 = vmatpush.bf16.msra.mxu0 %v8004
        %10267 = vmatpush.bf16.msra.mxu0 %v7996
        %10268 = vmatpush.bf16.msra.mxu0 %v7988
        %10269 = vmatpush.bf16.msra.mxu0 %v7980
        %10270 = vmatpush.bf16.msra.mxu0 %v7972
        %10271 = vmatpush.bf16.msra.mxu0 %v7964
        %10272 = vmatpush.bf16.msra.mxu0 %v7956
        %10273 = vmatpush.bf16.msra.mxu0 %v7948
        %10274 = vmatmul.bf16.gmra.mxu0 %v3894
        %v10275 = vpop.f32.mrf.mxu0
        %v10276 = vadd.f32 %v10263, %v10275
        %v10277 = vpop.f32.mrf.mxu0
        %10278 = vdwg.mxu0
        %10279 = vmatpush.bf16.msra.mxu0 %v7045
        %10280 = vmatpush.bf16.msra.mxu0 %v7037
        %10281 = vmatpush.bf16.msra.mxu0 %v7029
        %10282 = vmatpush.bf16.msra.mxu0 %v7021
        %10283 = vmatpush.bf16.msra.mxu0 %v7013
        %10284 = vmatpush.bf16.msra.mxu0 %v7005
        %10285 = vmatpush.bf16.msra.mxu0 %v6997
        %10286 = vmatpush.bf16.msra.mxu0 %v6989
        %10287 = vmatmul.bf16.gmra.mxu0 %v3879
        %v10288 = vpop.f32.mrf.mxu0
        %v10289 = vadd.f32 %v3839, %v10288
        %v10290 = vpop.f32.mrf.mxu0
        %10291 = vdwg.mxu0
        %10292 = vmatpush.bf16.msra.mxu0 %v7109
        %10293 = vmatpush.bf16.msra.mxu0 %v7101
        %10294 = vmatpush.bf16.msra.mxu0 %v7093
        %10295 = vmatpush.bf16.msra.mxu0 %v7085
        %10296 = vmatpush.bf16.msra.mxu0 %v7077
        %10297 = vmatpush.bf16.msra.mxu0 %v7069
        %10298 = vmatpush.bf16.msra.mxu0 %v7061
        %10299 = vmatpush.bf16.msra.mxu0 %v7053
        %10300 = vmatmul.bf16.gmra.mxu0 %v3880
        %v10301 = vpop.f32.mrf.mxu0
        %v10302 = vadd.f32 %v10289, %v10301
        %v10303 = vpop.f32.mrf.mxu0
        %10304 = vdwg.mxu0
        %10305 = vmatpush.bf16.msra.mxu0 %v7173
        %10306 = vmatpush.bf16.msra.mxu0 %v7165
        %10307 = vmatpush.bf16.msra.mxu0 %v7157
        %10308 = vmatpush.bf16.msra.mxu0 %v7149
        %10309 = vmatpush.bf16.msra.mxu0 %v7141
        %10310 = vmatpush.bf16.msra.mxu0 %v7133
        %10311 = vmatpush.bf16.msra.mxu0 %v7125
        %10312 = vmatpush.bf16.msra.mxu0 %v7117
        %10313 = vmatmul.bf16.gmra.mxu0 %v3881
        %v10314 = vpop.f32.mrf.mxu0
        %v10315 = vadd.f32 %v10302, %v10314
        %v10316 = vpop.f32.mrf.mxu0
        %10317 = vdwg.mxu0
        %10318 = vmatpush.bf16.msra.mxu0 %v7237
        %10319 = vmatpush.bf16.msra.mxu0 %v7229
        %10320 = vmatpush.bf16.msra.mxu0 %v7221
        %10321 = vmatpush.bf16.msra.mxu0 %v7213
        %10322 = vmatpush.bf16.msra.mxu0 %v7205
        %10323 = vmatpush.bf16.msra.mxu0 %v7197
        %10324 = vmatpush.bf16.msra.mxu0 %v7189
        %10325 = vmatpush.bf16.msra.mxu0 %v7181
        %10326 = vmatmul.bf16.gmra.mxu0 %v3882
        %v10327 = vpop.f32.mrf.mxu0
        %v10328 = vadd.f32 %v10315, %v10327
        %v10329 = vpop.f32.mrf.mxu0
        %10330 = vdwg.mxu0
        %10331 = vmatpush.bf16.msra.mxu0 %v7301
        %10332 = vmatpush.bf16.msra.mxu0 %v7293
        %10333 = vmatpush.bf16.msra.mxu0 %v7285
        %10334 = vmatpush.bf16.msra.mxu0 %v7277
        %10335 = vmatpush.bf16.msra.mxu0 %v7269
        %10336 = vmatpush.bf16.msra.mxu0 %v7261
        %10337 = vmatpush.bf16.msra.mxu0 %v7253
        %10338 = vmatpush.bf16.msra.mxu0 %v7245
        %10339 = vmatmul.bf16.gmra.mxu0 %v3883
        %v10340 = vpop.f32.mrf.mxu0
        %v10341 = vadd.f32 %v10328, %v10340
        %v10342 = vpop.f32.mrf.mxu0
        %10343 = vdwg.mxu0
        %10344 = vmatpush.bf16.msra.mxu0 %v7365
        %10345 = vmatpush.bf16.msra.mxu0 %v7357
        %10346 = vmatpush.bf16.msra.mxu0 %v7349
        %10347 = vmatpush.bf16.msra.mxu0 %v7341
        %10348 = vmatpush.bf16.msra.mxu0 %v7333
        %10349 = vmatpush.bf16.msra.mxu0 %v7325
        %10350 = vmatpush.bf16.msra.mxu0 %v7317
        %10351 = vmatpush.bf16.msra.mxu0 %v7309
        %10352 = vmatmul.bf16.gmra.mxu0 %v3884
        %v10353 = vpop.f32.mrf.mxu0
        %v10354 = vadd.f32 %v10341, %v10353
        %v10355 = vpop.f32.mrf.mxu0
        %10356 = vdwg.mxu0
        %10357 = vmatpush.bf16.msra.mxu0 %v7429
        %10358 = vmatpush.bf16.msra.mxu0 %v7421
        %10359 = vmatpush.bf16.msra.mxu0 %v7413
        %10360 = vmatpush.bf16.msra.mxu0 %v7405
        %10361 = vmatpush.bf16.msra.mxu0 %v7397
        %10362 = vmatpush.bf16.msra.mxu0 %v7389
        %10363 = vmatpush.bf16.msra.mxu0 %v7381
        %10364 = vmatpush.bf16.msra.mxu0 %v7373
        %10365 = vmatmul.bf16.gmra.mxu0 %v3885
        %v10366 = vpop.f32.mrf.mxu0
        %v10367 = vadd.f32 %v10354, %v10366
        %v10368 = vpop.f32.mrf.mxu0
        %10369 = vdwg.mxu0
        %10370 = vmatpush.bf16.msra.mxu0 %v7493
        %10371 = vmatpush.bf16.msra.mxu0 %v7485
        %10372 = vmatpush.bf16.msra.mxu0 %v7477
        %10373 = vmatpush.bf16.msra.mxu0 %v7469
        %10374 = vmatpush.bf16.msra.mxu0 %v7461
        %10375 = vmatpush.bf16.msra.mxu0 %v7453
        %10376 = vmatpush.bf16.msra.mxu0 %v7445
        %10377 = vmatpush.bf16.msra.mxu0 %v7437
        %10378 = vmatmul.bf16.gmra.mxu0 %v3886
        %v10379 = vpop.f32.mrf.mxu0
        %v10380 = vadd.f32 %v10367, %v10379
        %v10381 = vpop.f32.mrf.mxu0
        %10382 = vdwg.mxu0
        %10383 = vmatpush.bf16.msra.mxu0 %v7557
        %10384 = vmatpush.bf16.msra.mxu0 %v7549
        %10385 = vmatpush.bf16.msra.mxu0 %v7541
        %10386 = vmatpush.bf16.msra.mxu0 %v7533
        %10387 = vmatpush.bf16.msra.mxu0 %v7525
        %10388 = vmatpush.bf16.msra.mxu0 %v7517
        %10389 = vmatpush.bf16.msra.mxu0 %v7509
        %10390 = vmatpush.bf16.msra.mxu0 %v7501
        %10391 = vmatmul.bf16.gmra.mxu0 %v3887
        %v10392 = vpop.f32.mrf.mxu0
        %v10393 = vadd.f32 %v10380, %v10392
        %v10394 = vpop.f32.mrf.mxu0
        %10395 = vdwg.mxu0
        %10396 = vmatpush.bf16.msra.mxu0 %v7621
        %10397 = vmatpush.bf16.msra.mxu0 %v7613
        %10398 = vmatpush.bf16.msra.mxu0 %v7605
        %10399 = vmatpush.bf16.msra.mxu0 %v7597
        %10400 = vmatpush.bf16.msra.mxu0 %v7589
        %10401 = vmatpush.bf16.msra.mxu0 %v7581
        %10402 = vmatpush.bf16.msra.mxu0 %v7573
        %10403 = vmatpush.bf16.msra.mxu0 %v7565
        %10404 = vmatmul.bf16.gmra.mxu0 %v3888
        %v10405 = vpop.f32.mrf.mxu0
        %v10406 = vadd.f32 %v10393, %v10405
        %v10407 = vpop.f32.mrf.mxu0
        %10408 = vdwg.mxu0
        %10409 = vmatpush.bf16.msra.mxu0 %v7685
        %10410 = vmatpush.bf16.msra.mxu0 %v7677
        %10411 = vmatpush.bf16.msra.mxu0 %v7669
        %10412 = vmatpush.bf16.msra.mxu0 %v7661
        %10413 = vmatpush.bf16.msra.mxu0 %v7653
        %10414 = vmatpush.bf16.msra.mxu0 %v7645
        %10415 = vmatpush.bf16.msra.mxu0 %v7637
        %10416 = vmatpush.bf16.msra.mxu0 %v7629
        %10417 = vmatmul.bf16.gmra.mxu0 %v3889
        %v10418 = vpop.f32.mrf.mxu0
        %v10419 = vadd.f32 %v10406, %v10418
        %v10420 = vpop.f32.mrf.mxu0
        %10421 = vdwg.mxu0
        %10422 = vmatpush.bf16.msra.mxu0 %v7749
        %10423 = vmatpush.bf16.msra.mxu0 %v7741
        %10424 = vmatpush.bf16.msra.mxu0 %v7733
        %10425 = vmatpush.bf16.msra.mxu0 %v7725
        %10426 = vmatpush.bf16.msra.mxu0 %v7717
        %10427 = vmatpush.bf16.msra.mxu0 %v7709
        %10428 = vmatpush.bf16.msra.mxu0 %v7701
        %10429 = vmatpush.bf16.msra.mxu0 %v7693
        %10430 = vmatmul.bf16.gmra.mxu0 %v3890
        %v10431 = vpop.f32.mrf.mxu0
        %v10432 = vadd.f32 %v10419, %v10431
        %v10433 = vpop.f32.mrf.mxu0
        %10434 = vdwg.mxu0
        %10435 = vmatpush.bf16.msra.mxu0 %v7813
        %10436 = vmatpush.bf16.msra.mxu0 %v7805
        %10437 = vmatpush.bf16.msra.mxu0 %v7797
        %10438 = vmatpush.bf16.msra.mxu0 %v7789
        %10439 = vmatpush.bf16.msra.mxu0 %v7781
        %10440 = vmatpush.bf16.msra.mxu0 %v7773
        %10441 = vmatpush.bf16.msra.mxu0 %v7765
        %10442 = vmatpush.bf16.msra.mxu0 %v7757
        %10443 = vmatmul.bf16.gmra.mxu0 %v3891
        %v10444 = vpop.f32.mrf.mxu0
        %v10445 = vadd.f32 %v10432, %v10444
        %v10446 = vpop.f32.mrf.mxu0
        %10447 = vdwg.mxu0
        %10448 = vmatpush.bf16.msra.mxu0 %v7877
        %10449 = vmatpush.bf16.msra.mxu0 %v7869
        %10450 = vmatpush.bf16.msra.mxu0 %v7861
        %10451 = vmatpush.bf16.msra.mxu0 %v7853
        %10452 = vmatpush.bf16.msra.mxu0 %v7845
        %10453 = vmatpush.bf16.msra.mxu0 %v7837
        %10454 = vmatpush.bf16.msra.mxu0 %v7829
        %10455 = vmatpush.bf16.msra.mxu0 %v7821
        %10456 = vmatmul.bf16.gmra.mxu0 %v3892
        %v10457 = vpop.f32.mrf.mxu0
        %v10458 = vadd.f32 %v10445, %v10457
        %v10459 = vpop.f32.mrf.mxu0
        %10460 = vdwg.mxu0
        %10461 = vmatpush.bf16.msra.mxu0 %v7941
        %10462 = vmatpush.bf16.msra.mxu0 %v7933
        %10463 = vmatpush.bf16.msra.mxu0 %v7925
        %10464 = vmatpush.bf16.msra.mxu0 %v7917
        %10465 = vmatpush.bf16.msra.mxu0 %v7909
        %10466 = vmatpush.bf16.msra.mxu0 %v7901
        %10467 = vmatpush.bf16.msra.mxu0 %v7893
        %10468 = vmatpush.bf16.msra.mxu0 %v7885
        %10469 = vmatmul.bf16.gmra.mxu0 %v3893
        %v10470 = vpop.f32.mrf.mxu0
        %v10471 = vadd.f32 %v10458, %v10470
        %v10472 = vpop.f32.mrf.mxu0
        %10473 = vdwg.mxu0
        %10474 = vmatpush.bf16.msra.mxu0 %v8005
        %10475 = vmatpush.bf16.msra.mxu0 %v7997
        %10476 = vmatpush.bf16.msra.mxu0 %v7989
        %10477 = vmatpush.bf16.msra.mxu0 %v7981
        %10478 = vmatpush.bf16.msra.mxu0 %v7973
        %10479 = vmatpush.bf16.msra.mxu0 %v7965
        %10480 = vmatpush.bf16.msra.mxu0 %v7957
        %10481 = vmatpush.bf16.msra.mxu0 %v7949
        %10482 = vmatmul.bf16.gmra.mxu0 %v3894
        %v10483 = vpop.f32.mrf.mxu0
        %v10484 = vadd.f32 %v10471, %v10483
        %v10485 = vpop.f32.mrf.mxu0
        %10486 = vdwg.mxu0
        %10487 = vmatpush.bf16.msra.mxu0 %v7046
        %10488 = vmatpush.bf16.msra.mxu0 %v7038
        %10489 = vmatpush.bf16.msra.mxu0 %v7030
        %10490 = vmatpush.bf16.msra.mxu0 %v7022
        %10491 = vmatpush.bf16.msra.mxu0 %v7014
        %10492 = vmatpush.bf16.msra.mxu0 %v7006
        %10493 = vmatpush.bf16.msra.mxu0 %v6998
        %10494 = vmatpush.bf16.msra.mxu0 %v6990
        %10495 = vmatmul.bf16.gmra.mxu0 %v3879
        %v10496 = vpop.f32.mrf.mxu0
        %v10497 = vadd.f32 %v3852, %v10496
        %v10498 = vpop.f32.mrf.mxu0
        %10499 = vdwg.mxu0
        %10500 = vmatpush.bf16.msra.mxu0 %v7110
        %10501 = vmatpush.bf16.msra.mxu0 %v7102
        %10502 = vmatpush.bf16.msra.mxu0 %v7094
        %10503 = vmatpush.bf16.msra.mxu0 %v7086
        %10504 = vmatpush.bf16.msra.mxu0 %v7078
        %10505 = vmatpush.bf16.msra.mxu0 %v7070
        %10506 = vmatpush.bf16.msra.mxu0 %v7062
        %10507 = vmatpush.bf16.msra.mxu0 %v7054
        %10508 = vmatmul.bf16.gmra.mxu0 %v3880
        %v10509 = vpop.f32.mrf.mxu0
        %v10510 = vadd.f32 %v10497, %v10509
        %v10511 = vpop.f32.mrf.mxu0
        %10512 = vdwg.mxu0
        %10513 = vmatpush.bf16.msra.mxu0 %v7174
        %10514 = vmatpush.bf16.msra.mxu0 %v7166
        %10515 = vmatpush.bf16.msra.mxu0 %v7158
        %10516 = vmatpush.bf16.msra.mxu0 %v7150
        %10517 = vmatpush.bf16.msra.mxu0 %v7142
        %10518 = vmatpush.bf16.msra.mxu0 %v7134
        %10519 = vmatpush.bf16.msra.mxu0 %v7126
        %10520 = vmatpush.bf16.msra.mxu0 %v7118
        %10521 = vmatmul.bf16.gmra.mxu0 %v3881
        %v10522 = vpop.f32.mrf.mxu0
        %v10523 = vadd.f32 %v10510, %v10522
        %v10524 = vpop.f32.mrf.mxu0
        %10525 = vdwg.mxu0
        %10526 = vmatpush.bf16.msra.mxu0 %v7238
        %10527 = vmatpush.bf16.msra.mxu0 %v7230
        %10528 = vmatpush.bf16.msra.mxu0 %v7222
        %10529 = vmatpush.bf16.msra.mxu0 %v7214
        %10530 = vmatpush.bf16.msra.mxu0 %v7206
        %10531 = vmatpush.bf16.msra.mxu0 %v7198
        %10532 = vmatpush.bf16.msra.mxu0 %v7190
        %10533 = vmatpush.bf16.msra.mxu0 %v7182
        %10534 = vmatmul.bf16.gmra.mxu0 %v3882
        %v10535 = vpop.f32.mrf.mxu0
        %v10536 = vadd.f32 %v10523, %v10535
        %v10537 = vpop.f32.mrf.mxu0
        %10538 = vdwg.mxu0
        %10539 = vmatpush.bf16.msra.mxu0 %v7302
        %10540 = vmatpush.bf16.msra.mxu0 %v7294
        %10541 = vmatpush.bf16.msra.mxu0 %v7286
        %10542 = vmatpush.bf16.msra.mxu0 %v7278
        %10543 = vmatpush.bf16.msra.mxu0 %v7270
        %10544 = vmatpush.bf16.msra.mxu0 %v7262
        %10545 = vmatpush.bf16.msra.mxu0 %v7254
        %10546 = vmatpush.bf16.msra.mxu0 %v7246
        %10547 = vmatmul.bf16.gmra.mxu0 %v3883
        %v10548 = vpop.f32.mrf.mxu0
        %v10549 = vadd.f32 %v10536, %v10548
        %v10550 = vpop.f32.mrf.mxu0
        %10551 = vdwg.mxu0
        %10552 = vmatpush.bf16.msra.mxu0 %v7366
        %10553 = vmatpush.bf16.msra.mxu0 %v7358
        %10554 = vmatpush.bf16.msra.mxu0 %v7350
        %10555 = vmatpush.bf16.msra.mxu0 %v7342
        %10556 = vmatpush.bf16.msra.mxu0 %v7334
        %10557 = vmatpush.bf16.msra.mxu0 %v7326
        %10558 = vmatpush.bf16.msra.mxu0 %v7318
        %10559 = vmatpush.bf16.msra.mxu0 %v7310
        %10560 = vmatmul.bf16.gmra.mxu0 %v3884
        %v10561 = vpop.f32.mrf.mxu0
        %v10562 = vadd.f32 %v10549, %v10561
        %v10563 = vpop.f32.mrf.mxu0
        %10564 = vdwg.mxu0
        %10565 = vmatpush.bf16.msra.mxu0 %v7430
        %10566 = vmatpush.bf16.msra.mxu0 %v7422
        %10567 = vmatpush.bf16.msra.mxu0 %v7414
        %10568 = vmatpush.bf16.msra.mxu0 %v7406
        %10569 = vmatpush.bf16.msra.mxu0 %v7398
        %10570 = vmatpush.bf16.msra.mxu0 %v7390
        %10571 = vmatpush.bf16.msra.mxu0 %v7382
        %10572 = vmatpush.bf16.msra.mxu0 %v7374
        %10573 = vmatmul.bf16.gmra.mxu0 %v3885
        %v10574 = vpop.f32.mrf.mxu0
        %v10575 = vadd.f32 %v10562, %v10574
        %v10576 = vpop.f32.mrf.mxu0
        %10577 = vdwg.mxu0
        %10578 = vmatpush.bf16.msra.mxu0 %v7494
        %10579 = vmatpush.bf16.msra.mxu0 %v7486
        %10580 = vmatpush.bf16.msra.mxu0 %v7478
        %10581 = vmatpush.bf16.msra.mxu0 %v7470
        %10582 = vmatpush.bf16.msra.mxu0 %v7462
        %10583 = vmatpush.bf16.msra.mxu0 %v7454
        %10584 = vmatpush.bf16.msra.mxu0 %v7446
        %10585 = vmatpush.bf16.msra.mxu0 %v7438
        %10586 = vmatmul.bf16.gmra.mxu0 %v3886
        %v10587 = vpop.f32.mrf.mxu0
        %v10588 = vadd.f32 %v10575, %v10587
        %v10589 = vpop.f32.mrf.mxu0
        %10590 = vdwg.mxu0
        %10591 = vmatpush.bf16.msra.mxu0 %v7558
        %10592 = vmatpush.bf16.msra.mxu0 %v7550
        %10593 = vmatpush.bf16.msra.mxu0 %v7542
        %10594 = vmatpush.bf16.msra.mxu0 %v7534
        %10595 = vmatpush.bf16.msra.mxu0 %v7526
        %10596 = vmatpush.bf16.msra.mxu0 %v7518
        %10597 = vmatpush.bf16.msra.mxu0 %v7510
        %10598 = vmatpush.bf16.msra.mxu0 %v7502
        %10599 = vmatmul.bf16.gmra.mxu0 %v3887
        %v10600 = vpop.f32.mrf.mxu0
        %v10601 = vadd.f32 %v10588, %v10600
        %v10602 = vpop.f32.mrf.mxu0
        %10603 = vdwg.mxu0
        %10604 = vmatpush.bf16.msra.mxu0 %v7622
        %10605 = vmatpush.bf16.msra.mxu0 %v7614
        %10606 = vmatpush.bf16.msra.mxu0 %v7606
        %10607 = vmatpush.bf16.msra.mxu0 %v7598
        %10608 = vmatpush.bf16.msra.mxu0 %v7590
        %10609 = vmatpush.bf16.msra.mxu0 %v7582
        %10610 = vmatpush.bf16.msra.mxu0 %v7574
        %10611 = vmatpush.bf16.msra.mxu0 %v7566
        %10612 = vmatmul.bf16.gmra.mxu0 %v3888
        %v10613 = vpop.f32.mrf.mxu0
        %v10614 = vadd.f32 %v10601, %v10613
        %v10615 = vpop.f32.mrf.mxu0
        %10616 = vdwg.mxu0
        %10617 = vmatpush.bf16.msra.mxu0 %v7686
        %10618 = vmatpush.bf16.msra.mxu0 %v7678
        %10619 = vmatpush.bf16.msra.mxu0 %v7670
        %10620 = vmatpush.bf16.msra.mxu0 %v7662
        %10621 = vmatpush.bf16.msra.mxu0 %v7654
        %10622 = vmatpush.bf16.msra.mxu0 %v7646
        %10623 = vmatpush.bf16.msra.mxu0 %v7638
        %10624 = vmatpush.bf16.msra.mxu0 %v7630
        %10625 = vmatmul.bf16.gmra.mxu0 %v3889
        %v10626 = vpop.f32.mrf.mxu0
        %v10627 = vadd.f32 %v10614, %v10626
        %v10628 = vpop.f32.mrf.mxu0
        %10629 = vdwg.mxu0
        %10630 = vmatpush.bf16.msra.mxu0 %v7750
        %10631 = vmatpush.bf16.msra.mxu0 %v7742
        %10632 = vmatpush.bf16.msra.mxu0 %v7734
        %10633 = vmatpush.bf16.msra.mxu0 %v7726
        %10634 = vmatpush.bf16.msra.mxu0 %v7718
        %10635 = vmatpush.bf16.msra.mxu0 %v7710
        %10636 = vmatpush.bf16.msra.mxu0 %v7702
        %10637 = vmatpush.bf16.msra.mxu0 %v7694
        %10638 = vmatmul.bf16.gmra.mxu0 %v3890
        %v10639 = vpop.f32.mrf.mxu0
        %v10640 = vadd.f32 %v10627, %v10639
        %v10641 = vpop.f32.mrf.mxu0
        %10642 = vdwg.mxu0
        %10643 = vmatpush.bf16.msra.mxu0 %v7814
        %10644 = vmatpush.bf16.msra.mxu0 %v7806
        %10645 = vmatpush.bf16.msra.mxu0 %v7798
        %10646 = vmatpush.bf16.msra.mxu0 %v7790
        %10647 = vmatpush.bf16.msra.mxu0 %v7782
        %10648 = vmatpush.bf16.msra.mxu0 %v7774
        %10649 = vmatpush.bf16.msra.mxu0 %v7766
        %10650 = vmatpush.bf16.msra.mxu0 %v7758
        %10651 = vmatmul.bf16.gmra.mxu0 %v3891
        %v10652 = vpop.f32.mrf.mxu0
        %v10653 = vadd.f32 %v10640, %v10652
        %v10654 = vpop.f32.mrf.mxu0
        %10655 = vdwg.mxu0
        %10656 = vmatpush.bf16.msra.mxu0 %v7878
        %10657 = vmatpush.bf16.msra.mxu0 %v7870
        %10658 = vmatpush.bf16.msra.mxu0 %v7862
        %10659 = vmatpush.bf16.msra.mxu0 %v7854
        %10660 = vmatpush.bf16.msra.mxu0 %v7846
        %10661 = vmatpush.bf16.msra.mxu0 %v7838
        %10662 = vmatpush.bf16.msra.mxu0 %v7830
        %10663 = vmatpush.bf16.msra.mxu0 %v7822
        %10664 = vmatmul.bf16.gmra.mxu0 %v3892
        %v10665 = vpop.f32.mrf.mxu0
        %v10666 = vadd.f32 %v10653, %v10665
        %v10667 = vpop.f32.mrf.mxu0
        %10668 = vdwg.mxu0
        %10669 = vmatpush.bf16.msra.mxu0 %v7942
        %10670 = vmatpush.bf16.msra.mxu0 %v7934
        %10671 = vmatpush.bf16.msra.mxu0 %v7926
        %10672 = vmatpush.bf16.msra.mxu0 %v7918
        %10673 = vmatpush.bf16.msra.mxu0 %v7910
        %10674 = vmatpush.bf16.msra.mxu0 %v7902
        %10675 = vmatpush.bf16.msra.mxu0 %v7894
        %10676 = vmatpush.bf16.msra.mxu0 %v7886
        %10677 = vmatmul.bf16.gmra.mxu0 %v3893
        %v10678 = vpop.f32.mrf.mxu0
        %v10679 = vadd.f32 %v10666, %v10678
        %v10680 = vpop.f32.mrf.mxu0
        %10681 = vdwg.mxu0
        %10682 = vmatpush.bf16.msra.mxu0 %v8006
        %10683 = vmatpush.bf16.msra.mxu0 %v7998
        %10684 = vmatpush.bf16.msra.mxu0 %v7990
        %10685 = vmatpush.bf16.msra.mxu0 %v7982
        %10686 = vmatpush.bf16.msra.mxu0 %v7974
        %10687 = vmatpush.bf16.msra.mxu0 %v7966
        %10688 = vmatpush.bf16.msra.mxu0 %v7958
        %10689 = vmatpush.bf16.msra.mxu0 %v7950
        %10690 = vmatmul.bf16.gmra.mxu0 %v3894
        %v10691 = vpop.f32.mrf.mxu0
        %v10692 = vadd.f32 %v10679, %v10691
        %v10693 = vpop.f32.mrf.mxu0
        %10694 = vdwg.mxu0
        %v10695 = vld [vmem:[%s449] sm:$0xff]
        %v10697 = vperm.slane %v10695, 0
        %v10698 = vperm.slane %v10695, 1
        %v10699 = vperm.slane %v10695, 2
        %v10700 = vperm.slane %v10695, 3
        %v10701 = vperm.slane %v10695, 4
        %v10702 = vperm.slane %v10695, 5
        %v10703 = vperm.slane %v10695, 6
        %v10704 = vperm.slane %v10695, 7
        %v10713 = vadd.f32 %v9236, %v10697
        %v10714 = vadd.f32 %v9444, %v10698
        %v10715 = vadd.f32 %v9652, %v10699
        %v10716 = vadd.f32 %v9860, %v10700
        %v10717 = vadd.f32 %v10068, %v10701
        %v10718 = vadd.f32 %v10276, %v10702
        %v10719 = vadd.f32 %v10484, %v10703
        %v10720 = vadd.f32 %v10692, %v10704
        %v10721 = vmax.f32 %v10713, 0.0
        %v10722 = vmax.f32 %v10714, 0.0
        %v10723 = vmax.f32 %v10715, 0.0
        %v10724 = vmax.f32 %v10716, 0.0
        %v10725 = vmax.f32 %v10717, 0.0
        %v10726 = vmax.f32 %v10718, 0.0
        %v10727 = vmax.f32 %v10719, 0.0
        %v10728 = vmax.f32 %v10720, 0.0
        %v10729 = vld [vmem:[#allocation3] sm:$0xff]
        %v10730 = vld [vmem:[#allocation3 + $0x8] sm:$0xff]
        %v10731 = vld [vmem:[#allocation3 + $0x10] sm:$0xff]
        %v10732 = vld [vmem:[#allocation3 + $0x18] sm:$0xff]
        %v10733 = vpack.c.bf16 %v10721, %v10721
        %v10734 = vpack.c.bf16 %v10722, %v10722
        %v10735 = vpack.c.bf16 %v10723, %v10723
        %v10736 = vpack.c.bf16 %v10724, %v10724
        %v10737 = vpack.c.bf16 %v10725, %v10725
        %v10738 = vpack.c.bf16 %v10726, %v10726
        %v10739 = vpack.c.bf16 %v10727, %v10727
        %v10740 = vpack.c.bf16 %v10728, %v10728
        %v10741 = vld [vmem:[%s459] sm:$0xff]
        %v10742 = vld [vmem:[%s459 + $0x8] sm:$0xff]
        %v10743 = vld [vmem:[%s459 + $0x10] sm:$0xff]
        %v10744 = vld [vmem:[%s459 + $0x18] sm:$0xff]
        %v10745 = vld [vmem:[%s459 + $0x20] sm:$0xff]
        %v10746 = vld [vmem:[%s459 + $0x28] sm:$0xff]
        %v10747 = vld [vmem:[%s459 + $0x30] sm:$0xff]
        %v10748 = vld [vmem:[%s459 + $0x38] sm:$0xff]
        %v10749 = vld [vmem:[%s459 + $0x40] sm:$0xff]
        %v10750 = vld [vmem:[%s459 + $0x48] sm:$0xff]
        %v10751 = vld [vmem:[%s459 + $0x50] sm:$0xff]
        %v10752 = vld [vmem:[%s459 + $0x58] sm:$0xff]
        %v10753 = vld [vmem:[%s459 + $0x60] sm:$0xff]
        %v10754 = vld [vmem:[%s459 + $0x68] sm:$0xff]
        %v10755 = vld [vmem:[%s459 + $0x70] sm:$0xff]
        %v10756 = vld [vmem:[%s459 + $0x78] sm:$0xff]
        %v10757 = vld [vmem:[%s459 + $0x80] sm:$0xff]
        %v10758 = vld [vmem:[%s459 + $0x88] sm:$0xff]
        %v10759 = vld [vmem:[%s459 + $0x90] sm:$0xff]
        %v10760 = vld [vmem:[%s459 + $0x98] sm:$0xff]
        %v10761 = vld [vmem:[%s459 + $0xa0] sm:$0xff]
        %v10762 = vld [vmem:[%s459 + $0xa8] sm:$0xff]
        %v10763 = vld [vmem:[%s459 + $0xb0] sm:$0xff]
        %v10764 = vld [vmem:[%s459 + $0xb8] sm:$0xff]
        %v10765 = vld [vmem:[%s459 + $0xc0] sm:$0xff]
        %v10766 = vld [vmem:[%s459 + $0xc8] sm:$0xff]
        %v10767 = vld [vmem:[%s459 + $0xd0] sm:$0xff]
        %v10768 = vld [vmem:[%s459 + $0xd8] sm:$0xff]
        %v10769 = vld [vmem:[%s459 + $0xe0] sm:$0xff]
        %v10770 = vld [vmem:[%s459 + $0xe8] sm:$0xff]
        %v10771 = vld [vmem:[%s459 + $0xf0] sm:$0xff]
        %v10772 = vld [vmem:[%s459 + $0xf8] sm:$0xff]
        %v10773 = vld [vmem:[%s459 + $0x100] sm:$0xff]
        %v10774 = vld [vmem:[%s459 + $0x108] sm:$0xff]
        %v10775 = vld [vmem:[%s459 + $0x110] sm:$0xff]
        %v10776 = vld [vmem:[%s459 + $0x118] sm:$0xff]
        %v10777 = vld [vmem:[%s459 + $0x120] sm:$0xff]
        %v10778 = vld [vmem:[%s459 + $0x128] sm:$0xff]
        %v10779 = vld [vmem:[%s459 + $0x130] sm:$0xff]
        %v10780 = vld [vmem:[%s459 + $0x138] sm:$0xff]
        %v10781 = vld [vmem:[%s459 + $0x140] sm:$0xff]
        %v10782 = vld [vmem:[%s459 + $0x148] sm:$0xff]
        %v10783 = vld [vmem:[%s459 + $0x150] sm:$0xff]
        %v10784 = vld [vmem:[%s459 + $0x158] sm:$0xff]
        %v10785 = vld [vmem:[%s459 + $0x160] sm:$0xff]
        %v10786 = vld [vmem:[%s459 + $0x168] sm:$0xff]
        %v10787 = vld [vmem:[%s459 + $0x170] sm:$0xff]
        %v10788 = vld [vmem:[%s459 + $0x178] sm:$0xff]
        %v10789 = vld [vmem:[%s459 + $0x180] sm:$0xff]
        %v10790 = vld [vmem:[%s459 + $0x188] sm:$0xff]
        %v10791 = vld [vmem:[%s459 + $0x190] sm:$0xff]
        %v10792 = vld [vmem:[%s459 + $0x198] sm:$0xff]
        %v10793 = vld [vmem:[%s459 + $0x1a0] sm:$0xff]
        %v10794 = vld [vmem:[%s459 + $0x1a8] sm:$0xff]
        %v10795 = vld [vmem:[%s459 + $0x1b0] sm:$0xff]
        %v10796 = vld [vmem:[%s459 + $0x1b8] sm:$0xff]
        %v10797 = vld [vmem:[%s459 + $0x1c0] sm:$0xff]
        %v10798 = vld [vmem:[%s459 + $0x1c8] sm:$0xff]
        %v10799 = vld [vmem:[%s459 + $0x1d0] sm:$0xff]
        %v10800 = vld [vmem:[%s459 + $0x1d8] sm:$0xff]
        %v10801 = vld [vmem:[%s459 + $0x1e0] sm:$0xff]
        %v10802 = vld [vmem:[%s459 + $0x1e8] sm:$0xff]
        %v10803 = vld [vmem:[%s459 + $0x1f0] sm:$0xff]
        %v10804 = vld [vmem:[%s459 + $0x1f8] sm:$0xff]
        %v10805 = vld [vmem:[%s459 + $0x200] sm:$0xff]
        %v10806 = vld [vmem:[%s459 + $0x208] sm:$0xff]
        %v10807 = vld [vmem:[%s459 + $0x210] sm:$0xff]
        %v10808 = vld [vmem:[%s459 + $0x218] sm:$0xff]
        %v10809 = vld [vmem:[%s459 + $0x220] sm:$0xff]
        %v10810 = vld [vmem:[%s459 + $0x228] sm:$0xff]
        %v10811 = vld [vmem:[%s459 + $0x230] sm:$0xff]
        %v10812 = vld [vmem:[%s459 + $0x238] sm:$0xff]
        %v10813 = vld [vmem:[%s459 + $0x240] sm:$0xff]
        %v10814 = vld [vmem:[%s459 + $0x248] sm:$0xff]
        %v10815 = vld [vmem:[%s459 + $0x250] sm:$0xff]
        %v10816 = vld [vmem:[%s459 + $0x258] sm:$0xff]
        %v10817 = vld [vmem:[%s459 + $0x260] sm:$0xff]
        %v10818 = vld [vmem:[%s459 + $0x268] sm:$0xff]
        %v10819 = vld [vmem:[%s459 + $0x270] sm:$0xff]
        %v10820 = vld [vmem:[%s459 + $0x278] sm:$0xff]
        %v10821 = vld [vmem:[%s459 + $0x280] sm:$0xff]
        %v10822 = vld [vmem:[%s459 + $0x288] sm:$0xff]
        %v10823 = vld [vmem:[%s459 + $0x290] sm:$0xff]
        %v10824 = vld [vmem:[%s459 + $0x298] sm:$0xff]
        %v10825 = vld [vmem:[%s459 + $0x2a0] sm:$0xff]
        %v10826 = vld [vmem:[%s459 + $0x2a8] sm:$0xff]
        %v10827 = vld [vmem:[%s459 + $0x2b0] sm:$0xff]
        %v10828 = vld [vmem:[%s459 + $0x2b8] sm:$0xff]
        %v10829 = vld [vmem:[%s459 + $0x2c0] sm:$0xff]
        %v10830 = vld [vmem:[%s459 + $0x2c8] sm:$0xff]
        %v10831 = vld [vmem:[%s459 + $0x2d0] sm:$0xff]
        %v10832 = vld [vmem:[%s459 + $0x2d8] sm:$0xff]
        %v10833 = vld [vmem:[%s459 + $0x2e0] sm:$0xff]
        %v10834 = vld [vmem:[%s459 + $0x2e8] sm:$0xff]
        %v10835 = vld [vmem:[%s459 + $0x2f0] sm:$0xff]
        %v10836 = vld [vmem:[%s459 + $0x2f8] sm:$0xff]
        %v10837 = vld [vmem:[%s459 + $0x300] sm:$0xff]
        %v10838 = vld [vmem:[%s459 + $0x308] sm:$0xff]
        %v10839 = vld [vmem:[%s459 + $0x310] sm:$0xff]
        %v10840 = vld [vmem:[%s459 + $0x318] sm:$0xff]
        %v10841 = vld [vmem:[%s459 + $0x320] sm:$0xff]
        %v10842 = vld [vmem:[%s459 + $0x328] sm:$0xff]
        %v10843 = vld [vmem:[%s459 + $0x330] sm:$0xff]
        %v10844 = vld [vmem:[%s459 + $0x338] sm:$0xff]
        %v10845 = vld [vmem:[%s459 + $0x340] sm:$0xff]
        %v10846 = vld [vmem:[%s459 + $0x348] sm:$0xff]
        %v10847 = vld [vmem:[%s459 + $0x350] sm:$0xff]
        %v10848 = vld [vmem:[%s459 + $0x358] sm:$0xff]
        %v10849 = vld [vmem:[%s459 + $0x360] sm:$0xff]
        %v10850 = vld [vmem:[%s459 + $0x368] sm:$0xff]
        %v10851 = vld [vmem:[%s459 + $0x370] sm:$0xff]
        %v10852 = vld [vmem:[%s459 + $0x378] sm:$0xff]
        %v10853 = vld [vmem:[%s459 + $0x380] sm:$0xff]
        %v10854 = vld [vmem:[%s459 + $0x388] sm:$0xff]
        %v10855 = vld [vmem:[%s459 + $0x390] sm:$0xff]
        %v10856 = vld [vmem:[%s459 + $0x398] sm:$0xff]
        %v10857 = vld [vmem:[%s459 + $0x3a0] sm:$0xff]
        %v10858 = vld [vmem:[%s459 + $0x3a8] sm:$0xff]
        %v10859 = vld [vmem:[%s459 + $0x3b0] sm:$0xff]
        %v10860 = vld [vmem:[%s459 + $0x3b8] sm:$0xff]
        %v10861 = vld [vmem:[%s459 + $0x3c0] sm:$0xff]
        %v10862 = vld [vmem:[%s459 + $0x3c8] sm:$0xff]
        %v10863 = vld [vmem:[%s459 + $0x3d0] sm:$0xff]
        %v10864 = vld [vmem:[%s459 + $0x3d8] sm:$0xff]
        %v10865 = vld [vmem:[%s459 + $0x3e0] sm:$0xff]
        %v10866 = vld [vmem:[%s459 + $0x3e8] sm:$0xff]
        %v10867 = vld [vmem:[%s459 + $0x3f0] sm:$0xff]
        %v10868 = vld [vmem:[%s459 + $0x3f8] sm:$0xff]
        %v10869 = vld [vmem:[%s459 + $0x400] sm:$0xff]
        %v10870 = vld [vmem:[%s459 + $0x408] sm:$0xff]
        %v10871 = vld [vmem:[%s459 + $0x410] sm:$0xff]
        %v10872 = vld [vmem:[%s459 + $0x418] sm:$0xff]
        %v10873 = vld [vmem:[%s459 + $0x420] sm:$0xff]
        %v10874 = vld [vmem:[%s459 + $0x428] sm:$0xff]
        %v10875 = vld [vmem:[%s459 + $0x430] sm:$0xff]
        %v10876 = vld [vmem:[%s459 + $0x438] sm:$0xff]
        %v10877 = vld [vmem:[%s459 + $0x440] sm:$0xff]
        %v10878 = vld [vmem:[%s459 + $0x448] sm:$0xff]
        %v10879 = vld [vmem:[%s459 + $0x450] sm:$0xff]
        %v10880 = vld [vmem:[%s459 + $0x458] sm:$0xff]
        %v10881 = vld [vmem:[%s459 + $0x460] sm:$0xff]
        %v10882 = vld [vmem:[%s459 + $0x468] sm:$0xff]
        %v10883 = vld [vmem:[%s459 + $0x470] sm:$0xff]
        %v10884 = vld [vmem:[%s459 + $0x478] sm:$0xff]
        %v10885 = vld [vmem:[%s459 + $0x480] sm:$0xff]
        %v10886 = vld [vmem:[%s459 + $0x488] sm:$0xff]
        %v10887 = vld [vmem:[%s459 + $0x490] sm:$0xff]
        %v10888 = vld [vmem:[%s459 + $0x498] sm:$0xff]
        %v10889 = vld [vmem:[%s459 + $0x4a0] sm:$0xff]
        %v10890 = vld [vmem:[%s459 + $0x4a8] sm:$0xff]
        %v10891 = vld [vmem:[%s459 + $0x4b0] sm:$0xff]
        %v10892 = vld [vmem:[%s459 + $0x4b8] sm:$0xff]
        %v10893 = vld [vmem:[%s459 + $0x4c0] sm:$0xff]
        %v10894 = vld [vmem:[%s459 + $0x4c8] sm:$0xff]
        %v10895 = vld [vmem:[%s459 + $0x4d0] sm:$0xff]
        %v10896 = vld [vmem:[%s459 + $0x4d8] sm:$0xff]
        %v10897 = vld [vmem:[%s459 + $0x4e0] sm:$0xff]
        %v10898 = vld [vmem:[%s459 + $0x4e8] sm:$0xff]
        %v10899 = vld [vmem:[%s459 + $0x4f0] sm:$0xff]
        %v10900 = vld [vmem:[%s459 + $0x4f8] sm:$0xff]
        %v10901 = vld [vmem:[%s459 + $0x500] sm:$0xff]
        %v10902 = vld [vmem:[%s459 + $0x508] sm:$0xff]
        %v10903 = vld [vmem:[%s459 + $0x510] sm:$0xff]
        %v10904 = vld [vmem:[%s459 + $0x518] sm:$0xff]
        %v10905 = vld [vmem:[%s459 + $0x520] sm:$0xff]
        %v10906 = vld [vmem:[%s459 + $0x528] sm:$0xff]
        %v10907 = vld [vmem:[%s459 + $0x530] sm:$0xff]
        %v10908 = vld [vmem:[%s459 + $0x538] sm:$0xff]
        %v10909 = vld [vmem:[%s459 + $0x540] sm:$0xff]
        %v10910 = vld [vmem:[%s459 + $0x548] sm:$0xff]
        %v10911 = vld [vmem:[%s459 + $0x550] sm:$0xff]
        %v10912 = vld [vmem:[%s459 + $0x558] sm:$0xff]
        %v10913 = vld [vmem:[%s459 + $0x560] sm:$0xff]
        %v10914 = vld [vmem:[%s459 + $0x568] sm:$0xff]
        %v10915 = vld [vmem:[%s459 + $0x570] sm:$0xff]
        %v10916 = vld [vmem:[%s459 + $0x578] sm:$0xff]
        %v10917 = vld [vmem:[%s459 + $0x580] sm:$0xff]
        %v10918 = vld [vmem:[%s459 + $0x588] sm:$0xff]
        %v10919 = vld [vmem:[%s459 + $0x590] sm:$0xff]
        %v10920 = vld [vmem:[%s459 + $0x598] sm:$0xff]
        %v10921 = vld [vmem:[%s459 + $0x5a0] sm:$0xff]
        %v10922 = vld [vmem:[%s459 + $0x5a8] sm:$0xff]
        %v10923 = vld [vmem:[%s459 + $0x5b0] sm:$0xff]
        %v10924 = vld [vmem:[%s459 + $0x5b8] sm:$0xff]
        %v10925 = vld [vmem:[%s459 + $0x5c0] sm:$0xff]
        %v10926 = vld [vmem:[%s459 + $0x5c8] sm:$0xff]
        %v10927 = vld [vmem:[%s459 + $0x5d0] sm:$0xff]
        %v10928 = vld [vmem:[%s459 + $0x5d8] sm:$0xff]
        %v10929 = vld [vmem:[%s459 + $0x5e0] sm:$0xff]
        %v10930 = vld [vmem:[%s459 + $0x5e8] sm:$0xff]
        %v10931 = vld [vmem:[%s459 + $0x5f0] sm:$0xff]
        %v10932 = vld [vmem:[%s459 + $0x5f8] sm:$0xff]
        %v10933 = vld [vmem:[%s459 + $0x600] sm:$0xff]
        %v10934 = vld [vmem:[%s459 + $0x608] sm:$0xff]
        %v10935 = vld [vmem:[%s459 + $0x610] sm:$0xff]
        %v10936 = vld [vmem:[%s459 + $0x618] sm:$0xff]
        %v10937 = vld [vmem:[%s459 + $0x620] sm:$0xff]
        %v10938 = vld [vmem:[%s459 + $0x628] sm:$0xff]
        %v10939 = vld [vmem:[%s459 + $0x630] sm:$0xff]
        %v10940 = vld [vmem:[%s459 + $0x638] sm:$0xff]
        %v10941 = vld [vmem:[%s459 + $0x640] sm:$0xff]
        %v10942 = vld [vmem:[%s459 + $0x648] sm:$0xff]
        %v10943 = vld [vmem:[%s459 + $0x650] sm:$0xff]
        %v10944 = vld [vmem:[%s459 + $0x658] sm:$0xff]
        %v10945 = vld [vmem:[%s459 + $0x660] sm:$0xff]
        %v10946 = vld [vmem:[%s459 + $0x668] sm:$0xff]
        %v10947 = vld [vmem:[%s459 + $0x670] sm:$0xff]
        %v10948 = vld [vmem:[%s459 + $0x678] sm:$0xff]
        %v10949 = vld [vmem:[%s459 + $0x680] sm:$0xff]
        %v10950 = vld [vmem:[%s459 + $0x688] sm:$0xff]
        %v10951 = vld [vmem:[%s459 + $0x690] sm:$0xff]
        %v10952 = vld [vmem:[%s459 + $0x698] sm:$0xff]
        %v10953 = vld [vmem:[%s459 + $0x6a0] sm:$0xff]
        %v10954 = vld [vmem:[%s459 + $0x6a8] sm:$0xff]
        %v10955 = vld [vmem:[%s459 + $0x6b0] sm:$0xff]
        %v10956 = vld [vmem:[%s459 + $0x6b8] sm:$0xff]
        %v10957 = vld [vmem:[%s459 + $0x6c0] sm:$0xff]
        %v10958 = vld [vmem:[%s459 + $0x6c8] sm:$0xff]
        %v10959 = vld [vmem:[%s459 + $0x6d0] sm:$0xff]
        %v10960 = vld [vmem:[%s459 + $0x6d8] sm:$0xff]
        %v10961 = vld [vmem:[%s459 + $0x6e0] sm:$0xff]
        %v10962 = vld [vmem:[%s459 + $0x6e8] sm:$0xff]
        %v10963 = vld [vmem:[%s459 + $0x6f0] sm:$0xff]
        %v10964 = vld [vmem:[%s459 + $0x6f8] sm:$0xff]
        %v10965 = vld [vmem:[%s459 + $0x700] sm:$0xff]
        %v10966 = vld [vmem:[%s459 + $0x708] sm:$0xff]
        %v10967 = vld [vmem:[%s459 + $0x710] sm:$0xff]
        %v10968 = vld [vmem:[%s459 + $0x718] sm:$0xff]
        %v10969 = vld [vmem:[%s459 + $0x720] sm:$0xff]
        %v10970 = vld [vmem:[%s459 + $0x728] sm:$0xff]
        %v10971 = vld [vmem:[%s459 + $0x730] sm:$0xff]
        %v10972 = vld [vmem:[%s459 + $0x738] sm:$0xff]
        %v10973 = vld [vmem:[%s459 + $0x740] sm:$0xff]
        %v10974 = vld [vmem:[%s459 + $0x748] sm:$0xff]
        %v10975 = vld [vmem:[%s459 + $0x750] sm:$0xff]
        %v10976 = vld [vmem:[%s459 + $0x758] sm:$0xff]
        %v10977 = vld [vmem:[%s459 + $0x760] sm:$0xff]
        %v10978 = vld [vmem:[%s459 + $0x768] sm:$0xff]
        %v10979 = vld [vmem:[%s459 + $0x770] sm:$0xff]
        %v10980 = vld [vmem:[%s459 + $0x778] sm:$0xff]
        %v10981 = vld [vmem:[%s459 + $0x780] sm:$0xff]
        %v10982 = vld [vmem:[%s459 + $0x788] sm:$0xff]
        %v10983 = vld [vmem:[%s459 + $0x790] sm:$0xff]
        %v10984 = vld [vmem:[%s459 + $0x798] sm:$0xff]
        %v10985 = vld [vmem:[%s459 + $0x7a0] sm:$0xff]
        %v10986 = vld [vmem:[%s459 + $0x7a8] sm:$0xff]
        %v10987 = vld [vmem:[%s459 + $0x7b0] sm:$0xff]
        %v10988 = vld [vmem:[%s459 + $0x7b8] sm:$0xff]
        %v10989 = vld [vmem:[%s459 + $0x7c0] sm:$0xff]
        %v10990 = vld [vmem:[%s459 + $0x7c8] sm:$0xff]
        %v10991 = vld [vmem:[%s459 + $0x7d0] sm:$0xff]
        %v10992 = vld [vmem:[%s459 + $0x7d8] sm:$0xff]
        %v10993 = vld [vmem:[%s459 + $0x7e0] sm:$0xff]
        %v10994 = vld [vmem:[%s459 + $0x7e8] sm:$0xff]
        %v10995 = vld [vmem:[%s459 + $0x7f0] sm:$0xff]
        %v10996 = vld [vmem:[%s459 + $0x7f8] sm:$0xff]
        %v11253 = vunpack.c.l.b16 %v10741
        %v11254 = vunpack.c.h.b16 %v10741
        %v11255 = vunpack.c.l.b16 %v10742
        %v11256 = vunpack.c.h.b16 %v10742
        %v11257 = vunpack.c.l.b16 %v10743
        %v11258 = vunpack.c.h.b16 %v10743
        %v11259 = vunpack.c.l.b16 %v10744
        %v11260 = vunpack.c.h.b16 %v10744
        %v11261 = vunpack.c.l.b16 %v10745
        %v11262 = vunpack.c.h.b16 %v10745
        %v11263 = vunpack.c.l.b16 %v10746
        %v11264 = vunpack.c.h.b16 %v10746
        %v11265 = vunpack.c.l.b16 %v10747
        %v11266 = vunpack.c.h.b16 %v10747
        %v11267 = vunpack.c.l.b16 %v10748
        %v11268 = vunpack.c.h.b16 %v10748
        %v11269 = vunpack.c.l.b16 %v10749
        %v11270 = vunpack.c.h.b16 %v10749
        %v11271 = vunpack.c.l.b16 %v10750
        %v11272 = vunpack.c.h.b16 %v10750
        %v11273 = vunpack.c.l.b16 %v10751
        %v11274 = vunpack.c.h.b16 %v10751
        %v11275 = vunpack.c.l.b16 %v10752
        %v11276 = vunpack.c.h.b16 %v10752
        %v11277 = vunpack.c.l.b16 %v10753
        %v11278 = vunpack.c.h.b16 %v10753
        %v11279 = vunpack.c.l.b16 %v10754
        %v11280 = vunpack.c.h.b16 %v10754
        %v11281 = vunpack.c.l.b16 %v10755
        %v11282 = vunpack.c.h.b16 %v10755
        %v11283 = vunpack.c.l.b16 %v10756
        %v11284 = vunpack.c.h.b16 %v10756
        %v11285 = vunpack.c.l.b16 %v10757
        %v11286 = vunpack.c.h.b16 %v10757
        %v11287 = vunpack.c.l.b16 %v10758
        %v11288 = vunpack.c.h.b16 %v10758
        %v11289 = vunpack.c.l.b16 %v10759
        %v11290 = vunpack.c.h.b16 %v10759
        %v11291 = vunpack.c.l.b16 %v10760
        %v11292 = vunpack.c.h.b16 %v10760
        %v11293 = vunpack.c.l.b16 %v10761
        %v11294 = vunpack.c.h.b16 %v10761
        %v11295 = vunpack.c.l.b16 %v10762
        %v11296 = vunpack.c.h.b16 %v10762
        %v11297 = vunpack.c.l.b16 %v10763
        %v11298 = vunpack.c.h.b16 %v10763
        %v11299 = vunpack.c.l.b16 %v10764
        %v11300 = vunpack.c.h.b16 %v10764
        %v11301 = vunpack.c.l.b16 %v10765
        %v11302 = vunpack.c.h.b16 %v10765
        %v11303 = vunpack.c.l.b16 %v10766
        %v11304 = vunpack.c.h.b16 %v10766
        %v11305 = vunpack.c.l.b16 %v10767
        %v11306 = vunpack.c.h.b16 %v10767
        %v11307 = vunpack.c.l.b16 %v10768
        %v11308 = vunpack.c.h.b16 %v10768
        %v11309 = vunpack.c.l.b16 %v10769
        %v11310 = vunpack.c.h.b16 %v10769
        %v11311 = vunpack.c.l.b16 %v10770
        %v11312 = vunpack.c.h.b16 %v10770
        %v11313 = vunpack.c.l.b16 %v10771
        %v11314 = vunpack.c.h.b16 %v10771
        %v11315 = vunpack.c.l.b16 %v10772
        %v11316 = vunpack.c.h.b16 %v10772
        %v11317 = vunpack.c.l.b16 %v10773
        %v11318 = vunpack.c.h.b16 %v10773
        %v11319 = vunpack.c.l.b16 %v10774
        %v11320 = vunpack.c.h.b16 %v10774
        %v11321 = vunpack.c.l.b16 %v10775
        %v11322 = vunpack.c.h.b16 %v10775
        %v11323 = vunpack.c.l.b16 %v10776
        %v11324 = vunpack.c.h.b16 %v10776
        %v11325 = vunpack.c.l.b16 %v10777
        %v11326 = vunpack.c.h.b16 %v10777
        %v11327 = vunpack.c.l.b16 %v10778
        %v11328 = vunpack.c.h.b16 %v10778
        %v11329 = vunpack.c.l.b16 %v10779
        %v11330 = vunpack.c.h.b16 %v10779
        %v11331 = vunpack.c.l.b16 %v10780
        %v11332 = vunpack.c.h.b16 %v10780
        %v11333 = vunpack.c.l.b16 %v10781
        %v11334 = vunpack.c.h.b16 %v10781
        %v11335 = vunpack.c.l.b16 %v10782
        %v11336 = vunpack.c.h.b16 %v10782
        %v11337 = vunpack.c.l.b16 %v10783
        %v11338 = vunpack.c.h.b16 %v10783
        %v11339 = vunpack.c.l.b16 %v10784
        %v11340 = vunpack.c.h.b16 %v10784
        %v11341 = vunpack.c.l.b16 %v10785
        %v11342 = vunpack.c.h.b16 %v10785
        %v11343 = vunpack.c.l.b16 %v10786
        %v11344 = vunpack.c.h.b16 %v10786
        %v11345 = vunpack.c.l.b16 %v10787
        %v11346 = vunpack.c.h.b16 %v10787
        %v11347 = vunpack.c.l.b16 %v10788
        %v11348 = vunpack.c.h.b16 %v10788
        %v11349 = vunpack.c.l.b16 %v10789
        %v11350 = vunpack.c.h.b16 %v10789
        %v11351 = vunpack.c.l.b16 %v10790
        %v11352 = vunpack.c.h.b16 %v10790
        %v11353 = vunpack.c.l.b16 %v10791
        %v11354 = vunpack.c.h.b16 %v10791
        %v11355 = vunpack.c.l.b16 %v10792
        %v11356 = vunpack.c.h.b16 %v10792
        %v11357 = vunpack.c.l.b16 %v10793
        %v11358 = vunpack.c.h.b16 %v10793
        %v11359 = vunpack.c.l.b16 %v10794
        %v11360 = vunpack.c.h.b16 %v10794
        %v11361 = vunpack.c.l.b16 %v10795
        %v11362 = vunpack.c.h.b16 %v10795
        %v11363 = vunpack.c.l.b16 %v10796
        %v11364 = vunpack.c.h.b16 %v10796
        %v11365 = vunpack.c.l.b16 %v10797
        %v11366 = vunpack.c.h.b16 %v10797
        %v11367 = vunpack.c.l.b16 %v10798
        %v11368 = vunpack.c.h.b16 %v10798
        %v11369 = vunpack.c.l.b16 %v10799
        %v11370 = vunpack.c.h.b16 %v10799
        %v11371 = vunpack.c.l.b16 %v10800
        %v11372 = vunpack.c.h.b16 %v10800
        %v11373 = vunpack.c.l.b16 %v10801
        %v11374 = vunpack.c.h.b16 %v10801
        %v11375 = vunpack.c.l.b16 %v10802
        %v11376 = vunpack.c.h.b16 %v10802
        %v11377 = vunpack.c.l.b16 %v10803
        %v11378 = vunpack.c.h.b16 %v10803
        %v11379 = vunpack.c.l.b16 %v10804
        %v11380 = vunpack.c.h.b16 %v10804
        %v11381 = vunpack.c.l.b16 %v10805
        %v11382 = vunpack.c.h.b16 %v10805
        %v11383 = vunpack.c.l.b16 %v10806
        %v11384 = vunpack.c.h.b16 %v10806
        %v11385 = vunpack.c.l.b16 %v10807
        %v11386 = vunpack.c.h.b16 %v10807
        %v11387 = vunpack.c.l.b16 %v10808
        %v11388 = vunpack.c.h.b16 %v10808
        %v11389 = vunpack.c.l.b16 %v10809
        %v11390 = vunpack.c.h.b16 %v10809
        %v11391 = vunpack.c.l.b16 %v10810
        %v11392 = vunpack.c.h.b16 %v10810
        %v11393 = vunpack.c.l.b16 %v10811
        %v11394 = vunpack.c.h.b16 %v10811
        %v11395 = vunpack.c.l.b16 %v10812
        %v11396 = vunpack.c.h.b16 %v10812
        %v11397 = vunpack.c.l.b16 %v10813
        %v11398 = vunpack.c.h.b16 %v10813
        %v11399 = vunpack.c.l.b16 %v10814
        %v11400 = vunpack.c.h.b16 %v10814
        %v11401 = vunpack.c.l.b16 %v10815
        %v11402 = vunpack.c.h.b16 %v10815
        %v11403 = vunpack.c.l.b16 %v10816
        %v11404 = vunpack.c.h.b16 %v10816
        %v11405 = vunpack.c.l.b16 %v10817
        %v11406 = vunpack.c.h.b16 %v10817
        %v11407 = vunpack.c.l.b16 %v10818
        %v11408 = vunpack.c.h.b16 %v10818
        %v11409 = vunpack.c.l.b16 %v10819
        %v11410 = vunpack.c.h.b16 %v10819
        %v11411 = vunpack.c.l.b16 %v10820
        %v11412 = vunpack.c.h.b16 %v10820
        %v11413 = vunpack.c.l.b16 %v10821
        %v11414 = vunpack.c.h.b16 %v10821
        %v11415 = vunpack.c.l.b16 %v10822
        %v11416 = vunpack.c.h.b16 %v10822
        %v11417 = vunpack.c.l.b16 %v10823
        %v11418 = vunpack.c.h.b16 %v10823
        %v11419 = vunpack.c.l.b16 %v10824
        %v11420 = vunpack.c.h.b16 %v10824
        %v11421 = vunpack.c.l.b16 %v10825
        %v11422 = vunpack.c.h.b16 %v10825
        %v11423 = vunpack.c.l.b16 %v10826
        %v11424 = vunpack.c.h.b16 %v10826
        %v11425 = vunpack.c.l.b16 %v10827
        %v11426 = vunpack.c.h.b16 %v10827
        %v11427 = vunpack.c.l.b16 %v10828
        %v11428 = vunpack.c.h.b16 %v10828
        %v11429 = vunpack.c.l.b16 %v10829
        %v11430 = vunpack.c.h.b16 %v10829
        %v11431 = vunpack.c.l.b16 %v10830
        %v11432 = vunpack.c.h.b16 %v10830
        %v11433 = vunpack.c.l.b16 %v10831
        %v11434 = vunpack.c.h.b16 %v10831
        %v11435 = vunpack.c.l.b16 %v10832
        %v11436 = vunpack.c.h.b16 %v10832
        %v11437 = vunpack.c.l.b16 %v10833
        %v11438 = vunpack.c.h.b16 %v10833
        %v11439 = vunpack.c.l.b16 %v10834
        %v11440 = vunpack.c.h.b16 %v10834
        %v11441 = vunpack.c.l.b16 %v10835
        %v11442 = vunpack.c.h.b16 %v10835
        %v11443 = vunpack.c.l.b16 %v10836
        %v11444 = vunpack.c.h.b16 %v10836
        %v11445 = vunpack.c.l.b16 %v10837
        %v11446 = vunpack.c.h.b16 %v10837
        %v11447 = vunpack.c.l.b16 %v10838
        %v11448 = vunpack.c.h.b16 %v10838
        %v11449 = vunpack.c.l.b16 %v10839
        %v11450 = vunpack.c.h.b16 %v10839
        %v11451 = vunpack.c.l.b16 %v10840
        %v11452 = vunpack.c.h.b16 %v10840
        %v11453 = vunpack.c.l.b16 %v10841
        %v11454 = vunpack.c.h.b16 %v10841
        %v11455 = vunpack.c.l.b16 %v10842
        %v11456 = vunpack.c.h.b16 %v10842
        %v11457 = vunpack.c.l.b16 %v10843
        %v11458 = vunpack.c.h.b16 %v10843
        %v11459 = vunpack.c.l.b16 %v10844
        %v11460 = vunpack.c.h.b16 %v10844
        %v11461 = vunpack.c.l.b16 %v10845
        %v11462 = vunpack.c.h.b16 %v10845
        %v11463 = vunpack.c.l.b16 %v10846
        %v11464 = vunpack.c.h.b16 %v10846
        %v11465 = vunpack.c.l.b16 %v10847
        %v11466 = vunpack.c.h.b16 %v10847
        %v11467 = vunpack.c.l.b16 %v10848
        %v11468 = vunpack.c.h.b16 %v10848
        %v11469 = vunpack.c.l.b16 %v10849
        %v11470 = vunpack.c.h.b16 %v10849
        %v11471 = vunpack.c.l.b16 %v10850
        %v11472 = vunpack.c.h.b16 %v10850
        %v11473 = vunpack.c.l.b16 %v10851
        %v11474 = vunpack.c.h.b16 %v10851
        %v11475 = vunpack.c.l.b16 %v10852
        %v11476 = vunpack.c.h.b16 %v10852
        %v11477 = vunpack.c.l.b16 %v10853
        %v11478 = vunpack.c.h.b16 %v10853
        %v11479 = vunpack.c.l.b16 %v10854
        %v11480 = vunpack.c.h.b16 %v10854
        %v11481 = vunpack.c.l.b16 %v10855
        %v11482 = vunpack.c.h.b16 %v10855
        %v11483 = vunpack.c.l.b16 %v10856
        %v11484 = vunpack.c.h.b16 %v10856
        %v11485 = vunpack.c.l.b16 %v10857
        %v11486 = vunpack.c.h.b16 %v10857
        %v11487 = vunpack.c.l.b16 %v10858
        %v11488 = vunpack.c.h.b16 %v10858
        %v11489 = vunpack.c.l.b16 %v10859
        %v11490 = vunpack.c.h.b16 %v10859
        %v11491 = vunpack.c.l.b16 %v10860
        %v11492 = vunpack.c.h.b16 %v10860
        %v11493 = vunpack.c.l.b16 %v10861
        %v11494 = vunpack.c.h.b16 %v10861
        %v11495 = vunpack.c.l.b16 %v10862
        %v11496 = vunpack.c.h.b16 %v10862
        %v11497 = vunpack.c.l.b16 %v10863
        %v11498 = vunpack.c.h.b16 %v10863
        %v11499 = vunpack.c.l.b16 %v10864
        %v11500 = vunpack.c.h.b16 %v10864
        %v11501 = vunpack.c.l.b16 %v10865
        %v11502 = vunpack.c.h.b16 %v10865
        %v11503 = vunpack.c.l.b16 %v10866
        %v11504 = vunpack.c.h.b16 %v10866
        %v11505 = vunpack.c.l.b16 %v10867
        %v11506 = vunpack.c.h.b16 %v10867
        %v11507 = vunpack.c.l.b16 %v10868
        %v11508 = vunpack.c.h.b16 %v10868
        %v11509 = vunpack.c.l.b16 %v10869
        %v11510 = vunpack.c.h.b16 %v10869
        %v11511 = vunpack.c.l.b16 %v10870
        %v11512 = vunpack.c.h.b16 %v10870
        %v11513 = vunpack.c.l.b16 %v10871
        %v11514 = vunpack.c.h.b16 %v10871
        %v11515 = vunpack.c.l.b16 %v10872
        %v11516 = vunpack.c.h.b16 %v10872
        %v11517 = vunpack.c.l.b16 %v10873
        %v11518 = vunpack.c.h.b16 %v10873
        %v11519 = vunpack.c.l.b16 %v10874
        %v11520 = vunpack.c.h.b16 %v10874
        %v11521 = vunpack.c.l.b16 %v10875
        %v11522 = vunpack.c.h.b16 %v10875
        %v11523 = vunpack.c.l.b16 %v10876
        %v11524 = vunpack.c.h.b16 %v10876
        %v11525 = vunpack.c.l.b16 %v10877
        %v11526 = vunpack.c.h.b16 %v10877
        %v11527 = vunpack.c.l.b16 %v10878
        %v11528 = vunpack.c.h.b16 %v10878
        %v11529 = vunpack.c.l.b16 %v10879
        %v11530 = vunpack.c.h.b16 %v10879
        %v11531 = vunpack.c.l.b16 %v10880
        %v11532 = vunpack.c.h.b16 %v10880
        %v11533 = vunpack.c.l.b16 %v10881
        %v11534 = vunpack.c.h.b16 %v10881
        %v11535 = vunpack.c.l.b16 %v10882
        %v11536 = vunpack.c.h.b16 %v10882
        %v11537 = vunpack.c.l.b16 %v10883
        %v11538 = vunpack.c.h.b16 %v10883
        %v11539 = vunpack.c.l.b16 %v10884
        %v11540 = vunpack.c.h.b16 %v10884
        %v11541 = vunpack.c.l.b16 %v10885
        %v11542 = vunpack.c.h.b16 %v10885
        %v11543 = vunpack.c.l.b16 %v10886
        %v11544 = vunpack.c.h.b16 %v10886
        %v11545 = vunpack.c.l.b16 %v10887
        %v11546 = vunpack.c.h.b16 %v10887
        %v11547 = vunpack.c.l.b16 %v10888
        %v11548 = vunpack.c.h.b16 %v10888
        %v11549 = vunpack.c.l.b16 %v10889
        %v11550 = vunpack.c.h.b16 %v10889
        %v11551 = vunpack.c.l.b16 %v10890
        %v11552 = vunpack.c.h.b16 %v10890
        %v11553 = vunpack.c.l.b16 %v10891
        %v11554 = vunpack.c.h.b16 %v10891
        %v11555 = vunpack.c.l.b16 %v10892
        %v11556 = vunpack.c.h.b16 %v10892
        %v11557 = vunpack.c.l.b16 %v10893
        %v11558 = vunpack.c.h.b16 %v10893
        %v11559 = vunpack.c.l.b16 %v10894
        %v11560 = vunpack.c.h.b16 %v10894
        %v11561 = vunpack.c.l.b16 %v10895
        %v11562 = vunpack.c.h.b16 %v10895
        %v11563 = vunpack.c.l.b16 %v10896
        %v11564 = vunpack.c.h.b16 %v10896
        %v11565 = vunpack.c.l.b16 %v10897
        %v11566 = vunpack.c.h.b16 %v10897
        %v11567 = vunpack.c.l.b16 %v10898
        %v11568 = vunpack.c.h.b16 %v10898
        %v11569 = vunpack.c.l.b16 %v10899
        %v11570 = vunpack.c.h.b16 %v10899
        %v11571 = vunpack.c.l.b16 %v10900
        %v11572 = vunpack.c.h.b16 %v10900
        %v11573 = vunpack.c.l.b16 %v10901
        %v11574 = vunpack.c.h.b16 %v10901
        %v11575 = vunpack.c.l.b16 %v10902
        %v11576 = vunpack.c.h.b16 %v10902
        %v11577 = vunpack.c.l.b16 %v10903
        %v11578 = vunpack.c.h.b16 %v10903
        %v11579 = vunpack.c.l.b16 %v10904
        %v11580 = vunpack.c.h.b16 %v10904
        %v11581 = vunpack.c.l.b16 %v10905
        %v11582 = vunpack.c.h.b16 %v10905
        %v11583 = vunpack.c.l.b16 %v10906
        %v11584 = vunpack.c.h.b16 %v10906
        %v11585 = vunpack.c.l.b16 %v10907
        %v11586 = vunpack.c.h.b16 %v10907
        %v11587 = vunpack.c.l.b16 %v10908
        %v11588 = vunpack.c.h.b16 %v10908
        %v11589 = vunpack.c.l.b16 %v10909
        %v11590 = vunpack.c.h.b16 %v10909
        %v11591 = vunpack.c.l.b16 %v10910
        %v11592 = vunpack.c.h.b16 %v10910
        %v11593 = vunpack.c.l.b16 %v10911
        %v11594 = vunpack.c.h.b16 %v10911
        %v11595 = vunpack.c.l.b16 %v10912
        %v11596 = vunpack.c.h.b16 %v10912
        %v11597 = vunpack.c.l.b16 %v10913
        %v11598 = vunpack.c.h.b16 %v10913
        %v11599 = vunpack.c.l.b16 %v10914
        %v11600 = vunpack.c.h.b16 %v10914
        %v11601 = vunpack.c.l.b16 %v10915
        %v11602 = vunpack.c.h.b16 %v10915
        %v11603 = vunpack.c.l.b16 %v10916
        %v11604 = vunpack.c.h.b16 %v10916
        %v11605 = vunpack.c.l.b16 %v10917
        %v11606 = vunpack.c.h.b16 %v10917
        %v11607 = vunpack.c.l.b16 %v10918
        %v11608 = vunpack.c.h.b16 %v10918
        %v11609 = vunpack.c.l.b16 %v10919
        %v11610 = vunpack.c.h.b16 %v10919
        %v11611 = vunpack.c.l.b16 %v10920
        %v11612 = vunpack.c.h.b16 %v10920
        %v11613 = vunpack.c.l.b16 %v10921
        %v11614 = vunpack.c.h.b16 %v10921
        %v11615 = vunpack.c.l.b16 %v10922
        %v11616 = vunpack.c.h.b16 %v10922
        %v11617 = vunpack.c.l.b16 %v10923
        %v11618 = vunpack.c.h.b16 %v10923
        %v11619 = vunpack.c.l.b16 %v10924
        %v11620 = vunpack.c.h.b16 %v10924
        %v11621 = vunpack.c.l.b16 %v10925
        %v11622 = vunpack.c.h.b16 %v10925
        %v11623 = vunpack.c.l.b16 %v10926
        %v11624 = vunpack.c.h.b16 %v10926
        %v11625 = vunpack.c.l.b16 %v10927
        %v11626 = vunpack.c.h.b16 %v10927
        %v11627 = vunpack.c.l.b16 %v10928
        %v11628 = vunpack.c.h.b16 %v10928
        %v11629 = vunpack.c.l.b16 %v10929
        %v11630 = vunpack.c.h.b16 %v10929
        %v11631 = vunpack.c.l.b16 %v10930
        %v11632 = vunpack.c.h.b16 %v10930
        %v11633 = vunpack.c.l.b16 %v10931
        %v11634 = vunpack.c.h.b16 %v10931
        %v11635 = vunpack.c.l.b16 %v10932
        %v11636 = vunpack.c.h.b16 %v10932
        %v11637 = vunpack.c.l.b16 %v10933
        %v11638 = vunpack.c.h.b16 %v10933
        %v11639 = vunpack.c.l.b16 %v10934
        %v11640 = vunpack.c.h.b16 %v10934
        %v11641 = vunpack.c.l.b16 %v10935
        %v11642 = vunpack.c.h.b16 %v10935
        %v11643 = vunpack.c.l.b16 %v10936
        %v11644 = vunpack.c.h.b16 %v10936
        %v11645 = vunpack.c.l.b16 %v10937
        %v11646 = vunpack.c.h.b16 %v10937
        %v11647 = vunpack.c.l.b16 %v10938
        %v11648 = vunpack.c.h.b16 %v10938
        %v11649 = vunpack.c.l.b16 %v10939
        %v11650 = vunpack.c.h.b16 %v10939
        %v11651 = vunpack.c.l.b16 %v10940
        %v11652 = vunpack.c.h.b16 %v10940
        %v11653 = vunpack.c.l.b16 %v10941
        %v11654 = vunpack.c.h.b16 %v10941
        %v11655 = vunpack.c.l.b16 %v10942
        %v11656 = vunpack.c.h.b16 %v10942
        %v11657 = vunpack.c.l.b16 %v10943
        %v11658 = vunpack.c.h.b16 %v10943
        %v11659 = vunpack.c.l.b16 %v10944
        %v11660 = vunpack.c.h.b16 %v10944
        %v11661 = vunpack.c.l.b16 %v10945
        %v11662 = vunpack.c.h.b16 %v10945
        %v11663 = vunpack.c.l.b16 %v10946
        %v11664 = vunpack.c.h.b16 %v10946
        %v11665 = vunpack.c.l.b16 %v10947
        %v11666 = vunpack.c.h.b16 %v10947
        %v11667 = vunpack.c.l.b16 %v10948
        %v11668 = vunpack.c.h.b16 %v10948
        %v11669 = vunpack.c.l.b16 %v10949
        %v11670 = vunpack.c.h.b16 %v10949
        %v11671 = vunpack.c.l.b16 %v10950
        %v11672 = vunpack.c.h.b16 %v10950
        %v11673 = vunpack.c.l.b16 %v10951
        %v11674 = vunpack.c.h.b16 %v10951
        %v11675 = vunpack.c.l.b16 %v10952
        %v11676 = vunpack.c.h.b16 %v10952
        %v11677 = vunpack.c.l.b16 %v10953
        %v11678 = vunpack.c.h.b16 %v10953
        %v11679 = vunpack.c.l.b16 %v10954
        %v11680 = vunpack.c.h.b16 %v10954
        %v11681 = vunpack.c.l.b16 %v10955
        %v11682 = vunpack.c.h.b16 %v10955
        %v11683 = vunpack.c.l.b16 %v10956
        %v11684 = vunpack.c.h.b16 %v10956
        %v11685 = vunpack.c.l.b16 %v10957
        %v11686 = vunpack.c.h.b16 %v10957
        %v11687 = vunpack.c.l.b16 %v10958
        %v11688 = vunpack.c.h.b16 %v10958
        %v11689 = vunpack.c.l.b16 %v10959
        %v11690 = vunpack.c.h.b16 %v10959
        %v11691 = vunpack.c.l.b16 %v10960
        %v11692 = vunpack.c.h.b16 %v10960
        %v11693 = vunpack.c.l.b16 %v10961
        %v11694 = vunpack.c.h.b16 %v10961
        %v11695 = vunpack.c.l.b16 %v10962
        %v11696 = vunpack.c.h.b16 %v10962
        %v11697 = vunpack.c.l.b16 %v10963
        %v11698 = vunpack.c.h.b16 %v10963
        %v11699 = vunpack.c.l.b16 %v10964
        %v11700 = vunpack.c.h.b16 %v10964
        %v11701 = vunpack.c.l.b16 %v10965
        %v11702 = vunpack.c.h.b16 %v10965
        %v11703 = vunpack.c.l.b16 %v10966
        %v11704 = vunpack.c.h.b16 %v10966
        %v11705 = vunpack.c.l.b16 %v10967
        %v11706 = vunpack.c.h.b16 %v10967
        %v11707 = vunpack.c.l.b16 %v10968
        %v11708 = vunpack.c.h.b16 %v10968
        %v11709 = vunpack.c.l.b16 %v10969
        %v11710 = vunpack.c.h.b16 %v10969
        %v11711 = vunpack.c.l.b16 %v10970
        %v11712 = vunpack.c.h.b16 %v10970
        %v11713 = vunpack.c.l.b16 %v10971
        %v11714 = vunpack.c.h.b16 %v10971
        %v11715 = vunpack.c.l.b16 %v10972
        %v11716 = vunpack.c.h.b16 %v10972
        %v11717 = vunpack.c.l.b16 %v10973
        %v11718 = vunpack.c.h.b16 %v10973
        %v11719 = vunpack.c.l.b16 %v10974
        %v11720 = vunpack.c.h.b16 %v10974
        %v11721 = vunpack.c.l.b16 %v10975
        %v11722 = vunpack.c.h.b16 %v10975
        %v11723 = vunpack.c.l.b16 %v10976
        %v11724 = vunpack.c.h.b16 %v10976
        %v11725 = vunpack.c.l.b16 %v10977
        %v11726 = vunpack.c.h.b16 %v10977
        %v11727 = vunpack.c.l.b16 %v10978
        %v11728 = vunpack.c.h.b16 %v10978
        %v11729 = vunpack.c.l.b16 %v10979
        %v11730 = vunpack.c.h.b16 %v10979
        %v11731 = vunpack.c.l.b16 %v10980
        %v11732 = vunpack.c.h.b16 %v10980
        %v11733 = vunpack.c.l.b16 %v10981
        %v11734 = vunpack.c.h.b16 %v10981
        %v11735 = vunpack.c.l.b16 %v10982
        %v11736 = vunpack.c.h.b16 %v10982
        %v11737 = vunpack.c.l.b16 %v10983
        %v11738 = vunpack.c.h.b16 %v10983
        %v11739 = vunpack.c.l.b16 %v10984
        %v11740 = vunpack.c.h.b16 %v10984
        %v11741 = vunpack.c.l.b16 %v10985
        %v11742 = vunpack.c.h.b16 %v10985
        %v11743 = vunpack.c.l.b16 %v10986
        %v11744 = vunpack.c.h.b16 %v10986
        %v11745 = vunpack.c.l.b16 %v10987
        %v11746 = vunpack.c.h.b16 %v10987
        %v11747 = vunpack.c.l.b16 %v10988
        %v11748 = vunpack.c.h.b16 %v10988
        %v11749 = vunpack.c.l.b16 %v10989
        %v11750 = vunpack.c.h.b16 %v10989
        %v11751 = vunpack.c.l.b16 %v10990
        %v11752 = vunpack.c.h.b16 %v10990
        %v11753 = vunpack.c.l.b16 %v10991
        %v11754 = vunpack.c.h.b16 %v10991
        %v11755 = vunpack.c.l.b16 %v10992
        %v11756 = vunpack.c.h.b16 %v10992
        %v11757 = vunpack.c.l.b16 %v10993
        %v11758 = vunpack.c.h.b16 %v10993
        %v11759 = vunpack.c.l.b16 %v10994
        %v11760 = vunpack.c.h.b16 %v10994
        %v11761 = vunpack.c.l.b16 %v10995
        %v11762 = vunpack.c.h.b16 %v10995
        %v11763 = vunpack.c.l.b16 %v10996
        %v11764 = vunpack.c.h.b16 %v10996
        %v11765 = vpack.c.b16 %v11257, %v11253
        %v11766 = vpack.c.b16 %v11258, %v11254
        %v11767 = vpack.c.b16 %v11259, %v11255
        %v11768 = vpack.c.b16 %v11260, %v11256
        %v11769 = vpack.c.b16 %v11265, %v11261
        %v11770 = vpack.c.b16 %v11266, %v11262
        %v11771 = vpack.c.b16 %v11267, %v11263
        %v11772 = vpack.c.b16 %v11268, %v11264
        %v11773 = vpack.c.b16 %v11273, %v11269
        %v11774 = vpack.c.b16 %v11274, %v11270
        %v11775 = vpack.c.b16 %v11275, %v11271
        %v11776 = vpack.c.b16 %v11276, %v11272
        %v11777 = vpack.c.b16 %v11281, %v11277
        %v11778 = vpack.c.b16 %v11282, %v11278
        %v11779 = vpack.c.b16 %v11283, %v11279
        %v11780 = vpack.c.b16 %v11284, %v11280
        %v11781 = vpack.c.b16 %v11289, %v11285
        %v11782 = vpack.c.b16 %v11290, %v11286
        %v11783 = vpack.c.b16 %v11291, %v11287
        %v11784 = vpack.c.b16 %v11292, %v11288
        %v11785 = vpack.c.b16 %v11297, %v11293
        %v11786 = vpack.c.b16 %v11298, %v11294
        %v11787 = vpack.c.b16 %v11299, %v11295
        %v11788 = vpack.c.b16 %v11300, %v11296
        %v11789 = vpack.c.b16 %v11305, %v11301
        %v11790 = vpack.c.b16 %v11306, %v11302
        %v11791 = vpack.c.b16 %v11307, %v11303
        %v11792 = vpack.c.b16 %v11308, %v11304
        %v11793 = vpack.c.b16 %v11313, %v11309
        %v11794 = vpack.c.b16 %v11314, %v11310
        %v11795 = vpack.c.b16 %v11315, %v11311
        %v11796 = vpack.c.b16 %v11316, %v11312
        %v11797 = vpack.c.b16 %v11321, %v11317
        %v11798 = vpack.c.b16 %v11322, %v11318
        %v11799 = vpack.c.b16 %v11323, %v11319
        %v11800 = vpack.c.b16 %v11324, %v11320
        %v11801 = vpack.c.b16 %v11329, %v11325
        %v11802 = vpack.c.b16 %v11330, %v11326
        %v11803 = vpack.c.b16 %v11331, %v11327
        %v11804 = vpack.c.b16 %v11332, %v11328
        %v11805 = vpack.c.b16 %v11337, %v11333
        %v11806 = vpack.c.b16 %v11338, %v11334
        %v11807 = vpack.c.b16 %v11339, %v11335
        %v11808 = vpack.c.b16 %v11340, %v11336
        %v11809 = vpack.c.b16 %v11345, %v11341
        %v11810 = vpack.c.b16 %v11346, %v11342
        %v11811 = vpack.c.b16 %v11347, %v11343
        %v11812 = vpack.c.b16 %v11348, %v11344
        %v11813 = vpack.c.b16 %v11353, %v11349
        %v11814 = vpack.c.b16 %v11354, %v11350
        %v11815 = vpack.c.b16 %v11355, %v11351
        %v11816 = vpack.c.b16 %v11356, %v11352
        %v11817 = vpack.c.b16 %v11361, %v11357
        %v11818 = vpack.c.b16 %v11362, %v11358
        %v11819 = vpack.c.b16 %v11363, %v11359
        %v11820 = vpack.c.b16 %v11364, %v11360
        %v11821 = vpack.c.b16 %v11369, %v11365
        %v11822 = vpack.c.b16 %v11370, %v11366
        %v11823 = vpack.c.b16 %v11371, %v11367
        %v11824 = vpack.c.b16 %v11372, %v11368
        %v11825 = vpack.c.b16 %v11377, %v11373
        %v11826 = vpack.c.b16 %v11378, %v11374
        %v11827 = vpack.c.b16 %v11379, %v11375
        %v11828 = vpack.c.b16 %v11380, %v11376
        %v11829 = vpack.c.b16 %v11385, %v11381
        %v11830 = vpack.c.b16 %v11386, %v11382
        %v11831 = vpack.c.b16 %v11387, %v11383
        %v11832 = vpack.c.b16 %v11388, %v11384
        %v11833 = vpack.c.b16 %v11393, %v11389
        %v11834 = vpack.c.b16 %v11394, %v11390
        %v11835 = vpack.c.b16 %v11395, %v11391
        %v11836 = vpack.c.b16 %v11396, %v11392
        %v11837 = vpack.c.b16 %v11401, %v11397
        %v11838 = vpack.c.b16 %v11402, %v11398
        %v11839 = vpack.c.b16 %v11403, %v11399
        %v11840 = vpack.c.b16 %v11404, %v11400
        %v11841 = vpack.c.b16 %v11409, %v11405
        %v11842 = vpack.c.b16 %v11410, %v11406
        %v11843 = vpack.c.b16 %v11411, %v11407
        %v11844 = vpack.c.b16 %v11412, %v11408
        %v11845 = vpack.c.b16 %v11417, %v11413
        %v11846 = vpack.c.b16 %v11418, %v11414
        %v11847 = vpack.c.b16 %v11419, %v11415
        %v11848 = vpack.c.b16 %v11420, %v11416
        %v11849 = vpack.c.b16 %v11425, %v11421
        %v11850 = vpack.c.b16 %v11426, %v11422
        %v11851 = vpack.c.b16 %v11427, %v11423
        %v11852 = vpack.c.b16 %v11428, %v11424
        %v11853 = vpack.c.b16 %v11433, %v11429
        %v11854 = vpack.c.b16 %v11434, %v11430
        %v11855 = vpack.c.b16 %v11435, %v11431
        %v11856 = vpack.c.b16 %v11436, %v11432
        %v11857 = vpack.c.b16 %v11441, %v11437
        %v11858 = vpack.c.b16 %v11442, %v11438
        %v11859 = vpack.c.b16 %v11443, %v11439
        %v11860 = vpack.c.b16 %v11444, %v11440
        %v11861 = vpack.c.b16 %v11449, %v11445
        %v11862 = vpack.c.b16 %v11450, %v11446
        %v11863 = vpack.c.b16 %v11451, %v11447
        %v11864 = vpack.c.b16 %v11452, %v11448
        %v11865 = vpack.c.b16 %v11457, %v11453
        %v11866 = vpack.c.b16 %v11458, %v11454
        %v11867 = vpack.c.b16 %v11459, %v11455
        %v11868 = vpack.c.b16 %v11460, %v11456
        %v11869 = vpack.c.b16 %v11465, %v11461
        %v11870 = vpack.c.b16 %v11466, %v11462
        %v11871 = vpack.c.b16 %v11467, %v11463
        %v11872 = vpack.c.b16 %v11468, %v11464
        %v11873 = vpack.c.b16 %v11473, %v11469
        %v11874 = vpack.c.b16 %v11474, %v11470
        %v11875 = vpack.c.b16 %v11475, %v11471
        %v11876 = vpack.c.b16 %v11476, %v11472
        %v11877 = vpack.c.b16 %v11481, %v11477
        %v11878 = vpack.c.b16 %v11482, %v11478
        %v11879 = vpack.c.b16 %v11483, %v11479
        %v11880 = vpack.c.b16 %v11484, %v11480
        %v11881 = vpack.c.b16 %v11489, %v11485
        %v11882 = vpack.c.b16 %v11490, %v11486
        %v11883 = vpack.c.b16 %v11491, %v11487
        %v11884 = vpack.c.b16 %v11492, %v11488
        %v11885 = vpack.c.b16 %v11497, %v11493
        %v11886 = vpack.c.b16 %v11498, %v11494
        %v11887 = vpack.c.b16 %v11499, %v11495
        %v11888 = vpack.c.b16 %v11500, %v11496
        %v11889 = vpack.c.b16 %v11505, %v11501
        %v11890 = vpack.c.b16 %v11506, %v11502
        %v11891 = vpack.c.b16 %v11507, %v11503
        %v11892 = vpack.c.b16 %v11508, %v11504
        %v11893 = vpack.c.b16 %v11513, %v11509
        %v11894 = vpack.c.b16 %v11514, %v11510
        %v11895 = vpack.c.b16 %v11515, %v11511
        %v11896 = vpack.c.b16 %v11516, %v11512
        %v11897 = vpack.c.b16 %v11521, %v11517
        %v11898 = vpack.c.b16 %v11522, %v11518
        %v11899 = vpack.c.b16 %v11523, %v11519
        %v11900 = vpack.c.b16 %v11524, %v11520
        %v11901 = vpack.c.b16 %v11529, %v11525
        %v11902 = vpack.c.b16 %v11530, %v11526
        %v11903 = vpack.c.b16 %v11531, %v11527
        %v11904 = vpack.c.b16 %v11532, %v11528
        %v11905 = vpack.c.b16 %v11537, %v11533
        %v11906 = vpack.c.b16 %v11538, %v11534
        %v11907 = vpack.c.b16 %v11539, %v11535
        %v11908 = vpack.c.b16 %v11540, %v11536
        %v11909 = vpack.c.b16 %v11545, %v11541
        %v11910 = vpack.c.b16 %v11546, %v11542
        %v11911 = vpack.c.b16 %v11547, %v11543
        %v11912 = vpack.c.b16 %v11548, %v11544
        %v11913 = vpack.c.b16 %v11553, %v11549
        %v11914 = vpack.c.b16 %v11554, %v11550
        %v11915 = vpack.c.b16 %v11555, %v11551
        %v11916 = vpack.c.b16 %v11556, %v11552
        %v11917 = vpack.c.b16 %v11561, %v11557
        %v11918 = vpack.c.b16 %v11562, %v11558
        %v11919 = vpack.c.b16 %v11563, %v11559
        %v11920 = vpack.c.b16 %v11564, %v11560
        %v11921 = vpack.c.b16 %v11569, %v11565
        %v11922 = vpack.c.b16 %v11570, %v11566
        %v11923 = vpack.c.b16 %v11571, %v11567
        %v11924 = vpack.c.b16 %v11572, %v11568
        %v11925 = vpack.c.b16 %v11577, %v11573
        %v11926 = vpack.c.b16 %v11578, %v11574
        %v11927 = vpack.c.b16 %v11579, %v11575
        %v11928 = vpack.c.b16 %v11580, %v11576
        %v11929 = vpack.c.b16 %v11585, %v11581
        %v11930 = vpack.c.b16 %v11586, %v11582
        %v11931 = vpack.c.b16 %v11587, %v11583
        %v11932 = vpack.c.b16 %v11588, %v11584
        %v11933 = vpack.c.b16 %v11593, %v11589
        %v11934 = vpack.c.b16 %v11594, %v11590
        %v11935 = vpack.c.b16 %v11595, %v11591
        %v11936 = vpack.c.b16 %v11596, %v11592
        %v11937 = vpack.c.b16 %v11601, %v11597
        %v11938 = vpack.c.b16 %v11602, %v11598
        %v11939 = vpack.c.b16 %v11603, %v11599
        %v11940 = vpack.c.b16 %v11604, %v11600
        %v11941 = vpack.c.b16 %v11609, %v11605
        %v11942 = vpack.c.b16 %v11610, %v11606
        %v11943 = vpack.c.b16 %v11611, %v11607
        %v11944 = vpack.c.b16 %v11612, %v11608
        %v11945 = vpack.c.b16 %v11617, %v11613
        %v11946 = vpack.c.b16 %v11618, %v11614
        %v11947 = vpack.c.b16 %v11619, %v11615
        %v11948 = vpack.c.b16 %v11620, %v11616
        %v11949 = vpack.c.b16 %v11625, %v11621
        %v11950 = vpack.c.b16 %v11626, %v11622
        %v11951 = vpack.c.b16 %v11627, %v11623
        %v11952 = vpack.c.b16 %v11628, %v11624
        %v11953 = vpack.c.b16 %v11633, %v11629
        %v11954 = vpack.c.b16 %v11634, %v11630
        %v11955 = vpack.c.b16 %v11635, %v11631
        %v11956 = vpack.c.b16 %v11636, %v11632
        %v11957 = vpack.c.b16 %v11641, %v11637
        %v11958 = vpack.c.b16 %v11642, %v11638
        %v11959 = vpack.c.b16 %v11643, %v11639
        %v11960 = vpack.c.b16 %v11644, %v11640
        %v11961 = vpack.c.b16 %v11649, %v11645
        %v11962 = vpack.c.b16 %v11650, %v11646
        %v11963 = vpack.c.b16 %v11651, %v11647
        %v11964 = vpack.c.b16 %v11652, %v11648
        %v11965 = vpack.c.b16 %v11657, %v11653
        %v11966 = vpack.c.b16 %v11658, %v11654
        %v11967 = vpack.c.b16 %v11659, %v11655
        %v11968 = vpack.c.b16 %v11660, %v11656
        %v11969 = vpack.c.b16 %v11665, %v11661
        %v11970 = vpack.c.b16 %v11666, %v11662
        %v11971 = vpack.c.b16 %v11667, %v11663
        %v11972 = vpack.c.b16 %v11668, %v11664
        %v11973 = vpack.c.b16 %v11673, %v11669
        %v11974 = vpack.c.b16 %v11674, %v11670
        %v11975 = vpack.c.b16 %v11675, %v11671
        %v11976 = vpack.c.b16 %v11676, %v11672
        %v11977 = vpack.c.b16 %v11681, %v11677
        %v11978 = vpack.c.b16 %v11682, %v11678
        %v11979 = vpack.c.b16 %v11683, %v11679
        %v11980 = vpack.c.b16 %v11684, %v11680
        %v11981 = vpack.c.b16 %v11689, %v11685
        %v11982 = vpack.c.b16 %v11690, %v11686
        %v11983 = vpack.c.b16 %v11691, %v11687
        %v11984 = vpack.c.b16 %v11692, %v11688
        %v11985 = vpack.c.b16 %v11697, %v11693
        %v11986 = vpack.c.b16 %v11698, %v11694
        %v11987 = vpack.c.b16 %v11699, %v11695
        %v11988 = vpack.c.b16 %v11700, %v11696
        %v11989 = vpack.c.b16 %v11705, %v11701
        %v11990 = vpack.c.b16 %v11706, %v11702
        %v11991 = vpack.c.b16 %v11707, %v11703
        %v11992 = vpack.c.b16 %v11708, %v11704
        %v11993 = vpack.c.b16 %v11713, %v11709
        %v11994 = vpack.c.b16 %v11714, %v11710
        %v11995 = vpack.c.b16 %v11715, %v11711
        %v11996 = vpack.c.b16 %v11716, %v11712
        %v11997 = vpack.c.b16 %v11721, %v11717
        %v11998 = vpack.c.b16 %v11722, %v11718
        %v11999 = vpack.c.b16 %v11723, %v11719
        %v12000 = vpack.c.b16 %v11724, %v11720
        %v12001 = vpack.c.b16 %v11729, %v11725
        %v12002 = vpack.c.b16 %v11730, %v11726
        %v12003 = vpack.c.b16 %v11731, %v11727
        %v12004 = vpack.c.b16 %v11732, %v11728
        %v12005 = vpack.c.b16 %v11737, %v11733
        %v12006 = vpack.c.b16 %v11738, %v11734
        %v12007 = vpack.c.b16 %v11739, %v11735
        %v12008 = vpack.c.b16 %v11740, %v11736
        %v12009 = vpack.c.b16 %v11745, %v11741
        %v12010 = vpack.c.b16 %v11746, %v11742
        %v12011 = vpack.c.b16 %v11747, %v11743
        %v12012 = vpack.c.b16 %v11748, %v11744
        %v12013 = vpack.c.b16 %v11753, %v11749
        %v12014 = vpack.c.b16 %v11754, %v11750
        %v12015 = vpack.c.b16 %v11755, %v11751
        %v12016 = vpack.c.b16 %v11756, %v11752
        %v12017 = vpack.c.b16 %v11761, %v11757
        %v12018 = vpack.c.b16 %v11762, %v11758
        %v12019 = vpack.c.b16 %v11763, %v11759
        %v12020 = vpack.c.b16 %v11764, %v11760
        %12277 = vmatpush.bf16.msra.mxu0 %v11793
        %12278 = vmatpush.bf16.msra.mxu0 %v11789
        %12279 = vmatpush.bf16.msra.mxu0 %v11785
        %12280 = vmatpush.bf16.msra.mxu0 %v11781
        %12281 = vmatpush.bf16.msra.mxu0 %v11777
        %12282 = vmatpush.bf16.msra.mxu0 %v11773
        %12283 = vmatpush.bf16.msra.mxu0 %v11769
        %12284 = vmatpush.bf16.msra.mxu0 %v11765
        %12285 = vmatmul.bf16.gmra.mxu0 %v10733
        %v12286 = vpop.f32.mrf.mxu0
        %v12287 = vadd.f32 0.0, %v12286
        %v12288 = vpop.f32.mrf.mxu0
        %12289 = vdwg.mxu0
        %12290 = vmatpush.bf16.msra.mxu0 %v11825
        %12291 = vmatpush.bf16.msra.mxu0 %v11821
        %12292 = vmatpush.bf16.msra.mxu0 %v11817
        %12293 = vmatpush.bf16.msra.mxu0 %v11813
        %12294 = vmatpush.bf16.msra.mxu0 %v11809
        %12295 = vmatpush.bf16.msra.mxu0 %v11805
        %12296 = vmatpush.bf16.msra.mxu0 %v11801
        %12297 = vmatpush.bf16.msra.mxu0 %v11797
        %12298 = vmatmul.bf16.gmra.mxu0 %v10734
        %v12299 = vpop.f32.mrf.mxu0
        %v12300 = vadd.f32 %v12287, %v12299
        %v12301 = vpop.f32.mrf.mxu0
        %12302 = vdwg.mxu0
        %12303 = vmatpush.bf16.msra.mxu0 %v11857
        %12304 = vmatpush.bf16.msra.mxu0 %v11853
        %12305 = vmatpush.bf16.msra.mxu0 %v11849
        %12306 = vmatpush.bf16.msra.mxu0 %v11845
        %12307 = vmatpush.bf16.msra.mxu0 %v11841
        %12308 = vmatpush.bf16.msra.mxu0 %v11837
        %12309 = vmatpush.bf16.msra.mxu0 %v11833
        %12310 = vmatpush.bf16.msra.mxu0 %v11829
        %12311 = vmatmul.bf16.gmra.mxu0 %v10735
        %v12312 = vpop.f32.mrf.mxu0
        %v12313 = vadd.f32 %v12300, %v12312
        %v12314 = vpop.f32.mrf.mxu0
        %12315 = vdwg.mxu0
        %12316 = vmatpush.bf16.msra.mxu0 %v11889
        %12317 = vmatpush.bf16.msra.mxu0 %v11885
        %12318 = vmatpush.bf16.msra.mxu0 %v11881
        %12319 = vmatpush.bf16.msra.mxu0 %v11877
        %12320 = vmatpush.bf16.msra.mxu0 %v11873
        %12321 = vmatpush.bf16.msra.mxu0 %v11869
        %12322 = vmatpush.bf16.msra.mxu0 %v11865
        %12323 = vmatpush.bf16.msra.mxu0 %v11861
        %12324 = vmatmul.bf16.gmra.mxu0 %v10736
        %v12325 = vpop.f32.mrf.mxu0
        %v12326 = vadd.f32 %v12313, %v12325
        %v12327 = vpop.f32.mrf.mxu0
        %12328 = vdwg.mxu0
        %12329 = vmatpush.bf16.msra.mxu0 %v11921
        %12330 = vmatpush.bf16.msra.mxu0 %v11917
        %12331 = vmatpush.bf16.msra.mxu0 %v11913
        %12332 = vmatpush.bf16.msra.mxu0 %v11909
        %12333 = vmatpush.bf16.msra.mxu0 %v11905
        %12334 = vmatpush.bf16.msra.mxu0 %v11901
        %12335 = vmatpush.bf16.msra.mxu0 %v11897
        %12336 = vmatpush.bf16.msra.mxu0 %v11893
        %12337 = vmatmul.bf16.gmra.mxu0 %v10737
        %v12338 = vpop.f32.mrf.mxu0
        %v12339 = vadd.f32 %v12326, %v12338
        %v12340 = vpop.f32.mrf.mxu0
        %12341 = vdwg.mxu0
        %12342 = vmatpush.bf16.msra.mxu0 %v11953
        %12343 = vmatpush.bf16.msra.mxu0 %v11949
        %12344 = vmatpush.bf16.msra.mxu0 %v11945
        %12345 = vmatpush.bf16.msra.mxu0 %v11941
        %12346 = vmatpush.bf16.msra.mxu0 %v11937
        %12347 = vmatpush.bf16.msra.mxu0 %v11933
        %12348 = vmatpush.bf16.msra.mxu0 %v11929
        %12349 = vmatpush.bf16.msra.mxu0 %v11925
        %12350 = vmatmul.bf16.gmra.mxu0 %v10738
        %v12351 = vpop.f32.mrf.mxu0
        %v12352 = vadd.f32 %v12339, %v12351
        %v12353 = vpop.f32.mrf.mxu0
        %12354 = vdwg.mxu0
        %12355 = vmatpush.bf16.msra.mxu0 %v11985
        %12356 = vmatpush.bf16.msra.mxu0 %v11981
        %12357 = vmatpush.bf16.msra.mxu0 %v11977
        %12358 = vmatpush.bf16.msra.mxu0 %v11973
        %12359 = vmatpush.bf16.msra.mxu0 %v11969
        %12360 = vmatpush.bf16.msra.mxu0 %v11965
        %12361 = vmatpush.bf16.msra.mxu0 %v11961
        %12362 = vmatpush.bf16.msra.mxu0 %v11957
        %12363 = vmatmul.bf16.gmra.mxu0 %v10739
        %v12364 = vpop.f32.mrf.mxu0
        %v12365 = vadd.f32 %v12352, %v12364
        %v12366 = vpop.f32.mrf.mxu0
        %12367 = vdwg.mxu0
        %12368 = vmatpush.bf16.msra.mxu0 %v12017
        %12369 = vmatpush.bf16.msra.mxu0 %v12013
        %12370 = vmatpush.bf16.msra.mxu0 %v12009
        %12371 = vmatpush.bf16.msra.mxu0 %v12005
        %12372 = vmatpush.bf16.msra.mxu0 %v12001
        %12373 = vmatpush.bf16.msra.mxu0 %v11997
        %12374 = vmatpush.bf16.msra.mxu0 %v11993
        %12375 = vmatpush.bf16.msra.mxu0 %v11989
        %12376 = vmatmul.bf16.gmra.mxu0 %v10740
        %v12377 = vpop.f32.mrf.mxu0
        %v12378 = vadd.f32 %v12365, %v12377
        %v12379 = vpop.f32.mrf.mxu0
        %12380 = vdwg.mxu0
        %12381 = vmatpush.bf16.msra.mxu0 %v11794
        %12382 = vmatpush.bf16.msra.mxu0 %v11790
        %12383 = vmatpush.bf16.msra.mxu0 %v11786
        %12384 = vmatpush.bf16.msra.mxu0 %v11782
        %12385 = vmatpush.bf16.msra.mxu0 %v11778
        %12386 = vmatpush.bf16.msra.mxu0 %v11774
        %12387 = vmatpush.bf16.msra.mxu0 %v11770
        %12388 = vmatpush.bf16.msra.mxu0 %v11766
        %12389 = vmatmul.bf16.gmra.mxu0 %v10733
        %v12390 = vpop.f32.mrf.mxu0
        %v12391 = vadd.f32 0.0, %v12390
        %v12392 = vpop.f32.mrf.mxu0
        %12393 = vdwg.mxu0
        %12394 = vmatpush.bf16.msra.mxu0 %v11826
        %12395 = vmatpush.bf16.msra.mxu0 %v11822
        %12396 = vmatpush.bf16.msra.mxu0 %v11818
        %12397 = vmatpush.bf16.msra.mxu0 %v11814
        %12398 = vmatpush.bf16.msra.mxu0 %v11810
        %12399 = vmatpush.bf16.msra.mxu0 %v11806
        %12400 = vmatpush.bf16.msra.mxu0 %v11802
        %12401 = vmatpush.bf16.msra.mxu0 %v11798
        %12402 = vmatmul.bf16.gmra.mxu0 %v10734
        %v12403 = vpop.f32.mrf.mxu0
        %v12404 = vadd.f32 %v12391, %v12403
        %v12405 = vpop.f32.mrf.mxu0
        %12406 = vdwg.mxu0
        %12407 = vmatpush.bf16.msra.mxu0 %v11858
        %12408 = vmatpush.bf16.msra.mxu0 %v11854
        %12409 = vmatpush.bf16.msra.mxu0 %v11850
        %12410 = vmatpush.bf16.msra.mxu0 %v11846
        %12411 = vmatpush.bf16.msra.mxu0 %v11842
        %12412 = vmatpush.bf16.msra.mxu0 %v11838
        %12413 = vmatpush.bf16.msra.mxu0 %v11834
        %12414 = vmatpush.bf16.msra.mxu0 %v11830
        %12415 = vmatmul.bf16.gmra.mxu0 %v10735
        %v12416 = vpop.f32.mrf.mxu0
        %v12417 = vadd.f32 %v12404, %v12416
        %v12418 = vpop.f32.mrf.mxu0
        %12419 = vdwg.mxu0
        %12420 = vmatpush.bf16.msra.mxu0 %v11890
        %12421 = vmatpush.bf16.msra.mxu0 %v11886
        %12422 = vmatpush.bf16.msra.mxu0 %v11882
        %12423 = vmatpush.bf16.msra.mxu0 %v11878
        %12424 = vmatpush.bf16.msra.mxu0 %v11874
        %12425 = vmatpush.bf16.msra.mxu0 %v11870
        %12426 = vmatpush.bf16.msra.mxu0 %v11866
        %12427 = vmatpush.bf16.msra.mxu0 %v11862
        %12428 = vmatmul.bf16.gmra.mxu0 %v10736
        %v12429 = vpop.f32.mrf.mxu0
        %v12430 = vadd.f32 %v12417, %v12429
        %v12431 = vpop.f32.mrf.mxu0
        %12432 = vdwg.mxu0
        %12433 = vmatpush.bf16.msra.mxu0 %v11922
        %12434 = vmatpush.bf16.msra.mxu0 %v11918
        %12435 = vmatpush.bf16.msra.mxu0 %v11914
        %12436 = vmatpush.bf16.msra.mxu0 %v11910
        %12437 = vmatpush.bf16.msra.mxu0 %v11906
        %12438 = vmatpush.bf16.msra.mxu0 %v11902
        %12439 = vmatpush.bf16.msra.mxu0 %v11898
        %12440 = vmatpush.bf16.msra.mxu0 %v11894
        %12441 = vmatmul.bf16.gmra.mxu0 %v10737
        %v12442 = vpop.f32.mrf.mxu0
        %v12443 = vadd.f32 %v12430, %v12442
        %v12444 = vpop.f32.mrf.mxu0
        %12445 = vdwg.mxu0
        %12446 = vmatpush.bf16.msra.mxu0 %v11954
        %12447 = vmatpush.bf16.msra.mxu0 %v11950
        %12448 = vmatpush.bf16.msra.mxu0 %v11946
        %12449 = vmatpush.bf16.msra.mxu0 %v11942
        %12450 = vmatpush.bf16.msra.mxu0 %v11938
        %12451 = vmatpush.bf16.msra.mxu0 %v11934
        %12452 = vmatpush.bf16.msra.mxu0 %v11930
        %12453 = vmatpush.bf16.msra.mxu0 %v11926
        %12454 = vmatmul.bf16.gmra.mxu0 %v10738
        %v12455 = vpop.f32.mrf.mxu0
        %v12456 = vadd.f32 %v12443, %v12455
        %v12457 = vpop.f32.mrf.mxu0
        %12458 = vdwg.mxu0
        %12459 = vmatpush.bf16.msra.mxu0 %v11986
        %12460 = vmatpush.bf16.msra.mxu0 %v11982
        %12461 = vmatpush.bf16.msra.mxu0 %v11978
        %12462 = vmatpush.bf16.msra.mxu0 %v11974
        %12463 = vmatpush.bf16.msra.mxu0 %v11970
        %12464 = vmatpush.bf16.msra.mxu0 %v11966
        %12465 = vmatpush.bf16.msra.mxu0 %v11962
        %12466 = vmatpush.bf16.msra.mxu0 %v11958
        %12467 = vmatmul.bf16.gmra.mxu0 %v10739
        %v12468 = vpop.f32.mrf.mxu0
        %v12469 = vadd.f32 %v12456, %v12468
        %v12470 = vpop.f32.mrf.mxu0
        %12471 = vdwg.mxu0
        %12472 = vmatpush.bf16.msra.mxu0 %v12018
        %12473 = vmatpush.bf16.msra.mxu0 %v12014
        %12474 = vmatpush.bf16.msra.mxu0 %v12010
        %12475 = vmatpush.bf16.msra.mxu0 %v12006
        %12476 = vmatpush.bf16.msra.mxu0 %v12002
        %12477 = vmatpush.bf16.msra.mxu0 %v11998
        %12478 = vmatpush.bf16.msra.mxu0 %v11994
        %12479 = vmatpush.bf16.msra.mxu0 %v11990
        %12480 = vmatmul.bf16.gmra.mxu0 %v10740
        %v12481 = vpop.f32.mrf.mxu0
        %v12482 = vadd.f32 %v12469, %v12481
        %v12483 = vpop.f32.mrf.mxu0
        %12484 = vdwg.mxu0
        %12485 = vmatpush.bf16.msra.mxu0 %v11795
        %12486 = vmatpush.bf16.msra.mxu0 %v11791
        %12487 = vmatpush.bf16.msra.mxu0 %v11787
        %12488 = vmatpush.bf16.msra.mxu0 %v11783
        %12489 = vmatpush.bf16.msra.mxu0 %v11779
        %12490 = vmatpush.bf16.msra.mxu0 %v11775
        %12491 = vmatpush.bf16.msra.mxu0 %v11771
        %12492 = vmatpush.bf16.msra.mxu0 %v11767
        %12493 = vmatmul.bf16.gmra.mxu0 %v10733
        %v12494 = vpop.f32.mrf.mxu0
        %v12495 = vadd.f32 0.0, %v12494
        %v12496 = vpop.f32.mrf.mxu0
        %12497 = vdwg.mxu0
        %12498 = vmatpush.bf16.msra.mxu0 %v11827
        %12499 = vmatpush.bf16.msra.mxu0 %v11823
        %12500 = vmatpush.bf16.msra.mxu0 %v11819
        %12501 = vmatpush.bf16.msra.mxu0 %v11815
        %12502 = vmatpush.bf16.msra.mxu0 %v11811
        %12503 = vmatpush.bf16.msra.mxu0 %v11807
        %12504 = vmatpush.bf16.msra.mxu0 %v11803
        %12505 = vmatpush.bf16.msra.mxu0 %v11799
        %12506 = vmatmul.bf16.gmra.mxu0 %v10734
        %v12507 = vpop.f32.mrf.mxu0
        %v12508 = vadd.f32 %v12495, %v12507
        %v12509 = vpop.f32.mrf.mxu0
        %12510 = vdwg.mxu0
        %12511 = vmatpush.bf16.msra.mxu0 %v11859
        %12512 = vmatpush.bf16.msra.mxu0 %v11855
        %12513 = vmatpush.bf16.msra.mxu0 %v11851
        %12514 = vmatpush.bf16.msra.mxu0 %v11847
        %12515 = vmatpush.bf16.msra.mxu0 %v11843
        %12516 = vmatpush.bf16.msra.mxu0 %v11839
        %12517 = vmatpush.bf16.msra.mxu0 %v11835
        %12518 = vmatpush.bf16.msra.mxu0 %v11831
        %12519 = vmatmul.bf16.gmra.mxu0 %v10735
        %v12520 = vpop.f32.mrf.mxu0
        %v12521 = vadd.f32 %v12508, %v12520
        %v12522 = vpop.f32.mrf.mxu0
        %12523 = vdwg.mxu0
        %12524 = vmatpush.bf16.msra.mxu0 %v11891
        %12525 = vmatpush.bf16.msra.mxu0 %v11887
        %12526 = vmatpush.bf16.msra.mxu0 %v11883
        %12527 = vmatpush.bf16.msra.mxu0 %v11879
        %12528 = vmatpush.bf16.msra.mxu0 %v11875
        %12529 = vmatpush.bf16.msra.mxu0 %v11871
        %12530 = vmatpush.bf16.msra.mxu0 %v11867
        %12531 = vmatpush.bf16.msra.mxu0 %v11863
        %12532 = vmatmul.bf16.gmra.mxu0 %v10736
        %v12533 = vpop.f32.mrf.mxu0
        %v12534 = vadd.f32 %v12521, %v12533
        %v12535 = vpop.f32.mrf.mxu0
        %12536 = vdwg.mxu0
        %12537 = vmatpush.bf16.msra.mxu0 %v11923
        %12538 = vmatpush.bf16.msra.mxu0 %v11919
        %12539 = vmatpush.bf16.msra.mxu0 %v11915
        %12540 = vmatpush.bf16.msra.mxu0 %v11911
        %12541 = vmatpush.bf16.msra.mxu0 %v11907
        %12542 = vmatpush.bf16.msra.mxu0 %v11903
        %12543 = vmatpush.bf16.msra.mxu0 %v11899
        %12544 = vmatpush.bf16.msra.mxu0 %v11895
        %12545 = vmatmul.bf16.gmra.mxu0 %v10737
        %v12546 = vpop.f32.mrf.mxu0
        %v12547 = vadd.f32 %v12534, %v12546
        %v12548 = vpop.f32.mrf.mxu0
        %12549 = vdwg.mxu0
        %12550 = vmatpush.bf16.msra.mxu0 %v11955
        %12551 = vmatpush.bf16.msra.mxu0 %v11951
        %12552 = vmatpush.bf16.msra.mxu0 %v11947
        %12553 = vmatpush.bf16.msra.mxu0 %v11943
        %12554 = vmatpush.bf16.msra.mxu0 %v11939
        %12555 = vmatpush.bf16.msra.mxu0 %v11935
        %12556 = vmatpush.bf16.msra.mxu0 %v11931
        %12557 = vmatpush.bf16.msra.mxu0 %v11927
        %12558 = vmatmul.bf16.gmra.mxu0 %v10738
        %v12559 = vpop.f32.mrf.mxu0
        %v12560 = vadd.f32 %v12547, %v12559
        %v12561 = vpop.f32.mrf.mxu0
        %12562 = vdwg.mxu0
        %12563 = vmatpush.bf16.msra.mxu0 %v11987
        %12564 = vmatpush.bf16.msra.mxu0 %v11983
        %12565 = vmatpush.bf16.msra.mxu0 %v11979
        %12566 = vmatpush.bf16.msra.mxu0 %v11975
        %12567 = vmatpush.bf16.msra.mxu0 %v11971
        %12568 = vmatpush.bf16.msra.mxu0 %v11967
        %12569 = vmatpush.bf16.msra.mxu0 %v11963
        %12570 = vmatpush.bf16.msra.mxu0 %v11959
        %12571 = vmatmul.bf16.gmra.mxu0 %v10739
        %v12572 = vpop.f32.mrf.mxu0
        %v12573 = vadd.f32 %v12560, %v12572
        %v12574 = vpop.f32.mrf.mxu0
        %12575 = vdwg.mxu0
        %12576 = vmatpush.bf16.msra.mxu0 %v12019
        %12577 = vmatpush.bf16.msra.mxu0 %v12015
        %12578 = vmatpush.bf16.msra.mxu0 %v12011
        %12579 = vmatpush.bf16.msra.mxu0 %v12007
        %12580 = vmatpush.bf16.msra.mxu0 %v12003
        %12581 = vmatpush.bf16.msra.mxu0 %v11999
        %12582 = vmatpush.bf16.msra.mxu0 %v11995
        %12583 = vmatpush.bf16.msra.mxu0 %v11991
        %12584 = vmatmul.bf16.gmra.mxu0 %v10740
        %v12585 = vpop.f32.mrf.mxu0
        %v12586 = vadd.f32 %v12573, %v12585
        %v12587 = vpop.f32.mrf.mxu0
        %12588 = vdwg.mxu0
        %12589 = vmatpush.bf16.msra.mxu0 %v11796
        %12590 = vmatpush.bf16.msra.mxu0 %v11792
        %12591 = vmatpush.bf16.msra.mxu0 %v11788
        %12592 = vmatpush.bf16.msra.mxu0 %v11784
        %12593 = vmatpush.bf16.msra.mxu0 %v11780
        %12594 = vmatpush.bf16.msra.mxu0 %v11776
        %12595 = vmatpush.bf16.msra.mxu0 %v11772
        %12596 = vmatpush.bf16.msra.mxu0 %v11768
        %12597 = vmatmul.bf16.gmra.mxu0 %v10733
        %v12598 = vpop.f32.mrf.mxu0
        %v12599 = vadd.f32 0.0, %v12598
        %v12600 = vpop.f32.mrf.mxu0
        %12601 = vdwg.mxu0
        %12602 = vmatpush.bf16.msra.mxu0 %v11828
        %12603 = vmatpush.bf16.msra.mxu0 %v11824
        %12604 = vmatpush.bf16.msra.mxu0 %v11820
        %12605 = vmatpush.bf16.msra.mxu0 %v11816
        %12606 = vmatpush.bf16.msra.mxu0 %v11812
        %12607 = vmatpush.bf16.msra.mxu0 %v11808
        %12608 = vmatpush.bf16.msra.mxu0 %v11804
        %12609 = vmatpush.bf16.msra.mxu0 %v11800
        %12610 = vmatmul.bf16.gmra.mxu0 %v10734
        %v12611 = vpop.f32.mrf.mxu0
        %v12612 = vadd.f32 %v12599, %v12611
        %v12613 = vpop.f32.mrf.mxu0
        %12614 = vdwg.mxu0
        %12615 = vmatpush.bf16.msra.mxu0 %v11860
        %12616 = vmatpush.bf16.msra.mxu0 %v11856
        %12617 = vmatpush.bf16.msra.mxu0 %v11852
        %12618 = vmatpush.bf16.msra.mxu0 %v11848
        %12619 = vmatpush.bf16.msra.mxu0 %v11844
        %12620 = vmatpush.bf16.msra.mxu0 %v11840
        %12621 = vmatpush.bf16.msra.mxu0 %v11836
        %12622 = vmatpush.bf16.msra.mxu0 %v11832
        %12623 = vmatmul.bf16.gmra.mxu0 %v10735
        %v12624 = vpop.f32.mrf.mxu0
        %v12625 = vadd.f32 %v12612, %v12624
        %v12626 = vpop.f32.mrf.mxu0
        %12627 = vdwg.mxu0
        %12628 = vmatpush.bf16.msra.mxu0 %v11892
        %12629 = vmatpush.bf16.msra.mxu0 %v11888
        %12630 = vmatpush.bf16.msra.mxu0 %v11884
        %12631 = vmatpush.bf16.msra.mxu0 %v11880
        %12632 = vmatpush.bf16.msra.mxu0 %v11876
        %12633 = vmatpush.bf16.msra.mxu0 %v11872
        %12634 = vmatpush.bf16.msra.mxu0 %v11868
        %12635 = vmatpush.bf16.msra.mxu0 %v11864
        %12636 = vmatmul.bf16.gmra.mxu0 %v10736
        %v12637 = vpop.f32.mrf.mxu0
        %v12638 = vadd.f32 %v12625, %v12637
        %v12639 = vpop.f32.mrf.mxu0
        %12640 = vdwg.mxu0
        %12641 = vmatpush.bf16.msra.mxu0 %v11924
        %12642 = vmatpush.bf16.msra.mxu0 %v11920
        %12643 = vmatpush.bf16.msra.mxu0 %v11916
        %12644 = vmatpush.bf16.msra.mxu0 %v11912
        %12645 = vmatpush.bf16.msra.mxu0 %v11908
        %12646 = vmatpush.bf16.msra.mxu0 %v11904
        %12647 = vmatpush.bf16.msra.mxu0 %v11900
        %12648 = vmatpush.bf16.msra.mxu0 %v11896
        %12649 = vmatmul.bf16.gmra.mxu0 %v10737
        %v12650 = vpop.f32.mrf.mxu0
        %v12651 = vadd.f32 %v12638, %v12650
        %v12652 = vpop.f32.mrf.mxu0
        %12653 = vdwg.mxu0
        %12654 = vmatpush.bf16.msra.mxu0 %v11956
        %12655 = vmatpush.bf16.msra.mxu0 %v11952
        %12656 = vmatpush.bf16.msra.mxu0 %v11948
        %12657 = vmatpush.bf16.msra.mxu0 %v11944
        %12658 = vmatpush.bf16.msra.mxu0 %v11940
        %12659 = vmatpush.bf16.msra.mxu0 %v11936
        %12660 = vmatpush.bf16.msra.mxu0 %v11932
        %12661 = vmatpush.bf16.msra.mxu0 %v11928
        %12662 = vmatmul.bf16.gmra.mxu0 %v10738
        %v12663 = vpop.f32.mrf.mxu0
        %v12664 = vadd.f32 %v12651, %v12663
        %v12665 = vpop.f32.mrf.mxu0
        %12666 = vdwg.mxu0
        %12667 = vmatpush.bf16.msra.mxu0 %v11988
        %12668 = vmatpush.bf16.msra.mxu0 %v11984
        %12669 = vmatpush.bf16.msra.mxu0 %v11980
        %12670 = vmatpush.bf16.msra.mxu0 %v11976
        %12671 = vmatpush.bf16.msra.mxu0 %v11972
        %12672 = vmatpush.bf16.msra.mxu0 %v11968
        %12673 = vmatpush.bf16.msra.mxu0 %v11964
        %12674 = vmatpush.bf16.msra.mxu0 %v11960
        %12675 = vmatmul.bf16.gmra.mxu0 %v10739
        %v12676 = vpop.f32.mrf.mxu0
        %v12677 = vadd.f32 %v12664, %v12676
        %v12678 = vpop.f32.mrf.mxu0
        %12679 = vdwg.mxu0
        %12680 = vmatpush.bf16.msra.mxu0 %v12020
        %12681 = vmatpush.bf16.msra.mxu0 %v12016
        %12682 = vmatpush.bf16.msra.mxu0 %v12012
        %12683 = vmatpush.bf16.msra.mxu0 %v12008
        %12684 = vmatpush.bf16.msra.mxu0 %v12004
        %12685 = vmatpush.bf16.msra.mxu0 %v12000
        %12686 = vmatpush.bf16.msra.mxu0 %v11996
        %12687 = vmatpush.bf16.msra.mxu0 %v11992
        %12688 = vmatmul.bf16.gmra.mxu0 %v10740
        %v12689 = vpop.f32.mrf.mxu0
        %v12690 = vadd.f32 %v12677, %v12689
        %v12691 = vpop.f32.mrf.mxu0
        %12692 = vdwg.mxu0
        %v12693 = vadd.f32 %v10729, %v12378
        %v12694 = vadd.f32 %v10730, %v12482
        %v12695 = vadd.f32 %v10731, %v12586
        %v12696 = vadd.f32 %v10732, %v12690
        %12697 = vst [vmem:[#allocation3] sm:$0xff] %v12693
        %12698 = vst [vmem:[#allocation3 + $0x8] sm:$0xff] %v12694
        %12699 = vst [vmem:[#allocation3 + $0x10] sm:$0xff] %v12695
        %12700 = vst [vmem:[#allocation3 + $0x18] sm:$0xff] %v12696
        %p12701 = scmp.eq.s32.totalorder %s25, 1
        // Predicated region
        $region93: #{tpu_custom_call.1} parent=55 // pred_check
          %p12702 = pneg %p12701
        $region94: #{tpu_custom_call.1} parent=55 // pred_check_branch
          %12704 = sbr.rel (%p12702) target = $region96
        $region95: #{tpu_custom_call.1} parent=55 // pred_region
          %v12705 = vld [vmem:[#allocation3] sm:$0xff]
          %v12706 = vld [vmem:[#allocation3 + $0x8] sm:$0xff]
          %v12707 = vld [vmem:[#allocation3 + $0x10] sm:$0xff]
          %v12708 = vld [vmem:[#allocation3 + $0x18] sm:$0xff]
          %v12709 = vld [vmem:[#allocation13] sm:$0xf]
          %v12711 = vperm.slane %v12709, 0
          %v12712 = vperm.slane %v12709, 1
          %v12713 = vperm.slane %v12709, 2
          %v12714 = vperm.slane %v12709, 3
          %v12719 = vadd.f32 %v12705, %v12711
          %v12720 = vadd.f32 %v12706, %v12712
          %v12721 = vadd.f32 %v12707, %v12713
          %v12722 = vadd.f32 %v12708, %v12714
          %v12723 = vmax.f32 %v12719, 0.0
          %v12724 = vmax.f32 %v12720, 0.0
          %v12725 = vmax.f32 %v12721, 0.0
          %v12726 = vmax.f32 %v12722, 0.0
          %v12727 = vld [vmem:[#allocation14] sm:$0xf]
          %v12729 = vperm.slane %v12727, 0
          %v12730 = vperm.slane %v12727, 1
          %v12731 = vperm.slane %v12727, 2
          %v12732 = vperm.slane %v12727, 3
          %v12737 = vmul.f32 %v12723, %v12729
          %v12738 = vmul.f32 %v12724, %v12730
          %v12739 = vmul.f32 %v12725, %v12731
          %v12740 = vmul.f32 %v12726, %v12732
          %v12741 = vadd.f32 %v12737, %v12738
          %v12742 = vadd.f32 %v12741, %v12739
          %v12743 = vadd.f32 %v12742, %v12740
          %12744 = vadd.xlane.f32.xlu0 %v12743
          %v12745 = vpop.xlane.xlu0 %12744
          %v12746 = vld [vmem:[#allocation4] sm:$0x1]
          %v12748 = vperm.slane %v12746, 0
          %v12750 = vadd.f32 %v12745, %v12748
          %vm12751 = vcmask 7168
          %12752 = vst.msk [vmem:[%s9] sm:$0xff] %vm12751, %v12750
        $region96: #{tpu_custom_call.1} parent=55 // pred_fallthru
          _
        // Predicated region
        $region97: #{tpu_custom_call.1} parent=55 // pred_check
          %p12753 = pneg %p247
        $region98: #{tpu_custom_call.1} parent=55 // pred_check_branch
          %12755 = sbr.rel (%p12753) target = $region100
        $region99: #{tpu_custom_call.1} parent=55 // pred_region
          _
        $region100: #{tpu_custom_call.1} parent=55 // pred_fallthru
          _
        // Predicated region
        $region101: #{tpu_custom_call.1} parent=55 // pred_check
          %p12756 = pneg %p247
        $region102: #{tpu_custom_call.1} parent=55 // pred_check_branch
          %12758 = sbr.rel (%p12756) target = $region104
        $region103: #{tpu_custom_call.1} parent=55 // pred_region
          _
        $region104: #{tpu_custom_call.1} parent=55 // pred_fallthru
          _
      $region56: #{tpu_custom_call.1} parent=5 // pred_fallthru
        _
      %p12759 = scmp.le.s32.totalorder 2, %s20
      // Predicated region
      $region105: #{tpu_custom_call.1} parent=5 // pred_check
        %p12760 = pneg %p12759
      $region106: #{tpu_custom_call.1} parent=5 // pred_check_branch
        %12762 = sbr.rel (%p12760) target = $region108
      $region107: #{tpu_custom_call.1} parent=5 // pred_region
        %s12763 = ssub.s32 %s20, 2
      $region108: #{tpu_custom_call.1} parent=5 // pred_fallthru
        _
    $region6: #{tpu_custom_call.1} parent=1 // loop_footer
      %s24 = sadd.s32 1, %s20
    $region7: #{tpu_custom_call.1} parent=1 // loop_footer_branch
      %19 = sbr.rel target = $region3
    $region8: #{tpu_custom_call.1} parent=1 // loop_exit
      _
    %12764 = vsyncpa [#allocation6], 1
    %s12765 = scalar_lea.sflag [#allocation6], 1
    %12766 = vsyncpa %s12765, 1
    %12767 = vsyncpa [#allocation8], 1
    %12768 = vsyncpa [#allocation15], 1

</llo_original>
